<compile_context>
chip_gen: v7x
topology: tpu7x:2x2x1
jax: 0.10.0
libtpu: 0.0.40
codegen_flags: <defaults>
</compile_context>

<pallas_src>
import functools

import jax
import jax.numpy as jnp
from jax.experimental import pallas as pl
from jax.experimental.pallas import tpu as pltpu


# ----------------------------- kernel helpers --------------------------------

def _col_selectors(n):
    """(n, n//2) 0/1 matrices: even[i, o]=1 iff i==2o ; odd[i, o]=1 iff i==2o+1."""
    i_idx = jax.lax.broadcasted_iota(jnp.int32, (n, n // 2), 0)
    o_idx = jax.lax.broadcasted_iota(jnp.int32, (n, n // 2), 1)
    even = (i_idx == 2 * o_idx).astype(jnp.float32)
    odd = (i_idx == 2 * o_idx + 1).astype(jnp.float32)
    return even, odd


def _row_selectors(n):
    """(n//2, n) 0/1 matrices: even[o, i]=1 iff i==2o ; odd[o, i]=1 iff i==2o+1."""
    o_idx = jax.lax.broadcasted_iota(jnp.int32, (n // 2, n), 0)
    i_idx = jax.lax.broadcasted_iota(jnp.int32, (n // 2, n), 1)
    even = (i_idx == 2 * o_idx).astype(jnp.float32)
    odd = (i_idx == 2 * o_idx + 1).astype(jnp.float32)
    return even, odd


# ------------------------------ fused kernel ---------------------------------

def _lenet_kernel(x_ref, band1_ref, b1_ref, band2_ref, b2_ref,
                  w3_ref, b3_ref, w4_ref, b4_ref, w5_ref, b5_ref,
                  out_ref, *, batch):
    B = batch
    f32 = jnp.float32
    dot = functools.partial(jnp.dot, preferred_element_type=f32)

    # ---------------- conv1: 5x5, 1 -> 6, 'valid', + ReLU --------------------
    # x: (B, 28, 28).  Rows of every 2-D activation below are ordered (b, row).
    x = x_ref[...]
    # x1[b*24 + oh, i*28 + w] = x[b, oh + i, w]
    x1 = jnp.concatenate(
        [x[:, i:i + 24, :].reshape(B * 24, 28) for i in range(5)], axis=1)

    a1 = []   # 6 values of shape (B*24, 24): rows (b, oh), lanes ow
    for c in range(6):
        y = dot(x1, band1_ref[c]) + b1_ref[c]
        a1.append(jnp.maximum(y, 0.0))

    # ---------------- maxpool 2x2 / stride 2: 24x24 -> 12x12 -----------------
    ce1, co1 = _col_selectors(24)        # (24, 12)
    re1, ro1 = _row_selectors(B * 24)    # (B*12, B*24)
    p1 = []   # 6 values of shape (B*12, 12): rows (b, oh'), lanes ow'
    for c in range(6):
        vw = jnp.maximum(dot(a1[c], ce1), dot(a1[c], co1))   # pool along width
        p1.append(jnp.maximum(dot(re1, vw), dot(ro1, vw)))   # pool along height

    # ---------------- conv2: 5x5, 6 -> 12, 'valid', + ReLU -------------------
    # x2[b*8 + oh, c*60 + i*12 + w] = p1_c[b*12 + oh + i, w]
    x2_parts = []
    for c in range(6):
        for i in range(5):
            rows = [p1[c][b * 12 + i:b * 12 + i + 8, :] for b in range(B)]
            x2_parts.append(jnp.concatenate(rows, axis=0))   # (B*8, 12)
    x2 = jnp.concatenate(x2_parts, axis=1)                   # (B*8, 360)

    a2 = []   # 12 values of shape (B*8, 8)
    for d in range(12):
        y = dot(x2, band2_ref[d]) + b2_ref[d]
        a2.append(jnp.maximum(y, 0.0))

    # ---------------- maxpool 2x2 / stride 2: 8x8 -> 4x4 ---------------------
    ce2, co2 = _col_selectors(8)         # (8, 4)
    re2, ro2 = _row_selectors(B * 8)     # (B*4, B*8)
    p2 = []   # 12 values of shape (B*4, 4)
    for d in range(12):
        vw = jnp.maximum(dot(a2[d], ce2), dot(a2[d], co2))
        p2.append(jnp.maximum(dot(re2, vw), dot(ro2, vw)))

    # ---------------- flatten + fc1 + fc2 + out ------------------------------
    # g[b, h*48 + d*4 + w] = p2_d[b*4 + h, w]; the PyTorch (c, h, w) flatten
    # order is folded into the fc1 weight permutation (w3).
    p2cat = jnp.concatenate(p2, axis=1)                      # (B*4, 48)
    g_parts = []
    for h in range(4):
        rows = [p2cat[b * 4 + h:b * 4 + h + 1, :] for b in range(B)]
        g_parts.append(jnp.concatenate(rows, axis=0))        # (B, 48)
    g = jnp.concatenate(g_parts, axis=1)                     # (B, 192)

    h1 = jnp.maximum(dot(g, w3_ref[...]) + b3_ref[...], 0.0)   # (B, 120)
    h2 = jnp.maximum(dot(h1, w4_ref[...]) + b4_ref[...], 0.0)  # (B, 60)
    out_ref[...] = dot(h2, w5_ref[...]) + b5_ref[...]          # (B, 10)


# ----------------------------- parameter prep --------------------------------

def prepare_params(params):
    """Repack the PyTorch-layout parameters once, outside the hot path."""
    f32 = jnp.float32
    conv1_w = params["conv1_w"].astype(f32)      # (6, 1, 5, 5)
    conv2_w = params["conv2_w"].astype(f32)      # (12, 6, 5, 5)

    # Band matrix for conv1: band1[c, i*28 + w, ow] = conv1_w[c, 0, i, w - ow]
    diff1 = jnp.arange(28)[:, None] - jnp.arange(24)[None, :]             # (28, 24)
    taps1 = jnp.stack([(diff1 == j).astype(f32) for j in range(5)], 0)    # (5, 28, 24)
    band1 = jnp.einsum("cij,jwo->ciwo", conv1_w[:, 0], taps1)             # (6, 5, 28, 24)
    band1 = band1.reshape(6, 5 * 28, 24)

    # Band matrix for conv2: band2[d, c*60 + i*12 + w, ow] = conv2_w[d, c, i, w - ow]
    diff2 = jnp.arange(12)[:, None] - jnp.arange(8)[None, :]              # (12, 8)
    taps2 = jnp.stack([(diff2 == j).astype(f32) for j in range(5)], 0)    # (5, 12, 8)
    band2 = jnp.einsum("dcij,jwo->dciwo", conv2_w, taps2)                 # (12, 6, 5, 12, 8)
    band2 = band2.reshape(12, 6 * 5 * 12, 8)

    # fc1 weight: PyTorch flatten index is d*16 + h*4 + w; the kernel's flat
    # activation uses lane index h*48 + d*4 + w, so permute accordingly.
    w3 = params["fc1_w"].astype(f32).reshape(120, 12, 4, 4)
    w3 = w3.transpose(2, 1, 3, 0).reshape(192, 120)

    return {
        "band1": band1,
        "b1": params["conv1_b"].astype(f32),                 # (6,)  -> SMEM scalars
        "band2": band2,
        "b2": params["conv2_b"].astype(f32),                 # (12,) -> SMEM scalars
        "w3": w3,
        "b3": params["fc1_b"].astype(f32).reshape(1, 120),
        "w4": params["fc2_w"].astype(f32).T,                 # (120, 60)
        "b4": params["fc2_b"].astype(f32).reshape(1, 60),
        "w5": params["out_w"].astype(f32).T,                 # (60, 10)
        "b5": params["out_b"].astype(f32).reshape(1, 10),
    }


# ------------------------------ the network ----------------------------------

@jax.jit
def network_forward(prep, x_nchw):
    B = x_nchw.shape[0]
    x = x_nchw.astype(jnp.float32).reshape(B, 28, 28)

    vmem = pl.BlockSpec(memory_space=pltpu.MemorySpace.VMEM)
    smem = pl.BlockSpec(memory_space=pltpu.MemorySpace.SMEM)

    kernel = functools.partial(_lenet_kernel, batch=B)
    return pl.pallas_call(
        kernel,
        out_shape=jax.ShapeDtypeStruct((B, 10), jnp.float32),
        in_specs=[vmem,        # x
                  vmem, smem,  # conv1 band, conv1 bias
                  vmem, smem,  # conv2 band, conv2 bias
                  vmem, vmem,  # fc1 w, fc1 b
                  vmem, vmem,  # fc2 w, fc2 b
                  vmem, vmem], # out w, out b
        out_specs=vmem,
        compiler_params=pltpu.CompilerParams(
            vmem_limit_bytes=32 * 1024 * 1024),
    )(x, prep["band1"], prep["b1"], prep["band2"], prep["b2"],
      prep["w3"], prep["b3"], prep["w4"], prep["b4"], prep["w5"], prep["b5"])


def init_params(key):
    """Deterministic parameter init (uniform +-1/sqrt(fan_in), like PyTorch default)."""
    def u(k, shape, fan_in):
        bound = 1.0 / jnp.sqrt(float(fan_in))
        return jax.random.uniform(k, shape, jnp.float32, -bound, bound)

    ks = jax.random.split(key, 10)
    return {
        "conv1_w": u(ks[0], (6, 1, 5, 5), 1 * 5 * 5),
        "conv1_b": u(ks[1], (6,), 1 * 5 * 5),
        "conv2_w": u(ks[2], (12, 6, 5, 5), 6 * 5 * 5),
        "conv2_b": u(ks[3], (12,), 6 * 5 * 5),
        "fc1_w": u(ks[4], (120, 12 * 4 * 4), 12 * 4 * 4),   # PyTorch (out, in)
        "fc1_b": u(ks[5], (120,), 12 * 4 * 4),
        "fc2_w": u(ks[6], (60, 120), 120),
        "fc2_b": u(ks[7], (60,), 120),
        "out_w": u(ks[8], (10, 60), 60),
        "out_b": u(ks[9], (10,), 60),
    }


def _reference_forward(params, x_nchw):
    """Pure-JAX (XLA) reference matching the PyTorch module."""
    f32 = jnp.float32
    hi = jax.lax.Precision.HIGHEST
    x = x_nchw.astype(f32)

    def conv(x, w, b):
        y = jax.lax.conv_general_dilated(
            x, w, window_strides=(1, 1), padding="VALID",
            dimension_numbers=("NCHW", "OIHW", "NCHW"), precision=hi)
        return y + b[None, :, None, None]

    def pool(x):
        B, C, H, W = x.shape
        return x.reshape(B, C, H // 2, 2, W // 2, 2).max(axis=(3, 5))

    x = pool(jax.nn.relu(conv(x, params["conv1_w"], params["conv1_b"])))
    x = pool(jax.nn.relu(conv(x, params["conv2_w"], params["conv2_b"])))
    x = x.reshape(x.shape[0], 12 * 4 * 4)
    x = jax.nn.relu(x @ params["fc1_w"].T + params["fc1_b"])
    x = jax.nn.relu(x @ params["fc2_w"].T + params["fc2_b"])
    return x @ params["out_w"].T + params["out_b"]


if __name__ == "__main__":
    key = jax.random.PRNGKey(0)
    pkey, xkey = jax.random.split(key)
    params = init_params(pkey)
    prep = prepare_params(params)

    # Architecture implies 28x28 single-channel input (two 5x5 'valid' convs +
    # two 2x2 pools -> 12*4*4 features before fc1); batch = 2.
    x = jax.random.normal(xkey, (2, 1, 28, 28), dtype=jnp.float32)

    out = network_forward(prep, x)
    out = jax.block_until_ready(out)
    assert out.shape == (2, 10), out.shape

    # Structural sanity check vs. a pure-XLA reference. Loose tolerance so it
    # is robust to MXU precision modes; layout/index bugs would show up as
    # O(1) discrepancies, far above this threshold.
    ref = _reference_forward(params, x)
    assert jnp.allclose(out, ref, rtol=5e-2, atol=5e-2)

    print("KERNEL_OK")
</pallas_src>

<mosaic_0001>
module attributes {stable_mosaic.version = 11 : i64} {
  func.func @_lenet_kernel(%arg0: memref<2x28x28xf32, #tpu.memory_space<vmem>>, %arg1: memref<6x140x24xf32, #tpu.memory_space<vmem>>, %arg2: memref<6xf32, #tpu.memory_space<smem>>, %arg3: memref<12x360x8xf32, #tpu.memory_space<vmem>>, %arg4: memref<12xf32, #tpu.memory_space<smem>>, %arg5: memref<192x120xf32, #tpu.memory_space<vmem>>, %arg6: memref<1x120xf32, #tpu.memory_space<vmem>>, %arg7: memref<120x60xf32, #tpu.memory_space<vmem>>, %arg8: memref<1x60xf32, #tpu.memory_space<vmem>>, %arg9: memref<60x10xf32, #tpu.memory_space<vmem>>, %arg10: memref<1x10xf32, #tpu.memory_space<vmem>>, %arg11: memref<2x10xf32, #tpu.memory_space<vmem>>) attributes {dimension_semantics = [], scalar_prefetch = 0 : i64, scratch_operands = 0 : i64, tpu.core_type = #tpu.core_type<tc>} {
    %c0 = arith.constant 0 : index
    %c0_0 = arith.constant 0 : index
    %c0_1 = arith.constant 0 : index
    %0 = vector.load %arg0[%c0, %c0_0, %c0_1] : memref<2x28x28xf32, #tpu.memory_space<vmem>>, vector<2x28x28xf32>
    %1 = vector.extract_strided_slice %0 {offsets = [0, 0, 0], sizes = [2, 24, 28], strides = [1, 1, 1]} : vector<2x28x28xf32> to vector<2x24x28xf32>
    %2 = vector.shape_cast %1 : vector<2x24x28xf32> to vector<48x28xf32>
    %3 = vector.extract_strided_slice %0 {offsets = [0, 1, 0], sizes = [2, 24, 28], strides = [1, 1, 1]} : vector<2x28x28xf32> to vector<2x24x28xf32>
    %4 = vector.shape_cast %3 : vector<2x24x28xf32> to vector<48x28xf32>
    %5 = vector.extract_strided_slice %0 {offsets = [0, 2, 0], sizes = [2, 24, 28], strides = [1, 1, 1]} : vector<2x28x28xf32> to vector<2x24x28xf32>
    %6 = vector.shape_cast %5 : vector<2x24x28xf32> to vector<48x28xf32>
    %7 = vector.extract_strided_slice %0 {offsets = [0, 3, 0], sizes = [2, 24, 28], strides = [1, 1, 1]} : vector<2x28x28xf32> to vector<2x24x28xf32>
    %8 = vector.shape_cast %7 : vector<2x24x28xf32> to vector<48x28xf32>
    %9 = vector.extract_strided_slice %0 {offsets = [0, 4, 0], sizes = [2, 24, 28], strides = [1, 1, 1]} : vector<2x28x28xf32> to vector<2x24x28xf32>
    %10 = vector.shape_cast %9 : vector<2x24x28xf32> to vector<48x28xf32>
    %11 = tpu.concatenate %2, %4, %6, %8, %10 in 1 : vector<48x28xf32>, vector<48x28xf32>, vector<48x28xf32>, vector<48x28xf32>, vector<48x28xf32> -> vector<48x140xf32>
    %c0_2 = arith.constant 0 : index
    %c0_3 = arith.constant 0 : index
    %c0_4 = arith.constant 0 : index
    %12 = vector.load %arg1[%c0_2, %c0_3, %c0_4] : memref<6x140x24xf32, #tpu.memory_space<vmem>>, vector<1x140x24xf32>
    %13 = vector.shape_cast %12 : vector<1x140x24xf32> to vector<140x24xf32>
    %cst = arith.constant dense<0.000000e+00> : vector<48x24xf32>
    %14 = tpu.matmul %11, %13, %cst {dimension_numbers = #tpu.dot_dimension_numbers<[1], [0], [0], [1], [0, 0, 1, 1], [], []>} : vector<48x140xf32>, vector<140x24xf32>, vector<48x24xf32> -> vector<48x24xf32>
    %c0_5 = arith.constant 0 : index
    %15 = memref.load %arg2[%c0_5] : memref<6xf32, #tpu.memory_space<smem>>
    %16 = vector.broadcast %15 : f32 to vector<48x24xf32>
    %17 = arith.addf %14, %16 : vector<48x24xf32>
    %cst_6 = arith.constant 0.000000e+00 : f32
    %18 = vector.broadcast %cst_6 : f32 to vector<48x24xf32>
    %19 = arith.maximumf %17, %18 : vector<48x24xf32>
    %c1 = arith.constant 1 : index
    %c0_7 = arith.constant 0 : index
    %c0_8 = arith.constant 0 : index
    %20 = vector.load %arg1[%c1, %c0_7, %c0_8] : memref<6x140x24xf32, #tpu.memory_space<vmem>>, vector<1x140x24xf32>
    %21 = vector.shape_cast %20 : vector<1x140x24xf32> to vector<140x24xf32>
    %cst_9 = arith.constant dense<0.000000e+00> : vector<48x24xf32>
    %22 = tpu.matmul %11, %21, %cst_9 {dimension_numbers = #tpu.dot_dimension_numbers<[1], [0], [0], [1], [0, 0, 1, 1], [], []>} : vector<48x140xf32>, vector<140x24xf32>, vector<48x24xf32> -> vector<48x24xf32>
    %c1_10 = arith.constant 1 : index
    %23 = memref.load %arg2[%c1_10] : memref<6xf32, #tpu.memory_space<smem>>
    %24 = vector.broadcast %23 : f32 to vector<48x24xf32>
    %25 = arith.addf %22, %24 : vector<48x24xf32>
    %cst_11 = arith.constant 0.000000e+00 : f32
    %26 = vector.broadcast %cst_11 : f32 to vector<48x24xf32>
    %27 = arith.maximumf %25, %26 : vector<48x24xf32>
    %c2 = arith.constant 2 : index
    %c0_12 = arith.constant 0 : index
    %c0_13 = arith.constant 0 : index
    %28 = vector.load %arg1[%c2, %c0_12, %c0_13] : memref<6x140x24xf32, #tpu.memory_space<vmem>>, vector<1x140x24xf32>
    %29 = vector.shape_cast %28 : vector<1x140x24xf32> to vector<140x24xf32>
    %cst_14 = arith.constant dense<0.000000e+00> : vector<48x24xf32>
    %30 = tpu.matmul %11, %29, %cst_14 {dimension_numbers = #tpu.dot_dimension_numbers<[1], [0], [0], [1], [0, 0, 1, 1], [], []>} : vector<48x140xf32>, vector<140x24xf32>, vector<48x24xf32> -> vector<48x24xf32>
    %c2_15 = arith.constant 2 : index
    %31 = memref.load %arg2[%c2_15] : memref<6xf32, #tpu.memory_space<smem>>
    %32 = vector.broadcast %31 : f32 to vector<48x24xf32>
    %33 = arith.addf %30, %32 : vector<48x24xf32>
    %cst_16 = arith.constant 0.000000e+00 : f32
    %34 = vector.broadcast %cst_16 : f32 to vector<48x24xf32>
    %35 = arith.maximumf %33, %34 : vector<48x24xf32>
    %c3 = arith.constant 3 : index
    %c0_17 = arith.constant 0 : index
    %c0_18 = arith.constant 0 : index
    %36 = vector.load %arg1[%c3, %c0_17, %c0_18] : memref<6x140x24xf32, #tpu.memory_space<vmem>>, vector<1x140x24xf32>
    %37 = vector.shape_cast %36 : vector<1x140x24xf32> to vector<140x24xf32>
    %cst_19 = arith.constant dense<0.000000e+00> : vector<48x24xf32>
    %38 = tpu.matmul %11, %37, %cst_19 {dimension_numbers = #tpu.dot_dimension_numbers<[1], [0], [0], [1], [0, 0, 1, 1], [], []>} : vector<48x140xf32>, vector<140x24xf32>, vector<48x24xf32> -> vector<48x24xf32>
    %c3_20 = arith.constant 3 : index
    %39 = memref.load %arg2[%c3_20] : memref<6xf32, #tpu.memory_space<smem>>
    %40 = vector.broadcast %39 : f32 to vector<48x24xf32>
    %41 = arith.addf %38, %40 : vector<48x24xf32>
    %cst_21 = arith.constant 0.000000e+00 : f32
    %42 = vector.broadcast %cst_21 : f32 to vector<48x24xf32>
    %43 = arith.maximumf %41, %42 : vector<48x24xf32>
    %c4 = arith.constant 4 : index
    %c0_22 = arith.constant 0 : index
    %c0_23 = arith.constant 0 : index
    %44 = vector.load %arg1[%c4, %c0_22, %c0_23] : memref<6x140x24xf32, #tpu.memory_space<vmem>>, vector<1x140x24xf32>
    %45 = vector.shape_cast %44 : vector<1x140x24xf32> to vector<140x24xf32>
    %cst_24 = arith.constant dense<0.000000e+00> : vector<48x24xf32>
    %46 = tpu.matmul %11, %45, %cst_24 {dimension_numbers = #tpu.dot_dimension_numbers<[1], [0], [0], [1], [0, 0, 1, 1], [], []>} : vector<48x140xf32>, vector<140x24xf32>, vector<48x24xf32> -> vector<48x24xf32>
    %c4_25 = arith.constant 4 : index
    %47 = memref.load %arg2[%c4_25] : memref<6xf32, #tpu.memory_space<smem>>
    %48 = vector.broadcast %47 : f32 to vector<48x24xf32>
    %49 = arith.addf %46, %48 : vector<48x24xf32>
    %cst_26 = arith.constant 0.000000e+00 : f32
    %50 = vector.broadcast %cst_26 : f32 to vector<48x24xf32>
    %51 = arith.maximumf %49, %50 : vector<48x24xf32>
    %c5 = arith.constant 5 : index
    %c0_27 = arith.constant 0 : index
    %c0_28 = arith.constant 0 : index
    %52 = vector.load %arg1[%c5, %c0_27, %c0_28] : memref<6x140x24xf32, #tpu.memory_space<vmem>>, vector<1x140x24xf32>
    %53 = vector.shape_cast %52 : vector<1x140x24xf32> to vector<140x24xf32>
    %cst_29 = arith.constant dense<0.000000e+00> : vector<48x24xf32>
    %54 = tpu.matmul %11, %53, %cst_29 {dimension_numbers = #tpu.dot_dimension_numbers<[1], [0], [0], [1], [0, 0, 1, 1], [], []>} : vector<48x140xf32>, vector<140x24xf32>, vector<48x24xf32> -> vector<48x24xf32>
    %c5_30 = arith.constant 5 : index
    %55 = memref.load %arg2[%c5_30] : memref<6xf32, #tpu.memory_space<smem>>
    %56 = vector.broadcast %55 : f32 to vector<48x24xf32>
    %57 = arith.addf %54, %56 : vector<48x24xf32>
    %cst_31 = arith.constant 0.000000e+00 : f32
    %58 = vector.broadcast %cst_31 : f32 to vector<48x24xf32>
    %59 = arith.maximumf %57, %58 : vector<48x24xf32>
    %60 = tpu.iota {dimensions = array<i32: 0>} : vector<24x12xi32>
    %61 = tpu.iota {dimensions = array<i32: 1>} : vector<24x12xi32>
    %c2_i32 = arith.constant 2 : i32
    %62 = vector.broadcast %c2_i32 : i32 to vector<24x12xi32>
    %63 = arith.muli %62, %61 : vector<24x12xi32>
    %64 = arith.cmpi eq, %60, %63 : vector<24x12xi32>
    %65 = arith.extui %64 : vector<24x12xi1> to vector<24x12xi32>
    %66 = arith.sitofp %65 : vector<24x12xi32> to vector<24x12xf32>
    %c2_i32_32 = arith.constant 2 : i32
    %67 = vector.broadcast %c2_i32_32 : i32 to vector<24x12xi32>
    %68 = arith.muli %67, %61 : vector<24x12xi32>
    %c1_i32 = arith.constant 1 : i32
    %69 = vector.broadcast %c1_i32 : i32 to vector<24x12xi32>
    %70 = arith.addi %68, %69 : vector<24x12xi32>
    %71 = arith.cmpi eq, %60, %70 : vector<24x12xi32>
    %72 = arith.extui %71 : vector<24x12xi1> to vector<24x12xi32>
    %73 = arith.sitofp %72 : vector<24x12xi32> to vector<24x12xf32>
    %74 = tpu.iota {dimensions = array<i32: 0>} : vector<24x48xi32>
    %75 = tpu.iota {dimensions = array<i32: 1>} : vector<24x48xi32>
    %c2_i32_33 = arith.constant 2 : i32
    %76 = vector.broadcast %c2_i32_33 : i32 to vector<24x48xi32>
    %77 = arith.muli %76, %74 : vector<24x48xi32>
    %78 = arith.cmpi eq, %75, %77 : vector<24x48xi32>
    %79 = arith.extui %78 : vector<24x48xi1> to vector<24x48xi32>
    %80 = arith.sitofp %79 : vector<24x48xi32> to vector<24x48xf32>
    %c2_i32_34 = arith.constant 2 : i32
    %81 = vector.broadcast %c2_i32_34 : i32 to vector<24x48xi32>
    %82 = arith.muli %81, %74 : vector<24x48xi32>
    %c1_i32_35 = arith.constant 1 : i32
    %83 = vector.broadcast %c1_i32_35 : i32 to vector<24x48xi32>
    %84 = arith.addi %82, %83 : vector<24x48xi32>
    %85 = arith.cmpi eq, %75, %84 : vector<24x48xi32>
    %86 = arith.extui %85 : vector<24x48xi1> to vector<24x48xi32>
    %87 = arith.sitofp %86 : vector<24x48xi32> to vector<24x48xf32>
    %cst_36 = arith.constant dense<0.000000e+00> : vector<48x12xf32>
    %88 = tpu.matmul %19, %66, %cst_36 {dimension_numbers = #tpu.dot_dimension_numbers<[1], [0], [0], [1], [0, 0, 1, 1], [], []>} : vector<48x24xf32>, vector<24x12xf32>, vector<48x12xf32> -> vector<48x12xf32>
    %cst_37 = arith.constant dense<0.000000e+00> : vector<48x12xf32>
    %89 = tpu.matmul %19, %73, %cst_37 {dimension_numbers = #tpu.dot_dimension_numbers<[1], [0], [0], [1], [0, 0, 1, 1], [], []>} : vector<48x24xf32>, vector<24x12xf32>, vector<48x12xf32> -> vector<48x12xf32>
    %90 = arith.maximumf %88, %89 : vector<48x12xf32>
    %cst_38 = arith.constant dense<0.000000e+00> : vector<24x12xf32>
    %91 = tpu.matmul %80, %90, %cst_38 {dimension_numbers = #tpu.dot_dimension_numbers<[1], [0], [0], [1], [0, 0, 1, 1], [], []>} : vector<24x48xf32>, vector<48x12xf32>, vector<24x12xf32> -> vector<24x12xf32>
    %cst_39 = arith.constant dense<0.000000e+00> : vector<24x12xf32>
    %92 = tpu.matmul %87, %90, %cst_39 {dimension_numbers = #tpu.dot_dimension_numbers<[1], [0], [0], [1], [0, 0, 1, 1], [], []>} : vector<24x48xf32>, vector<48x12xf32>, vector<24x12xf32> -> vector<24x12xf32>
    %93 = arith.maximumf %91, %92 : vector<24x12xf32>
    %cst_40 = arith.constant dense<0.000000e+00> : vector<48x12xf32>
    %94 = tpu.matmul %27, %66, %cst_40 {dimension_numbers = #tpu.dot_dimension_numbers<[1], [0], [0], [1], [0, 0, 1, 1], [], []>} : vector<48x24xf32>, vector<24x12xf32>, vector<48x12xf32> -> vector<48x12xf32>
    %cst_41 = arith.constant dense<0.000000e+00> : vector<48x12xf32>
    %95 = tpu.matmul %27, %73, %cst_41 {dimension_numbers = #tpu.dot_dimension_numbers<[1], [0], [0], [1], [0, 0, 1, 1], [], []>} : vector<48x24xf32>, vector<24x12xf32>, vector<48x12xf32> -> vector<48x12xf32>
    %96 = arith.maximumf %94, %95 : vector<48x12xf32>
    %cst_42 = arith.constant dense<0.000000e+00> : vector<24x12xf32>
    %97 = tpu.matmul %80, %96, %cst_42 {dimension_numbers = #tpu.dot_dimension_numbers<[1], [0], [0], [1], [0, 0, 1, 1], [], []>} : vector<24x48xf32>, vector<48x12xf32>, vector<24x12xf32> -> vector<24x12xf32>
    %cst_43 = arith.constant dense<0.000000e+00> : vector<24x12xf32>
    %98 = tpu.matmul %87, %96, %cst_43 {dimension_numbers = #tpu.dot_dimension_numbers<[1], [0], [0], [1], [0, 0, 1, 1], [], []>} : vector<24x48xf32>, vector<48x12xf32>, vector<24x12xf32> -> vector<24x12xf32>
    %99 = arith.maximumf %97, %98 : vector<24x12xf32>
    %cst_44 = arith.constant dense<0.000000e+00> : vector<48x12xf32>
    %100 = tpu.matmul %35, %66, %cst_44 {dimension_numbers = #tpu.dot_dimension_numbers<[1], [0], [0], [1], [0, 0, 1, 1], [], []>} : vector<48x24xf32>, vector<24x12xf32>, vector<48x12xf32> -> vector<48x12xf32>
    %cst_45 = arith.constant dense<0.000000e+00> : vector<48x12xf32>
    %101 = tpu.matmul %35, %73, %cst_45 {dimension_numbers = #tpu.dot_dimension_numbers<[1], [0], [0], [1], [0, 0, 1, 1], [], []>} : vector<48x24xf32>, vector<24x12xf32>, vector<48x12xf32> -> vector<48x12xf32>
    %102 = arith.maximumf %100, %101 : vector<48x12xf32>
    %cst_46 = arith.constant dense<0.000000e+00> : vector<24x12xf32>
    %103 = tpu.matmul %80, %102, %cst_46 {dimension_numbers = #tpu.dot_dimension_numbers<[1], [0], [0], [1], [0, 0, 1, 1], [], []>} : vector<24x48xf32>, vector<48x12xf32>, vector<24x12xf32> -> vector<24x12xf32>
    %cst_47 = arith.constant dense<0.000000e+00> : vector<24x12xf32>
    %104 = tpu.matmul %87, %102, %cst_47 {dimension_numbers = #tpu.dot_dimension_numbers<[1], [0], [0], [1], [0, 0, 1, 1], [], []>} : vector<24x48xf32>, vector<48x12xf32>, vector<24x12xf32> -> vector<24x12xf32>
    %105 = arith.maximumf %103, %104 : vector<24x12xf32>
    %cst_48 = arith.constant dense<0.000000e+00> : vector<48x12xf32>
    %106 = tpu.matmul %43, %66, %cst_48 {dimension_numbers = #tpu.dot_dimension_numbers<[1], [0], [0], [1], [0, 0, 1, 1], [], []>} : vector<48x24xf32>, vector<24x12xf32>, vector<48x12xf32> -> vector<48x12xf32>
    %cst_49 = arith.constant dense<0.000000e+00> : vector<48x12xf32>
    %107 = tpu.matmul %43, %73, %cst_49 {dimension_numbers = #tpu.dot_dimension_numbers<[1], [0], [0], [1], [0, 0, 1, 1], [], []>} : vector<48x24xf32>, vector<24x12xf32>, vector<48x12xf32> -> vector<48x12xf32>
    %108 = arith.maximumf %106, %107 : vector<48x12xf32>
    %cst_50 = arith.constant dense<0.000000e+00> : vector<24x12xf32>
    %109 = tpu.matmul %80, %108, %cst_50 {dimension_numbers = #tpu.dot_dimension_numbers<[1], [0], [0], [1], [0, 0, 1, 1], [], []>} : vector<24x48xf32>, vector<48x12xf32>, vector<24x12xf32> -> vector<24x12xf32>
    %cst_51 = arith.constant dense<0.000000e+00> : vector<24x12xf32>
    %110 = tpu.matmul %87, %108, %cst_51 {dimension_numbers = #tpu.dot_dimension_numbers<[1], [0], [0], [1], [0, 0, 1, 1], [], []>} : vector<24x48xf32>, vector<48x12xf32>, vector<24x12xf32> -> vector<24x12xf32>
    %111 = arith.maximumf %109, %110 : vector<24x12xf32>
    %cst_52 = arith.constant dense<0.000000e+00> : vector<48x12xf32>
    %112 = tpu.matmul %51, %66, %cst_52 {dimension_numbers = #tpu.dot_dimension_numbers<[1], [0], [0], [1], [0, 0, 1, 1], [], []>} : vector<48x24xf32>, vector<24x12xf32>, vector<48x12xf32> -> vector<48x12xf32>
    %cst_53 = arith.constant dense<0.000000e+00> : vector<48x12xf32>
    %113 = tpu.matmul %51, %73, %cst_53 {dimension_numbers = #tpu.dot_dimension_numbers<[1], [0], [0], [1], [0, 0, 1, 1], [], []>} : vector<48x24xf32>, vector<24x12xf32>, vector<48x12xf32> -> vector<48x12xf32>
    %114 = arith.maximumf %112, %113 : vector<48x12xf32>
    %cst_54 = arith.constant dense<0.000000e+00> : vector<24x12xf32>
    %115 = tpu.matmul %80, %114, %cst_54 {dimension_numbers = #tpu.dot_dimension_numbers<[1], [0], [0], [1], [0, 0, 1, 1], [], []>} : vector<24x48xf32>, vector<48x12xf32>, vector<24x12xf32> -> vector<24x12xf32>
    %cst_55 = arith.constant dense<0.000000e+00> : vector<24x12xf32>
    %116 = tpu.matmul %87, %114, %cst_55 {dimension_numbers = #tpu.dot_dimension_numbers<[1], [0], [0], [1], [0, 0, 1, 1], [], []>} : vector<24x48xf32>, vector<48x12xf32>, vector<24x12xf32> -> vector<24x12xf32>
    %117 = arith.maximumf %115, %116 : vector<24x12xf32>
    %cst_56 = arith.constant dense<0.000000e+00> : vector<48x12xf32>
    %118 = tpu.matmul %59, %66, %cst_56 {dimension_numbers = #tpu.dot_dimension_numbers<[1], [0], [0], [1], [0, 0, 1, 1], [], []>} : vector<48x24xf32>, vector<24x12xf32>, vector<48x12xf32> -> vector<48x12xf32>
    %cst_57 = arith.constant dense<0.000000e+00> : vector<48x12xf32>
    %119 = tpu.matmul %59, %73, %cst_57 {dimension_numbers = #tpu.dot_dimension_numbers<[1], [0], [0], [1], [0, 0, 1, 1], [], []>} : vector<48x24xf32>, vector<24x12xf32>, vector<48x12xf32> -> vector<48x12xf32>
    %120 = arith.maximumf %118, %119 : vector<48x12xf32>
    %cst_58 = arith.constant dense<0.000000e+00> : vector<24x12xf32>
    %121 = tpu.matmul %80, %120, %cst_58 {dimension_numbers = #tpu.dot_dimension_numbers<[1], [0], [0], [1], [0, 0, 1, 1], [], []>} : vector<24x48xf32>, vector<48x12xf32>, vector<24x12xf32> -> vector<24x12xf32>
    %cst_59 = arith.constant dense<0.000000e+00> : vector<24x12xf32>
    %122 = tpu.matmul %87, %120, %cst_59 {dimension_numbers = #tpu.dot_dimension_numbers<[1], [0], [0], [1], [0, 0, 1, 1], [], []>} : vector<24x48xf32>, vector<48x12xf32>, vector<24x12xf32> -> vector<24x12xf32>
    %123 = arith.maximumf %121, %122 : vector<24x12xf32>
    %124 = vector.extract_strided_slice %93 {offsets = [0, 0], sizes = [8, 12], strides = [1, 1]} : vector<24x12xf32> to vector<8x12xf32>
    %125 = vector.extract_strided_slice %93 {offsets = [12, 0], sizes = [8, 12], strides = [1, 1]} : vector<24x12xf32> to vector<8x12xf32>
    %126 = tpu.concatenate %124, %125 in 0 : vector<8x12xf32>, vector<8x12xf32> -> vector<16x12xf32>
    %127 = vector.extract_strided_slice %93 {offsets = [1, 0], sizes = [8, 12], strides = [1, 1]} : vector<24x12xf32> to vector<8x12xf32>
    %128 = vector.extract_strided_slice %93 {offsets = [13, 0], sizes = [8, 12], strides = [1, 1]} : vector<24x12xf32> to vector<8x12xf32>
    %129 = tpu.concatenate %127, %128 in 0 : vector<8x12xf32>, vector<8x12xf32> -> vector<16x12xf32>
    %130 = vector.extract_strided_slice %93 {offsets = [2, 0], sizes = [8, 12], strides = [1, 1]} : vector<24x12xf32> to vector<8x12xf32>
    %131 = vector.extract_strided_slice %93 {offsets = [14, 0], sizes = [8, 12], strides = [1, 1]} : vector<24x12xf32> to vector<8x12xf32>
    %132 = tpu.concatenate %130, %131 in 0 : vector<8x12xf32>, vector<8x12xf32> -> vector<16x12xf32>
    %133 = vector.extract_strided_slice %93 {offsets = [3, 0], sizes = [8, 12], strides = [1, 1]} : vector<24x12xf32> to vector<8x12xf32>
    %134 = vector.extract_strided_slice %93 {offsets = [15, 0], sizes = [8, 12], strides = [1, 1]} : vector<24x12xf32> to vector<8x12xf32>
    %135 = tpu.concatenate %133, %134 in 0 : vector<8x12xf32>, vector<8x12xf32> -> vector<16x12xf32>
    %136 = vector.extract_strided_slice %93 {offsets = [4, 0], sizes = [8, 12], strides = [1, 1]} : vector<24x12xf32> to vector<8x12xf32>
    %137 = vector.extract_strided_slice %93 {offsets = [16, 0], sizes = [8, 12], strides = [1, 1]} : vector<24x12xf32> to vector<8x12xf32>
    %138 = tpu.concatenate %136, %137 in 0 : vector<8x12xf32>, vector<8x12xf32> -> vector<16x12xf32>
    %139 = vector.extract_strided_slice %99 {offsets = [0, 0], sizes = [8, 12], strides = [1, 1]} : vector<24x12xf32> to vector<8x12xf32>
    %140 = vector.extract_strided_slice %99 {offsets = [12, 0], sizes = [8, 12], strides = [1, 1]} : vector<24x12xf32> to vector<8x12xf32>
    %141 = tpu.concatenate %139, %140 in 0 : vector<8x12xf32>, vector<8x12xf32> -> vector<16x12xf32>
    %142 = vector.extract_strided_slice %99 {offsets = [1, 0], sizes = [8, 12], strides = [1, 1]} : vector<24x12xf32> to vector<8x12xf32>
    %143 = vector.extract_strided_slice %99 {offsets = [13, 0], sizes = [8, 12], strides = [1, 1]} : vector<24x12xf32> to vector<8x12xf32>
    %144 = tpu.concatenate %142, %143 in 0 : vector<8x12xf32>, vector<8x12xf32> -> vector<16x12xf32>
    %145 = vector.extract_strided_slice %99 {offsets = [2, 0], sizes = [8, 12], strides = [1, 1]} : vector<24x12xf32> to vector<8x12xf32>
    %146 = vector.extract_strided_slice %99 {offsets = [14, 0], sizes = [8, 12], strides = [1, 1]} : vector<24x12xf32> to vector<8x12xf32>
    %147 = tpu.concatenate %145, %146 in 0 : vector<8x12xf32>, vector<8x12xf32> -> vector<16x12xf32>
    %148 = vector.extract_strided_slice %99 {offsets = [3, 0], sizes = [8, 12], strides = [1, 1]} : vector<24x12xf32> to vector<8x12xf32>
    %149 = vector.extract_strided_slice %99 {offsets = [15, 0], sizes = [8, 12], strides = [1, 1]} : vector<24x12xf32> to vector<8x12xf32>
    %150 = tpu.concatenate %148, %149 in 0 : vector<8x12xf32>, vector<8x12xf32> -> vector<16x12xf32>
    %151 = vector.extract_strided_slice %99 {offsets = [4, 0], sizes = [8, 12], strides = [1, 1]} : vector<24x12xf32> to vector<8x12xf32>
    %152 = vector.extract_strided_slice %99 {offsets = [16, 0], sizes = [8, 12], strides = [1, 1]} : vector<24x12xf32> to vector<8x12xf32>
    %153 = tpu.concatenate %151, %152 in 0 : vector<8x12xf32>, vector<8x12xf32> -> vector<16x12xf32>
    %154 = vector.extract_strided_slice %105 {offsets = [0, 0], sizes = [8, 12], strides = [1, 1]} : vector<24x12xf32> to vector<8x12xf32>
    %155 = vector.extract_strided_slice %105 {offsets = [12, 0], sizes = [8, 12], strides = [1, 1]} : vector<24x12xf32> to vector<8x12xf32>
    %156 = tpu.concatenate %154, %155 in 0 : vector<8x12xf32>, vector<8x12xf32> -> vector<16x12xf32>
    %157 = vector.extract_strided_slice %105 {offsets = [1, 0], sizes = [8, 12], strides = [1, 1]} : vector<24x12xf32> to vector<8x12xf32>
    %158 = vector.extract_strided_slice %105 {offsets = [13, 0], sizes = [8, 12], strides = [1, 1]} : vector<24x12xf32> to vector<8x12xf32>
    %159 = tpu.concatenate %157, %158 in 0 : vector<8x12xf32>, vector<8x12xf32> -> vector<16x12xf32>
    %160 = vector.extract_strided_slice %105 {offsets = [2, 0], sizes = [8, 12], strides = [1, 1]} : vector<24x12xf32> to vector<8x12xf32>
    %161 = vector.extract_strided_slice %105 {offsets = [14, 0], sizes = [8, 12], strides = [1, 1]} : vector<24x12xf32> to vector<8x12xf32>
    %162 = tpu.concatenate %160, %161 in 0 : vector<8x12xf32>, vector<8x12xf32> -> vector<16x12xf32>
    %163 = vector.extract_strided_slice %105 {offsets = [3, 0], sizes = [8, 12], strides = [1, 1]} : vector<24x12xf32> to vector<8x12xf32>
    %164 = vector.extract_strided_slice %105 {offsets = [15, 0], sizes = [8, 12], strides = [1, 1]} : vector<24x12xf32> to vector<8x12xf32>
    %165 = tpu.concatenate %163, %164 in 0 : vector<8x12xf32>, vector<8x12xf32> -> vector<16x12xf32>
    %166 = vector.extract_strided_slice %105 {offsets = [4, 0], sizes = [8, 12], strides = [1, 1]} : vector<24x12xf32> to vector<8x12xf32>
    %167 = vector.extract_strided_slice %105 {offsets = [16, 0], sizes = [8, 12], strides = [1, 1]} : vector<24x12xf32> to vector<8x12xf32>
    %168 = tpu.concatenate %166, %167 in 0 : vector<8x12xf32>, vector<8x12xf32> -> vector<16x12xf32>
    %169 = vector.extract_strided_slice %111 {offsets = [0, 0], sizes = [8, 12], strides = [1, 1]} : vector<24x12xf32> to vector<8x12xf32>
    %170 = vector.extract_strided_slice %111 {offsets = [12, 0], sizes = [8, 12], strides = [1, 1]} : vector<24x12xf32> to vector<8x12xf32>
    %171 = tpu.concatenate %169, %170 in 0 : vector<8x12xf32>, vector<8x12xf32> -> vector<16x12xf32>
    %172 = vector.extract_strided_slice %111 {offsets = [1, 0], sizes = [8, 12], strides = [1, 1]} : vector<24x12xf32> to vector<8x12xf32>
    %173 = vector.extract_strided_slice %111 {offsets = [13, 0], sizes = [8, 12], strides = [1, 1]} : vector<24x12xf32> to vector<8x12xf32>
    %174 = tpu.concatenate %172, %173 in 0 : vector<8x12xf32>, vector<8x12xf32> -> vector<16x12xf32>
    %175 = vector.extract_strided_slice %111 {offsets = [2, 0], sizes = [8, 12], strides = [1, 1]} : vector<24x12xf32> to vector<8x12xf32>
    %176 = vector.extract_strided_slice %111 {offsets = [14, 0], sizes = [8, 12], strides = [1, 1]} : vector<24x12xf32> to vector<8x12xf32>
    %177 = tpu.concatenate %175, %176 in 0 : vector<8x12xf32>, vector<8x12xf32> -> vector<16x12xf32>
    %178 = vector.extract_strided_slice %111 {offsets = [3, 0], sizes = [8, 12], strides = [1, 1]} : vector<24x12xf32> to vector<8x12xf32>
    %179 = vector.extract_strided_slice %111 {offsets = [15, 0], sizes = [8, 12], strides = [1, 1]} : vector<24x12xf32> to vector<8x12xf32>
    %180 = tpu.concatenate %178, %179 in 0 : vector<8x12xf32>, vector<8x12xf32> -> vector<16x12xf32>
    %181 = vector.extract_strided_slice %111 {offsets = [4, 0], sizes = [8, 12], strides = [1, 1]} : vector<24x12xf32> to vector<8x12xf32>
    %182 = vector.extract_strided_slice %111 {offsets = [16, 0], sizes = [8, 12], strides = [1, 1]} : vector<24x12xf32> to vector<8x12xf32>
    %183 = tpu.concatenate %181, %182 in 0 : vector<8x12xf32>, vector<8x12xf32> -> vector<16x12xf32>
    %184 = vector.extract_strided_slice %117 {offsets = [0, 0], sizes = [8, 12], strides = [1, 1]} : vector<24x12xf32> to vector<8x12xf32>
    %185 = vector.extract_strided_slice %117 {offsets = [12, 0], sizes = [8, 12], strides = [1, 1]} : vector<24x12xf32> to vector<8x12xf32>
    %186 = tpu.concatenate %184, %185 in 0 : vector<8x12xf32>, vector<8x12xf32> -> vector<16x12xf32>
    %187 = vector.extract_strided_slice %117 {offsets = [1, 0], sizes = [8, 12], strides = [1, 1]} : vector<24x12xf32> to vector<8x12xf32>
    %188 = vector.extract_strided_slice %117 {offsets = [13, 0], sizes = [8, 12], strides = [1, 1]} : vector<24x12xf32> to vector<8x12xf32>
    %189 = tpu.concatenate %187, %188 in 0 : vector<8x12xf32>, vector<8x12xf32> -> vector<16x12xf32>
    %190 = vector.extract_strided_slice %117 {offsets = [2, 0], sizes = [8, 12], strides = [1, 1]} : vector<24x12xf32> to vector<8x12xf32>
    %191 = vector.extract_strided_slice %117 {offsets = [14, 0], sizes = [8, 12], strides = [1, 1]} : vector<24x12xf32> to vector<8x12xf32>
    %192 = tpu.concatenate %190, %191 in 0 : vector<8x12xf32>, vector<8x12xf32> -> vector<16x12xf32>
    %193 = vector.extract_strided_slice %117 {offsets = [3, 0], sizes = [8, 12], strides = [1, 1]} : vector<24x12xf32> to vector<8x12xf32>
    %194 = vector.extract_strided_slice %117 {offsets = [15, 0], sizes = [8, 12], strides = [1, 1]} : vector<24x12xf32> to vector<8x12xf32>
    %195 = tpu.concatenate %193, %194 in 0 : vector<8x12xf32>, vector<8x12xf32> -> vector<16x12xf32>
    %196 = vector.extract_strided_slice %117 {offsets = [4, 0], sizes = [8, 12], strides = [1, 1]} : vector<24x12xf32> to vector<8x12xf32>
    %197 = vector.extract_strided_slice %117 {offsets = [16, 0], sizes = [8, 12], strides = [1, 1]} : vector<24x12xf32> to vector<8x12xf32>
    %198 = tpu.concatenate %196, %197 in 0 : vector<8x12xf32>, vector<8x12xf32> -> vector<16x12xf32>
    %199 = vector.extract_strided_slice %123 {offsets = [0, 0], sizes = [8, 12], strides = [1, 1]} : vector<24x12xf32> to vector<8x12xf32>
    %200 = vector.extract_strided_slice %123 {offsets = [12, 0], sizes = [8, 12], strides = [1, 1]} : vector<24x12xf32> to vector<8x12xf32>
    %201 = tpu.concatenate %199, %200 in 0 : vector<8x12xf32>, vector<8x12xf32> -> vector<16x12xf32>
    %202 = vector.extract_strided_slice %123 {offsets = [1, 0], sizes = [8, 12], strides = [1, 1]} : vector<24x12xf32> to vector<8x12xf32>
    %203 = vector.extract_strided_slice %123 {offsets = [13, 0], sizes = [8, 12], strides = [1, 1]} : vector<24x12xf32> to vector<8x12xf32>
    %204 = tpu.concatenate %202, %203 in 0 : vector<8x12xf32>, vector<8x12xf32> -> vector<16x12xf32>
    %205 = vector.extract_strided_slice %123 {offsets = [2, 0], sizes = [8, 12], strides = [1, 1]} : vector<24x12xf32> to vector<8x12xf32>
    %206 = vector.extract_strided_slice %123 {offsets = [14, 0], sizes = [8, 12], strides = [1, 1]} : vector<24x12xf32> to vector<8x12xf32>
    %207 = tpu.concatenate %205, %206 in 0 : vector<8x12xf32>, vector<8x12xf32> -> vector<16x12xf32>
    %208 = vector.extract_strided_slice %123 {offsets = [3, 0], sizes = [8, 12], strides = [1, 1]} : vector<24x12xf32> to vector<8x12xf32>
    %209 = vector.extract_strided_slice %123 {offsets = [15, 0], sizes = [8, 12], strides = [1, 1]} : vector<24x12xf32> to vector<8x12xf32>
    %210 = tpu.concatenate %208, %209 in 0 : vector<8x12xf32>, vector<8x12xf32> -> vector<16x12xf32>
    %211 = vector.extract_strided_slice %123 {offsets = [4, 0], sizes = [8, 12], strides = [1, 1]} : vector<24x12xf32> to vector<8x12xf32>
    %212 = vector.extract_strided_slice %123 {offsets = [16, 0], sizes = [8, 12], strides = [1, 1]} : vector<24x12xf32> to vector<8x12xf32>
    %213 = tpu.concatenate %211, %212 in 0 : vector<8x12xf32>, vector<8x12xf32> -> vector<16x12xf32>
    %214 = tpu.concatenate %126, %129, %132, %135, %138, %141, %144, %147, %150, %153, %156, %159, %162, %165, %168, %171 in 1 : vector<16x12xf32>, vector<16x12xf32>, vector<16x12xf32>, vector<16x12xf32>, vector<16x12xf32>, vector<16x12xf32>, vector<16x12xf32>, vector<16x12xf32>, vector<16x12xf32>, vector<16x12xf32>, vector<16x12xf32>, vector<16x12xf32>, vector<16x12xf32>, vector<16x12xf32>, vector<16x12xf32>, vector<16x12xf32> -> vector<16x192xf32>
    %215 = tpu.concatenate %174, %177, %180, %183, %186, %189, %192, %195, %198, %201, %204, %207, %210, %213 in 1 : vector<16x12xf32>, vector<16x12xf32>, vector<16x12xf32>, vector<16x12xf32>, vector<16x12xf32>, vector<16x12xf32>, vector<16x12xf32>, vector<16x12xf32>, vector<16x12xf32>, vector<16x12xf32>, vector<16x12xf32>, vector<16x12xf32>, vector<16x12xf32>, vector<16x12xf32> -> vector<16x168xf32>
    %216 = tpu.concatenate %214, %215 in 1 : vector<16x192xf32>, vector<16x168xf32> -> vector<16x360xf32>
    %c0_60 = arith.constant 0 : index
    %c0_61 = arith.constant 0 : index
    %c0_62 = arith.constant 0 : index
    %217 = vector.load %arg3[%c0_60, %c0_61, %c0_62] : memref<12x360x8xf32, #tpu.memory_space<vmem>>, vector<1x360x8xf32>
    %218 = vector.shape_cast %217 : vector<1x360x8xf32> to vector<360x8xf32>
    %cst_63 = arith.constant dense<0.000000e+00> : vector<16x8xf32>
    %219 = tpu.matmul %216, %218, %cst_63 {dimension_numbers = #tpu.dot_dimension_numbers<[1], [0], [0], [1], [0, 0, 1, 1], [], []>} : vector<16x360xf32>, vector<360x8xf32>, vector<16x8xf32> -> vector<16x8xf32>
    %c0_64 = arith.constant 0 : index
    %220 = memref.load %arg4[%c0_64] : memref<12xf32, #tpu.memory_space<smem>>
    %221 = vector.broadcast %220 : f32 to vector<16x8xf32>
    %222 = arith.addf %219, %221 : vector<16x8xf32>
    %cst_65 = arith.constant 0.000000e+00 : f32
    %223 = vector.broadcast %cst_65 : f32 to vector<16x8xf32>
    %224 = arith.maximumf %222, %223 : vector<16x8xf32>
    %c1_66 = arith.constant 1 : index
    %c0_67 = arith.constant 0 : index
    %c0_68 = arith.constant 0 : index
    %225 = vector.load %arg3[%c1_66, %c0_67, %c0_68] : memref<12x360x8xf32, #tpu.memory_space<vmem>>, vector<1x360x8xf32>
    %226 = vector.shape_cast %225 : vector<1x360x8xf32> to vector<360x8xf32>
    %cst_69 = arith.constant dense<0.000000e+00> : vector<16x8xf32>
    %227 = tpu.matmul %216, %226, %cst_69 {dimension_numbers = #tpu.dot_dimension_numbers<[1], [0], [0], [1], [0, 0, 1, 1], [], []>} : vector<16x360xf32>, vector<360x8xf32>, vector<16x8xf32> -> vector<16x8xf32>
    %c1_70 = arith.constant 1 : index
    %228 = memref.load %arg4[%c1_70] : memref<12xf32, #tpu.memory_space<smem>>
    %229 = vector.broadcast %228 : f32 to vector<16x8xf32>
    %230 = arith.addf %227, %229 : vector<16x8xf32>
    %cst_71 = arith.constant 0.000000e+00 : f32
    %231 = vector.broadcast %cst_71 : f32 to vector<16x8xf32>
    %232 = arith.maximumf %230, %231 : vector<16x8xf32>
    %c2_72 = arith.constant 2 : index
    %c0_73 = arith.constant 0 : index
    %c0_74 = arith.constant 0 : index
    %233 = vector.load %arg3[%c2_72, %c0_73, %c0_74] : memref<12x360x8xf32, #tpu.memory_space<vmem>>, vector<1x360x8xf32>
    %234 = vector.shape_cast %233 : vector<1x360x8xf32> to vector<360x8xf32>
    %cst_75 = arith.constant dense<0.000000e+00> : vector<16x8xf32>
    %235 = tpu.matmul %216, %234, %cst_75 {dimension_numbers = #tpu.dot_dimension_numbers<[1], [0], [0], [1], [0, 0, 1, 1], [], []>} : vector<16x360xf32>, vector<360x8xf32>, vector<16x8xf32> -> vector<16x8xf32>
    %c2_76 = arith.constant 2 : index
    %236 = memref.load %arg4[%c2_76] : memref<12xf32, #tpu.memory_space<smem>>
    %237 = vector.broadcast %236 : f32 to vector<16x8xf32>
    %238 = arith.addf %235, %237 : vector<16x8xf32>
    %cst_77 = arith.constant 0.000000e+00 : f32
    %239 = vector.broadcast %cst_77 : f32 to vector<16x8xf32>
    %240 = arith.maximumf %238, %239 : vector<16x8xf32>
    %c3_78 = arith.constant 3 : index
    %c0_79 = arith.constant 0 : index
    %c0_80 = arith.constant 0 : index
    %241 = vector.load %arg3[%c3_78, %c0_79, %c0_80] : memref<12x360x8xf32, #tpu.memory_space<vmem>>, vector<1x360x8xf32>
    %242 = vector.shape_cast %241 : vector<1x360x8xf32> to vector<360x8xf32>
    %cst_81 = arith.constant dense<0.000000e+00> : vector<16x8xf32>
    %243 = tpu.matmul %216, %242, %cst_81 {dimension_numbers = #tpu.dot_dimension_numbers<[1], [0], [0], [1], [0, 0, 1, 1], [], []>} : vector<16x360xf32>, vector<360x8xf32>, vector<16x8xf32> -> vector<16x8xf32>
    %c3_82 = arith.constant 3 : index
    %244 = memref.load %arg4[%c3_82] : memref<12xf32, #tpu.memory_space<smem>>
    %245 = vector.broadcast %244 : f32 to vector<16x8xf32>
    %246 = arith.addf %243, %245 : vector<16x8xf32>
    %cst_83 = arith.constant 0.000000e+00 : f32
    %247 = vector.broadcast %cst_83 : f32 to vector<16x8xf32>
    %248 = arith.maximumf %246, %247 : vector<16x8xf32>
    %c4_84 = arith.constant 4 : index
    %c0_85 = arith.constant 0 : index
    %c0_86 = arith.constant 0 : index
    %249 = vector.load %arg3[%c4_84, %c0_85, %c0_86] : memref<12x360x8xf32, #tpu.memory_space<vmem>>, vector<1x360x8xf32>
    %250 = vector.shape_cast %249 : vector<1x360x8xf32> to vector<360x8xf32>
    %cst_87 = arith.constant dense<0.000000e+00> : vector<16x8xf32>
    %251 = tpu.matmul %216, %250, %cst_87 {dimension_numbers = #tpu.dot_dimension_numbers<[1], [0], [0], [1], [0, 0, 1, 1], [], []>} : vector<16x360xf32>, vector<360x8xf32>, vector<16x8xf32> -> vector<16x8xf32>
    %c4_88 = arith.constant 4 : index
    %252 = memref.load %arg4[%c4_88] : memref<12xf32, #tpu.memory_space<smem>>
    %253 = vector.broadcast %252 : f32 to vector<16x8xf32>
    %254 = arith.addf %251, %253 : vector<16x8xf32>
    %cst_89 = arith.constant 0.000000e+00 : f32
    %255 = vector.broadcast %cst_89 : f32 to vector<16x8xf32>
    %256 = arith.maximumf %254, %255 : vector<16x8xf32>
    %c5_90 = arith.constant 5 : index
    %c0_91 = arith.constant 0 : index
    %c0_92 = arith.constant 0 : index
    %257 = vector.load %arg3[%c5_90, %c0_91, %c0_92] : memref<12x360x8xf32, #tpu.memory_space<vmem>>, vector<1x360x8xf32>
    %258 = vector.shape_cast %257 : vector<1x360x8xf32> to vector<360x8xf32>
    %cst_93 = arith.constant dense<0.000000e+00> : vector<16x8xf32>
    %259 = tpu.matmul %216, %258, %cst_93 {dimension_numbers = #tpu.dot_dimension_numbers<[1], [0], [0], [1], [0, 0, 1, 1], [], []>} : vector<16x360xf32>, vector<360x8xf32>, vector<16x8xf32> -> vector<16x8xf32>
    %c5_94 = arith.constant 5 : index
    %260 = memref.load %arg4[%c5_94] : memref<12xf32, #tpu.memory_space<smem>>
    %261 = vector.broadcast %260 : f32 to vector<16x8xf32>
    %262 = arith.addf %259, %261 : vector<16x8xf32>
    %cst_95 = arith.constant 0.000000e+00 : f32
    %263 = vector.broadcast %cst_95 : f32 to vector<16x8xf32>
    %264 = arith.maximumf %262, %263 : vector<16x8xf32>
    %c6 = arith.constant 6 : index
    %c0_96 = arith.constant 0 : index
    %c0_97 = arith.constant 0 : index
    %265 = vector.load %arg3[%c6, %c0_96, %c0_97] : memref<12x360x8xf32, #tpu.memory_space<vmem>>, vector<1x360x8xf32>
    %266 = vector.shape_cast %265 : vector<1x360x8xf32> to vector<360x8xf32>
    %cst_98 = arith.constant dense<0.000000e+00> : vector<16x8xf32>
    %267 = tpu.matmul %216, %266, %cst_98 {dimension_numbers = #tpu.dot_dimension_numbers<[1], [0], [0], [1], [0, 0, 1, 1], [], []>} : vector<16x360xf32>, vector<360x8xf32>, vector<16x8xf32> -> vector<16x8xf32>
    %c6_99 = arith.constant 6 : index
    %268 = memref.load %arg4[%c6_99] : memref<12xf32, #tpu.memory_space<smem>>
    %269 = vector.broadcast %268 : f32 to vector<16x8xf32>
    %270 = arith.addf %267, %269 : vector<16x8xf32>
    %cst_100 = arith.constant 0.000000e+00 : f32
    %271 = vector.broadcast %cst_100 : f32 to vector<16x8xf32>
    %272 = arith.maximumf %270, %271 : vector<16x8xf32>
    %c7 = arith.constant 7 : index
    %c0_101 = arith.constant 0 : index
    %c0_102 = arith.constant 0 : index
    %273 = vector.load %arg3[%c7, %c0_101, %c0_102] : memref<12x360x8xf32, #tpu.memory_space<vmem>>, vector<1x360x8xf32>
    %274 = vector.shape_cast %273 : vector<1x360x8xf32> to vector<360x8xf32>
    %cst_103 = arith.constant dense<0.000000e+00> : vector<16x8xf32>
    %275 = tpu.matmul %216, %274, %cst_103 {dimension_numbers = #tpu.dot_dimension_numbers<[1], [0], [0], [1], [0, 0, 1, 1], [], []>} : vector<16x360xf32>, vector<360x8xf32>, vector<16x8xf32> -> vector<16x8xf32>
    %c7_104 = arith.constant 7 : index
    %276 = memref.load %arg4[%c7_104] : memref<12xf32, #tpu.memory_space<smem>>
    %277 = vector.broadcast %276 : f32 to vector<16x8xf32>
    %278 = arith.addf %275, %277 : vector<16x8xf32>
    %cst_105 = arith.constant 0.000000e+00 : f32
    %279 = vector.broadcast %cst_105 : f32 to vector<16x8xf32>
    %280 = arith.maximumf %278, %279 : vector<16x8xf32>
    %c8 = arith.constant 8 : index
    %c0_106 = arith.constant 0 : index
    %c0_107 = arith.constant 0 : index
    %281 = vector.load %arg3[%c8, %c0_106, %c0_107] : memref<12x360x8xf32, #tpu.memory_space<vmem>>, vector<1x360x8xf32>
    %282 = vector.shape_cast %281 : vector<1x360x8xf32> to vector<360x8xf32>
    %cst_108 = arith.constant dense<0.000000e+00> : vector<16x8xf32>
    %283 = tpu.matmul %216, %282, %cst_108 {dimension_numbers = #tpu.dot_dimension_numbers<[1], [0], [0], [1], [0, 0, 1, 1], [], []>} : vector<16x360xf32>, vector<360x8xf32>, vector<16x8xf32> -> vector<16x8xf32>
    %c8_109 = arith.constant 8 : index
    %284 = memref.load %arg4[%c8_109] : memref<12xf32, #tpu.memory_space<smem>>
    %285 = vector.broadcast %284 : f32 to vector<16x8xf32>
    %286 = arith.addf %283, %285 : vector<16x8xf32>
    %cst_110 = arith.constant 0.000000e+00 : f32
    %287 = vector.broadcast %cst_110 : f32 to vector<16x8xf32>
    %288 = arith.maximumf %286, %287 : vector<16x8xf32>
    %c9 = arith.constant 9 : index
    %c0_111 = arith.constant 0 : index
    %c0_112 = arith.constant 0 : index
    %289 = vector.load %arg3[%c9, %c0_111, %c0_112] : memref<12x360x8xf32, #tpu.memory_space<vmem>>, vector<1x360x8xf32>
    %290 = vector.shape_cast %289 : vector<1x360x8xf32> to vector<360x8xf32>
    %cst_113 = arith.constant dense<0.000000e+00> : vector<16x8xf32>
    %291 = tpu.matmul %216, %290, %cst_113 {dimension_numbers = #tpu.dot_dimension_numbers<[1], [0], [0], [1], [0, 0, 1, 1], [], []>} : vector<16x360xf32>, vector<360x8xf32>, vector<16x8xf32> -> vector<16x8xf32>
    %c9_114 = arith.constant 9 : index
    %292 = memref.load %arg4[%c9_114] : memref<12xf32, #tpu.memory_space<smem>>
    %293 = vector.broadcast %292 : f32 to vector<16x8xf32>
    %294 = arith.addf %291, %293 : vector<16x8xf32>
    %cst_115 = arith.constant 0.000000e+00 : f32
    %295 = vector.broadcast %cst_115 : f32 to vector<16x8xf32>
    %296 = arith.maximumf %294, %295 : vector<16x8xf32>
    %c10 = arith.constant 10 : index
    %c0_116 = arith.constant 0 : index
    %c0_117 = arith.constant 0 : index
    %297 = vector.load %arg3[%c10, %c0_116, %c0_117] : memref<12x360x8xf32, #tpu.memory_space<vmem>>, vector<1x360x8xf32>
    %298 = vector.shape_cast %297 : vector<1x360x8xf32> to vector<360x8xf32>
    %cst_118 = arith.constant dense<0.000000e+00> : vector<16x8xf32>
    %299 = tpu.matmul %216, %298, %cst_118 {dimension_numbers = #tpu.dot_dimension_numbers<[1], [0], [0], [1], [0, 0, 1, 1], [], []>} : vector<16x360xf32>, vector<360x8xf32>, vector<16x8xf32> -> vector<16x8xf32>
    %c10_119 = arith.constant 10 : index
    %300 = memref.load %arg4[%c10_119] : memref<12xf32, #tpu.memory_space<smem>>
    %301 = vector.broadcast %300 : f32 to vector<16x8xf32>
    %302 = arith.addf %299, %301 : vector<16x8xf32>
    %cst_120 = arith.constant 0.000000e+00 : f32
    %303 = vector.broadcast %cst_120 : f32 to vector<16x8xf32>
    %304 = arith.maximumf %302, %303 : vector<16x8xf32>
    %c11 = arith.constant 11 : index
    %c0_121 = arith.constant 0 : index
    %c0_122 = arith.constant 0 : index
    %305 = vector.load %arg3[%c11, %c0_121, %c0_122] : memref<12x360x8xf32, #tpu.memory_space<vmem>>, vector<1x360x8xf32>
    %306 = vector.shape_cast %305 : vector<1x360x8xf32> to vector<360x8xf32>
    %cst_123 = arith.constant dense<0.000000e+00> : vector<16x8xf32>
    %307 = tpu.matmul %216, %306, %cst_123 {dimension_numbers = #tpu.dot_dimension_numbers<[1], [0], [0], [1], [0, 0, 1, 1], [], []>} : vector<16x360xf32>, vector<360x8xf32>, vector<16x8xf32> -> vector<16x8xf32>
    %c11_124 = arith.constant 11 : index
    %308 = memref.load %arg4[%c11_124] : memref<12xf32, #tpu.memory_space<smem>>
    %309 = vector.broadcast %308 : f32 to vector<16x8xf32>
    %310 = arith.addf %307, %309 : vector<16x8xf32>
    %cst_125 = arith.constant 0.000000e+00 : f32
    %311 = vector.broadcast %cst_125 : f32 to vector<16x8xf32>
    %312 = arith.maximumf %310, %311 : vector<16x8xf32>
    %313 = tpu.iota {dimensions = array<i32: 0>} : vector<8x4xi32>
    %314 = tpu.iota {dimensions = array<i32: 1>} : vector<8x4xi32>
    %c2_i32_126 = arith.constant 2 : i32
    %315 = vector.broadcast %c2_i32_126 : i32 to vector<8x4xi32>
    %316 = arith.muli %315, %314 : vector<8x4xi32>
    %317 = arith.cmpi eq, %313, %316 : vector<8x4xi32>
    %318 = arith.extui %317 : vector<8x4xi1> to vector<8x4xi32>
    %319 = arith.sitofp %318 : vector<8x4xi32> to vector<8x4xf32>
    %c2_i32_127 = arith.constant 2 : i32
    %320 = vector.broadcast %c2_i32_127 : i32 to vector<8x4xi32>
    %321 = arith.muli %320, %314 : vector<8x4xi32>
    %c1_i32_128 = arith.constant 1 : i32
    %322 = vector.broadcast %c1_i32_128 : i32 to vector<8x4xi32>
    %323 = arith.addi %321, %322 : vector<8x4xi32>
    %324 = arith.cmpi eq, %313, %323 : vector<8x4xi32>
    %325 = arith.extui %324 : vector<8x4xi1> to vector<8x4xi32>
    %326 = arith.sitofp %325 : vector<8x4xi32> to vector<8x4xf32>
    %327 = tpu.iota {dimensions = array<i32: 0>} : vector<8x16xi32>
    %328 = tpu.iota {dimensions = array<i32: 1>} : vector<8x16xi32>
    %c2_i32_129 = arith.constant 2 : i32
    %329 = vector.broadcast %c2_i32_129 : i32 to vector<8x16xi32>
    %330 = arith.muli %329, %327 : vector<8x16xi32>
    %331 = arith.cmpi eq, %328, %330 : vector<8x16xi32>
    %332 = arith.extui %331 : vector<8x16xi1> to vector<8x16xi32>
    %333 = arith.sitofp %332 : vector<8x16xi32> to vector<8x16xf32>
    %c2_i32_130 = arith.constant 2 : i32
    %334 = vector.broadcast %c2_i32_130 : i32 to vector<8x16xi32>
    %335 = arith.muli %334, %327 : vector<8x16xi32>
    %c1_i32_131 = arith.constant 1 : i32
    %336 = vector.broadcast %c1_i32_131 : i32 to vector<8x16xi32>
    %337 = arith.addi %335, %336 : vector<8x16xi32>
    %338 = arith.cmpi eq, %328, %337 : vector<8x16xi32>
    %339 = arith.extui %338 : vector<8x16xi1> to vector<8x16xi32>
    %340 = arith.sitofp %339 : vector<8x16xi32> to vector<8x16xf32>
    %cst_132 = arith.constant dense<0.000000e+00> : vector<16x4xf32>
    %341 = tpu.matmul %224, %319, %cst_132 {dimension_numbers = #tpu.dot_dimension_numbers<[1], [0], [0], [1], [0, 0, 1, 1], [], []>} : vector<16x8xf32>, vector<8x4xf32>, vector<16x4xf32> -> vector<16x4xf32>
    %cst_133 = arith.constant dense<0.000000e+00> : vector<16x4xf32>
    %342 = tpu.matmul %224, %326, %cst_133 {dimension_numbers = #tpu.dot_dimension_numbers<[1], [0], [0], [1], [0, 0, 1, 1], [], []>} : vector<16x8xf32>, vector<8x4xf32>, vector<16x4xf32> -> vector<16x4xf32>
    %343 = arith.maximumf %341, %342 : vector<16x4xf32>
    %cst_134 = arith.constant dense<0.000000e+00> : vector<8x4xf32>
    %344 = tpu.matmul %333, %343, %cst_134 {dimension_numbers = #tpu.dot_dimension_numbers<[1], [0], [0], [1], [0, 0, 1, 1], [], []>} : vector<8x16xf32>, vector<16x4xf32>, vector<8x4xf32> -> vector<8x4xf32>
    %cst_135 = arith.constant dense<0.000000e+00> : vector<8x4xf32>
    %345 = tpu.matmul %340, %343, %cst_135 {dimension_numbers = #tpu.dot_dimension_numbers<[1], [0], [0], [1], [0, 0, 1, 1], [], []>} : vector<8x16xf32>, vector<16x4xf32>, vector<8x4xf32> -> vector<8x4xf32>
    %346 = arith.maximumf %344, %345 : vector<8x4xf32>
    %cst_136 = arith.constant dense<0.000000e+00> : vector<16x4xf32>
    %347 = tpu.matmul %232, %319, %cst_136 {dimension_numbers = #tpu.dot_dimension_numbers<[1], [0], [0], [1], [0, 0, 1, 1], [], []>} : vector<16x8xf32>, vector<8x4xf32>, vector<16x4xf32> -> vector<16x4xf32>
    %cst_137 = arith.constant dense<0.000000e+00> : vector<16x4xf32>
    %348 = tpu.matmul %232, %326, %cst_137 {dimension_numbers = #tpu.dot_dimension_numbers<[1], [0], [0], [1], [0, 0, 1, 1], [], []>} : vector<16x8xf32>, vector<8x4xf32>, vector<16x4xf32> -> vector<16x4xf32>
    %349 = arith.maximumf %347, %348 : vector<16x4xf32>
    %cst_138 = arith.constant dense<0.000000e+00> : vector<8x4xf32>
    %350 = tpu.matmul %333, %349, %cst_138 {dimension_numbers = #tpu.dot_dimension_numbers<[1], [0], [0], [1], [0, 0, 1, 1], [], []>} : vector<8x16xf32>, vector<16x4xf32>, vector<8x4xf32> -> vector<8x4xf32>
    %cst_139 = arith.constant dense<0.000000e+00> : vector<8x4xf32>
    %351 = tpu.matmul %340, %349, %cst_139 {dimension_numbers = #tpu.dot_dimension_numbers<[1], [0], [0], [1], [0, 0, 1, 1], [], []>} : vector<8x16xf32>, vector<16x4xf32>, vector<8x4xf32> -> vector<8x4xf32>
    %352 = arith.maximumf %350, %351 : vector<8x4xf32>
    %cst_140 = arith.constant dense<0.000000e+00> : vector<16x4xf32>
    %353 = tpu.matmul %240, %319, %cst_140 {dimension_numbers = #tpu.dot_dimension_numbers<[1], [0], [0], [1], [0, 0, 1, 1], [], []>} : vector<16x8xf32>, vector<8x4xf32>, vector<16x4xf32> -> vector<16x4xf32>
    %cst_141 = arith.constant dense<0.000000e+00> : vector<16x4xf32>
    %354 = tpu.matmul %240, %326, %cst_141 {dimension_numbers = #tpu.dot_dimension_numbers<[1], [0], [0], [1], [0, 0, 1, 1], [], []>} : vector<16x8xf32>, vector<8x4xf32>, vector<16x4xf32> -> vector<16x4xf32>
    %355 = arith.maximumf %353, %354 : vector<16x4xf32>
    %cst_142 = arith.constant dense<0.000000e+00> : vector<8x4xf32>
    %356 = tpu.matmul %333, %355, %cst_142 {dimension_numbers = #tpu.dot_dimension_numbers<[1], [0], [0], [1], [0, 0, 1, 1], [], []>} : vector<8x16xf32>, vector<16x4xf32>, vector<8x4xf32> -> vector<8x4xf32>
    %cst_143 = arith.constant dense<0.000000e+00> : vector<8x4xf32>
    %357 = tpu.matmul %340, %355, %cst_143 {dimension_numbers = #tpu.dot_dimension_numbers<[1], [0], [0], [1], [0, 0, 1, 1], [], []>} : vector<8x16xf32>, vector<16x4xf32>, vector<8x4xf32> -> vector<8x4xf32>
    %358 = arith.maximumf %356, %357 : vector<8x4xf32>
    %cst_144 = arith.constant dense<0.000000e+00> : vector<16x4xf32>
    %359 = tpu.matmul %248, %319, %cst_144 {dimension_numbers = #tpu.dot_dimension_numbers<[1], [0], [0], [1], [0, 0, 1, 1], [], []>} : vector<16x8xf32>, vector<8x4xf32>, vector<16x4xf32> -> vector<16x4xf32>
    %cst_145 = arith.constant dense<0.000000e+00> : vector<16x4xf32>
    %360 = tpu.matmul %248, %326, %cst_145 {dimension_numbers = #tpu.dot_dimension_numbers<[1], [0], [0], [1], [0, 0, 1, 1], [], []>} : vector<16x8xf32>, vector<8x4xf32>, vector<16x4xf32> -> vector<16x4xf32>
    %361 = arith.maximumf %359, %360 : vector<16x4xf32>
    %cst_146 = arith.constant dense<0.000000e+00> : vector<8x4xf32>
    %362 = tpu.matmul %333, %361, %cst_146 {dimension_numbers = #tpu.dot_dimension_numbers<[1], [0], [0], [1], [0, 0, 1, 1], [], []>} : vector<8x16xf32>, vector<16x4xf32>, vector<8x4xf32> -> vector<8x4xf32>
    %cst_147 = arith.constant dense<0.000000e+00> : vector<8x4xf32>
    %363 = tpu.matmul %340, %361, %cst_147 {dimension_numbers = #tpu.dot_dimension_numbers<[1], [0], [0], [1], [0, 0, 1, 1], [], []>} : vector<8x16xf32>, vector<16x4xf32>, vector<8x4xf32> -> vector<8x4xf32>
    %364 = arith.maximumf %362, %363 : vector<8x4xf32>
    %cst_148 = arith.constant dense<0.000000e+00> : vector<16x4xf32>
    %365 = tpu.matmul %256, %319, %cst_148 {dimension_numbers = #tpu.dot_dimension_numbers<[1], [0], [0], [1], [0, 0, 1, 1], [], []>} : vector<16x8xf32>, vector<8x4xf32>, vector<16x4xf32> -> vector<16x4xf32>
    %cst_149 = arith.constant dense<0.000000e+00> : vector<16x4xf32>
    %366 = tpu.matmul %256, %326, %cst_149 {dimension_numbers = #tpu.dot_dimension_numbers<[1], [0], [0], [1], [0, 0, 1, 1], [], []>} : vector<16x8xf32>, vector<8x4xf32>, vector<16x4xf32> -> vector<16x4xf32>
    %367 = arith.maximumf %365, %366 : vector<16x4xf32>
    %cst_150 = arith.constant dense<0.000000e+00> : vector<8x4xf32>
    %368 = tpu.matmul %333, %367, %cst_150 {dimension_numbers = #tpu.dot_dimension_numbers<[1], [0], [0], [1], [0, 0, 1, 1], [], []>} : vector<8x16xf32>, vector<16x4xf32>, vector<8x4xf32> -> vector<8x4xf32>
    %cst_151 = arith.constant dense<0.000000e+00> : vector<8x4xf32>
    %369 = tpu.matmul %340, %367, %cst_151 {dimension_numbers = #tpu.dot_dimension_numbers<[1], [0], [0], [1], [0, 0, 1, 1], [], []>} : vector<8x16xf32>, vector<16x4xf32>, vector<8x4xf32> -> vector<8x4xf32>
    %370 = arith.maximumf %368, %369 : vector<8x4xf32>
    %cst_152 = arith.constant dense<0.000000e+00> : vector<16x4xf32>
    %371 = tpu.matmul %264, %319, %cst_152 {dimension_numbers = #tpu.dot_dimension_numbers<[1], [0], [0], [1], [0, 0, 1, 1], [], []>} : vector<16x8xf32>, vector<8x4xf32>, vector<16x4xf32> -> vector<16x4xf32>
    %cst_153 = arith.constant dense<0.000000e+00> : vector<16x4xf32>
    %372 = tpu.matmul %264, %326, %cst_153 {dimension_numbers = #tpu.dot_dimension_numbers<[1], [0], [0], [1], [0, 0, 1, 1], [], []>} : vector<16x8xf32>, vector<8x4xf32>, vector<16x4xf32> -> vector<16x4xf32>
    %373 = arith.maximumf %371, %372 : vector<16x4xf32>
    %cst_154 = arith.constant dense<0.000000e+00> : vector<8x4xf32>
    %374 = tpu.matmul %333, %373, %cst_154 {dimension_numbers = #tpu.dot_dimension_numbers<[1], [0], [0], [1], [0, 0, 1, 1], [], []>} : vector<8x16xf32>, vector<16x4xf32>, vector<8x4xf32> -> vector<8x4xf32>
    %cst_155 = arith.constant dense<0.000000e+00> : vector<8x4xf32>
    %375 = tpu.matmul %340, %373, %cst_155 {dimension_numbers = #tpu.dot_dimension_numbers<[1], [0], [0], [1], [0, 0, 1, 1], [], []>} : vector<8x16xf32>, vector<16x4xf32>, vector<8x4xf32> -> vector<8x4xf32>
    %376 = arith.maximumf %374, %375 : vector<8x4xf32>
    %cst_156 = arith.constant dense<0.000000e+00> : vector<16x4xf32>
    %377 = tpu.matmul %272, %319, %cst_156 {dimension_numbers = #tpu.dot_dimension_numbers<[1], [0], [0], [1], [0, 0, 1, 1], [], []>} : vector<16x8xf32>, vector<8x4xf32>, vector<16x4xf32> -> vector<16x4xf32>
    %cst_157 = arith.constant dense<0.000000e+00> : vector<16x4xf32>
    %378 = tpu.matmul %272, %326, %cst_157 {dimension_numbers = #tpu.dot_dimension_numbers<[1], [0], [0], [1], [0, 0, 1, 1], [], []>} : vector<16x8xf32>, vector<8x4xf32>, vector<16x4xf32> -> vector<16x4xf32>
    %379 = arith.maximumf %377, %378 : vector<16x4xf32>
    %cst_158 = arith.constant dense<0.000000e+00> : vector<8x4xf32>
    %380 = tpu.matmul %333, %379, %cst_158 {dimension_numbers = #tpu.dot_dimension_numbers<[1], [0], [0], [1], [0, 0, 1, 1], [], []>} : vector<8x16xf32>, vector<16x4xf32>, vector<8x4xf32> -> vector<8x4xf32>
    %cst_159 = arith.constant dense<0.000000e+00> : vector<8x4xf32>
    %381 = tpu.matmul %340, %379, %cst_159 {dimension_numbers = #tpu.dot_dimension_numbers<[1], [0], [0], [1], [0, 0, 1, 1], [], []>} : vector<8x16xf32>, vector<16x4xf32>, vector<8x4xf32> -> vector<8x4xf32>
    %382 = arith.maximumf %380, %381 : vector<8x4xf32>
    %cst_160 = arith.constant dense<0.000000e+00> : vector<16x4xf32>
    %383 = tpu.matmul %280, %319, %cst_160 {dimension_numbers = #tpu.dot_dimension_numbers<[1], [0], [0], [1], [0, 0, 1, 1], [], []>} : vector<16x8xf32>, vector<8x4xf32>, vector<16x4xf32> -> vector<16x4xf32>
    %cst_161 = arith.constant dense<0.000000e+00> : vector<16x4xf32>
    %384 = tpu.matmul %280, %326, %cst_161 {dimension_numbers = #tpu.dot_dimension_numbers<[1], [0], [0], [1], [0, 0, 1, 1], [], []>} : vector<16x8xf32>, vector<8x4xf32>, vector<16x4xf32> -> vector<16x4xf32>
    %385 = arith.maximumf %383, %384 : vector<16x4xf32>
    %cst_162 = arith.constant dense<0.000000e+00> : vector<8x4xf32>
    %386 = tpu.matmul %333, %385, %cst_162 {dimension_numbers = #tpu.dot_dimension_numbers<[1], [0], [0], [1], [0, 0, 1, 1], [], []>} : vector<8x16xf32>, vector<16x4xf32>, vector<8x4xf32> -> vector<8x4xf32>
    %cst_163 = arith.constant dense<0.000000e+00> : vector<8x4xf32>
    %387 = tpu.matmul %340, %385, %cst_163 {dimension_numbers = #tpu.dot_dimension_numbers<[1], [0], [0], [1], [0, 0, 1, 1], [], []>} : vector<8x16xf32>, vector<16x4xf32>, vector<8x4xf32> -> vector<8x4xf32>
    %388 = arith.maximumf %386, %387 : vector<8x4xf32>
    %cst_164 = arith.constant dense<0.000000e+00> : vector<16x4xf32>
    %389 = tpu.matmul %288, %319, %cst_164 {dimension_numbers = #tpu.dot_dimension_numbers<[1], [0], [0], [1], [0, 0, 1, 1], [], []>} : vector<16x8xf32>, vector<8x4xf32>, vector<16x4xf32> -> vector<16x4xf32>
    %cst_165 = arith.constant dense<0.000000e+00> : vector<16x4xf32>
    %390 = tpu.matmul %288, %326, %cst_165 {dimension_numbers = #tpu.dot_dimension_numbers<[1], [0], [0], [1], [0, 0, 1, 1], [], []>} : vector<16x8xf32>, vector<8x4xf32>, vector<16x4xf32> -> vector<16x4xf32>
    %391 = arith.maximumf %389, %390 : vector<16x4xf32>
    %cst_166 = arith.constant dense<0.000000e+00> : vector<8x4xf32>
    %392 = tpu.matmul %333, %391, %cst_166 {dimension_numbers = #tpu.dot_dimension_numbers<[1], [0], [0], [1], [0, 0, 1, 1], [], []>} : vector<8x16xf32>, vector<16x4xf32>, vector<8x4xf32> -> vector<8x4xf32>
    %cst_167 = arith.constant dense<0.000000e+00> : vector<8x4xf32>
    %393 = tpu.matmul %340, %391, %cst_167 {dimension_numbers = #tpu.dot_dimension_numbers<[1], [0], [0], [1], [0, 0, 1, 1], [], []>} : vector<8x16xf32>, vector<16x4xf32>, vector<8x4xf32> -> vector<8x4xf32>
    %394 = arith.maximumf %392, %393 : vector<8x4xf32>
    %cst_168 = arith.constant dense<0.000000e+00> : vector<16x4xf32>
    %395 = tpu.matmul %296, %319, %cst_168 {dimension_numbers = #tpu.dot_dimension_numbers<[1], [0], [0], [1], [0, 0, 1, 1], [], []>} : vector<16x8xf32>, vector<8x4xf32>, vector<16x4xf32> -> vector<16x4xf32>
    %cst_169 = arith.constant dense<0.000000e+00> : vector<16x4xf32>
    %396 = tpu.matmul %296, %326, %cst_169 {dimension_numbers = #tpu.dot_dimension_numbers<[1], [0], [0], [1], [0, 0, 1, 1], [], []>} : vector<16x8xf32>, vector<8x4xf32>, vector<16x4xf32> -> vector<16x4xf32>
    %397 = arith.maximumf %395, %396 : vector<16x4xf32>
    %cst_170 = arith.constant dense<0.000000e+00> : vector<8x4xf32>
    %398 = tpu.matmul %333, %397, %cst_170 {dimension_numbers = #tpu.dot_dimension_numbers<[1], [0], [0], [1], [0, 0, 1, 1], [], []>} : vector<8x16xf32>, vector<16x4xf32>, vector<8x4xf32> -> vector<8x4xf32>
    %cst_171 = arith.constant dense<0.000000e+00> : vector<8x4xf32>
    %399 = tpu.matmul %340, %397, %cst_171 {dimension_numbers = #tpu.dot_dimension_numbers<[1], [0], [0], [1], [0, 0, 1, 1], [], []>} : vector<8x16xf32>, vector<16x4xf32>, vector<8x4xf32> -> vector<8x4xf32>
    %400 = arith.maximumf %398, %399 : vector<8x4xf32>
    %cst_172 = arith.constant dense<0.000000e+00> : vector<16x4xf32>
    %401 = tpu.matmul %304, %319, %cst_172 {dimension_numbers = #tpu.dot_dimension_numbers<[1], [0], [0], [1], [0, 0, 1, 1], [], []>} : vector<16x8xf32>, vector<8x4xf32>, vector<16x4xf32> -> vector<16x4xf32>
    %cst_173 = arith.constant dense<0.000000e+00> : vector<16x4xf32>
    %402 = tpu.matmul %304, %326, %cst_173 {dimension_numbers = #tpu.dot_dimension_numbers<[1], [0], [0], [1], [0, 0, 1, 1], [], []>} : vector<16x8xf32>, vector<8x4xf32>, vector<16x4xf32> -> vector<16x4xf32>
    %403 = arith.maximumf %401, %402 : vector<16x4xf32>
    %cst_174 = arith.constant dense<0.000000e+00> : vector<8x4xf32>
    %404 = tpu.matmul %333, %403, %cst_174 {dimension_numbers = #tpu.dot_dimension_numbers<[1], [0], [0], [1], [0, 0, 1, 1], [], []>} : vector<8x16xf32>, vector<16x4xf32>, vector<8x4xf32> -> vector<8x4xf32>
    %cst_175 = arith.constant dense<0.000000e+00> : vector<8x4xf32>
    %405 = tpu.matmul %340, %403, %cst_175 {dimension_numbers = #tpu.dot_dimension_numbers<[1], [0], [0], [1], [0, 0, 1, 1], [], []>} : vector<8x16xf32>, vector<16x4xf32>, vector<8x4xf32> -> vector<8x4xf32>
    %406 = arith.maximumf %404, %405 : vector<8x4xf32>
    %cst_176 = arith.constant dense<0.000000e+00> : vector<16x4xf32>
    %407 = tpu.matmul %312, %319, %cst_176 {dimension_numbers = #tpu.dot_dimension_numbers<[1], [0], [0], [1], [0, 0, 1, 1], [], []>} : vector<16x8xf32>, vector<8x4xf32>, vector<16x4xf32> -> vector<16x4xf32>
    %cst_177 = arith.constant dense<0.000000e+00> : vector<16x4xf32>
    %408 = tpu.matmul %312, %326, %cst_177 {dimension_numbers = #tpu.dot_dimension_numbers<[1], [0], [0], [1], [0, 0, 1, 1], [], []>} : vector<16x8xf32>, vector<8x4xf32>, vector<16x4xf32> -> vector<16x4xf32>
    %409 = arith.maximumf %407, %408 : vector<16x4xf32>
    %cst_178 = arith.constant dense<0.000000e+00> : vector<8x4xf32>
    %410 = tpu.matmul %333, %409, %cst_178 {dimension_numbers = #tpu.dot_dimension_numbers<[1], [0], [0], [1], [0, 0, 1, 1], [], []>} : vector<8x16xf32>, vector<16x4xf32>, vector<8x4xf32> -> vector<8x4xf32>
    %cst_179 = arith.constant dense<0.000000e+00> : vector<8x4xf32>
    %411 = tpu.matmul %340, %409, %cst_179 {dimension_numbers = #tpu.dot_dimension_numbers<[1], [0], [0], [1], [0, 0, 1, 1], [], []>} : vector<8x16xf32>, vector<16x4xf32>, vector<8x4xf32> -> vector<8x4xf32>
    %412 = arith.maximumf %410, %411 : vector<8x4xf32>
    %413 = tpu.concatenate %346, %352, %358, %364, %370, %376, %382, %388, %394, %400, %406, %412 in 1 : vector<8x4xf32>, vector<8x4xf32>, vector<8x4xf32>, vector<8x4xf32>, vector<8x4xf32>, vector<8x4xf32>, vector<8x4xf32>, vector<8x4xf32>, vector<8x4xf32>, vector<8x4xf32>, vector<8x4xf32>, vector<8x4xf32> -> vector<8x48xf32>
    %414 = vector.extract_strided_slice %413 {offsets = [0, 0], sizes = [1, 48], strides = [1, 1]} : vector<8x48xf32> to vector<1x48xf32>
    %415 = vector.extract_strided_slice %413 {offsets = [4, 0], sizes = [1, 48], strides = [1, 1]} : vector<8x48xf32> to vector<1x48xf32>
    %416 = tpu.concatenate %414, %415 in 0 : vector<1x48xf32>, vector<1x48xf32> -> vector<2x48xf32>
    %417 = vector.extract_strided_slice %413 {offsets = [1, 0], sizes = [1, 48], strides = [1, 1]} : vector<8x48xf32> to vector<1x48xf32>
    %418 = vector.extract_strided_slice %413 {offsets = [5, 0], sizes = [1, 48], strides = [1, 1]} : vector<8x48xf32> to vector<1x48xf32>
    %419 = tpu.concatenate %417, %418 in 0 : vector<1x48xf32>, vector<1x48xf32> -> vector<2x48xf32>
    %420 = vector.extract_strided_slice %413 {offsets = [2, 0], sizes = [1, 48], strides = [1, 1]} : vector<8x48xf32> to vector<1x48xf32>
    %421 = vector.extract_strided_slice %413 {offsets = [6, 0], sizes = [1, 48], strides = [1, 1]} : vector<8x48xf32> to vector<1x48xf32>
    %422 = tpu.concatenate %420, %421 in 0 : vector<1x48xf32>, vector<1x48xf32> -> vector<2x48xf32>
    %423 = vector.extract_strided_slice %413 {offsets = [3, 0], sizes = [1, 48], strides = [1, 1]} : vector<8x48xf32> to vector<1x48xf32>
    %424 = vector.extract_strided_slice %413 {offsets = [7, 0], sizes = [1, 48], strides = [1, 1]} : vector<8x48xf32> to vector<1x48xf32>
    %425 = tpu.concatenate %423, %424 in 0 : vector<1x48xf32>, vector<1x48xf32> -> vector<2x48xf32>
    %426 = tpu.concatenate %416, %419, %422, %425 in 1 : vector<2x48xf32>, vector<2x48xf32>, vector<2x48xf32>, vector<2x48xf32> -> vector<2x192xf32>
    %c0_180 = arith.constant 0 : index
    %c0_181 = arith.constant 0 : index
    %427 = vector.load %arg5[%c0_180, %c0_181] : memref<192x120xf32, #tpu.memory_space<vmem>>, vector<192x120xf32>
    %cst_182 = arith.constant dense<0.000000e+00> : vector<2x120xf32>
    %428 = tpu.matmul %426, %427, %cst_182 {dimension_numbers = #tpu.dot_dimension_numbers<[1], [0], [0], [1], [0, 0, 1, 1], [], []>} : vector<2x192xf32>, vector<192x120xf32>, vector<2x120xf32> -> vector<2x120xf32>
    %c0_183 = arith.constant 0 : index
    %c0_184 = arith.constant 0 : index
    %429 = vector.load %arg6[%c0_183, %c0_184] : memref<1x120xf32, #tpu.memory_space<vmem>>, vector<1x120xf32>
    %430 = vector.broadcast %429 : vector<1x120xf32> to vector<2x120xf32>
    %431 = arith.addf %428, %430 : vector<2x120xf32>
    %cst_185 = arith.constant 0.000000e+00 : f32
    %432 = vector.broadcast %cst_185 : f32 to vector<2x120xf32>
    %433 = arith.maximumf %431, %432 : vector<2x120xf32>
    %c0_186 = arith.constant 0 : index
    %c0_187 = arith.constant 0 : index
    %434 = vector.load %arg7[%c0_186, %c0_187] : memref<120x60xf32, #tpu.memory_space<vmem>>, vector<120x60xf32>
    %cst_188 = arith.constant dense<0.000000e+00> : vector<2x60xf32>
    %435 = tpu.matmul %433, %434, %cst_188 {dimension_numbers = #tpu.dot_dimension_numbers<[1], [0], [0], [1], [0, 0, 1, 1], [], []>} : vector<2x120xf32>, vector<120x60xf32>, vector<2x60xf32> -> vector<2x60xf32>
    %c0_189 = arith.constant 0 : index
    %c0_190 = arith.constant 0 : index
    %436 = vector.load %arg8[%c0_189, %c0_190] : memref<1x60xf32, #tpu.memory_space<vmem>>, vector<1x60xf32>
    %437 = vector.broadcast %436 : vector<1x60xf32> to vector<2x60xf32>
    %438 = arith.addf %435, %437 : vector<2x60xf32>
    %cst_191 = arith.constant 0.000000e+00 : f32
    %439 = vector.broadcast %cst_191 : f32 to vector<2x60xf32>
    %440 = arith.maximumf %438, %439 : vector<2x60xf32>
    %c0_192 = arith.constant 0 : index
    %c0_193 = arith.constant 0 : index
    %441 = vector.load %arg9[%c0_192, %c0_193] : memref<60x10xf32, #tpu.memory_space<vmem>>, vector<60x10xf32>
    %cst_194 = arith.constant dense<0.000000e+00> : vector<2x10xf32>
    %442 = tpu.matmul %440, %441, %cst_194 {dimension_numbers = #tpu.dot_dimension_numbers<[1], [0], [0], [1], [0, 0, 1, 1], [], []>} : vector<2x60xf32>, vector<60x10xf32>, vector<2x10xf32> -> vector<2x10xf32>
    %c0_195 = arith.constant 0 : index
    %c0_196 = arith.constant 0 : index
    %443 = vector.load %arg10[%c0_195, %c0_196] : memref<1x10xf32, #tpu.memory_space<vmem>>, vector<1x10xf32>
    %444 = vector.broadcast %443 : vector<1x10xf32> to vector<2x10xf32>
    %445 = arith.addf %442, %444 : vector<2x10xf32>
    %c0_197 = arith.constant 0 : index
    %c0_198 = arith.constant 0 : index
    %446 = vector.load %arg11[%c0_197, %c0_198] : memref<2x10xf32, #tpu.memory_space<vmem>>, vector<2x10xf32>
    tpu.vector_store %arg11[%c0_197, %c0_198], %445 {strides = array<i32>} : memref<2x10xf32, #tpu.memory_space<vmem>>, vector<2x10xf32>,
    return
  }
}

</mosaic_0001>

<llo_original>
// kernel: network_forward.1
$region0: #{network_forward.1}
  #allocation0 [shape = 'u32[]', space=smem, size = 0x4, offset = 0x4, fixed_abs, tag = 'smem constant byte address 0x4 - core index']
  #allocation1 [shape = 'u32[144,128]{1,0:T(1,128)}', space=vmem, size = 0x12000, scoped, tag = 'internal scratch']
  %s0 = inlined_call_operand.vmem [shape: f32[2,28,28], index: 0, kind: input, shape index: {}]
  %s1 = inlined_call_operand.vmem [shape: f32[6,140,24], index: 1, kind: input, shape index: {}]
  %s2 = inlined_call_operand.vmem [shape: f32[6], index: 2, kind: input, shape index: {}]
  %s3 = inlined_call_operand.vmem [shape: f32[12,360,8], index: 3, kind: input, shape index: {}]
  %s4 = inlined_call_operand.vmem [shape: f32[12], index: 4, kind: input, shape index: {}]
  %s5 = inlined_call_operand.vmem [shape: f32[192,120], index: 5, kind: input, shape index: {}]
  %s6 = inlined_call_operand.vmem [shape: f32[1,120], index: 6, kind: input, shape index: {}]
  %s7 = inlined_call_operand.vmem [shape: f32[120,60], index: 7, kind: input, shape index: {}]
  %s8 = inlined_call_operand.vmem [shape: f32[1,60], index: 8, kind: input, shape index: {}]
  %s9 = inlined_call_operand.vmem [shape: f32[60,10], index: 9, kind: input, shape index: {}]
  %s10 = inlined_call_operand.vmem [shape: f32[1,10], index: 10, kind: input, shape index: {}]
  %s11 = inlined_call_operand.hbm [shape: f32[2,10], index: 11, kind: output, shape index: {}]
  %s12 = sld [smem:[#allocation0]]
  $region62: #{network_forward.1} parent=0
    _
  %s14 = ssub.s32 1, %s12
  %s15 = scalar_select 0, %s14, %s12
  $region1: #{network_forward.1} parent=0
    #allocation2 [shape = 'u8[512]{0}', space=smem, size = 0x200, scoped, tag = 'input window, operand 2, single buffered']
    #allocation3 [shape = 's32[1]{0}', space=sflag, size = 0x4, scoped, tag = 'scoped memory for network_forward.1']
    #allocation4 [shape = 's32[1]{0}', space=sflag, size = 0x4, scoped, tag = 'scoped memory for network_forward.1']
    #allocation5 [shape = 'u8[512]{0}', space=smem, size = 0x200, scoped, tag = 'input window, operand 4, single buffered']
    #allocation6 [shape = 's32[1]{0}', space=sflag, size = 0x4, scoped, tag = 'scoped memory for network_forward.1']
    #allocation7 [shape = 'u8[1024]{0}', space=vmem, size = 0x400, scoped, tag = 'output window, operand 0, single buffered']
    %16 = vsyncpa [#allocation4], 0
    %17 = vsyncpa [#allocation6], 0
    %18 = vsyncpa [#allocation3], 0
    // Predicated region
    $region2: #{network_forward.1} parent=1 // pred_check
      _
    $region3: #{network_forward.1} parent=1 // pred_check_branch
      %20 = sbr.rel (0) target = $region5
    $region4: #{network_forward.1} parent=1 // pred_region
      _
    $region5: #{network_forward.1} parent=1 // pred_fallthru
      _
    // Predicated region
    $region6: #{network_forward.1} parent=1 // pred_check
      _
    $region7: #{network_forward.1} parent=1 // pred_check_branch
      %22 = sbr.rel (0) target = $region9
    $region8: #{network_forward.1} parent=1 // pred_region
      _
    $region9: #{network_forward.1} parent=1 // pred_fallthru
      _
    // Predicated region
    $region10: #{network_forward.1} parent=1 // pred_check
      _
    $region11: #{network_forward.1} parent=1 // pred_check_branch
      %24 = sbr.rel (0) target = $region13
    $region12: #{network_forward.1} parent=1 // pred_region
      %s26 = ssub.s32 16, 16
      %27 = vsyncadd [#allocation4], %s26
      %s29 = sshll.u32 %s2, 4
      %s30 = int_to_ptr.vmem [resolvable:$true] %s29
      %32 = dma.vmem_to_smem %s30, 16, [#allocation2], [#allocation4]
    $region13: #{network_forward.1} parent=1 // pred_fallthru
      _
    // Predicated region
    $region14: #{network_forward.1} parent=1 // pred_check
      _
    $region15: #{network_forward.1} parent=1 // pred_check_branch
      %34 = sbr.rel (0) target = $region17
    $region16: #{network_forward.1} parent=1 // pred_region
      _
    $region17: #{network_forward.1} parent=1 // pred_fallthru
      _
    // Predicated region
    $region18: #{network_forward.1} parent=1 // pred_check
      _
    $region19: #{network_forward.1} parent=1 // pred_check_branch
      %36 = sbr.rel (0) target = $region21
    $region20: #{network_forward.1} parent=1 // pred_region
      %s38 = ssub.s32 16, 16
      %39 = vsyncadd [#allocation6], %s38
      %s41 = sshll.u32 %s4, 4
      %s42 = int_to_ptr.vmem [resolvable:$true] %s41
      %44 = dma.vmem_to_smem %s42, 16, [#allocation5], [#allocation6]
    $region21: #{network_forward.1} parent=1 // pred_fallthru
      _
    // Predicated region
    $region22: #{network_forward.1} parent=1 // pred_check
      _
    $region23: #{network_forward.1} parent=1 // pred_check_branch
      %46 = sbr.rel (0) target = $region25
    $region24: #{network_forward.1} parent=1 // pred_region
      _
    $region25: #{network_forward.1} parent=1 // pred_fallthru
      _
    // Predicated region
    $region26: #{network_forward.1} parent=1 // pred_check
      _
    $region27: #{network_forward.1} parent=1 // pred_check_branch
      %48 = sbr.rel (0) target = $region29
    $region28: #{network_forward.1} parent=1 // pred_region
      _
    $region29: #{network_forward.1} parent=1 // pred_fallthru
      _
    // Predicated region
    $region30: #{network_forward.1} parent=1 // pred_check
      _
    $region31: #{network_forward.1} parent=1 // pred_check_branch
      %50 = sbr.rel (0) target = $region33
    $region32: #{network_forward.1} parent=1 // pred_region
      _
    $region33: #{network_forward.1} parent=1 // pred_fallthru
      _
    // Predicated region
    $region34: #{network_forward.1} parent=1 // pred_check
      _
    $region35: #{network_forward.1} parent=1 // pred_check_branch
      %52 = sbr.rel (0) target = $region37
    $region36: #{network_forward.1} parent=1 // pred_region
      _
    $region37: #{network_forward.1} parent=1 // pred_fallthru
      _
    // Predicated region
    $region38: #{network_forward.1} parent=1 // pred_check
      _
    $region39: #{network_forward.1} parent=1 // pred_check_branch
      %54 = sbr.rel (0) target = $region41
    $region40: #{network_forward.1} parent=1 // pred_region
      _
    $region41: #{network_forward.1} parent=1 // pred_fallthru
      _
    // Predicated region
    $region42: #{network_forward.1} parent=1 // pred_check
      _
    $region43: #{network_forward.1} parent=1 // pred_check_branch
      %56 = sbr.rel (0) target = $region45
    $region44: #{network_forward.1} parent=1 // pred_region
      _
    $region45: #{network_forward.1} parent=1 // pred_fallthru
      _
    // Predicated region
    $region46: #{network_forward.1} parent=1 // pred_check
      _
    $region47: #{network_forward.1} parent=1 // pred_check_branch
      %58 = sbr.rel (0) target = $region49
    $region48: #{network_forward.1} parent=1 // pred_region
      %59 = dma.done [#allocation4], 16
    $region49: #{network_forward.1} parent=1 // pred_fallthru
      _
    // Predicated region
    $region50: #{network_forward.1} parent=1 // pred_check
      _
    $region51: #{network_forward.1} parent=1 // pred_check_branch
      %61 = sbr.rel (0) target = $region53
    $region52: #{network_forward.1} parent=1 // pred_region
      %62 = dma.done [#allocation6], 16
    $region53: #{network_forward.1} parent=1 // pred_fallthru
      _
    %63 = sfence
    %v64 = vld [vmem:[%s0] sm:$0xff]
    %v65 = vld [vmem:[%s0 + $0x8] sm:$0xff]
    %v66 = vld [vmem:[%s0 + $0x10] sm:$0xff]
    %v67 = vld [vmem:[%s0 + $0x18] sm:$0xf]
    %v68 = vld [vmem:[%s0 + $0x20] sm:$0xff]
    %v69 = vld [vmem:[%s0 + $0x28] sm:$0xff]
    %v70 = vld [vmem:[%s0 + $0x30] sm:$0xff]
    %v71 = vld [vmem:[%s0 + $0x38] sm:$0xf]
    %vm80 = vcmask 1046528
    %v81 = vrot.slane %v64, 1
    %v82 = vrot.slane %v65, 1
    %v83 = vsel %vm80, %v81, %v82
    %v84 = vrot.slane %v66, 1
    %v85 = vsel %vm80, %v82, %v84
    %v86 = vrot.slane %v67, 1
    %v87 = vsel %vm80, %v84, %v86
    %v88 = vrot.slane %v68, 1
    %v89 = vrot.slane %v69, 1
    %v90 = vsel %vm80, %v88, %v89
    %v91 = vrot.slane %v70, 1
    %v92 = vsel %vm80, %v89, %v91
    %v93 = vrot.slane %v71, 1
    %v94 = vsel %vm80, %v91, %v93
    %vm95 = vcmask 1045504
    %v96 = vrot.slane %v64, 2
    %v97 = vrot.slane %v65, 2
    %v98 = vsel %vm95, %v96, %v97
    %v99 = vrot.slane %v66, 2
    %v100 = vsel %vm95, %v97, %v99
    %v101 = vrot.slane %v67, 2
    %v102 = vsel %vm95, %v99, %v101
    %v103 = vrot.slane %v68, 2
    %v104 = vrot.slane %v69, 2
    %v105 = vsel %vm95, %v103, %v104
    %v106 = vrot.slane %v70, 2
    %v107 = vsel %vm95, %v104, %v106
    %v108 = vrot.slane %v71, 2
    %v109 = vsel %vm95, %v106, %v108
    %vm110 = vcmask 1044480
    %v111 = vrot.slane %v64, 3
    %v112 = vrot.slane %v65, 3
    %v113 = vsel %vm110, %v111, %v112
    %v114 = vrot.slane %v66, 3
    %v115 = vsel %vm110, %v112, %v114
    %v116 = vrot.slane %v67, 3
    %v117 = vsel %vm110, %v114, %v116
    %v118 = vrot.slane %v68, 3
    %v119 = vrot.slane %v69, 3
    %v120 = vsel %vm110, %v118, %v119
    %v121 = vrot.slane %v70, 3
    %v122 = vsel %vm110, %v119, %v121
    %v123 = vrot.slane %v71, 3
    %v124 = vsel %vm110, %v121, %v123
    %vm125 = vcmask 1043456
    %v126 = vrot.slane %v64, 4
    %v127 = vrot.slane %v65, 4
    %v128 = vsel %vm125, %v126, %v127
    %v129 = vrot.slane %v66, 4
    %v130 = vsel %vm125, %v127, %v129
    %v131 = vrot.slane %v67, 4
    %v132 = vsel %vm125, %v129, %v131
    %v133 = vrot.slane %v68, 4
    %v134 = vrot.slane %v69, 4
    %v135 = vsel %vm125, %v133, %v134
    %v136 = vrot.slane %v70, 4
    %v137 = vsel %vm125, %v134, %v136
    %v138 = vrot.slane %v71, 4
    %v139 = vsel %vm125, %v136, %v138
    %140 = vrot.lane.b32.xlu0 %v83, 28
    %v141 = vpop.permute.xlu0 %140
    %142 = vrot.lane.b32.xlu0 %v85, 28
    %v143 = vpop.permute.xlu0 %142
    %144 = vrot.lane.b32.xlu0 %v87, 28
    %v145 = vpop.permute.xlu0 %144
    %146 = vrot.lane.b32.xlu0 %v90, 28
    %v147 = vpop.permute.xlu0 %146
    %148 = vrot.lane.b32.xlu0 %v92, 28
    %v149 = vpop.permute.xlu0 %148
    %150 = vrot.lane.b32.xlu0 %v94, 28
    %v151 = vpop.permute.xlu0 %150
    %158 = vrot.lane.b32.xlu0 %v98, 56
    %v159 = vpop.permute.xlu0 %158
    %160 = vrot.lane.b32.xlu0 %v100, 56
    %v161 = vpop.permute.xlu0 %160
    %162 = vrot.lane.b32.xlu0 %v102, 56
    %v163 = vpop.permute.xlu0 %162
    %164 = vrot.lane.b32.xlu0 %v105, 56
    %v165 = vpop.permute.xlu0 %164
    %166 = vrot.lane.b32.xlu0 %v107, 56
    %v167 = vpop.permute.xlu0 %166
    %168 = vrot.lane.b32.xlu0 %v109, 56
    %v169 = vpop.permute.xlu0 %168
    %176 = vrot.lane.b32.xlu0 %v113, 84
    %v177 = vpop.permute.xlu0 %176
    %178 = vrot.lane.b32.xlu0 %v115, 84
    %v179 = vpop.permute.xlu0 %178
    %180 = vrot.lane.b32.xlu0 %v117, 84
    %v181 = vpop.permute.xlu0 %180
    %182 = vrot.lane.b32.xlu0 %v120, 84
    %v183 = vpop.permute.xlu0 %182
    %184 = vrot.lane.b32.xlu0 %v122, 84
    %v185 = vpop.permute.xlu0 %184
    %186 = vrot.lane.b32.xlu0 %v124, 84
    %v187 = vpop.permute.xlu0 %186
    %194 = vrot.lane.b32.xlu0 %v128, 112
    %v195 = vpop.permute.xlu0 %194
    %196 = vrot.lane.b32.xlu0 %v130, 112
    %v197 = vpop.permute.xlu0 %196
    %198 = vrot.lane.b32.xlu0 %v132, 112
    %v199 = vpop.permute.xlu0 %198
    %200 = vrot.lane.b32.xlu0 %v135, 112
    %v201 = vpop.permute.xlu0 %200
    %202 = vrot.lane.b32.xlu0 %v137, 112
    %v203 = vpop.permute.xlu0 %202
    %204 = vrot.lane.b32.xlu0 %v139, 112
    %v205 = vpop.permute.xlu0 %204
    %vm212 = vcmask 228352
    %v213 = vsel %vm212, %v64, %v141
    %v214 = vsel %vm212, %v65, %v143
    %v215 = vsel %vm212, %v66, %v145
    %v216 = vsel %vm212, %v68, %v147
    %v217 = vsel %vm212, %v69, %v149
    %v218 = vsel %vm212, %v70, %v151
    %vm219 = vcmask 457728
    %v220 = vsel %vm219, %v213, %v159
    %v221 = vsel %vm219, %v214, %v161
    %v222 = vsel %vm219, %v215, %v163
    %v223 = vsel %vm219, %v216, %v165
    %v224 = vsel %vm219, %v217, %v167
    %v225 = vsel %vm219, %v218, %v169
    %vm226 = vcmask 687104
    %v227 = vsel %vm226, %v220, %v177
    %v228 = vsel %vm226, %v221, %v179
    %v229 = vsel %vm226, %v222, %v181
    %v230 = vsel %vm226, %v223, %v183
    %v231 = vsel %vm226, %v224, %v185
    %v232 = vsel %vm226, %v225, %v187
    %vm233 = vcmask 916480
    %v234 = vsel %vm233, %v227, %v195
    %v235 = vsel %vm233, %v228, %v197
    %v236 = vsel %vm233, %v229, %v199
    %v237 = vsel %vm233, %v230, %v201
    %v238 = vsel %vm233, %v231, %v203
    %v239 = vsel %vm233, %v232, %v205
    %v240 = vld [vmem:[%s1] sm:$0xff]
    %v241 = vld [vmem:[%s1 + $0x8] sm:$0xff]
    %v242 = vld [vmem:[%s1 + $0x10] sm:$0xff]
    %v243 = vld [vmem:[%s1 + $0x18] sm:$0xff]
    %v244 = vld [vmem:[%s1 + $0x20] sm:$0xff]
    %v245 = vld [vmem:[%s1 + $0x28] sm:$0xff]
    %v246 = vld [vmem:[%s1 + $0x30] sm:$0xff]
    %v247 = vld [vmem:[%s1 + $0x38] sm:$0xff]
    %v248 = vld [vmem:[%s1 + $0x40] sm:$0xff]
    %v249 = vld [vmem:[%s1 + $0x48] sm:$0xff]
    %v250 = vld [vmem:[%s1 + $0x50] sm:$0xff]
    %v251 = vld [vmem:[%s1 + $0x58] sm:$0xff]
    %v252 = vld [vmem:[%s1 + $0x60] sm:$0xff]
    %v253 = vld [vmem:[%s1 + $0x68] sm:$0xff]
    %v254 = vld [vmem:[%s1 + $0x70] sm:$0xff]
    %v255 = vld [vmem:[%s1 + $0x78] sm:$0xff]
    %v256 = vld [vmem:[%s1 + $0x80] sm:$0xff]
    %v257 = vld [vmem:[%s1 + $0x88] sm:$0xf]
    %s258 = sld [smem:[#allocation2]]
    %v259 = vstv %s258
    %vm260 = vcmask 97280
    %v261 = vsel %vm260, %v195, 0
    %v263 = vsel %vm260, %v197, 0
    %v265 = vsel %vm260, %v199, 0
    %v267 = vsel %vm260, %v201, 0
    %v269 = vsel %vm260, %v203, 0
    %v271 = vsel %vm260, %v205, 0
    %v274 = vsel %vm125, %v257, 0
    %276 = vmatprep.subr.mxu0 0.0
    %277 = vmatpush1.msra.mxu0 %v240
    %278 = vmatprep.subr.mxu0 0.0
    %279 = vmatpush1.msra.mxu0 %v241
    %280 = vmatprep.subr.mxu0 0.0
    %281 = vmatpush1.msra.mxu0 %v242
    %282 = vmatprep.subr.mxu0 0.0
    %283 = vmatpush1.msra.mxu0 %v243
    %284 = vmatprep.subr.mxu0 0.0
    %285 = vmatpush1.msra.mxu0 %v244
    %286 = vmatprep.subr.mxu0 0.0
    %287 = vmatpush1.msra.mxu0 %v245
    %288 = vmatprep.subr.mxu0 0.0
    %289 = vmatpush1.msra.mxu0 %v246
    %290 = vmatprep.subr.mxu0 0.0
    %291 = vmatpush1.msra.mxu0 %v247
    %292 = vmatprep.subr.mxu0 0.0
    %293 = vmatpush1.msra.mxu0 %v248
    %294 = vmatprep.subr.mxu0 0.0
    %295 = vmatpush1.msra.mxu0 %v249
    %296 = vmatprep.subr.mxu0 0.0
    %297 = vmatpush1.msra.mxu0 %v250
    %298 = vmatprep.subr.mxu0 0.0
    %299 = vmatpush1.msra.mxu0 %v251
    %300 = vmatprep.subr.mxu0 0.0
    %301 = vmatpush1.msra.mxu0 %v252
    %302 = vmatprep.subr.mxu0 0.0
    %303 = vmatpush1.msra.mxu0 %v253
    %304 = vmatprep.subr.mxu0 0.0
    %305 = vmatpush1.msra.mxu0 %v254
    %306 = vmatprep.subr.mxu0 0.0
    %307 = vmatpush1.msra.mxu0 %v255
    %308 = vmatprep.subr.mxu0 0.0
    %309 = vmatpush1.msra.mxu0 %v256
    %310 = vmatprep.subr.mxu0 0.0
    %311 = vmatpush1.msra.mxu0 %v274
    %312 = vmatprep.subr.mxu0 0.0
    %313 = vmatpush1.msra.mxu0 0.0
    %314 = vmatprep.subr.mxu0 0.0
    %315 = vmatpush1.msra.mxu0 0.0
    %316 = vmatprep.subr.mxu0 0.0
    %317 = vmatpush1.msra.mxu0 0.0
    %318 = vmatprep.subr.mxu0 0.0
    %319 = vmatpush1.msra.mxu0 0.0
    %320 = vmatprep.subr.mxu0 0.0
    %321 = vmatpush1.msra.mxu0 0.0
    %322 = vmatprep.subr.mxu0 0.0
    %323 = vmatpush1.msra.mxu0 0.0
    %324 = vmatprep.subr.mxu0 0.0
    %325 = vmatpush1.msra.mxu0 0.0
    %326 = vmatprep.subr.mxu0 0.0
    %327 = vmatpush1.msra.mxu0 0.0
    %328 = vmatprep.subr.mxu0 0.0
    %329 = vmatpush1.msra.mxu0 0.0
    %330 = vmatprep.subr.mxu0 0.0
    %331 = vmatpush1.msra.mxu0 0.0
    %332 = vmatprep.subr.mxu0 0.0
    %333 = vmatpush1.msra.mxu0 0.0
    %334 = vmatprep.subr.mxu0 0.0
    %335 = vmatpush1.msra.mxu0 0.0
    %336 = vmatprep.subr.mxu0 0.0
    %337 = vmatpush1.msra.mxu0 0.0
    %338 = vmatprep.subr.mxu0 0.0
    %339 = vmatpush1.msra.mxu0 0.0
    %340 = vmatprep.mubr.f32.mxu0 %v261
    %341 = vmatmul.mubr.f32.gmra.mrb[0].mxu0 %v234
    %v342 = vpop.f32.mrb[0].mxu0
    %v343 = vadd.f32 %v259, %v342
    %v344 = vpop.f32.mrb[0].mxu0
    %345 = vmatprep.mubr.f32.mxu0 %v263
    %346 = vmatmul.mubr.f32.gmra.mrb[0].mxu0 %v235
    %v347 = vpop.f32.mrb[0].mxu0
    %v348 = vadd.f32 %v259, %v347
    %v349 = vpop.f32.mrb[0].mxu0
    %350 = vmatprep.mubr.f32.mxu0 %v265
    %351 = vmatmul.mubr.f32.gmra.mrb[0].mxu0 %v236
    %v352 = vpop.f32.mrb[0].mxu0
    %v353 = vadd.f32 %v259, %v352
    %v354 = vpop.f32.mrb[0].mxu0
    %355 = vmatprep.mubr.f32.mxu0 %v267
    %356 = vmatmul.mubr.f32.gmra.mrb[0].mxu0 %v237
    %v357 = vpop.f32.mrb[0].mxu0
    %v358 = vadd.f32 %v259, %v357
    %v359 = vpop.f32.mrb[0].mxu0
    %360 = vmatprep.mubr.f32.mxu0 %v269
    %361 = vmatmul.mubr.f32.gmra.mrb[0].mxu0 %v238
    %v362 = vpop.f32.mrb[0].mxu0
    %v363 = vadd.f32 %v259, %v362
    %v364 = vpop.f32.mrb[0].mxu0
    %365 = vmatprep.mubr.f32.mxu0 %v271
    %366 = vmatmul.mubr.f32.gmra.mrb[0].mxu0 %v239
    %v367 = vpop.f32.mrb[0].mxu0
    %v368 = vadd.f32 %v259, %v367
    %v369 = vpop.f32.mrb[0].mxu0
    %370 = vdwg.mxu0
    %v371 = vmax.f32 %v343, 0.0
    %v372 = vmax.f32 %v348, 0.0
    %v373 = vmax.f32 %v353, 0.0
    %v374 = vmax.f32 %v358, 0.0
    %v375 = vmax.f32 %v363, 0.0
    %v376 = vmax.f32 %v368, 0.0
    %s377 = scalar_lea.vmem %s1, 144
    %v378 = vld [vmem:[%s377] sm:$0xff]
    %v379 = vld [vmem:[%s377 + $0x8] sm:$0xff]
    %v380 = vld [vmem:[%s377 + $0x10] sm:$0xff]
    %v381 = vld [vmem:[%s377 + $0x18] sm:$0xff]
    %v382 = vld [vmem:[%s377 + $0x20] sm:$0xff]
    %v383 = vld [vmem:[%s377 + $0x28] sm:$0xff]
    %v384 = vld [vmem:[%s377 + $0x30] sm:$0xff]
    %v385 = vld [vmem:[%s377 + $0x38] sm:$0xff]
    %v386 = vld [vmem:[%s377 + $0x40] sm:$0xff]
    %v387 = vld [vmem:[%s377 + $0x48] sm:$0xff]
    %v388 = vld [vmem:[%s377 + $0x50] sm:$0xff]
    %v389 = vld [vmem:[%s377 + $0x58] sm:$0xff]
    %v390 = vld [vmem:[%s377 + $0x60] sm:$0xff]
    %v391 = vld [vmem:[%s377 + $0x68] sm:$0xff]
    %v392 = vld [vmem:[%s377 + $0x70] sm:$0xff]
    %v393 = vld [vmem:[%s377 + $0x78] sm:$0xff]
    %v394 = vld [vmem:[%s377 + $0x80] sm:$0xff]
    %v395 = vld [vmem:[%s377 + $0x88] sm:$0xf]
    %s396 = sld [smem:[#allocation2 + $0x1]]
    %v397 = vstv %s396
    %v399 = vsel %vm125, %v395, 0
    %401 = vmatprep.subr.mxu0 0.0
    %402 = vmatpush1.msra.mxu0 %v378
    %403 = vmatprep.subr.mxu0 0.0
    %404 = vmatpush1.msra.mxu0 %v379
    %405 = vmatprep.subr.mxu0 0.0
    %406 = vmatpush1.msra.mxu0 %v380
    %407 = vmatprep.subr.mxu0 0.0
    %408 = vmatpush1.msra.mxu0 %v381
    %409 = vmatprep.subr.mxu0 0.0
    %410 = vmatpush1.msra.mxu0 %v382
    %411 = vmatprep.subr.mxu0 0.0
    %412 = vmatpush1.msra.mxu0 %v383
    %413 = vmatprep.subr.mxu0 0.0
    %414 = vmatpush1.msra.mxu0 %v384
    %415 = vmatprep.subr.mxu0 0.0
    %416 = vmatpush1.msra.mxu0 %v385
    %417 = vmatprep.subr.mxu0 0.0
    %418 = vmatpush1.msra.mxu0 %v386
    %419 = vmatprep.subr.mxu0 0.0
    %420 = vmatpush1.msra.mxu0 %v387
    %421 = vmatprep.subr.mxu0 0.0
    %422 = vmatpush1.msra.mxu0 %v388
    %423 = vmatprep.subr.mxu0 0.0
    %424 = vmatpush1.msra.mxu0 %v389
    %425 = vmatprep.subr.mxu0 0.0
    %426 = vmatpush1.msra.mxu0 %v390
    %427 = vmatprep.subr.mxu0 0.0
    %428 = vmatpush1.msra.mxu0 %v391
    %429 = vmatprep.subr.mxu0 0.0
    %430 = vmatpush1.msra.mxu0 %v392
    %431 = vmatprep.subr.mxu0 0.0
    %432 = vmatpush1.msra.mxu0 %v393
    %433 = vmatprep.subr.mxu0 0.0
    %434 = vmatpush1.msra.mxu0 %v394
    %435 = vmatprep.subr.mxu0 0.0
    %436 = vmatpush1.msra.mxu0 %v399
    %437 = vmatprep.subr.mxu0 0.0
    %438 = vmatpush1.msra.mxu0 0.0
    %439 = vmatprep.subr.mxu0 0.0
    %440 = vmatpush1.msra.mxu0 0.0
    %441 = vmatprep.subr.mxu0 0.0
    %442 = vmatpush1.msra.mxu0 0.0
    %443 = vmatprep.subr.mxu0 0.0
    %444 = vmatpush1.msra.mxu0 0.0
    %445 = vmatprep.subr.mxu0 0.0
    %446 = vmatpush1.msra.mxu0 0.0
    %447 = vmatprep.subr.mxu0 0.0
    %448 = vmatpush1.msra.mxu0 0.0
    %449 = vmatprep.subr.mxu0 0.0
    %450 = vmatpush1.msra.mxu0 0.0
    %451 = vmatprep.subr.mxu0 0.0
    %452 = vmatpush1.msra.mxu0 0.0
    %453 = vmatprep.subr.mxu0 0.0
    %454 = vmatpush1.msra.mxu0 0.0
    %455 = vmatprep.subr.mxu0 0.0
    %456 = vmatpush1.msra.mxu0 0.0
    %457 = vmatprep.subr.mxu0 0.0
    %458 = vmatpush1.msra.mxu0 0.0
    %459 = vmatprep.subr.mxu0 0.0
    %460 = vmatpush1.msra.mxu0 0.0
    %461 = vmatprep.subr.mxu0 0.0
    %462 = vmatpush1.msra.mxu0 0.0
    %463 = vmatprep.subr.mxu0 0.0
    %464 = vmatpush1.msra.mxu0 0.0
    %465 = vmatprep.mubr.f32.mxu0 %v261
    %466 = vmatmul.mubr.f32.gmra.mrb[0].mxu0 %v234
    %v467 = vpop.f32.mrb[0].mxu0
    %v468 = vadd.f32 %v397, %v467
    %v469 = vpop.f32.mrb[0].mxu0
    %470 = vmatprep.mubr.f32.mxu0 %v263
    %471 = vmatmul.mubr.f32.gmra.mrb[0].mxu0 %v235
    %v472 = vpop.f32.mrb[0].mxu0
    %v473 = vadd.f32 %v397, %v472
    %v474 = vpop.f32.mrb[0].mxu0
    %475 = vmatprep.mubr.f32.mxu0 %v265
    %476 = vmatmul.mubr.f32.gmra.mrb[0].mxu0 %v236
    %v477 = vpop.f32.mrb[0].mxu0
    %v478 = vadd.f32 %v397, %v477
    %v479 = vpop.f32.mrb[0].mxu0
    %480 = vmatprep.mubr.f32.mxu0 %v267
    %481 = vmatmul.mubr.f32.gmra.mrb[0].mxu0 %v237
    %v482 = vpop.f32.mrb[0].mxu0
    %v483 = vadd.f32 %v397, %v482
    %v484 = vpop.f32.mrb[0].mxu0
    %485 = vmatprep.mubr.f32.mxu0 %v269
    %486 = vmatmul.mubr.f32.gmra.mrb[0].mxu0 %v238
    %v487 = vpop.f32.mrb[0].mxu0
    %v488 = vadd.f32 %v397, %v487
    %v489 = vpop.f32.mrb[0].mxu0
    %490 = vmatprep.mubr.f32.mxu0 %v271
    %491 = vmatmul.mubr.f32.gmra.mrb[0].mxu0 %v239
    %v492 = vpop.f32.mrb[0].mxu0
    %v493 = vadd.f32 %v397, %v492
    %v494 = vpop.f32.mrb[0].mxu0
    %495 = vdwg.mxu0
    %v496 = vmax.f32 %v468, 0.0
    %v497 = vmax.f32 %v473, 0.0
    %v498 = vmax.f32 %v478, 0.0
    %v499 = vmax.f32 %v483, 0.0
    %v500 = vmax.f32 %v488, 0.0
    %v501 = vmax.f32 %v493, 0.0
    %s502 = scalar_lea.vmem %s1, 288
    %v503 = vld [vmem:[%s502] sm:$0xff]
    %v504 = vld [vmem:[%s502 + $0x8] sm:$0xff]
    %v505 = vld [vmem:[%s502 + $0x10] sm:$0xff]
    %v506 = vld [vmem:[%s502 + $0x18] sm:$0xff]
    %v507 = vld [vmem:[%s502 + $0x20] sm:$0xff]
    %v508 = vld [vmem:[%s502 + $0x28] sm:$0xff]
    %v509 = vld [vmem:[%s502 + $0x30] sm:$0xff]
    %v510 = vld [vmem:[%s502 + $0x38] sm:$0xff]
    %v511 = vld [vmem:[%s502 + $0x40] sm:$0xff]
    %v512 = vld [vmem:[%s502 + $0x48] sm:$0xff]
    %v513 = vld [vmem:[%s502 + $0x50] sm:$0xff]
    %v514 = vld [vmem:[%s502 + $0x58] sm:$0xff]
    %v515 = vld [vmem:[%s502 + $0x60] sm:$0xff]
    %v516 = vld [vmem:[%s502 + $0x68] sm:$0xff]
    %v517 = vld [vmem:[%s502 + $0x70] sm:$0xff]
    %v518 = vld [vmem:[%s502 + $0x78] sm:$0xff]
    %v519 = vld [vmem:[%s502 + $0x80] sm:$0xff]
    %v520 = vld [vmem:[%s502 + $0x88] sm:$0xf]
    %s521 = sld [smem:[#allocation2 + $0x2]]
    %v522 = vstv %s521
    %v524 = vsel %vm125, %v520, 0
    %526 = vmatprep.subr.mxu0 0.0
    %527 = vmatpush1.msra.mxu0 %v503
    %528 = vmatprep.subr.mxu0 0.0
    %529 = vmatpush1.msra.mxu0 %v504
    %530 = vmatprep.subr.mxu0 0.0
    %531 = vmatpush1.msra.mxu0 %v505
    %532 = vmatprep.subr.mxu0 0.0
    %533 = vmatpush1.msra.mxu0 %v506
    %534 = vmatprep.subr.mxu0 0.0
    %535 = vmatpush1.msra.mxu0 %v507
    %536 = vmatprep.subr.mxu0 0.0
    %537 = vmatpush1.msra.mxu0 %v508
    %538 = vmatprep.subr.mxu0 0.0
    %539 = vmatpush1.msra.mxu0 %v509
    %540 = vmatprep.subr.mxu0 0.0
    %541 = vmatpush1.msra.mxu0 %v510
    %542 = vmatprep.subr.mxu0 0.0
    %543 = vmatpush1.msra.mxu0 %v511
    %544 = vmatprep.subr.mxu0 0.0
    %545 = vmatpush1.msra.mxu0 %v512
    %546 = vmatprep.subr.mxu0 0.0
    %547 = vmatpush1.msra.mxu0 %v513
    %548 = vmatprep.subr.mxu0 0.0
    %549 = vmatpush1.msra.mxu0 %v514
    %550 = vmatprep.subr.mxu0 0.0
    %551 = vmatpush1.msra.mxu0 %v515
    %552 = vmatprep.subr.mxu0 0.0
    %553 = vmatpush1.msra.mxu0 %v516
    %554 = vmatprep.subr.mxu0 0.0
    %555 = vmatpush1.msra.mxu0 %v517
    %556 = vmatprep.subr.mxu0 0.0
    %557 = vmatpush1.msra.mxu0 %v518
    %558 = vmatprep.subr.mxu0 0.0
    %559 = vmatpush1.msra.mxu0 %v519
    %560 = vmatprep.subr.mxu0 0.0
    %561 = vmatpush1.msra.mxu0 %v524
    %562 = vmatprep.subr.mxu0 0.0
    %563 = vmatpush1.msra.mxu0 0.0
    %564 = vmatprep.subr.mxu0 0.0
    %565 = vmatpush1.msra.mxu0 0.0
    %566 = vmatprep.subr.mxu0 0.0
    %567 = vmatpush1.msra.mxu0 0.0
    %568 = vmatprep.subr.mxu0 0.0
    %569 = vmatpush1.msra.mxu0 0.0
    %570 = vmatprep.subr.mxu0 0.0
    %571 = vmatpush1.msra.mxu0 0.0
    %572 = vmatprep.subr.mxu0 0.0
    %573 = vmatpush1.msra.mxu0 0.0
    %574 = vmatprep.subr.mxu0 0.0
    %575 = vmatpush1.msra.mxu0 0.0
    %576 = vmatprep.subr.mxu0 0.0
    %577 = vmatpush1.msra.mxu0 0.0
    %578 = vmatprep.subr.mxu0 0.0
    %579 = vmatpush1.msra.mxu0 0.0
    %580 = vmatprep.subr.mxu0 0.0
    %581 = vmatpush1.msra.mxu0 0.0
    %582 = vmatprep.subr.mxu0 0.0
    %583 = vmatpush1.msra.mxu0 0.0
    %584 = vmatprep.subr.mxu0 0.0
    %585 = vmatpush1.msra.mxu0 0.0
    %586 = vmatprep.subr.mxu0 0.0
    %587 = vmatpush1.msra.mxu0 0.0
    %588 = vmatprep.subr.mxu0 0.0
    %589 = vmatpush1.msra.mxu0 0.0
    %590 = vmatprep.mubr.f32.mxu0 %v261
    %591 = vmatmul.mubr.f32.gmra.mrb[0].mxu0 %v234
    %v592 = vpop.f32.mrb[0].mxu0
    %v593 = vadd.f32 %v522, %v592
    %v594 = vpop.f32.mrb[0].mxu0
    %595 = vmatprep.mubr.f32.mxu0 %v263
    %596 = vmatmul.mubr.f32.gmra.mrb[0].mxu0 %v235
    %v597 = vpop.f32.mrb[0].mxu0
    %v598 = vadd.f32 %v522, %v597
    %v599 = vpop.f32.mrb[0].mxu0
    %600 = vmatprep.mubr.f32.mxu0 %v265
    %601 = vmatmul.mubr.f32.gmra.mrb[0].mxu0 %v236
    %v602 = vpop.f32.mrb[0].mxu0
    %v603 = vadd.f32 %v522, %v602
    %v604 = vpop.f32.mrb[0].mxu0
    %605 = vmatprep.mubr.f32.mxu0 %v267
    %606 = vmatmul.mubr.f32.gmra.mrb[0].mxu0 %v237
    %v607 = vpop.f32.mrb[0].mxu0
    %v608 = vadd.f32 %v522, %v607
    %v609 = vpop.f32.mrb[0].mxu0
    %610 = vmatprep.mubr.f32.mxu0 %v269
    %611 = vmatmul.mubr.f32.gmra.mrb[0].mxu0 %v238
    %v612 = vpop.f32.mrb[0].mxu0
    %v613 = vadd.f32 %v522, %v612
    %v614 = vpop.f32.mrb[0].mxu0
    %615 = vmatprep.mubr.f32.mxu0 %v271
    %616 = vmatmul.mubr.f32.gmra.mrb[0].mxu0 %v239
    %v617 = vpop.f32.mrb[0].mxu0
    %v618 = vadd.f32 %v522, %v617
    %v619 = vpop.f32.mrb[0].mxu0
    %620 = vdwg.mxu0
    %v621 = vmax.f32 %v593, 0.0
    %v622 = vmax.f32 %v598, 0.0
    %v623 = vmax.f32 %v603, 0.0
    %v624 = vmax.f32 %v608, 0.0
    %v625 = vmax.f32 %v613, 0.0
    %v626 = vmax.f32 %v618, 0.0
    %s627 = scalar_lea.vmem %s1, 432
    %v628 = vld [vmem:[%s627] sm:$0xff]
    %v629 = vld [vmem:[%s627 + $0x8] sm:$0xff]
    %v630 = vld [vmem:[%s627 + $0x10] sm:$0xff]
    %v631 = vld [vmem:[%s627 + $0x18] sm:$0xff]
    %v632 = vld [vmem:[%s627 + $0x20] sm:$0xff]
    %v633 = vld [vmem:[%s627 + $0x28] sm:$0xff]
    %v634 = vld [vmem:[%s627 + $0x30] sm:$0xff]
    %v635 = vld [vmem:[%s627 + $0x38] sm:$0xff]
    %v636 = vld [vmem:[%s627 + $0x40] sm:$0xff]
    %v637 = vld [vmem:[%s627 + $0x48] sm:$0xff]
    %v638 = vld [vmem:[%s627 + $0x50] sm:$0xff]
    %v639 = vld [vmem:[%s627 + $0x58] sm:$0xff]
    %v640 = vld [vmem:[%s627 + $0x60] sm:$0xff]
    %v641 = vld [vmem:[%s627 + $0x68] sm:$0xff]
    %v642 = vld [vmem:[%s627 + $0x70] sm:$0xff]
    %v643 = vld [vmem:[%s627 + $0x78] sm:$0xff]
    %v644 = vld [vmem:[%s627 + $0x80] sm:$0xff]
    %v645 = vld [vmem:[%s627 + $0x88] sm:$0xf]
    %s646 = sld [smem:[#allocation2 + $0x3]]
    %v647 = vstv %s646
    %v649 = vsel %vm125, %v645, 0
    %651 = vmatprep.subr.mxu0 0.0
    %652 = vmatpush1.msra.mxu0 %v628
    %653 = vmatprep.subr.mxu0 0.0
    %654 = vmatpush1.msra.mxu0 %v629
    %655 = vmatprep.subr.mxu0 0.0
    %656 = vmatpush1.msra.mxu0 %v630
    %657 = vmatprep.subr.mxu0 0.0
    %658 = vmatpush1.msra.mxu0 %v631
    %659 = vmatprep.subr.mxu0 0.0
    %660 = vmatpush1.msra.mxu0 %v632
    %661 = vmatprep.subr.mxu0 0.0
    %662 = vmatpush1.msra.mxu0 %v633
    %663 = vmatprep.subr.mxu0 0.0
    %664 = vmatpush1.msra.mxu0 %v634
    %665 = vmatprep.subr.mxu0 0.0
    %666 = vmatpush1.msra.mxu0 %v635
    %667 = vmatprep.subr.mxu0 0.0
    %668 = vmatpush1.msra.mxu0 %v636
    %669 = vmatprep.subr.mxu0 0.0
    %670 = vmatpush1.msra.mxu0 %v637
    %671 = vmatprep.subr.mxu0 0.0
    %672 = vmatpush1.msra.mxu0 %v638
    %673 = vmatprep.subr.mxu0 0.0
    %674 = vmatpush1.msra.mxu0 %v639
    %675 = vmatprep.subr.mxu0 0.0
    %676 = vmatpush1.msra.mxu0 %v640
    %677 = vmatprep.subr.mxu0 0.0
    %678 = vmatpush1.msra.mxu0 %v641
    %679 = vmatprep.subr.mxu0 0.0
    %680 = vmatpush1.msra.mxu0 %v642
    %681 = vmatprep.subr.mxu0 0.0
    %682 = vmatpush1.msra.mxu0 %v643
    %683 = vmatprep.subr.mxu0 0.0
    %684 = vmatpush1.msra.mxu0 %v644
    %685 = vmatprep.subr.mxu0 0.0
    %686 = vmatpush1.msra.mxu0 %v649
    %687 = vmatprep.subr.mxu0 0.0
    %688 = vmatpush1.msra.mxu0 0.0
    %689 = vmatprep.subr.mxu0 0.0
    %690 = vmatpush1.msra.mxu0 0.0
    %691 = vmatprep.subr.mxu0 0.0
    %692 = vmatpush1.msra.mxu0 0.0
    %693 = vmatprep.subr.mxu0 0.0
    %694 = vmatpush1.msra.mxu0 0.0
    %695 = vmatprep.subr.mxu0 0.0
    %696 = vmatpush1.msra.mxu0 0.0
    %697 = vmatprep.subr.mxu0 0.0
    %698 = vmatpush1.msra.mxu0 0.0
    %699 = vmatprep.subr.mxu0 0.0
    %700 = vmatpush1.msra.mxu0 0.0
    %701 = vmatprep.subr.mxu0 0.0
    %702 = vmatpush1.msra.mxu0 0.0
    %703 = vmatprep.subr.mxu0 0.0
    %704 = vmatpush1.msra.mxu0 0.0
    %705 = vmatprep.subr.mxu0 0.0
    %706 = vmatpush1.msra.mxu0 0.0
    %707 = vmatprep.subr.mxu0 0.0
    %708 = vmatpush1.msra.mxu0 0.0
    %709 = vmatprep.subr.mxu0 0.0
    %710 = vmatpush1.msra.mxu0 0.0
    %711 = vmatprep.subr.mxu0 0.0
    %712 = vmatpush1.msra.mxu0 0.0
    %713 = vmatprep.subr.mxu0 0.0
    %714 = vmatpush1.msra.mxu0 0.0
    %715 = vmatprep.mubr.f32.mxu0 %v261
    %716 = vmatmul.mubr.f32.gmra.mrb[0].mxu0 %v234
    %v717 = vpop.f32.mrb[0].mxu0
    %v718 = vadd.f32 %v647, %v717
    %v719 = vpop.f32.mrb[0].mxu0
    %720 = vmatprep.mubr.f32.mxu0 %v263
    %721 = vmatmul.mubr.f32.gmra.mrb[0].mxu0 %v235
    %v722 = vpop.f32.mrb[0].mxu0
    %v723 = vadd.f32 %v647, %v722
    %v724 = vpop.f32.mrb[0].mxu0
    %725 = vmatprep.mubr.f32.mxu0 %v265
    %726 = vmatmul.mubr.f32.gmra.mrb[0].mxu0 %v236
    %v727 = vpop.f32.mrb[0].mxu0
    %v728 = vadd.f32 %v647, %v727
    %v729 = vpop.f32.mrb[0].mxu0
    %730 = vmatprep.mubr.f32.mxu0 %v267
    %731 = vmatmul.mubr.f32.gmra.mrb[0].mxu0 %v237
    %v732 = vpop.f32.mrb[0].mxu0
    %v733 = vadd.f32 %v647, %v732
    %v734 = vpop.f32.mrb[0].mxu0
    %735 = vmatprep.mubr.f32.mxu0 %v269
    %736 = vmatmul.mubr.f32.gmra.mrb[0].mxu0 %v238
    %v737 = vpop.f32.mrb[0].mxu0
    %v738 = vadd.f32 %v647, %v737
    %v739 = vpop.f32.mrb[0].mxu0
    %740 = vmatprep.mubr.f32.mxu0 %v271
    %741 = vmatmul.mubr.f32.gmra.mrb[0].mxu0 %v239
    %v742 = vpop.f32.mrb[0].mxu0
    %v743 = vadd.f32 %v647, %v742
    %v744 = vpop.f32.mrb[0].mxu0
    %745 = vdwg.mxu0
    %v746 = vmax.f32 %v718, 0.0
    %v747 = vmax.f32 %v723, 0.0
    %v748 = vmax.f32 %v728, 0.0
    %v749 = vmax.f32 %v733, 0.0
    %v750 = vmax.f32 %v738, 0.0
    %v751 = vmax.f32 %v743, 0.0
    %s752 = scalar_lea.vmem %s1, 576
    %v753 = vld [vmem:[%s752] sm:$0xff]
    %v754 = vld [vmem:[%s752 + $0x8] sm:$0xff]
    %v755 = vld [vmem:[%s752 + $0x10] sm:$0xff]
    %v756 = vld [vmem:[%s752 + $0x18] sm:$0xff]
    %v757 = vld [vmem:[%s752 + $0x20] sm:$0xff]
    %v758 = vld [vmem:[%s752 + $0x28] sm:$0xff]
    %v759 = vld [vmem:[%s752 + $0x30] sm:$0xff]
    %v760 = vld [vmem:[%s752 + $0x38] sm:$0xff]
    %v761 = vld [vmem:[%s752 + $0x40] sm:$0xff]
    %v762 = vld [vmem:[%s752 + $0x48] sm:$0xff]
    %v763 = vld [vmem:[%s752 + $0x50] sm:$0xff]
    %v764 = vld [vmem:[%s752 + $0x58] sm:$0xff]
    %v765 = vld [vmem:[%s752 + $0x60] sm:$0xff]
    %v766 = vld [vmem:[%s752 + $0x68] sm:$0xff]
    %v767 = vld [vmem:[%s752 + $0x70] sm:$0xff]
    %v768 = vld [vmem:[%s752 + $0x78] sm:$0xff]
    %v769 = vld [vmem:[%s752 + $0x80] sm:$0xff]
    %v770 = vld [vmem:[%s752 + $0x88] sm:$0xf]
    %s771 = sld [smem:[#allocation2 + $0x4]]
    %v772 = vstv %s771
    %v774 = vsel %vm125, %v770, 0
    %776 = vmatprep.subr.mxu0 0.0
    %777 = vmatpush1.msra.mxu0 %v753
    %778 = vmatprep.subr.mxu0 0.0
    %779 = vmatpush1.msra.mxu0 %v754
    %780 = vmatprep.subr.mxu0 0.0
    %781 = vmatpush1.msra.mxu0 %v755
    %782 = vmatprep.subr.mxu0 0.0
    %783 = vmatpush1.msra.mxu0 %v756
    %784 = vmatprep.subr.mxu0 0.0
    %785 = vmatpush1.msra.mxu0 %v757
    %786 = vmatprep.subr.mxu0 0.0
    %787 = vmatpush1.msra.mxu0 %v758
    %788 = vmatprep.subr.mxu0 0.0
    %789 = vmatpush1.msra.mxu0 %v759
    %790 = vmatprep.subr.mxu0 0.0
    %791 = vmatpush1.msra.mxu0 %v760
    %792 = vmatprep.subr.mxu0 0.0
    %793 = vmatpush1.msra.mxu0 %v761
    %794 = vmatprep.subr.mxu0 0.0
    %795 = vmatpush1.msra.mxu0 %v762
    %796 = vmatprep.subr.mxu0 0.0
    %797 = vmatpush1.msra.mxu0 %v763
    %798 = vmatprep.subr.mxu0 0.0
    %799 = vmatpush1.msra.mxu0 %v764
    %800 = vmatprep.subr.mxu0 0.0
    %801 = vmatpush1.msra.mxu0 %v765
    %802 = vmatprep.subr.mxu0 0.0
    %803 = vmatpush1.msra.mxu0 %v766
    %804 = vmatprep.subr.mxu0 0.0
    %805 = vmatpush1.msra.mxu0 %v767
    %806 = vmatprep.subr.mxu0 0.0
    %807 = vmatpush1.msra.mxu0 %v768
    %808 = vmatprep.subr.mxu0 0.0
    %809 = vmatpush1.msra.mxu0 %v769
    %810 = vmatprep.subr.mxu0 0.0
    %811 = vmatpush1.msra.mxu0 %v774
    %812 = vmatprep.subr.mxu0 0.0
    %813 = vmatpush1.msra.mxu0 0.0
    %814 = vmatprep.subr.mxu0 0.0
    %815 = vmatpush1.msra.mxu0 0.0
    %816 = vmatprep.subr.mxu0 0.0
    %817 = vmatpush1.msra.mxu0 0.0
    %818 = vmatprep.subr.mxu0 0.0
    %819 = vmatpush1.msra.mxu0 0.0
    %820 = vmatprep.subr.mxu0 0.0
    %821 = vmatpush1.msra.mxu0 0.0
    %822 = vmatprep.subr.mxu0 0.0
    %823 = vmatpush1.msra.mxu0 0.0
    %824 = vmatprep.subr.mxu0 0.0
    %825 = vmatpush1.msra.mxu0 0.0
    %826 = vmatprep.subr.mxu0 0.0
    %827 = vmatpush1.msra.mxu0 0.0
    %828 = vmatprep.subr.mxu0 0.0
    %829 = vmatpush1.msra.mxu0 0.0
    %830 = vmatprep.subr.mxu0 0.0
    %831 = vmatpush1.msra.mxu0 0.0
    %832 = vmatprep.subr.mxu0 0.0
    %833 = vmatpush1.msra.mxu0 0.0
    %834 = vmatprep.subr.mxu0 0.0
    %835 = vmatpush1.msra.mxu0 0.0
    %836 = vmatprep.subr.mxu0 0.0
    %837 = vmatpush1.msra.mxu0 0.0
    %838 = vmatprep.subr.mxu0 0.0
    %839 = vmatpush1.msra.mxu0 0.0
    %840 = vmatprep.mubr.f32.mxu0 %v261
    %841 = vmatmul.mubr.f32.gmra.mrb[0].mxu0 %v234
    %v842 = vpop.f32.mrb[0].mxu0
    %v843 = vadd.f32 %v772, %v842
    %v844 = vpop.f32.mrb[0].mxu0
    %845 = vmatprep.mubr.f32.mxu0 %v263
    %846 = vmatmul.mubr.f32.gmra.mrb[0].mxu0 %v235
    %v847 = vpop.f32.mrb[0].mxu0
    %v848 = vadd.f32 %v772, %v847
    %v849 = vpop.f32.mrb[0].mxu0
    %850 = vmatprep.mubr.f32.mxu0 %v265
    %851 = vmatmul.mubr.f32.gmra.mrb[0].mxu0 %v236
    %v852 = vpop.f32.mrb[0].mxu0
    %v853 = vadd.f32 %v772, %v852
    %v854 = vpop.f32.mrb[0].mxu0
    %855 = vmatprep.mubr.f32.mxu0 %v267
    %856 = vmatmul.mubr.f32.gmra.mrb[0].mxu0 %v237
    %v857 = vpop.f32.mrb[0].mxu0
    %v858 = vadd.f32 %v772, %v857
    %v859 = vpop.f32.mrb[0].mxu0
    %860 = vmatprep.mubr.f32.mxu0 %v269
    %861 = vmatmul.mubr.f32.gmra.mrb[0].mxu0 %v238
    %v862 = vpop.f32.mrb[0].mxu0
    %v863 = vadd.f32 %v772, %v862
    %v864 = vpop.f32.mrb[0].mxu0
    %865 = vmatprep.mubr.f32.mxu0 %v271
    %866 = vmatmul.mubr.f32.gmra.mrb[0].mxu0 %v239
    %v867 = vpop.f32.mrb[0].mxu0
    %v868 = vadd.f32 %v772, %v867
    %v869 = vpop.f32.mrb[0].mxu0
    %870 = vdwg.mxu0
    %v871 = vmax.f32 %v843, 0.0
    %v872 = vmax.f32 %v848, 0.0
    %v873 = vmax.f32 %v853, 0.0
    %v874 = vmax.f32 %v858, 0.0
    %v875 = vmax.f32 %v863, 0.0
    %v876 = vmax.f32 %v868, 0.0
    %s877 = scalar_lea.vmem %s1, 720
    %v878 = vld [vmem:[%s877] sm:$0xff]
    %v879 = vld [vmem:[%s877 + $0x8] sm:$0xff]
    %v880 = vld [vmem:[%s877 + $0x10] sm:$0xff]
    %v881 = vld [vmem:[%s877 + $0x18] sm:$0xff]
    %v882 = vld [vmem:[%s877 + $0x20] sm:$0xff]
    %v883 = vld [vmem:[%s877 + $0x28] sm:$0xff]
    %v884 = vld [vmem:[%s877 + $0x30] sm:$0xff]
    %v885 = vld [vmem:[%s877 + $0x38] sm:$0xff]
    %v886 = vld [vmem:[%s877 + $0x40] sm:$0xff]
    %v887 = vld [vmem:[%s877 + $0x48] sm:$0xff]
    %v888 = vld [vmem:[%s877 + $0x50] sm:$0xff]
    %v889 = vld [vmem:[%s877 + $0x58] sm:$0xff]
    %v890 = vld [vmem:[%s877 + $0x60] sm:$0xff]
    %v891 = vld [vmem:[%s877 + $0x68] sm:$0xff]
    %v892 = vld [vmem:[%s877 + $0x70] sm:$0xff]
    %v893 = vld [vmem:[%s877 + $0x78] sm:$0xff]
    %v894 = vld [vmem:[%s877 + $0x80] sm:$0xff]
    %v895 = vld [vmem:[%s877 + $0x88] sm:$0xf]
    %s896 = sld [smem:[#allocation2 + $0x5]]
    %v897 = vstv %s896
    %v899 = vsel %vm125, %v895, 0
    %901 = vmatprep.subr.mxu0 0.0
    %902 = vmatpush1.msra.mxu0 %v878
    %903 = vmatprep.subr.mxu0 0.0
    %904 = vmatpush1.msra.mxu0 %v879
    %905 = vmatprep.subr.mxu0 0.0
    %906 = vmatpush1.msra.mxu0 %v880
    %907 = vmatprep.subr.mxu0 0.0
    %908 = vmatpush1.msra.mxu0 %v881
    %909 = vmatprep.subr.mxu0 0.0
    %910 = vmatpush1.msra.mxu0 %v882
    %911 = vmatprep.subr.mxu0 0.0
    %912 = vmatpush1.msra.mxu0 %v883
    %913 = vmatprep.subr.mxu0 0.0
    %914 = vmatpush1.msra.mxu0 %v884
    %915 = vmatprep.subr.mxu0 0.0
    %916 = vmatpush1.msra.mxu0 %v885
    %917 = vmatprep.subr.mxu0 0.0
    %918 = vmatpush1.msra.mxu0 %v886
    %919 = vmatprep.subr.mxu0 0.0
    %920 = vmatpush1.msra.mxu0 %v887
    %921 = vmatprep.subr.mxu0 0.0
    %922 = vmatpush1.msra.mxu0 %v888
    %923 = vmatprep.subr.mxu0 0.0
    %924 = vmatpush1.msra.mxu0 %v889
    %925 = vmatprep.subr.mxu0 0.0
    %926 = vmatpush1.msra.mxu0 %v890
    %927 = vmatprep.subr.mxu0 0.0
    %928 = vmatpush1.msra.mxu0 %v891
    %929 = vmatprep.subr.mxu0 0.0
    %930 = vmatpush1.msra.mxu0 %v892
    %931 = vmatprep.subr.mxu0 0.0
    %932 = vmatpush1.msra.mxu0 %v893
    %933 = vmatprep.subr.mxu0 0.0
    %934 = vmatpush1.msra.mxu0 %v894
    %935 = vmatprep.subr.mxu0 0.0
    %936 = vmatpush1.msra.mxu0 %v899
    %937 = vmatprep.subr.mxu0 0.0
    %938 = vmatpush1.msra.mxu0 0.0
    %939 = vmatprep.subr.mxu0 0.0
    %940 = vmatpush1.msra.mxu0 0.0
    %941 = vmatprep.subr.mxu0 0.0
    %942 = vmatpush1.msra.mxu0 0.0
    %943 = vmatprep.subr.mxu0 0.0
    %944 = vmatpush1.msra.mxu0 0.0
    %945 = vmatprep.subr.mxu0 0.0
    %946 = vmatpush1.msra.mxu0 0.0
    %947 = vmatprep.subr.mxu0 0.0
    %948 = vmatpush1.msra.mxu0 0.0
    %949 = vmatprep.subr.mxu0 0.0
    %950 = vmatpush1.msra.mxu0 0.0
    %951 = vmatprep.subr.mxu0 0.0
    %952 = vmatpush1.msra.mxu0 0.0
    %953 = vmatprep.subr.mxu0 0.0
    %954 = vmatpush1.msra.mxu0 0.0
    %955 = vmatprep.subr.mxu0 0.0
    %956 = vmatpush1.msra.mxu0 0.0
    %957 = vmatprep.subr.mxu0 0.0
    %958 = vmatpush1.msra.mxu0 0.0
    %959 = vmatprep.subr.mxu0 0.0
    %960 = vmatpush1.msra.mxu0 0.0
    %961 = vmatprep.subr.mxu0 0.0
    %962 = vmatpush1.msra.mxu0 0.0
    %963 = vmatprep.subr.mxu0 0.0
    %964 = vmatpush1.msra.mxu0 0.0
    %965 = vmatprep.mubr.f32.mxu0 %v261
    %966 = vmatmul.mubr.f32.gmra.mrb[0].mxu0 %v234
    %v967 = vpop.f32.mrb[0].mxu0
    %v968 = vadd.f32 %v897, %v967
    %v969 = vpop.f32.mrb[0].mxu0
    %970 = vmatprep.mubr.f32.mxu0 %v263
    %971 = vmatmul.mubr.f32.gmra.mrb[0].mxu0 %v235
    %v972 = vpop.f32.mrb[0].mxu0
    %v973 = vadd.f32 %v897, %v972
    %v974 = vpop.f32.mrb[0].mxu0
    %975 = vmatprep.mubr.f32.mxu0 %v265
    %976 = vmatmul.mubr.f32.gmra.mrb[0].mxu0 %v236
    %v977 = vpop.f32.mrb[0].mxu0
    %v978 = vadd.f32 %v897, %v977
    %v979 = vpop.f32.mrb[0].mxu0
    %980 = vmatprep.mubr.f32.mxu0 %v267
    %981 = vmatmul.mubr.f32.gmra.mrb[0].mxu0 %v237
    %v982 = vpop.f32.mrb[0].mxu0
    %v983 = vadd.f32 %v897, %v982
    %v984 = vpop.f32.mrb[0].mxu0
    %985 = vmatprep.mubr.f32.mxu0 %v269
    %986 = vmatmul.mubr.f32.gmra.mrb[0].mxu0 %v238
    %v987 = vpop.f32.mrb[0].mxu0
    %v988 = vadd.f32 %v897, %v987
    %v989 = vpop.f32.mrb[0].mxu0
    %990 = vmatprep.mubr.f32.mxu0 %v271
    %991 = vmatmul.mubr.f32.gmra.mrb[0].mxu0 %v239
    %v992 = vpop.f32.mrb[0].mxu0
    %v993 = vadd.f32 %v897, %v992
    %v994 = vpop.f32.mrb[0].mxu0
    %995 = vdwg.mxu0
    %v996 = vmax.f32 %v968, 0.0
    %v997 = vmax.f32 %v973, 0.0
    %v998 = vmax.f32 %v978, 0.0
    %v999 = vmax.f32 %v983, 0.0
    %v1000 = vmax.f32 %v988, 0.0
    %v1001 = vmax.f32 %v993, 0.0
    %v1002 = vlaneseq
    %v1003 = vshrl.u32 %v1002, 7
    %v1004 = vadd.s32 %v1003, 8
    %v1005 = vadd.s32 %v1003, 16
    %v1006 = vlaneseq
    %v1007 = vand.u32 %v1006, 127
    %v1008 = vmul.u32 %v1007, 2
    %vm1009 = vcmp.eq.s32.totalorder %v1003, %v1008
    %vm1010 = vcmp.eq.s32.totalorder %v1004, %v1008
    %vm1011 = vcmp.eq.s32.totalorder %v1005, %v1008
    %v1012 = vsel %vm1009, 1, 0
    %v1013 = vsel %vm1010, 1, 0
    %v1014 = vsel %vm1011, 1, 0
    %v1015 = vcvt.s32.f32 %v1012
    %v1016 = vcvt.s32.f32 %v1013
    %v1017 = vcvt.s32.f32 %v1014
    %v1018 = vadd.s32 %v1008, 1
    %vm1019 = vcmp.eq.s32.totalorder %v1003, %v1018
    %vm1020 = vcmp.eq.s32.totalorder %v1004, %v1018
    %vm1021 = vcmp.eq.s32.totalorder %v1005, %v1018
    %v1022 = vsel %vm1019, 1, 0
    %v1023 = vsel %vm1020, 1, 0
    %v1024 = vsel %vm1021, 1, 0
    %v1025 = vcvt.s32.f32 %v1022
    %v1026 = vcvt.s32.f32 %v1023
    %v1027 = vcvt.s32.f32 %v1024
    %v1028 = vmul.u32 %v1003, 2
    %v1029 = vmul.u32 %v1004, 2
    %v1030 = vmul.u32 %v1005, 2
    %vm1031 = vcmp.eq.s32.totalorder %v1007, %v1028
    %vm1032 = vcmp.eq.s32.totalorder %v1007, %v1029
    %vm1033 = vcmp.eq.s32.totalorder %v1007, %v1030
    %v1034 = vsel %vm1031, 1, 0
    %v1035 = vsel %vm1032, 1, 0
    %v1036 = vsel %vm1033, 1, 0
    %v1037 = vcvt.s32.f32 %v1034
    %v1038 = vcvt.s32.f32 %v1035
    %v1039 = vcvt.s32.f32 %v1036
    %v1040 = vadd.s32 %v1028, 1
    %v1041 = vadd.s32 %v1029, 1
    %v1042 = vadd.s32 %v1030, 1
    %vm1043 = vcmp.eq.s32.totalorder %v1007, %v1040
    %vm1044 = vcmp.eq.s32.totalorder %v1007, %v1041
    %vm1045 = vcmp.eq.s32.totalorder %v1007, %v1042
    %v1046 = vsel %vm1043, 1, 0
    %v1047 = vsel %vm1044, 1, 0
    %v1048 = vsel %vm1045, 1, 0
    %v1049 = vcvt.s32.f32 %v1046
    %v1050 = vcvt.s32.f32 %v1047
    %v1051 = vcvt.s32.f32 %v1048
    %vm1052 = vcmask 195584
    %v1054 = vsel %vm1052, %v371, 0
    %v1057 = vsel %vm1052, %v372, 0
    %v1060 = vsel %vm1052, %v373, 0
    %v1063 = vsel %vm1052, %v374, 0
    %v1066 = vsel %vm1052, %v375, 0
    %v1069 = vsel %vm1052, %v376, 0
    %1071 = vmatprep.subr.mxu0 0.0
    %1072 = vmatpush1.msra.mxu0 %v1015
    %1073 = vmatprep.subr.mxu0 0.0
    %1074 = vmatpush1.msra.mxu0 %v1016
    %1075 = vmatprep.subr.mxu0 0.0
    %1076 = vmatpush1.msra.mxu0 %v1017
    %1077 = vmatprep.subr.mxu0 0.0
    %1078 = vmatpush1.msra.mxu0 0.0
    %1079 = vmatprep.subr.mxu0 0.0
    %1080 = vmatpush1.msra.mxu0 0.0
    %1081 = vmatprep.subr.mxu0 0.0
    %1082 = vmatpush1.msra.mxu0 0.0
    %1083 = vmatprep.subr.mxu0 0.0
    %1084 = vmatpush1.msra.mxu0 0.0
    %1085 = vmatprep.subr.mxu0 0.0
    %1086 = vmatpush1.msra.mxu0 0.0
    %1087 = vmatprep.subr.mxu0 0.0
    %1088 = vmatpush1.msra.mxu0 0.0
    %1089 = vmatprep.subr.mxu0 0.0
    %1090 = vmatpush1.msra.mxu0 0.0
    %1091 = vmatprep.subr.mxu0 0.0
    %1092 = vmatpush1.msra.mxu0 0.0
    %1093 = vmatprep.subr.mxu0 0.0
    %1094 = vmatpush1.msra.mxu0 0.0
    %1095 = vmatprep.subr.mxu0 0.0
    %1096 = vmatpush1.msra.mxu0 0.0
    %1097 = vmatprep.subr.mxu0 0.0
    %1098 = vmatpush1.msra.mxu0 0.0
    %1099 = vmatprep.subr.mxu0 0.0
    %1100 = vmatpush1.msra.mxu0 0.0
    %1101 = vmatprep.subr.mxu0 0.0
    %1102 = vmatpush1.msra.mxu0 0.0
    %1103 = vmatprep.subr.mxu0 0.0
    %1104 = vmatpush1.msra.mxu0 0.0
    %1105 = vmatprep.subr.mxu0 0.0
    %1106 = vmatpush1.msra.mxu0 0.0
    %1107 = vmatprep.subr.mxu0 0.0
    %1108 = vmatpush1.msra.mxu0 0.0
    %1109 = vmatprep.subr.mxu0 0.0
    %1110 = vmatpush1.msra.mxu0 0.0
    %1111 = vmatprep.subr.mxu0 0.0
    %1112 = vmatpush1.msra.mxu0 0.0
    %1113 = vmatprep.subr.mxu0 0.0
    %1114 = vmatpush1.msra.mxu0 0.0
    %1115 = vmatprep.subr.mxu0 0.0
    %1116 = vmatpush1.msra.mxu0 0.0
    %1117 = vmatprep.subr.mxu0 0.0
    %1118 = vmatpush1.msra.mxu0 0.0
    %1119 = vmatprep.subr.mxu0 0.0
    %1120 = vmatpush1.msra.mxu0 0.0
    %1121 = vmatprep.subr.mxu0 0.0
    %1122 = vmatpush1.msra.mxu0 0.0
    %1123 = vmatprep.subr.mxu0 0.0
    %1124 = vmatpush1.msra.mxu0 0.0
    %1125 = vmatprep.subr.mxu0 0.0
    %1126 = vmatpush1.msra.mxu0 0.0
    %1127 = vmatprep.subr.mxu0 0.0
    %1128 = vmatpush1.msra.mxu0 0.0
    %1129 = vmatprep.subr.mxu0 0.0
    %1130 = vmatpush1.msra.mxu0 0.0
    %1131 = vmatprep.subr.mxu0 0.0
    %1132 = vmatpush1.msra.mxu0 0.0
    %1133 = vmatprep.subr.mxu0 0.0
    %1134 = vmatpush1.msra.mxu0 0.0
    %1135 = vmatprep.mubr.f32.mxu0 0.0
    %1136 = vmatmul.mubr.f32.gmra.mrb[0].mxu0 %v1054
    %v1137 = vpop.f32.mrb[0].mxu0
    %v1138 = vadd.f32 0.0, %v1137
    %v1139 = vpop.f32.mrb[0].mxu0
    %1140 = vmatprep.mubr.f32.mxu0 0.0
    %1141 = vmatmul.mubr.f32.gmra.mrb[0].mxu0 %v1057
    %v1142 = vpop.f32.mrb[0].mxu0
    %v1143 = vadd.f32 0.0, %v1142
    %v1144 = vpop.f32.mrb[0].mxu0
    %1145 = vmatprep.mubr.f32.mxu0 0.0
    %1146 = vmatmul.mubr.f32.gmra.mrb[0].mxu0 %v1060
    %v1147 = vpop.f32.mrb[0].mxu0
    %v1148 = vadd.f32 0.0, %v1147
    %v1149 = vpop.f32.mrb[0].mxu0
    %1150 = vmatprep.mubr.f32.mxu0 0.0
    %1151 = vmatmul.mubr.f32.gmra.mrb[0].mxu0 %v1063
    %v1152 = vpop.f32.mrb[0].mxu0
    %v1153 = vadd.f32 0.0, %v1152
    %v1154 = vpop.f32.mrb[0].mxu0
    %1155 = vmatprep.mubr.f32.mxu0 0.0
    %1156 = vmatmul.mubr.f32.gmra.mrb[0].mxu0 %v1066
    %v1157 = vpop.f32.mrb[0].mxu0
    %v1158 = vadd.f32 0.0, %v1157
    %v1159 = vpop.f32.mrb[0].mxu0
    %1160 = vmatprep.mubr.f32.mxu0 0.0
    %1161 = vmatmul.mubr.f32.gmra.mrb[0].mxu0 %v1069
    %v1162 = vpop.f32.mrb[0].mxu0
    %v1163 = vadd.f32 0.0, %v1162
    %v1164 = vpop.f32.mrb[0].mxu0
    %1165 = vdwg.mxu0
    %1166 = vmatprep.subr.mxu0 0.0
    %1167 = vmatpush1.msra.mxu0 %v1025
    %1168 = vmatprep.subr.mxu0 0.0
    %1169 = vmatpush1.msra.mxu0 %v1026
    %1170 = vmatprep.subr.mxu0 0.0
    %1171 = vmatpush1.msra.mxu0 %v1027
    %1172 = vmatprep.subr.mxu0 0.0
    %1173 = vmatpush1.msra.mxu0 0.0
    %1174 = vmatprep.subr.mxu0 0.0
    %1175 = vmatpush1.msra.mxu0 0.0
    %1176 = vmatprep.subr.mxu0 0.0
    %1177 = vmatpush1.msra.mxu0 0.0
    %1178 = vmatprep.subr.mxu0 0.0
    %1179 = vmatpush1.msra.mxu0 0.0
    %1180 = vmatprep.subr.mxu0 0.0
    %1181 = vmatpush1.msra.mxu0 0.0
    %1182 = vmatprep.subr.mxu0 0.0
    %1183 = vmatpush1.msra.mxu0 0.0
    %1184 = vmatprep.subr.mxu0 0.0
    %1185 = vmatpush1.msra.mxu0 0.0
    %1186 = vmatprep.subr.mxu0 0.0
    %1187 = vmatpush1.msra.mxu0 0.0
    %1188 = vmatprep.subr.mxu0 0.0
    %1189 = vmatpush1.msra.mxu0 0.0
    %1190 = vmatprep.subr.mxu0 0.0
    %1191 = vmatpush1.msra.mxu0 0.0
    %1192 = vmatprep.subr.mxu0 0.0
    %1193 = vmatpush1.msra.mxu0 0.0
    %1194 = vmatprep.subr.mxu0 0.0
    %1195 = vmatpush1.msra.mxu0 0.0
    %1196 = vmatprep.subr.mxu0 0.0
    %1197 = vmatpush1.msra.mxu0 0.0
    %1198 = vmatprep.subr.mxu0 0.0
    %1199 = vmatpush1.msra.mxu0 0.0
    %1200 = vmatprep.subr.mxu0 0.0
    %1201 = vmatpush1.msra.mxu0 0.0
    %1202 = vmatprep.subr.mxu0 0.0
    %1203 = vmatpush1.msra.mxu0 0.0
    %1204 = vmatprep.subr.mxu0 0.0
    %1205 = vmatpush1.msra.mxu0 0.0
    %1206 = vmatprep.subr.mxu0 0.0
    %1207 = vmatpush1.msra.mxu0 0.0
    %1208 = vmatprep.subr.mxu0 0.0
    %1209 = vmatpush1.msra.mxu0 0.0
    %1210 = vmatprep.subr.mxu0 0.0
    %1211 = vmatpush1.msra.mxu0 0.0
    %1212 = vmatprep.subr.mxu0 0.0
    %1213 = vmatpush1.msra.mxu0 0.0
    %1214 = vmatprep.subr.mxu0 0.0
    %1215 = vmatpush1.msra.mxu0 0.0
    %1216 = vmatprep.subr.mxu0 0.0
    %1217 = vmatpush1.msra.mxu0 0.0
    %1218 = vmatprep.subr.mxu0 0.0
    %1219 = vmatpush1.msra.mxu0 0.0
    %1220 = vmatprep.subr.mxu0 0.0
    %1221 = vmatpush1.msra.mxu0 0.0
    %1222 = vmatprep.subr.mxu0 0.0
    %1223 = vmatpush1.msra.mxu0 0.0
    %1224 = vmatprep.subr.mxu0 0.0
    %1225 = vmatpush1.msra.mxu0 0.0
    %1226 = vmatprep.subr.mxu0 0.0
    %1227 = vmatpush1.msra.mxu0 0.0
    %1228 = vmatprep.subr.mxu0 0.0
    %1229 = vmatpush1.msra.mxu0 0.0
    %1230 = vmatprep.mubr.f32.mxu0 0.0
    %1231 = vmatmul.mubr.f32.gmra.mrb[0].mxu0 %v1054
    %v1232 = vpop.f32.mrb[0].mxu0
    %v1233 = vadd.f32 0.0, %v1232
    %v1234 = vpop.f32.mrb[0].mxu0
    %1235 = vmatprep.mubr.f32.mxu0 0.0
    %1236 = vmatmul.mubr.f32.gmra.mrb[0].mxu0 %v1057
    %v1237 = vpop.f32.mrb[0].mxu0
    %v1238 = vadd.f32 0.0, %v1237
    %v1239 = vpop.f32.mrb[0].mxu0
    %1240 = vmatprep.mubr.f32.mxu0 0.0
    %1241 = vmatmul.mubr.f32.gmra.mrb[0].mxu0 %v1060
    %v1242 = vpop.f32.mrb[0].mxu0
    %v1243 = vadd.f32 0.0, %v1242
    %v1244 = vpop.f32.mrb[0].mxu0
    %1245 = vmatprep.mubr.f32.mxu0 0.0
    %1246 = vmatmul.mubr.f32.gmra.mrb[0].mxu0 %v1063
    %v1247 = vpop.f32.mrb[0].mxu0
    %v1248 = vadd.f32 0.0, %v1247
    %v1249 = vpop.f32.mrb[0].mxu0
    %1250 = vmatprep.mubr.f32.mxu0 0.0
    %1251 = vmatmul.mubr.f32.gmra.mrb[0].mxu0 %v1066
    %v1252 = vpop.f32.mrb[0].mxu0
    %v1253 = vadd.f32 0.0, %v1252
    %v1254 = vpop.f32.mrb[0].mxu0
    %1255 = vmatprep.mubr.f32.mxu0 0.0
    %1256 = vmatmul.mubr.f32.gmra.mrb[0].mxu0 %v1069
    %v1257 = vpop.f32.mrb[0].mxu0
    %v1258 = vadd.f32 0.0, %v1257
    %v1259 = vpop.f32.mrb[0].mxu0
    %1260 = vdwg.mxu0
    %v1261 = vmax.f32 %v1138, %v1233
    %v1262 = vmax.f32 %v1143, %v1238
    %v1263 = vmax.f32 %v1148, %v1243
    %v1264 = vmax.f32 %v1153, %v1248
    %v1265 = vmax.f32 %v1158, %v1253
    %v1266 = vmax.f32 %v1163, %v1258
    %vm1267 = vcmask 392192
    %v1269 = vsel %vm1267, %v1037, 0
    %v1272 = vsel %vm1267, %v1038, 0
    %v1275 = vsel %vm1267, %v1039, 0
    %1277 = vmatprep.subr.mxu0 0.0
    %1278 = vmatpush1.msra.mxu0 %v1261
    %1279 = vmatprep.subr.mxu0 0.0
    %1280 = vmatpush1.msra.mxu0 %v1262
    %1281 = vmatprep.subr.mxu0 0.0
    %1282 = vmatpush1.msra.mxu0 %v1263
    %1283 = vmatprep.subr.mxu0 0.0
    %1284 = vmatpush1.msra.mxu0 %v1264
    %1285 = vmatprep.subr.mxu0 0.0
    %1286 = vmatpush1.msra.mxu0 %v1265
    %1287 = vmatprep.subr.mxu0 0.0
    %1288 = vmatpush1.msra.mxu0 %v1266
    %1289 = vmatprep.subr.mxu0 0.0
    %1290 = vmatpush1.msra.mxu0 0.0
    %1291 = vmatprep.subr.mxu0 0.0
    %1292 = vmatpush1.msra.mxu0 0.0
    %1293 = vmatprep.subr.mxu0 0.0
    %1294 = vmatpush1.msra.mxu0 0.0
    %1295 = vmatprep.subr.mxu0 0.0
    %1296 = vmatpush1.msra.mxu0 0.0
    %1297 = vmatprep.subr.mxu0 0.0
    %1298 = vmatpush1.msra.mxu0 0.0
    %1299 = vmatprep.subr.mxu0 0.0
    %1300 = vmatpush1.msra.mxu0 0.0
    %1301 = vmatprep.subr.mxu0 0.0
    %1302 = vmatpush1.msra.mxu0 0.0
    %1303 = vmatprep.subr.mxu0 0.0
    %1304 = vmatpush1.msra.mxu0 0.0
    %1305 = vmatprep.subr.mxu0 0.0
    %1306 = vmatpush1.msra.mxu0 0.0
    %1307 = vmatprep.subr.mxu0 0.0
    %1308 = vmatpush1.msra.mxu0 0.0
    %1309 = vmatprep.subr.mxu0 0.0
    %1310 = vmatpush1.msra.mxu0 0.0
    %1311 = vmatprep.subr.mxu0 0.0
    %1312 = vmatpush1.msra.mxu0 0.0
    %1313 = vmatprep.subr.mxu0 0.0
    %1314 = vmatpush1.msra.mxu0 0.0
    %1315 = vmatprep.subr.mxu0 0.0
    %1316 = vmatpush1.msra.mxu0 0.0
    %1317 = vmatprep.subr.mxu0 0.0
    %1318 = vmatpush1.msra.mxu0 0.0
    %1319 = vmatprep.subr.mxu0 0.0
    %1320 = vmatpush1.msra.mxu0 0.0
    %1321 = vmatprep.subr.mxu0 0.0
    %1322 = vmatpush1.msra.mxu0 0.0
    %1323 = vmatprep.subr.mxu0 0.0
    %1324 = vmatpush1.msra.mxu0 0.0
    %1325 = vmatprep.subr.mxu0 0.0
    %1326 = vmatpush1.msra.mxu0 0.0
    %1327 = vmatprep.subr.mxu0 0.0
    %1328 = vmatpush1.msra.mxu0 0.0
    %1329 = vmatprep.subr.mxu0 0.0
    %1330 = vmatpush1.msra.mxu0 0.0
    %1331 = vmatprep.subr.mxu0 0.0
    %1332 = vmatpush1.msra.mxu0 0.0
    %1333 = vmatprep.subr.mxu0 0.0
    %1334 = vmatpush1.msra.mxu0 0.0
    %1335 = vmatprep.subr.mxu0 0.0
    %1336 = vmatpush1.msra.mxu0 0.0
    %1337 = vmatprep.subr.mxu0 0.0
    %1338 = vmatpush1.msra.mxu0 0.0
    %1339 = vmatprep.subr.mxu0 0.0
    %1340 = vmatpush1.msra.mxu0 0.0
    %1341 = vmatprep.mubr.f32.mxu0 0.0
    %1342 = vmatmul.mubr.f32.gmra.mrb[0].mxu0 %v1269
    %v1343 = vpop.f32.mrb[0].mxu0
    %v1344 = vadd.f32 0.0, %v1343
    %v1345 = vpop.f32.mrb[0].mxu0
    %1346 = vmatprep.mubr.f32.mxu0 0.0
    %1347 = vmatmul.mubr.f32.gmra.mrb[0].mxu0 %v1272
    %v1348 = vpop.f32.mrb[0].mxu0
    %v1349 = vadd.f32 0.0, %v1348
    %v1350 = vpop.f32.mrb[0].mxu0
    %1351 = vmatprep.mubr.f32.mxu0 0.0
    %1352 = vmatmul.mubr.f32.gmra.mrb[0].mxu0 %v1275
    %v1353 = vpop.f32.mrb[0].mxu0
    %v1354 = vadd.f32 0.0, %v1353
    %v1355 = vpop.f32.mrb[0].mxu0
    %1356 = vdwg.mxu0
    %v1358 = vsel %vm1267, %v1049, 0
    %v1361 = vsel %vm1267, %v1050, 0
    %v1364 = vsel %vm1267, %v1051, 0
    %1366 = vmatprep.subr.mxu0 0.0
    %1367 = vmatpush1.msra.mxu0 %v1261
    %1368 = vmatprep.subr.mxu0 0.0
    %1369 = vmatpush1.msra.mxu0 %v1262
    %1370 = vmatprep.subr.mxu0 0.0
    %1371 = vmatpush1.msra.mxu0 %v1263
    %1372 = vmatprep.subr.mxu0 0.0
    %1373 = vmatpush1.msra.mxu0 %v1264
    %1374 = vmatprep.subr.mxu0 0.0
    %1375 = vmatpush1.msra.mxu0 %v1265
    %1376 = vmatprep.subr.mxu0 0.0
    %1377 = vmatpush1.msra.mxu0 %v1266
    %1378 = vmatprep.subr.mxu0 0.0
    %1379 = vmatpush1.msra.mxu0 0.0
    %1380 = vmatprep.subr.mxu0 0.0
    %1381 = vmatpush1.msra.mxu0 0.0
    %1382 = vmatprep.subr.mxu0 0.0
    %1383 = vmatpush1.msra.mxu0 0.0
    %1384 = vmatprep.subr.mxu0 0.0
    %1385 = vmatpush1.msra.mxu0 0.0
    %1386 = vmatprep.subr.mxu0 0.0
    %1387 = vmatpush1.msra.mxu0 0.0
    %1388 = vmatprep.subr.mxu0 0.0
    %1389 = vmatpush1.msra.mxu0 0.0
    %1390 = vmatprep.subr.mxu0 0.0
    %1391 = vmatpush1.msra.mxu0 0.0
    %1392 = vmatprep.subr.mxu0 0.0
    %1393 = vmatpush1.msra.mxu0 0.0
    %1394 = vmatprep.subr.mxu0 0.0
    %1395 = vmatpush1.msra.mxu0 0.0
    %1396 = vmatprep.subr.mxu0 0.0
    %1397 = vmatpush1.msra.mxu0 0.0
    %1398 = vmatprep.subr.mxu0 0.0
    %1399 = vmatpush1.msra.mxu0 0.0
    %1400 = vmatprep.subr.mxu0 0.0
    %1401 = vmatpush1.msra.mxu0 0.0
    %1402 = vmatprep.subr.mxu0 0.0
    %1403 = vmatpush1.msra.mxu0 0.0
    %1404 = vmatprep.subr.mxu0 0.0
    %1405 = vmatpush1.msra.mxu0 0.0
    %1406 = vmatprep.subr.mxu0 0.0
    %1407 = vmatpush1.msra.mxu0 0.0
    %1408 = vmatprep.subr.mxu0 0.0
    %1409 = vmatpush1.msra.mxu0 0.0
    %1410 = vmatprep.subr.mxu0 0.0
    %1411 = vmatpush1.msra.mxu0 0.0
    %1412 = vmatprep.subr.mxu0 0.0
    %1413 = vmatpush1.msra.mxu0 0.0
    %1414 = vmatprep.subr.mxu0 0.0
    %1415 = vmatpush1.msra.mxu0 0.0
    %1416 = vmatprep.subr.mxu0 0.0
    %1417 = vmatpush1.msra.mxu0 0.0
    %1418 = vmatprep.subr.mxu0 0.0
    %1419 = vmatpush1.msra.mxu0 0.0
    %1420 = vmatprep.subr.mxu0 0.0
    %1421 = vmatpush1.msra.mxu0 0.0
    %1422 = vmatprep.subr.mxu0 0.0
    %1423 = vmatpush1.msra.mxu0 0.0
    %1424 = vmatprep.subr.mxu0 0.0
    %1425 = vmatpush1.msra.mxu0 0.0
    %1426 = vmatprep.subr.mxu0 0.0
    %1427 = vmatpush1.msra.mxu0 0.0
    %1428 = vmatprep.subr.mxu0 0.0
    %1429 = vmatpush1.msra.mxu0 0.0
    %1430 = vmatprep.mubr.f32.mxu0 0.0
    %1431 = vmatmul.mubr.f32.gmra.mrb[0].mxu0 %v1358
    %v1432 = vpop.f32.mrb[0].mxu0
    %v1433 = vadd.f32 0.0, %v1432
    %v1434 = vpop.f32.mrb[0].mxu0
    %1435 = vmatprep.mubr.f32.mxu0 0.0
    %1436 = vmatmul.mubr.f32.gmra.mrb[0].mxu0 %v1361
    %v1437 = vpop.f32.mrb[0].mxu0
    %v1438 = vadd.f32 0.0, %v1437
    %v1439 = vpop.f32.mrb[0].mxu0
    %1440 = vmatprep.mubr.f32.mxu0 0.0
    %1441 = vmatmul.mubr.f32.gmra.mrb[0].mxu0 %v1364
    %v1442 = vpop.f32.mrb[0].mxu0
    %v1443 = vadd.f32 0.0, %v1442
    %v1444 = vpop.f32.mrb[0].mxu0
    %1445 = vdwg.mxu0
    %v1446 = vmax.f32 %v1344, %v1433
    %v1447 = vmax.f32 %v1349, %v1438
    %v1448 = vmax.f32 %v1354, %v1443
    %v1450 = vsel %vm1052, %v496, 0
    %v1453 = vsel %vm1052, %v497, 0
    %v1456 = vsel %vm1052, %v498, 0
    %v1459 = vsel %vm1052, %v499, 0
    %v1462 = vsel %vm1052, %v500, 0
    %v1465 = vsel %vm1052, %v501, 0
    %1467 = vmatprep.subr.mxu0 0.0
    %1468 = vmatpush1.msra.mxu0 %v1015
    %1469 = vmatprep.subr.mxu0 0.0
    %1470 = vmatpush1.msra.mxu0 %v1016
    %1471 = vmatprep.subr.mxu0 0.0
    %1472 = vmatpush1.msra.mxu0 %v1017
    %1473 = vmatprep.subr.mxu0 0.0
    %1474 = vmatpush1.msra.mxu0 0.0
    %1475 = vmatprep.subr.mxu0 0.0
    %1476 = vmatpush1.msra.mxu0 0.0
    %1477 = vmatprep.subr.mxu0 0.0
    %1478 = vmatpush1.msra.mxu0 0.0
    %1479 = vmatprep.subr.mxu0 0.0
    %1480 = vmatpush1.msra.mxu0 0.0
    %1481 = vmatprep.subr.mxu0 0.0
    %1482 = vmatpush1.msra.mxu0 0.0
    %1483 = vmatprep.subr.mxu0 0.0
    %1484 = vmatpush1.msra.mxu0 0.0
    %1485 = vmatprep.subr.mxu0 0.0
    %1486 = vmatpush1.msra.mxu0 0.0
    %1487 = vmatprep.subr.mxu0 0.0
    %1488 = vmatpush1.msra.mxu0 0.0
    %1489 = vmatprep.subr.mxu0 0.0
    %1490 = vmatpush1.msra.mxu0 0.0
    %1491 = vmatprep.subr.mxu0 0.0
    %1492 = vmatpush1.msra.mxu0 0.0
    %1493 = vmatprep.subr.mxu0 0.0
    %1494 = vmatpush1.msra.mxu0 0.0
    %1495 = vmatprep.subr.mxu0 0.0
    %1496 = vmatpush1.msra.mxu0 0.0
    %1497 = vmatprep.subr.mxu0 0.0
    %1498 = vmatpush1.msra.mxu0 0.0
    %1499 = vmatprep.subr.mxu0 0.0
    %1500 = vmatpush1.msra.mxu0 0.0
    %1501 = vmatprep.subr.mxu0 0.0
    %1502 = vmatpush1.msra.mxu0 0.0
    %1503 = vmatprep.subr.mxu0 0.0
    %1504 = vmatpush1.msra.mxu0 0.0
    %1505 = vmatprep.subr.mxu0 0.0
    %1506 = vmatpush1.msra.mxu0 0.0
    %1507 = vmatprep.subr.mxu0 0.0
    %1508 = vmatpush1.msra.mxu0 0.0
    %1509 = vmatprep.subr.mxu0 0.0
    %1510 = vmatpush1.msra.mxu0 0.0
    %1511 = vmatprep.subr.mxu0 0.0
    %1512 = vmatpush1.msra.mxu0 0.0
    %1513 = vmatprep.subr.mxu0 0.0
    %1514 = vmatpush1.msra.mxu0 0.0
    %1515 = vmatprep.subr.mxu0 0.0
    %1516 = vmatpush1.msra.mxu0 0.0
    %1517 = vmatprep.subr.mxu0 0.0
    %1518 = vmatpush1.msra.mxu0 0.0
    %1519 = vmatprep.subr.mxu0 0.0
    %1520 = vmatpush1.msra.mxu0 0.0
    %1521 = vmatprep.subr.mxu0 0.0
    %1522 = vmatpush1.msra.mxu0 0.0
    %1523 = vmatprep.subr.mxu0 0.0
    %1524 = vmatpush1.msra.mxu0 0.0
    %1525 = vmatprep.subr.mxu0 0.0
    %1526 = vmatpush1.msra.mxu0 0.0
    %1527 = vmatprep.subr.mxu0 0.0
    %1528 = vmatpush1.msra.mxu0 0.0
    %1529 = vmatprep.subr.mxu0 0.0
    %1530 = vmatpush1.msra.mxu0 0.0
    %1531 = vmatprep.mubr.f32.mxu0 0.0
    %1532 = vmatmul.mubr.f32.gmra.mrb[0].mxu0 %v1450
    %v1533 = vpop.f32.mrb[0].mxu0
    %v1534 = vadd.f32 0.0, %v1533
    %v1535 = vpop.f32.mrb[0].mxu0
    %1536 = vmatprep.mubr.f32.mxu0 0.0
    %1537 = vmatmul.mubr.f32.gmra.mrb[0].mxu0 %v1453
    %v1538 = vpop.f32.mrb[0].mxu0
    %v1539 = vadd.f32 0.0, %v1538
    %v1540 = vpop.f32.mrb[0].mxu0
    %1541 = vmatprep.mubr.f32.mxu0 0.0
    %1542 = vmatmul.mubr.f32.gmra.mrb[0].mxu0 %v1456
    %v1543 = vpop.f32.mrb[0].mxu0
    %v1544 = vadd.f32 0.0, %v1543
    %v1545 = vpop.f32.mrb[0].mxu0
    %1546 = vmatprep.mubr.f32.mxu0 0.0
    %1547 = vmatmul.mubr.f32.gmra.mrb[0].mxu0 %v1459
    %v1548 = vpop.f32.mrb[0].mxu0
    %v1549 = vadd.f32 0.0, %v1548
    %v1550 = vpop.f32.mrb[0].mxu0
    %1551 = vmatprep.mubr.f32.mxu0 0.0
    %1552 = vmatmul.mubr.f32.gmra.mrb[0].mxu0 %v1462
    %v1553 = vpop.f32.mrb[0].mxu0
    %v1554 = vadd.f32 0.0, %v1553
    %v1555 = vpop.f32.mrb[0].mxu0
    %1556 = vmatprep.mubr.f32.mxu0 0.0
    %1557 = vmatmul.mubr.f32.gmra.mrb[0].mxu0 %v1465
    %v1558 = vpop.f32.mrb[0].mxu0
    %v1559 = vadd.f32 0.0, %v1558
    %v1560 = vpop.f32.mrb[0].mxu0
    %1561 = vdwg.mxu0
    %1562 = vmatprep.subr.mxu0 0.0
    %1563 = vmatpush1.msra.mxu0 %v1025
    %1564 = vmatprep.subr.mxu0 0.0
    %1565 = vmatpush1.msra.mxu0 %v1026
    %1566 = vmatprep.subr.mxu0 0.0
    %1567 = vmatpush1.msra.mxu0 %v1027
    %1568 = vmatprep.subr.mxu0 0.0
    %1569 = vmatpush1.msra.mxu0 0.0
    %1570 = vmatprep.subr.mxu0 0.0
    %1571 = vmatpush1.msra.mxu0 0.0
    %1572 = vmatprep.subr.mxu0 0.0
    %1573 = vmatpush1.msra.mxu0 0.0
    %1574 = vmatprep.subr.mxu0 0.0
    %1575 = vmatpush1.msra.mxu0 0.0
    %1576 = vmatprep.subr.mxu0 0.0
    %1577 = vmatpush1.msra.mxu0 0.0
    %1578 = vmatprep.subr.mxu0 0.0
    %1579 = vmatpush1.msra.mxu0 0.0
    %1580 = vmatprep.subr.mxu0 0.0
    %1581 = vmatpush1.msra.mxu0 0.0
    %1582 = vmatprep.subr.mxu0 0.0
    %1583 = vmatpush1.msra.mxu0 0.0
    %1584 = vmatprep.subr.mxu0 0.0
    %1585 = vmatpush1.msra.mxu0 0.0
    %1586 = vmatprep.subr.mxu0 0.0
    %1587 = vmatpush1.msra.mxu0 0.0
    %1588 = vmatprep.subr.mxu0 0.0
    %1589 = vmatpush1.msra.mxu0 0.0
    %1590 = vmatprep.subr.mxu0 0.0
    %1591 = vmatpush1.msra.mxu0 0.0
    %1592 = vmatprep.subr.mxu0 0.0
    %1593 = vmatpush1.msra.mxu0 0.0
    %1594 = vmatprep.subr.mxu0 0.0
    %1595 = vmatpush1.msra.mxu0 0.0
    %1596 = vmatprep.subr.mxu0 0.0
    %1597 = vmatpush1.msra.mxu0 0.0
    %1598 = vmatprep.subr.mxu0 0.0
    %1599 = vmatpush1.msra.mxu0 0.0
    %1600 = vmatprep.subr.mxu0 0.0
    %1601 = vmatpush1.msra.mxu0 0.0
    %1602 = vmatprep.subr.mxu0 0.0
    %1603 = vmatpush1.msra.mxu0 0.0
    %1604 = vmatprep.subr.mxu0 0.0
    %1605 = vmatpush1.msra.mxu0 0.0
    %1606 = vmatprep.subr.mxu0 0.0
    %1607 = vmatpush1.msra.mxu0 0.0
    %1608 = vmatprep.subr.mxu0 0.0
    %1609 = vmatpush1.msra.mxu0 0.0
    %1610 = vmatprep.subr.mxu0 0.0
    %1611 = vmatpush1.msra.mxu0 0.0
    %1612 = vmatprep.subr.mxu0 0.0
    %1613 = vmatpush1.msra.mxu0 0.0
    %1614 = vmatprep.subr.mxu0 0.0
    %1615 = vmatpush1.msra.mxu0 0.0
    %1616 = vmatprep.subr.mxu0 0.0
    %1617 = vmatpush1.msra.mxu0 0.0
    %1618 = vmatprep.subr.mxu0 0.0
    %1619 = vmatpush1.msra.mxu0 0.0
    %1620 = vmatprep.subr.mxu0 0.0
    %1621 = vmatpush1.msra.mxu0 0.0
    %1622 = vmatprep.subr.mxu0 0.0
    %1623 = vmatpush1.msra.mxu0 0.0
    %1624 = vmatprep.subr.mxu0 0.0
    %1625 = vmatpush1.msra.mxu0 0.0
    %1626 = vmatprep.mubr.f32.mxu0 0.0
    %1627 = vmatmul.mubr.f32.gmra.mrb[0].mxu0 %v1450
    %v1628 = vpop.f32.mrb[0].mxu0
    %v1629 = vadd.f32 0.0, %v1628
    %v1630 = vpop.f32.mrb[0].mxu0
    %1631 = vmatprep.mubr.f32.mxu0 0.0
    %1632 = vmatmul.mubr.f32.gmra.mrb[0].mxu0 %v1453
    %v1633 = vpop.f32.mrb[0].mxu0
    %v1634 = vadd.f32 0.0, %v1633
    %v1635 = vpop.f32.mrb[0].mxu0
    %1636 = vmatprep.mubr.f32.mxu0 0.0
    %1637 = vmatmul.mubr.f32.gmra.mrb[0].mxu0 %v1456
    %v1638 = vpop.f32.mrb[0].mxu0
    %v1639 = vadd.f32 0.0, %v1638
    %v1640 = vpop.f32.mrb[0].mxu0
    %1641 = vmatprep.mubr.f32.mxu0 0.0
    %1642 = vmatmul.mubr.f32.gmra.mrb[0].mxu0 %v1459
    %v1643 = vpop.f32.mrb[0].mxu0
    %v1644 = vadd.f32 0.0, %v1643
    %v1645 = vpop.f32.mrb[0].mxu0
    %1646 = vmatprep.mubr.f32.mxu0 0.0
    %1647 = vmatmul.mubr.f32.gmra.mrb[0].mxu0 %v1462
    %v1648 = vpop.f32.mrb[0].mxu0
    %v1649 = vadd.f32 0.0, %v1648
    %v1650 = vpop.f32.mrb[0].mxu0
    %1651 = vmatprep.mubr.f32.mxu0 0.0
    %1652 = vmatmul.mubr.f32.gmra.mrb[0].mxu0 %v1465
    %v1653 = vpop.f32.mrb[0].mxu0
    %v1654 = vadd.f32 0.0, %v1653
    %v1655 = vpop.f32.mrb[0].mxu0
    %1656 = vdwg.mxu0
    %v1657 = vmax.f32 %v1534, %v1629
    %v1658 = vmax.f32 %v1539, %v1634
    %v1659 = vmax.f32 %v1544, %v1639
    %v1660 = vmax.f32 %v1549, %v1644
    %v1661 = vmax.f32 %v1554, %v1649
    %v1662 = vmax.f32 %v1559, %v1654
    %1663 = vmatprep.subr.mxu0 0.0
    %1664 = vmatpush1.msra.mxu0 %v1657
    %1665 = vmatprep.subr.mxu0 0.0
    %1666 = vmatpush1.msra.mxu0 %v1658
    %1667 = vmatprep.subr.mxu0 0.0
    %1668 = vmatpush1.msra.mxu0 %v1659
    %1669 = vmatprep.subr.mxu0 0.0
    %1670 = vmatpush1.msra.mxu0 %v1660
    %1671 = vmatprep.subr.mxu0 0.0
    %1672 = vmatpush1.msra.mxu0 %v1661
    %1673 = vmatprep.subr.mxu0 0.0
    %1674 = vmatpush1.msra.mxu0 %v1662
    %1675 = vmatprep.subr.mxu0 0.0
    %1676 = vmatpush1.msra.mxu0 0.0
    %1677 = vmatprep.subr.mxu0 0.0
    %1678 = vmatpush1.msra.mxu0 0.0
    %1679 = vmatprep.subr.mxu0 0.0
    %1680 = vmatpush1.msra.mxu0 0.0
    %1681 = vmatprep.subr.mxu0 0.0
    %1682 = vmatpush1.msra.mxu0 0.0
    %1683 = vmatprep.subr.mxu0 0.0
    %1684 = vmatpush1.msra.mxu0 0.0
    %1685 = vmatprep.subr.mxu0 0.0
    %1686 = vmatpush1.msra.mxu0 0.0
    %1687 = vmatprep.subr.mxu0 0.0
    %1688 = vmatpush1.msra.mxu0 0.0
    %1689 = vmatprep.subr.mxu0 0.0
    %1690 = vmatpush1.msra.mxu0 0.0
    %1691 = vmatprep.subr.mxu0 0.0
    %1692 = vmatpush1.msra.mxu0 0.0
    %1693 = vmatprep.subr.mxu0 0.0
    %1694 = vmatpush1.msra.mxu0 0.0
    %1695 = vmatprep.subr.mxu0 0.0
    %1696 = vmatpush1.msra.mxu0 0.0
    %1697 = vmatprep.subr.mxu0 0.0
    %1698 = vmatpush1.msra.mxu0 0.0
    %1699 = vmatprep.subr.mxu0 0.0
    %1700 = vmatpush1.msra.mxu0 0.0
    %1701 = vmatprep.subr.mxu0 0.0
    %1702 = vmatpush1.msra.mxu0 0.0
    %1703 = vmatprep.subr.mxu0 0.0
    %1704 = vmatpush1.msra.mxu0 0.0
    %1705 = vmatprep.subr.mxu0 0.0
    %1706 = vmatpush1.msra.mxu0 0.0
    %1707 = vmatprep.subr.mxu0 0.0
    %1708 = vmatpush1.msra.mxu0 0.0
    %1709 = vmatprep.subr.mxu0 0.0
    %1710 = vmatpush1.msra.mxu0 0.0
    %1711 = vmatprep.subr.mxu0 0.0
    %1712 = vmatpush1.msra.mxu0 0.0
    %1713 = vmatprep.subr.mxu0 0.0
    %1714 = vmatpush1.msra.mxu0 0.0
    %1715 = vmatprep.subr.mxu0 0.0
    %1716 = vmatpush1.msra.mxu0 0.0
    %1717 = vmatprep.subr.mxu0 0.0
    %1718 = vmatpush1.msra.mxu0 0.0
    %1719 = vmatprep.subr.mxu0 0.0
    %1720 = vmatpush1.msra.mxu0 0.0
    %1721 = vmatprep.subr.mxu0 0.0
    %1722 = vmatpush1.msra.mxu0 0.0
    %1723 = vmatprep.subr.mxu0 0.0
    %1724 = vmatpush1.msra.mxu0 0.0
    %1725 = vmatprep.subr.mxu0 0.0
    %1726 = vmatpush1.msra.mxu0 0.0
    %1727 = vmatprep.mubr.f32.mxu0 0.0
    %1728 = vmatmul.mubr.f32.gmra.mrb[0].mxu0 %v1269
    %v1729 = vpop.f32.mrb[0].mxu0
    %v1730 = vadd.f32 0.0, %v1729
    %v1731 = vpop.f32.mrb[0].mxu0
    %1732 = vmatprep.mubr.f32.mxu0 0.0
    %1733 = vmatmul.mubr.f32.gmra.mrb[0].mxu0 %v1272
    %v1734 = vpop.f32.mrb[0].mxu0
    %v1735 = vadd.f32 0.0, %v1734
    %v1736 = vpop.f32.mrb[0].mxu0
    %1737 = vmatprep.mubr.f32.mxu0 0.0
    %1738 = vmatmul.mubr.f32.gmra.mrb[0].mxu0 %v1275
    %v1739 = vpop.f32.mrb[0].mxu0
    %v1740 = vadd.f32 0.0, %v1739
    %v1741 = vpop.f32.mrb[0].mxu0
    %1742 = vdwg.mxu0
    %1743 = vmatprep.subr.mxu0 0.0
    %1744 = vmatpush1.msra.mxu0 %v1657
    %1745 = vmatprep.subr.mxu0 0.0
    %1746 = vmatpush1.msra.mxu0 %v1658
    %1747 = vmatprep.subr.mxu0 0.0
    %1748 = vmatpush1.msra.mxu0 %v1659
    %1749 = vmatprep.subr.mxu0 0.0
    %1750 = vmatpush1.msra.mxu0 %v1660
    %1751 = vmatprep.subr.mxu0 0.0
    %1752 = vmatpush1.msra.mxu0 %v1661
    %1753 = vmatprep.subr.mxu0 0.0
    %1754 = vmatpush1.msra.mxu0 %v1662
    %1755 = vmatprep.subr.mxu0 0.0
    %1756 = vmatpush1.msra.mxu0 0.0
    %1757 = vmatprep.subr.mxu0 0.0
    %1758 = vmatpush1.msra.mxu0 0.0
    %1759 = vmatprep.subr.mxu0 0.0
    %1760 = vmatpush1.msra.mxu0 0.0
    %1761 = vmatprep.subr.mxu0 0.0
    %1762 = vmatpush1.msra.mxu0 0.0
    %1763 = vmatprep.subr.mxu0 0.0
    %1764 = vmatpush1.msra.mxu0 0.0
    %1765 = vmatprep.subr.mxu0 0.0
    %1766 = vmatpush1.msra.mxu0 0.0
    %1767 = vmatprep.subr.mxu0 0.0
    %1768 = vmatpush1.msra.mxu0 0.0
    %1769 = vmatprep.subr.mxu0 0.0
    %1770 = vmatpush1.msra.mxu0 0.0
    %1771 = vmatprep.subr.mxu0 0.0
    %1772 = vmatpush1.msra.mxu0 0.0
    %1773 = vmatprep.subr.mxu0 0.0
    %1774 = vmatpush1.msra.mxu0 0.0
    %1775 = vmatprep.subr.mxu0 0.0
    %1776 = vmatpush1.msra.mxu0 0.0
    %1777 = vmatprep.subr.mxu0 0.0
    %1778 = vmatpush1.msra.mxu0 0.0
    %1779 = vmatprep.subr.mxu0 0.0
    %1780 = vmatpush1.msra.mxu0 0.0
    %1781 = vmatprep.subr.mxu0 0.0
    %1782 = vmatpush1.msra.mxu0 0.0
    %1783 = vmatprep.subr.mxu0 0.0
    %1784 = vmatpush1.msra.mxu0 0.0
    %1785 = vmatprep.subr.mxu0 0.0
    %1786 = vmatpush1.msra.mxu0 0.0
    %1787 = vmatprep.subr.mxu0 0.0
    %1788 = vmatpush1.msra.mxu0 0.0
    %1789 = vmatprep.subr.mxu0 0.0
    %1790 = vmatpush1.msra.mxu0 0.0
    %1791 = vmatprep.subr.mxu0 0.0
    %1792 = vmatpush1.msra.mxu0 0.0
    %1793 = vmatprep.subr.mxu0 0.0
    %1794 = vmatpush1.msra.mxu0 0.0
    %1795 = vmatprep.subr.mxu0 0.0
    %1796 = vmatpush1.msra.mxu0 0.0
    %1797 = vmatprep.subr.mxu0 0.0
    %1798 = vmatpush1.msra.mxu0 0.0
    %1799 = vmatprep.subr.mxu0 0.0
    %1800 = vmatpush1.msra.mxu0 0.0
    %1801 = vmatprep.subr.mxu0 0.0
    %1802 = vmatpush1.msra.mxu0 0.0
    %1803 = vmatprep.subr.mxu0 0.0
    %1804 = vmatpush1.msra.mxu0 0.0
    %1805 = vmatprep.subr.mxu0 0.0
    %1806 = vmatpush1.msra.mxu0 0.0
    %1807 = vmatprep.mubr.f32.mxu0 0.0
    %1808 = vmatmul.mubr.f32.gmra.mrb[0].mxu0 %v1358
    %v1809 = vpop.f32.mrb[0].mxu0
    %v1810 = vadd.f32 0.0, %v1809
    %v1811 = vpop.f32.mrb[0].mxu0
    %1812 = vmatprep.mubr.f32.mxu0 0.0
    %1813 = vmatmul.mubr.f32.gmra.mrb[0].mxu0 %v1361
    %v1814 = vpop.f32.mrb[0].mxu0
    %v1815 = vadd.f32 0.0, %v1814
    %v1816 = vpop.f32.mrb[0].mxu0
    %1817 = vmatprep.mubr.f32.mxu0 0.0
    %1818 = vmatmul.mubr.f32.gmra.mrb[0].mxu0 %v1364
    %v1819 = vpop.f32.mrb[0].mxu0
    %v1820 = vadd.f32 0.0, %v1819
    %v1821 = vpop.f32.mrb[0].mxu0
    %1822 = vdwg.mxu0
    %v1823 = vmax.f32 %v1730, %v1810
    %v1824 = vmax.f32 %v1735, %v1815
    %v1825 = vmax.f32 %v1740, %v1820
    %v1827 = vsel %vm1052, %v621, 0
    %v1830 = vsel %vm1052, %v622, 0
    %v1833 = vsel %vm1052, %v623, 0
    %v1836 = vsel %vm1052, %v624, 0
    %v1839 = vsel %vm1052, %v625, 0
    %v1842 = vsel %vm1052, %v626, 0
    %1844 = vmatprep.subr.mxu0 0.0
    %1845 = vmatpush1.msra.mxu0 %v1015
    %1846 = vmatprep.subr.mxu0 0.0
    %1847 = vmatpush1.msra.mxu0 %v1016
    %1848 = vmatprep.subr.mxu0 0.0
    %1849 = vmatpush1.msra.mxu0 %v1017
    %1850 = vmatprep.subr.mxu0 0.0
    %1851 = vmatpush1.msra.mxu0 0.0
    %1852 = vmatprep.subr.mxu0 0.0
    %1853 = vmatpush1.msra.mxu0 0.0
    %1854 = vmatprep.subr.mxu0 0.0
    %1855 = vmatpush1.msra.mxu0 0.0
    %1856 = vmatprep.subr.mxu0 0.0
    %1857 = vmatpush1.msra.mxu0 0.0
    %1858 = vmatprep.subr.mxu0 0.0
    %1859 = vmatpush1.msra.mxu0 0.0
    %1860 = vmatprep.subr.mxu0 0.0
    %1861 = vmatpush1.msra.mxu0 0.0
    %1862 = vmatprep.subr.mxu0 0.0
    %1863 = vmatpush1.msra.mxu0 0.0
    %1864 = vmatprep.subr.mxu0 0.0
    %1865 = vmatpush1.msra.mxu0 0.0
    %1866 = vmatprep.subr.mxu0 0.0
    %1867 = vmatpush1.msra.mxu0 0.0
    %1868 = vmatprep.subr.mxu0 0.0
    %1869 = vmatpush1.msra.mxu0 0.0
    %1870 = vmatprep.subr.mxu0 0.0
    %1871 = vmatpush1.msra.mxu0 0.0
    %1872 = vmatprep.subr.mxu0 0.0
    %1873 = vmatpush1.msra.mxu0 0.0
    %1874 = vmatprep.subr.mxu0 0.0
    %1875 = vmatpush1.msra.mxu0 0.0
    %1876 = vmatprep.subr.mxu0 0.0
    %1877 = vmatpush1.msra.mxu0 0.0
    %1878 = vmatprep.subr.mxu0 0.0
    %1879 = vmatpush1.msra.mxu0 0.0
    %1880 = vmatprep.subr.mxu0 0.0
    %1881 = vmatpush1.msra.mxu0 0.0
    %1882 = vmatprep.subr.mxu0 0.0
    %1883 = vmatpush1.msra.mxu0 0.0
    %1884 = vmatprep.subr.mxu0 0.0
    %1885 = vmatpush1.msra.mxu0 0.0
    %1886 = vmatprep.subr.mxu0 0.0
    %1887 = vmatpush1.msra.mxu0 0.0
    %1888 = vmatprep.subr.mxu0 0.0
    %1889 = vmatpush1.msra.mxu0 0.0
    %1890 = vmatprep.subr.mxu0 0.0
    %1891 = vmatpush1.msra.mxu0 0.0
    %1892 = vmatprep.subr.mxu0 0.0
    %1893 = vmatpush1.msra.mxu0 0.0
    %1894 = vmatprep.subr.mxu0 0.0
    %1895 = vmatpush1.msra.mxu0 0.0
    %1896 = vmatprep.subr.mxu0 0.0
    %1897 = vmatpush1.msra.mxu0 0.0
    %1898 = vmatprep.subr.mxu0 0.0
    %1899 = vmatpush1.msra.mxu0 0.0
    %1900 = vmatprep.subr.mxu0 0.0
    %1901 = vmatpush1.msra.mxu0 0.0
    %1902 = vmatprep.subr.mxu0 0.0
    %1903 = vmatpush1.msra.mxu0 0.0
    %1904 = vmatprep.subr.mxu0 0.0
    %1905 = vmatpush1.msra.mxu0 0.0
    %1906 = vmatprep.subr.mxu0 0.0
    %1907 = vmatpush1.msra.mxu0 0.0
    %1908 = vmatprep.mubr.f32.mxu0 0.0
    %1909 = vmatmul.mubr.f32.gmra.mrb[0].mxu0 %v1827
    %v1910 = vpop.f32.mrb[0].mxu0
    %v1911 = vadd.f32 0.0, %v1910
    %v1912 = vpop.f32.mrb[0].mxu0
    %1913 = vmatprep.mubr.f32.mxu0 0.0
    %1914 = vmatmul.mubr.f32.gmra.mrb[0].mxu0 %v1830
    %v1915 = vpop.f32.mrb[0].mxu0
    %v1916 = vadd.f32 0.0, %v1915
    %v1917 = vpop.f32.mrb[0].mxu0
    %1918 = vmatprep.mubr.f32.mxu0 0.0
    %1919 = vmatmul.mubr.f32.gmra.mrb[0].mxu0 %v1833
    %v1920 = vpop.f32.mrb[0].mxu0
    %v1921 = vadd.f32 0.0, %v1920
    %v1922 = vpop.f32.mrb[0].mxu0
    %1923 = vmatprep.mubr.f32.mxu0 0.0
    %1924 = vmatmul.mubr.f32.gmra.mrb[0].mxu0 %v1836
    %v1925 = vpop.f32.mrb[0].mxu0
    %v1926 = vadd.f32 0.0, %v1925
    %v1927 = vpop.f32.mrb[0].mxu0
    %1928 = vmatprep.mubr.f32.mxu0 0.0
    %1929 = vmatmul.mubr.f32.gmra.mrb[0].mxu0 %v1839
    %v1930 = vpop.f32.mrb[0].mxu0
    %v1931 = vadd.f32 0.0, %v1930
    %v1932 = vpop.f32.mrb[0].mxu0
    %1933 = vmatprep.mubr.f32.mxu0 0.0
    %1934 = vmatmul.mubr.f32.gmra.mrb[0].mxu0 %v1842
    %v1935 = vpop.f32.mrb[0].mxu0
    %v1936 = vadd.f32 0.0, %v1935
    %v1937 = vpop.f32.mrb[0].mxu0
    %1938 = vdwg.mxu0
    %1939 = vmatprep.subr.mxu0 0.0
    %1940 = vmatpush1.msra.mxu0 %v1025
    %1941 = vmatprep.subr.mxu0 0.0
    %1942 = vmatpush1.msra.mxu0 %v1026
    %1943 = vmatprep.subr.mxu0 0.0
    %1944 = vmatpush1.msra.mxu0 %v1027
    %1945 = vmatprep.subr.mxu0 0.0
    %1946 = vmatpush1.msra.mxu0 0.0
    %1947 = vmatprep.subr.mxu0 0.0
    %1948 = vmatpush1.msra.mxu0 0.0
    %1949 = vmatprep.subr.mxu0 0.0
    %1950 = vmatpush1.msra.mxu0 0.0
    %1951 = vmatprep.subr.mxu0 0.0
    %1952 = vmatpush1.msra.mxu0 0.0
    %1953 = vmatprep.subr.mxu0 0.0
    %1954 = vmatpush1.msra.mxu0 0.0
    %1955 = vmatprep.subr.mxu0 0.0
    %1956 = vmatpush1.msra.mxu0 0.0
    %1957 = vmatprep.subr.mxu0 0.0
    %1958 = vmatpush1.msra.mxu0 0.0
    %1959 = vmatprep.subr.mxu0 0.0
    %1960 = vmatpush1.msra.mxu0 0.0
    %1961 = vmatprep.subr.mxu0 0.0
    %1962 = vmatpush1.msra.mxu0 0.0
    %1963 = vmatprep.subr.mxu0 0.0
    %1964 = vmatpush1.msra.mxu0 0.0
    %1965 = vmatprep.subr.mxu0 0.0
    %1966 = vmatpush1.msra.mxu0 0.0
    %1967 = vmatprep.subr.mxu0 0.0
    %1968 = vmatpush1.msra.mxu0 0.0
    %1969 = vmatprep.subr.mxu0 0.0
    %1970 = vmatpush1.msra.mxu0 0.0
    %1971 = vmatprep.subr.mxu0 0.0
    %1972 = vmatpush1.msra.mxu0 0.0
    %1973 = vmatprep.subr.mxu0 0.0
    %1974 = vmatpush1.msra.mxu0 0.0
    %1975 = vmatprep.subr.mxu0 0.0
    %1976 = vmatpush1.msra.mxu0 0.0
    %1977 = vmatprep.subr.mxu0 0.0
    %1978 = vmatpush1.msra.mxu0 0.0
    %1979 = vmatprep.subr.mxu0 0.0
    %1980 = vmatpush1.msra.mxu0 0.0
    %1981 = vmatprep.subr.mxu0 0.0
    %1982 = vmatpush1.msra.mxu0 0.0
    %1983 = vmatprep.subr.mxu0 0.0
    %1984 = vmatpush1.msra.mxu0 0.0
    %1985 = vmatprep.subr.mxu0 0.0
    %1986 = vmatpush1.msra.mxu0 0.0
    %1987 = vmatprep.subr.mxu0 0.0
    %1988 = vmatpush1.msra.mxu0 0.0
    %1989 = vmatprep.subr.mxu0 0.0
    %1990 = vmatpush1.msra.mxu0 0.0
    %1991 = vmatprep.subr.mxu0 0.0
    %1992 = vmatpush1.msra.mxu0 0.0
    %1993 = vmatprep.subr.mxu0 0.0
    %1994 = vmatpush1.msra.mxu0 0.0
    %1995 = vmatprep.subr.mxu0 0.0
    %1996 = vmatpush1.msra.mxu0 0.0
    %1997 = vmatprep.subr.mxu0 0.0
    %1998 = vmatpush1.msra.mxu0 0.0
    %1999 = vmatprep.subr.mxu0 0.0
    %2000 = vmatpush1.msra.mxu0 0.0
    %2001 = vmatprep.subr.mxu0 0.0
    %2002 = vmatpush1.msra.mxu0 0.0
    %2003 = vmatprep.mubr.f32.mxu0 0.0
    %2004 = vmatmul.mubr.f32.gmra.mrb[0].mxu0 %v1827
    %v2005 = vpop.f32.mrb[0].mxu0
    %v2006 = vadd.f32 0.0, %v2005
    %v2007 = vpop.f32.mrb[0].mxu0
    %2008 = vmatprep.mubr.f32.mxu0 0.0
    %2009 = vmatmul.mubr.f32.gmra.mrb[0].mxu0 %v1830
    %v2010 = vpop.f32.mrb[0].mxu0
    %v2011 = vadd.f32 0.0, %v2010
    %v2012 = vpop.f32.mrb[0].mxu0
    %2013 = vmatprep.mubr.f32.mxu0 0.0
    %2014 = vmatmul.mubr.f32.gmra.mrb[0].mxu0 %v1833
    %v2015 = vpop.f32.mrb[0].mxu0
    %v2016 = vadd.f32 0.0, %v2015
    %v2017 = vpop.f32.mrb[0].mxu0
    %2018 = vmatprep.mubr.f32.mxu0 0.0
    %2019 = vmatmul.mubr.f32.gmra.mrb[0].mxu0 %v1836
    %v2020 = vpop.f32.mrb[0].mxu0
    %v2021 = vadd.f32 0.0, %v2020
    %v2022 = vpop.f32.mrb[0].mxu0
    %2023 = vmatprep.mubr.f32.mxu0 0.0
    %2024 = vmatmul.mubr.f32.gmra.mrb[0].mxu0 %v1839
    %v2025 = vpop.f32.mrb[0].mxu0
    %v2026 = vadd.f32 0.0, %v2025
    %v2027 = vpop.f32.mrb[0].mxu0
    %2028 = vmatprep.mubr.f32.mxu0 0.0
    %2029 = vmatmul.mubr.f32.gmra.mrb[0].mxu0 %v1842
    %v2030 = vpop.f32.mrb[0].mxu0
    %v2031 = vadd.f32 0.0, %v2030
    %v2032 = vpop.f32.mrb[0].mxu0
    %2033 = vdwg.mxu0
    %v2034 = vmax.f32 %v1911, %v2006
    %v2035 = vmax.f32 %v1916, %v2011
    %v2036 = vmax.f32 %v1921, %v2016
    %v2037 = vmax.f32 %v1926, %v2021
    %v2038 = vmax.f32 %v1931, %v2026
    %v2039 = vmax.f32 %v1936, %v2031
    %2040 = vmatprep.subr.mxu0 0.0
    %2041 = vmatpush1.msra.mxu0 %v2034
    %2042 = vmatprep.subr.mxu0 0.0
    %2043 = vmatpush1.msra.mxu0 %v2035
    %2044 = vmatprep.subr.mxu0 0.0
    %2045 = vmatpush1.msra.mxu0 %v2036
    %2046 = vmatprep.subr.mxu0 0.0
    %2047 = vmatpush1.msra.mxu0 %v2037
    %2048 = vmatprep.subr.mxu0 0.0
    %2049 = vmatpush1.msra.mxu0 %v2038
    %2050 = vmatprep.subr.mxu0 0.0
    %2051 = vmatpush1.msra.mxu0 %v2039
    %2052 = vmatprep.subr.mxu0 0.0
    %2053 = vmatpush1.msra.mxu0 0.0
    %2054 = vmatprep.subr.mxu0 0.0
    %2055 = vmatpush1.msra.mxu0 0.0
    %2056 = vmatprep.subr.mxu0 0.0
    %2057 = vmatpush1.msra.mxu0 0.0
    %2058 = vmatprep.subr.mxu0 0.0
    %2059 = vmatpush1.msra.mxu0 0.0
    %2060 = vmatprep.subr.mxu0 0.0
    %2061 = vmatpush1.msra.mxu0 0.0
    %2062 = vmatprep.subr.mxu0 0.0
    %2063 = vmatpush1.msra.mxu0 0.0
    %2064 = vmatprep.subr.mxu0 0.0
    %2065 = vmatpush1.msra.mxu0 0.0
    %2066 = vmatprep.subr.mxu0 0.0
    %2067 = vmatpush1.msra.mxu0 0.0
    %2068 = vmatprep.subr.mxu0 0.0
    %2069 = vmatpush1.msra.mxu0 0.0
    %2070 = vmatprep.subr.mxu0 0.0
    %2071 = vmatpush1.msra.mxu0 0.0
    %2072 = vmatprep.subr.mxu0 0.0
    %2073 = vmatpush1.msra.mxu0 0.0
    %2074 = vmatprep.subr.mxu0 0.0
    %2075 = vmatpush1.msra.mxu0 0.0
    %2076 = vmatprep.subr.mxu0 0.0
    %2077 = vmatpush1.msra.mxu0 0.0
    %2078 = vmatprep.subr.mxu0 0.0
    %2079 = vmatpush1.msra.mxu0 0.0
    %2080 = vmatprep.subr.mxu0 0.0
    %2081 = vmatpush1.msra.mxu0 0.0
    %2082 = vmatprep.subr.mxu0 0.0
    %2083 = vmatpush1.msra.mxu0 0.0
    %2084 = vmatprep.subr.mxu0 0.0
    %2085 = vmatpush1.msra.mxu0 0.0
    %2086 = vmatprep.subr.mxu0 0.0
    %2087 = vmatpush1.msra.mxu0 0.0
    %2088 = vmatprep.subr.mxu0 0.0
    %2089 = vmatpush1.msra.mxu0 0.0
    %2090 = vmatprep.subr.mxu0 0.0
    %2091 = vmatpush1.msra.mxu0 0.0
    %2092 = vmatprep.subr.mxu0 0.0
    %2093 = vmatpush1.msra.mxu0 0.0
    %2094 = vmatprep.subr.mxu0 0.0
    %2095 = vmatpush1.msra.mxu0 0.0
    %2096 = vmatprep.subr.mxu0 0.0
    %2097 = vmatpush1.msra.mxu0 0.0
    %2098 = vmatprep.subr.mxu0 0.0
    %2099 = vmatpush1.msra.mxu0 0.0
    %2100 = vmatprep.subr.mxu0 0.0
    %2101 = vmatpush1.msra.mxu0 0.0
    %2102 = vmatprep.subr.mxu0 0.0
    %2103 = vmatpush1.msra.mxu0 0.0
    %2104 = vmatprep.mubr.f32.mxu0 0.0
    %2105 = vmatmul.mubr.f32.gmra.mrb[0].mxu0 %v1269
    %v2106 = vpop.f32.mrb[0].mxu0
    %v2107 = vadd.f32 0.0, %v2106
    %v2108 = vpop.f32.mrb[0].mxu0
    %2109 = vmatprep.mubr.f32.mxu0 0.0
    %2110 = vmatmul.mubr.f32.gmra.mrb[0].mxu0 %v1272
    %v2111 = vpop.f32.mrb[0].mxu0
    %v2112 = vadd.f32 0.0, %v2111
    %v2113 = vpop.f32.mrb[0].mxu0
    %2114 = vmatprep.mubr.f32.mxu0 0.0
    %2115 = vmatmul.mubr.f32.gmra.mrb[0].mxu0 %v1275
    %v2116 = vpop.f32.mrb[0].mxu0
    %v2117 = vadd.f32 0.0, %v2116
    %v2118 = vpop.f32.mrb[0].mxu0
    %2119 = vdwg.mxu0
    %2120 = vmatprep.subr.mxu0 0.0
    %2121 = vmatpush1.msra.mxu0 %v2034
    %2122 = vmatprep.subr.mxu0 0.0
    %2123 = vmatpush1.msra.mxu0 %v2035
    %2124 = vmatprep.subr.mxu0 0.0
    %2125 = vmatpush1.msra.mxu0 %v2036
    %2126 = vmatprep.subr.mxu0 0.0
    %2127 = vmatpush1.msra.mxu0 %v2037
    %2128 = vmatprep.subr.mxu0 0.0
    %2129 = vmatpush1.msra.mxu0 %v2038
    %2130 = vmatprep.subr.mxu0 0.0
    %2131 = vmatpush1.msra.mxu0 %v2039
    %2132 = vmatprep.subr.mxu0 0.0
    %2133 = vmatpush1.msra.mxu0 0.0
    %2134 = vmatprep.subr.mxu0 0.0
    %2135 = vmatpush1.msra.mxu0 0.0
    %2136 = vmatprep.subr.mxu0 0.0
    %2137 = vmatpush1.msra.mxu0 0.0
    %2138 = vmatprep.subr.mxu0 0.0
    %2139 = vmatpush1.msra.mxu0 0.0
    %2140 = vmatprep.subr.mxu0 0.0
    %2141 = vmatpush1.msra.mxu0 0.0
    %2142 = vmatprep.subr.mxu0 0.0
    %2143 = vmatpush1.msra.mxu0 0.0
    %2144 = vmatprep.subr.mxu0 0.0
    %2145 = vmatpush1.msra.mxu0 0.0
    %2146 = vmatprep.subr.mxu0 0.0
    %2147 = vmatpush1.msra.mxu0 0.0
    %2148 = vmatprep.subr.mxu0 0.0
    %2149 = vmatpush1.msra.mxu0 0.0
    %2150 = vmatprep.subr.mxu0 0.0
    %2151 = vmatpush1.msra.mxu0 0.0
    %2152 = vmatprep.subr.mxu0 0.0
    %2153 = vmatpush1.msra.mxu0 0.0
    %2154 = vmatprep.subr.mxu0 0.0
    %2155 = vmatpush1.msra.mxu0 0.0
    %2156 = vmatprep.subr.mxu0 0.0
    %2157 = vmatpush1.msra.mxu0 0.0
    %2158 = vmatprep.subr.mxu0 0.0
    %2159 = vmatpush1.msra.mxu0 0.0
    %2160 = vmatprep.subr.mxu0 0.0
    %2161 = vmatpush1.msra.mxu0 0.0
    %2162 = vmatprep.subr.mxu0 0.0
    %2163 = vmatpush1.msra.mxu0 0.0
    %2164 = vmatprep.subr.mxu0 0.0
    %2165 = vmatpush1.msra.mxu0 0.0
    %2166 = vmatprep.subr.mxu0 0.0
    %2167 = vmatpush1.msra.mxu0 0.0
    %2168 = vmatprep.subr.mxu0 0.0
    %2169 = vmatpush1.msra.mxu0 0.0
    %2170 = vmatprep.subr.mxu0 0.0
    %2171 = vmatpush1.msra.mxu0 0.0
    %2172 = vmatprep.subr.mxu0 0.0
    %2173 = vmatpush1.msra.mxu0 0.0
    %2174 = vmatprep.subr.mxu0 0.0
    %2175 = vmatpush1.msra.mxu0 0.0
    %2176 = vmatprep.subr.mxu0 0.0
    %2177 = vmatpush1.msra.mxu0 0.0
    %2178 = vmatprep.subr.mxu0 0.0
    %2179 = vmatpush1.msra.mxu0 0.0
    %2180 = vmatprep.subr.mxu0 0.0
    %2181 = vmatpush1.msra.mxu0 0.0
    %2182 = vmatprep.subr.mxu0 0.0
    %2183 = vmatpush1.msra.mxu0 0.0
    %2184 = vmatprep.mubr.f32.mxu0 0.0
    %2185 = vmatmul.mubr.f32.gmra.mrb[0].mxu0 %v1358
    %v2186 = vpop.f32.mrb[0].mxu0
    %v2187 = vadd.f32 0.0, %v2186
    %v2188 = vpop.f32.mrb[0].mxu0
    %2189 = vmatprep.mubr.f32.mxu0 0.0
    %2190 = vmatmul.mubr.f32.gmra.mrb[0].mxu0 %v1361
    %v2191 = vpop.f32.mrb[0].mxu0
    %v2192 = vadd.f32 0.0, %v2191
    %v2193 = vpop.f32.mrb[0].mxu0
    %2194 = vmatprep.mubr.f32.mxu0 0.0
    %2195 = vmatmul.mubr.f32.gmra.mrb[0].mxu0 %v1364
    %v2196 = vpop.f32.mrb[0].mxu0
    %v2197 = vadd.f32 0.0, %v2196
    %v2198 = vpop.f32.mrb[0].mxu0
    %2199 = vdwg.mxu0
    %v2200 = vmax.f32 %v2107, %v2187
    %v2201 = vmax.f32 %v2112, %v2192
    %v2202 = vmax.f32 %v2117, %v2197
    %v2204 = vsel %vm1052, %v746, 0
    %v2207 = vsel %vm1052, %v747, 0
    %v2210 = vsel %vm1052, %v748, 0
    %v2213 = vsel %vm1052, %v749, 0
    %v2216 = vsel %vm1052, %v750, 0
    %v2219 = vsel %vm1052, %v751, 0
    %2221 = vmatprep.subr.mxu0 0.0
    %2222 = vmatpush1.msra.mxu0 %v1015
    %2223 = vmatprep.subr.mxu0 0.0
    %2224 = vmatpush1.msra.mxu0 %v1016
    %2225 = vmatprep.subr.mxu0 0.0
    %2226 = vmatpush1.msra.mxu0 %v1017
    %2227 = vmatprep.subr.mxu0 0.0
    %2228 = vmatpush1.msra.mxu0 0.0
    %2229 = vmatprep.subr.mxu0 0.0
    %2230 = vmatpush1.msra.mxu0 0.0
    %2231 = vmatprep.subr.mxu0 0.0
    %2232 = vmatpush1.msra.mxu0 0.0
    %2233 = vmatprep.subr.mxu0 0.0
    %2234 = vmatpush1.msra.mxu0 0.0
    %2235 = vmatprep.subr.mxu0 0.0
    %2236 = vmatpush1.msra.mxu0 0.0
    %2237 = vmatprep.subr.mxu0 0.0
    %2238 = vmatpush1.msra.mxu0 0.0
    %2239 = vmatprep.subr.mxu0 0.0
    %2240 = vmatpush1.msra.mxu0 0.0
    %2241 = vmatprep.subr.mxu0 0.0
    %2242 = vmatpush1.msra.mxu0 0.0
    %2243 = vmatprep.subr.mxu0 0.0
    %2244 = vmatpush1.msra.mxu0 0.0
    %2245 = vmatprep.subr.mxu0 0.0
    %2246 = vmatpush1.msra.mxu0 0.0
    %2247 = vmatprep.subr.mxu0 0.0
    %2248 = vmatpush1.msra.mxu0 0.0
    %2249 = vmatprep.subr.mxu0 0.0
    %2250 = vmatpush1.msra.mxu0 0.0
    %2251 = vmatprep.subr.mxu0 0.0
    %2252 = vmatpush1.msra.mxu0 0.0
    %2253 = vmatprep.subr.mxu0 0.0
    %2254 = vmatpush1.msra.mxu0 0.0
    %2255 = vmatprep.subr.mxu0 0.0
    %2256 = vmatpush1.msra.mxu0 0.0
    %2257 = vmatprep.subr.mxu0 0.0
    %2258 = vmatpush1.msra.mxu0 0.0
    %2259 = vmatprep.subr.mxu0 0.0
    %2260 = vmatpush1.msra.mxu0 0.0
    %2261 = vmatprep.subr.mxu0 0.0
    %2262 = vmatpush1.msra.mxu0 0.0
    %2263 = vmatprep.subr.mxu0 0.0
    %2264 = vmatpush1.msra.mxu0 0.0
    %2265 = vmatprep.subr.mxu0 0.0
    %2266 = vmatpush1.msra.mxu0 0.0
    %2267 = vmatprep.subr.mxu0 0.0
    %2268 = vmatpush1.msra.mxu0 0.0
    %2269 = vmatprep.subr.mxu0 0.0
    %2270 = vmatpush1.msra.mxu0 0.0
    %2271 = vmatprep.subr.mxu0 0.0
    %2272 = vmatpush1.msra.mxu0 0.0
    %2273 = vmatprep.subr.mxu0 0.0
    %2274 = vmatpush1.msra.mxu0 0.0
    %2275 = vmatprep.subr.mxu0 0.0
    %2276 = vmatpush1.msra.mxu0 0.0
    %2277 = vmatprep.subr.mxu0 0.0
    %2278 = vmatpush1.msra.mxu0 0.0
    %2279 = vmatprep.subr.mxu0 0.0
    %2280 = vmatpush1.msra.mxu0 0.0
    %2281 = vmatprep.subr.mxu0 0.0
    %2282 = vmatpush1.msra.mxu0 0.0
    %2283 = vmatprep.subr.mxu0 0.0
    %2284 = vmatpush1.msra.mxu0 0.0
    %2285 = vmatprep.mubr.f32.mxu0 0.0
    %2286 = vmatmul.mubr.f32.gmra.mrb[0].mxu0 %v2204
    %v2287 = vpop.f32.mrb[0].mxu0
    %v2288 = vadd.f32 0.0, %v2287
    %v2289 = vpop.f32.mrb[0].mxu0
    %2290 = vmatprep.mubr.f32.mxu0 0.0
    %2291 = vmatmul.mubr.f32.gmra.mrb[0].mxu0 %v2207
    %v2292 = vpop.f32.mrb[0].mxu0
    %v2293 = vadd.f32 0.0, %v2292
    %v2294 = vpop.f32.mrb[0].mxu0
    %2295 = vmatprep.mubr.f32.mxu0 0.0
    %2296 = vmatmul.mubr.f32.gmra.mrb[0].mxu0 %v2210
    %v2297 = vpop.f32.mrb[0].mxu0
    %v2298 = vadd.f32 0.0, %v2297
    %v2299 = vpop.f32.mrb[0].mxu0
    %2300 = vmatprep.mubr.f32.mxu0 0.0
    %2301 = vmatmul.mubr.f32.gmra.mrb[0].mxu0 %v2213
    %v2302 = vpop.f32.mrb[0].mxu0
    %v2303 = vadd.f32 0.0, %v2302
    %v2304 = vpop.f32.mrb[0].mxu0
    %2305 = vmatprep.mubr.f32.mxu0 0.0
    %2306 = vmatmul.mubr.f32.gmra.mrb[0].mxu0 %v2216
    %v2307 = vpop.f32.mrb[0].mxu0
    %v2308 = vadd.f32 0.0, %v2307
    %v2309 = vpop.f32.mrb[0].mxu0
    %2310 = vmatprep.mubr.f32.mxu0 0.0
    %2311 = vmatmul.mubr.f32.gmra.mrb[0].mxu0 %v2219
    %v2312 = vpop.f32.mrb[0].mxu0
    %v2313 = vadd.f32 0.0, %v2312
    %v2314 = vpop.f32.mrb[0].mxu0
    %2315 = vdwg.mxu0
    %2316 = vmatprep.subr.mxu0 0.0
    %2317 = vmatpush1.msra.mxu0 %v1025
    %2318 = vmatprep.subr.mxu0 0.0
    %2319 = vmatpush1.msra.mxu0 %v1026
    %2320 = vmatprep.subr.mxu0 0.0
    %2321 = vmatpush1.msra.mxu0 %v1027
    %2322 = vmatprep.subr.mxu0 0.0
    %2323 = vmatpush1.msra.mxu0 0.0
    %2324 = vmatprep.subr.mxu0 0.0
    %2325 = vmatpush1.msra.mxu0 0.0
    %2326 = vmatprep.subr.mxu0 0.0
    %2327 = vmatpush1.msra.mxu0 0.0
    %2328 = vmatprep.subr.mxu0 0.0
    %2329 = vmatpush1.msra.mxu0 0.0
    %2330 = vmatprep.subr.mxu0 0.0
    %2331 = vmatpush1.msra.mxu0 0.0
    %2332 = vmatprep.subr.mxu0 0.0
    %2333 = vmatpush1.msra.mxu0 0.0
    %2334 = vmatprep.subr.mxu0 0.0
    %2335 = vmatpush1.msra.mxu0 0.0
    %2336 = vmatprep.subr.mxu0 0.0
    %2337 = vmatpush1.msra.mxu0 0.0
    %2338 = vmatprep.subr.mxu0 0.0
    %2339 = vmatpush1.msra.mxu0 0.0
    %2340 = vmatprep.subr.mxu0 0.0
    %2341 = vmatpush1.msra.mxu0 0.0
    %2342 = vmatprep.subr.mxu0 0.0
    %2343 = vmatpush1.msra.mxu0 0.0
    %2344 = vmatprep.subr.mxu0 0.0
    %2345 = vmatpush1.msra.mxu0 0.0
    %2346 = vmatprep.subr.mxu0 0.0
    %2347 = vmatpush1.msra.mxu0 0.0
    %2348 = vmatprep.subr.mxu0 0.0
    %2349 = vmatpush1.msra.mxu0 0.0
    %2350 = vmatprep.subr.mxu0 0.0
    %2351 = vmatpush1.msra.mxu0 0.0
    %2352 = vmatprep.subr.mxu0 0.0
    %2353 = vmatpush1.msra.mxu0 0.0
    %2354 = vmatprep.subr.mxu0 0.0
    %2355 = vmatpush1.msra.mxu0 0.0
    %2356 = vmatprep.subr.mxu0 0.0
    %2357 = vmatpush1.msra.mxu0 0.0
    %2358 = vmatprep.subr.mxu0 0.0
    %2359 = vmatpush1.msra.mxu0 0.0
    %2360 = vmatprep.subr.mxu0 0.0
    %2361 = vmatpush1.msra.mxu0 0.0
    %2362 = vmatprep.subr.mxu0 0.0
    %2363 = vmatpush1.msra.mxu0 0.0
    %2364 = vmatprep.subr.mxu0 0.0
    %2365 = vmatpush1.msra.mxu0 0.0
    %2366 = vmatprep.subr.mxu0 0.0
    %2367 = vmatpush1.msra.mxu0 0.0
    %2368 = vmatprep.subr.mxu0 0.0
    %2369 = vmatpush1.msra.mxu0 0.0
    %2370 = vmatprep.subr.mxu0 0.0
    %2371 = vmatpush1.msra.mxu0 0.0
    %2372 = vmatprep.subr.mxu0 0.0
    %2373 = vmatpush1.msra.mxu0 0.0
    %2374 = vmatprep.subr.mxu0 0.0
    %2375 = vmatpush1.msra.mxu0 0.0
    %2376 = vmatprep.subr.mxu0 0.0
    %2377 = vmatpush1.msra.mxu0 0.0
    %2378 = vmatprep.subr.mxu0 0.0
    %2379 = vmatpush1.msra.mxu0 0.0
    %2380 = vmatprep.mubr.f32.mxu0 0.0
    %2381 = vmatmul.mubr.f32.gmra.mrb[0].mxu0 %v2204
    %v2382 = vpop.f32.mrb[0].mxu0
    %v2383 = vadd.f32 0.0, %v2382
    %v2384 = vpop.f32.mrb[0].mxu0
    %2385 = vmatprep.mubr.f32.mxu0 0.0
    %2386 = vmatmul.mubr.f32.gmra.mrb[0].mxu0 %v2207
    %v2387 = vpop.f32.mrb[0].mxu0
    %v2388 = vadd.f32 0.0, %v2387
    %v2389 = vpop.f32.mrb[0].mxu0
    %2390 = vmatprep.mubr.f32.mxu0 0.0
    %2391 = vmatmul.mubr.f32.gmra.mrb[0].mxu0 %v2210
    %v2392 = vpop.f32.mrb[0].mxu0
    %v2393 = vadd.f32 0.0, %v2392
    %v2394 = vpop.f32.mrb[0].mxu0
    %2395 = vmatprep.mubr.f32.mxu0 0.0
    %2396 = vmatmul.mubr.f32.gmra.mrb[0].mxu0 %v2213
    %v2397 = vpop.f32.mrb[0].mxu0
    %v2398 = vadd.f32 0.0, %v2397
    %v2399 = vpop.f32.mrb[0].mxu0
    %2400 = vmatprep.mubr.f32.mxu0 0.0
    %2401 = vmatmul.mubr.f32.gmra.mrb[0].mxu0 %v2216
    %v2402 = vpop.f32.mrb[0].mxu0
    %v2403 = vadd.f32 0.0, %v2402
    %v2404 = vpop.f32.mrb[0].mxu0
    %2405 = vmatprep.mubr.f32.mxu0 0.0
    %2406 = vmatmul.mubr.f32.gmra.mrb[0].mxu0 %v2219
    %v2407 = vpop.f32.mrb[0].mxu0
    %v2408 = vadd.f32 0.0, %v2407
    %v2409 = vpop.f32.mrb[0].mxu0
    %2410 = vdwg.mxu0
    %v2411 = vmax.f32 %v2288, %v2383
    %v2412 = vmax.f32 %v2293, %v2388
    %v2413 = vmax.f32 %v2298, %v2393
    %v2414 = vmax.f32 %v2303, %v2398
    %v2415 = vmax.f32 %v2308, %v2403
    %v2416 = vmax.f32 %v2313, %v2408
    %2417 = vmatprep.subr.mxu0 0.0
    %2418 = vmatpush1.msra.mxu0 %v2411
    %2419 = vmatprep.subr.mxu0 0.0
    %2420 = vmatpush1.msra.mxu0 %v2412
    %2421 = vmatprep.subr.mxu0 0.0
    %2422 = vmatpush1.msra.mxu0 %v2413
    %2423 = vmatprep.subr.mxu0 0.0
    %2424 = vmatpush1.msra.mxu0 %v2414
    %2425 = vmatprep.subr.mxu0 0.0
    %2426 = vmatpush1.msra.mxu0 %v2415
    %2427 = vmatprep.subr.mxu0 0.0
    %2428 = vmatpush1.msra.mxu0 %v2416
    %2429 = vmatprep.subr.mxu0 0.0
    %2430 = vmatpush1.msra.mxu0 0.0
    %2431 = vmatprep.subr.mxu0 0.0
    %2432 = vmatpush1.msra.mxu0 0.0
    %2433 = vmatprep.subr.mxu0 0.0
    %2434 = vmatpush1.msra.mxu0 0.0
    %2435 = vmatprep.subr.mxu0 0.0
    %2436 = vmatpush1.msra.mxu0 0.0
    %2437 = vmatprep.subr.mxu0 0.0
    %2438 = vmatpush1.msra.mxu0 0.0
    %2439 = vmatprep.subr.mxu0 0.0
    %2440 = vmatpush1.msra.mxu0 0.0
    %2441 = vmatprep.subr.mxu0 0.0
    %2442 = vmatpush1.msra.mxu0 0.0
    %2443 = vmatprep.subr.mxu0 0.0
    %2444 = vmatpush1.msra.mxu0 0.0
    %2445 = vmatprep.subr.mxu0 0.0
    %2446 = vmatpush1.msra.mxu0 0.0
    %2447 = vmatprep.subr.mxu0 0.0
    %2448 = vmatpush1.msra.mxu0 0.0
    %2449 = vmatprep.subr.mxu0 0.0
    %2450 = vmatpush1.msra.mxu0 0.0
    %2451 = vmatprep.subr.mxu0 0.0
    %2452 = vmatpush1.msra.mxu0 0.0
    %2453 = vmatprep.subr.mxu0 0.0
    %2454 = vmatpush1.msra.mxu0 0.0
    %2455 = vmatprep.subr.mxu0 0.0
    %2456 = vmatpush1.msra.mxu0 0.0
    %2457 = vmatprep.subr.mxu0 0.0
    %2458 = vmatpush1.msra.mxu0 0.0
    %2459 = vmatprep.subr.mxu0 0.0
    %2460 = vmatpush1.msra.mxu0 0.0
    %2461 = vmatprep.subr.mxu0 0.0
    %2462 = vmatpush1.msra.mxu0 0.0
    %2463 = vmatprep.subr.mxu0 0.0
    %2464 = vmatpush1.msra.mxu0 0.0
    %2465 = vmatprep.subr.mxu0 0.0
    %2466 = vmatpush1.msra.mxu0 0.0
    %2467 = vmatprep.subr.mxu0 0.0
    %2468 = vmatpush1.msra.mxu0 0.0
    %2469 = vmatprep.subr.mxu0 0.0
    %2470 = vmatpush1.msra.mxu0 0.0
    %2471 = vmatprep.subr.mxu0 0.0
    %2472 = vmatpush1.msra.mxu0 0.0
    %2473 = vmatprep.subr.mxu0 0.0
    %2474 = vmatpush1.msra.mxu0 0.0
    %2475 = vmatprep.subr.mxu0 0.0
    %2476 = vmatpush1.msra.mxu0 0.0
    %2477 = vmatprep.subr.mxu0 0.0
    %2478 = vmatpush1.msra.mxu0 0.0
    %2479 = vmatprep.subr.mxu0 0.0
    %2480 = vmatpush1.msra.mxu0 0.0
    %2481 = vmatprep.mubr.f32.mxu0 0.0
    %2482 = vmatmul.mubr.f32.gmra.mrb[0].mxu0 %v1269
    %v2483 = vpop.f32.mrb[0].mxu0
    %v2484 = vadd.f32 0.0, %v2483
    %v2485 = vpop.f32.mrb[0].mxu0
    %2486 = vmatprep.mubr.f32.mxu0 0.0
    %2487 = vmatmul.mubr.f32.gmra.mrb[0].mxu0 %v1272
    %v2488 = vpop.f32.mrb[0].mxu0
    %v2489 = vadd.f32 0.0, %v2488
    %v2490 = vpop.f32.mrb[0].mxu0
    %2491 = vmatprep.mubr.f32.mxu0 0.0
    %2492 = vmatmul.mubr.f32.gmra.mrb[0].mxu0 %v1275
    %v2493 = vpop.f32.mrb[0].mxu0
    %v2494 = vadd.f32 0.0, %v2493
    %v2495 = vpop.f32.mrb[0].mxu0
    %2496 = vdwg.mxu0
    %2497 = vmatprep.subr.mxu0 0.0
    %2498 = vmatpush1.msra.mxu0 %v2411
    %2499 = vmatprep.subr.mxu0 0.0
    %2500 = vmatpush1.msra.mxu0 %v2412
    %2501 = vmatprep.subr.mxu0 0.0
    %2502 = vmatpush1.msra.mxu0 %v2413
    %2503 = vmatprep.subr.mxu0 0.0
    %2504 = vmatpush1.msra.mxu0 %v2414
    %2505 = vmatprep.subr.mxu0 0.0
    %2506 = vmatpush1.msra.mxu0 %v2415
    %2507 = vmatprep.subr.mxu0 0.0
    %2508 = vmatpush1.msra.mxu0 %v2416
    %2509 = vmatprep.subr.mxu0 0.0
    %2510 = vmatpush1.msra.mxu0 0.0
    %2511 = vmatprep.subr.mxu0 0.0
    %2512 = vmatpush1.msra.mxu0 0.0
    %2513 = vmatprep.subr.mxu0 0.0
    %2514 = vmatpush1.msra.mxu0 0.0
    %2515 = vmatprep.subr.mxu0 0.0
    %2516 = vmatpush1.msra.mxu0 0.0
    %2517 = vmatprep.subr.mxu0 0.0
    %2518 = vmatpush1.msra.mxu0 0.0
    %2519 = vmatprep.subr.mxu0 0.0
    %2520 = vmatpush1.msra.mxu0 0.0
    %2521 = vmatprep.subr.mxu0 0.0
    %2522 = vmatpush1.msra.mxu0 0.0
    %2523 = vmatprep.subr.mxu0 0.0
    %2524 = vmatpush1.msra.mxu0 0.0
    %2525 = vmatprep.subr.mxu0 0.0
    %2526 = vmatpush1.msra.mxu0 0.0
    %2527 = vmatprep.subr.mxu0 0.0
    %2528 = vmatpush1.msra.mxu0 0.0
    %2529 = vmatprep.subr.mxu0 0.0
    %2530 = vmatpush1.msra.mxu0 0.0
    %2531 = vmatprep.subr.mxu0 0.0
    %2532 = vmatpush1.msra.mxu0 0.0
    %2533 = vmatprep.subr.mxu0 0.0
    %2534 = vmatpush1.msra.mxu0 0.0
    %2535 = vmatprep.subr.mxu0 0.0
    %2536 = vmatpush1.msra.mxu0 0.0
    %2537 = vmatprep.subr.mxu0 0.0
    %2538 = vmatpush1.msra.mxu0 0.0
    %2539 = vmatprep.subr.mxu0 0.0
    %2540 = vmatpush1.msra.mxu0 0.0
    %2541 = vmatprep.subr.mxu0 0.0
    %2542 = vmatpush1.msra.mxu0 0.0
    %2543 = vmatprep.subr.mxu0 0.0
    %2544 = vmatpush1.msra.mxu0 0.0
    %2545 = vmatprep.subr.mxu0 0.0
    %2546 = vmatpush1.msra.mxu0 0.0
    %2547 = vmatprep.subr.mxu0 0.0
    %2548 = vmatpush1.msra.mxu0 0.0
    %2549 = vmatprep.subr.mxu0 0.0
    %2550 = vmatpush1.msra.mxu0 0.0
    %2551 = vmatprep.subr.mxu0 0.0
    %2552 = vmatpush1.msra.mxu0 0.0
    %2553 = vmatprep.subr.mxu0 0.0
    %2554 = vmatpush1.msra.mxu0 0.0
    %2555 = vmatprep.subr.mxu0 0.0
    %2556 = vmatpush1.msra.mxu0 0.0
    %2557 = vmatprep.subr.mxu0 0.0
    %2558 = vmatpush1.msra.mxu0 0.0
    %2559 = vmatprep.subr.mxu0 0.0
    %2560 = vmatpush1.msra.mxu0 0.0
    %2561 = vmatprep.mubr.f32.mxu0 0.0
    %2562 = vmatmul.mubr.f32.gmra.mrb[0].mxu0 %v1358
    %v2563 = vpop.f32.mrb[0].mxu0
    %v2564 = vadd.f32 0.0, %v2563
    %v2565 = vpop.f32.mrb[0].mxu0
    %2566 = vmatprep.mubr.f32.mxu0 0.0
    %2567 = vmatmul.mubr.f32.gmra.mrb[0].mxu0 %v1361
    %v2568 = vpop.f32.mrb[0].mxu0
    %v2569 = vadd.f32 0.0, %v2568
    %v2570 = vpop.f32.mrb[0].mxu0
    %2571 = vmatprep.mubr.f32.mxu0 0.0
    %2572 = vmatmul.mubr.f32.gmra.mrb[0].mxu0 %v1364
    %v2573 = vpop.f32.mrb[0].mxu0
    %v2574 = vadd.f32 0.0, %v2573
    %v2575 = vpop.f32.mrb[0].mxu0
    %2576 = vdwg.mxu0
    %v2577 = vmax.f32 %v2484, %v2564
    %v2578 = vmax.f32 %v2489, %v2569
    %v2579 = vmax.f32 %v2494, %v2574
    %v2581 = vsel %vm1052, %v871, 0
    %v2584 = vsel %vm1052, %v872, 0
    %v2587 = vsel %vm1052, %v873, 0
    %v2590 = vsel %vm1052, %v874, 0
    %v2593 = vsel %vm1052, %v875, 0
    %v2596 = vsel %vm1052, %v876, 0
    %2598 = vmatprep.subr.mxu0 0.0
    %2599 = vmatpush1.msra.mxu0 %v1015
    %2600 = vmatprep.subr.mxu0 0.0
    %2601 = vmatpush1.msra.mxu0 %v1016
    %2602 = vmatprep.subr.mxu0 0.0
    %2603 = vmatpush1.msra.mxu0 %v1017
    %2604 = vmatprep.subr.mxu0 0.0
    %2605 = vmatpush1.msra.mxu0 0.0
    %2606 = vmatprep.subr.mxu0 0.0
    %2607 = vmatpush1.msra.mxu0 0.0
    %2608 = vmatprep.subr.mxu0 0.0
    %2609 = vmatpush1.msra.mxu0 0.0
    %2610 = vmatprep.subr.mxu0 0.0
    %2611 = vmatpush1.msra.mxu0 0.0
    %2612 = vmatprep.subr.mxu0 0.0
    %2613 = vmatpush1.msra.mxu0 0.0
    %2614 = vmatprep.subr.mxu0 0.0
    %2615 = vmatpush1.msra.mxu0 0.0
    %2616 = vmatprep.subr.mxu0 0.0
    %2617 = vmatpush1.msra.mxu0 0.0
    %2618 = vmatprep.subr.mxu0 0.0
    %2619 = vmatpush1.msra.mxu0 0.0
    %2620 = vmatprep.subr.mxu0 0.0
    %2621 = vmatpush1.msra.mxu0 0.0
    %2622 = vmatprep.subr.mxu0 0.0
    %2623 = vmatpush1.msra.mxu0 0.0
    %2624 = vmatprep.subr.mxu0 0.0
    %2625 = vmatpush1.msra.mxu0 0.0
    %2626 = vmatprep.subr.mxu0 0.0
    %2627 = vmatpush1.msra.mxu0 0.0
    %2628 = vmatprep.subr.mxu0 0.0
    %2629 = vmatpush1.msra.mxu0 0.0
    %2630 = vmatprep.subr.mxu0 0.0
    %2631 = vmatpush1.msra.mxu0 0.0
    %2632 = vmatprep.subr.mxu0 0.0
    %2633 = vmatpush1.msra.mxu0 0.0
    %2634 = vmatprep.subr.mxu0 0.0
    %2635 = vmatpush1.msra.mxu0 0.0
    %2636 = vmatprep.subr.mxu0 0.0
    %2637 = vmatpush1.msra.mxu0 0.0
    %2638 = vmatprep.subr.mxu0 0.0
    %2639 = vmatpush1.msra.mxu0 0.0
    %2640 = vmatprep.subr.mxu0 0.0
    %2641 = vmatpush1.msra.mxu0 0.0
    %2642 = vmatprep.subr.mxu0 0.0
    %2643 = vmatpush1.msra.mxu0 0.0
    %2644 = vmatprep.subr.mxu0 0.0
    %2645 = vmatpush1.msra.mxu0 0.0
    %2646 = vmatprep.subr.mxu0 0.0
    %2647 = vmatpush1.msra.mxu0 0.0
    %2648 = vmatprep.subr.mxu0 0.0
    %2649 = vmatpush1.msra.mxu0 0.0
    %2650 = vmatprep.subr.mxu0 0.0
    %2651 = vmatpush1.msra.mxu0 0.0
    %2652 = vmatprep.subr.mxu0 0.0
    %2653 = vmatpush1.msra.mxu0 0.0
    %2654 = vmatprep.subr.mxu0 0.0
    %2655 = vmatpush1.msra.mxu0 0.0
    %2656 = vmatprep.subr.mxu0 0.0
    %2657 = vmatpush1.msra.mxu0 0.0
    %2658 = vmatprep.subr.mxu0 0.0
    %2659 = vmatpush1.msra.mxu0 0.0
    %2660 = vmatprep.subr.mxu0 0.0
    %2661 = vmatpush1.msra.mxu0 0.0
    %2662 = vmatprep.mubr.f32.mxu0 0.0
    %2663 = vmatmul.mubr.f32.gmra.mrb[0].mxu0 %v2581
    %v2664 = vpop.f32.mrb[0].mxu0
    %v2665 = vadd.f32 0.0, %v2664
    %v2666 = vpop.f32.mrb[0].mxu0
    %2667 = vmatprep.mubr.f32.mxu0 0.0
    %2668 = vmatmul.mubr.f32.gmra.mrb[0].mxu0 %v2584
    %v2669 = vpop.f32.mrb[0].mxu0
    %v2670 = vadd.f32 0.0, %v2669
    %v2671 = vpop.f32.mrb[0].mxu0
    %2672 = vmatprep.mubr.f32.mxu0 0.0
    %2673 = vmatmul.mubr.f32.gmra.mrb[0].mxu0 %v2587
    %v2674 = vpop.f32.mrb[0].mxu0
    %v2675 = vadd.f32 0.0, %v2674
    %v2676 = vpop.f32.mrb[0].mxu0
    %2677 = vmatprep.mubr.f32.mxu0 0.0
    %2678 = vmatmul.mubr.f32.gmra.mrb[0].mxu0 %v2590
    %v2679 = vpop.f32.mrb[0].mxu0
    %v2680 = vadd.f32 0.0, %v2679
    %v2681 = vpop.f32.mrb[0].mxu0
    %2682 = vmatprep.mubr.f32.mxu0 0.0
    %2683 = vmatmul.mubr.f32.gmra.mrb[0].mxu0 %v2593
    %v2684 = vpop.f32.mrb[0].mxu0
    %v2685 = vadd.f32 0.0, %v2684
    %v2686 = vpop.f32.mrb[0].mxu0
    %2687 = vmatprep.mubr.f32.mxu0 0.0
    %2688 = vmatmul.mubr.f32.gmra.mrb[0].mxu0 %v2596
    %v2689 = vpop.f32.mrb[0].mxu0
    %v2690 = vadd.f32 0.0, %v2689
    %v2691 = vpop.f32.mrb[0].mxu0
    %2692 = vdwg.mxu0
    %2693 = vmatprep.subr.mxu0 0.0
    %2694 = vmatpush1.msra.mxu0 %v1025
    %2695 = vmatprep.subr.mxu0 0.0
    %2696 = vmatpush1.msra.mxu0 %v1026
    %2697 = vmatprep.subr.mxu0 0.0
    %2698 = vmatpush1.msra.mxu0 %v1027
    %2699 = vmatprep.subr.mxu0 0.0
    %2700 = vmatpush1.msra.mxu0 0.0
    %2701 = vmatprep.subr.mxu0 0.0
    %2702 = vmatpush1.msra.mxu0 0.0
    %2703 = vmatprep.subr.mxu0 0.0
    %2704 = vmatpush1.msra.mxu0 0.0
    %2705 = vmatprep.subr.mxu0 0.0
    %2706 = vmatpush1.msra.mxu0 0.0
    %2707 = vmatprep.subr.mxu0 0.0
    %2708 = vmatpush1.msra.mxu0 0.0
    %2709 = vmatprep.subr.mxu0 0.0
    %2710 = vmatpush1.msra.mxu0 0.0
    %2711 = vmatprep.subr.mxu0 0.0
    %2712 = vmatpush1.msra.mxu0 0.0
    %2713 = vmatprep.subr.mxu0 0.0
    %2714 = vmatpush1.msra.mxu0 0.0
    %2715 = vmatprep.subr.mxu0 0.0
    %2716 = vmatpush1.msra.mxu0 0.0
    %2717 = vmatprep.subr.mxu0 0.0
    %2718 = vmatpush1.msra.mxu0 0.0
    %2719 = vmatprep.subr.mxu0 0.0
    %2720 = vmatpush1.msra.mxu0 0.0
    %2721 = vmatprep.subr.mxu0 0.0
    %2722 = vmatpush1.msra.mxu0 0.0
    %2723 = vmatprep.subr.mxu0 0.0
    %2724 = vmatpush1.msra.mxu0 0.0
    %2725 = vmatprep.subr.mxu0 0.0
    %2726 = vmatpush1.msra.mxu0 0.0
    %2727 = vmatprep.subr.mxu0 0.0
    %2728 = vmatpush1.msra.mxu0 0.0
    %2729 = vmatprep.subr.mxu0 0.0
    %2730 = vmatpush1.msra.mxu0 0.0
    %2731 = vmatprep.subr.mxu0 0.0
    %2732 = vmatpush1.msra.mxu0 0.0
    %2733 = vmatprep.subr.mxu0 0.0
    %2734 = vmatpush1.msra.mxu0 0.0
    %2735 = vmatprep.subr.mxu0 0.0
    %2736 = vmatpush1.msra.mxu0 0.0
    %2737 = vmatprep.subr.mxu0 0.0
    %2738 = vmatpush1.msra.mxu0 0.0
    %2739 = vmatprep.subr.mxu0 0.0
    %2740 = vmatpush1.msra.mxu0 0.0
    %2741 = vmatprep.subr.mxu0 0.0
    %2742 = vmatpush1.msra.mxu0 0.0
    %2743 = vmatprep.subr.mxu0 0.0
    %2744 = vmatpush1.msra.mxu0 0.0
    %2745 = vmatprep.subr.mxu0 0.0
    %2746 = vmatpush1.msra.mxu0 0.0
    %2747 = vmatprep.subr.mxu0 0.0
    %2748 = vmatpush1.msra.mxu0 0.0
    %2749 = vmatprep.subr.mxu0 0.0
    %2750 = vmatpush1.msra.mxu0 0.0
    %2751 = vmatprep.subr.mxu0 0.0
    %2752 = vmatpush1.msra.mxu0 0.0
    %2753 = vmatprep.subr.mxu0 0.0
    %2754 = vmatpush1.msra.mxu0 0.0
    %2755 = vmatprep.subr.mxu0 0.0
    %2756 = vmatpush1.msra.mxu0 0.0
    %2757 = vmatprep.mubr.f32.mxu0 0.0
    %2758 = vmatmul.mubr.f32.gmra.mrb[0].mxu0 %v2581
    %v2759 = vpop.f32.mrb[0].mxu0
    %v2760 = vadd.f32 0.0, %v2759
    %v2761 = vpop.f32.mrb[0].mxu0
    %2762 = vmatprep.mubr.f32.mxu0 0.0
    %2763 = vmatmul.mubr.f32.gmra.mrb[0].mxu0 %v2584
    %v2764 = vpop.f32.mrb[0].mxu0
    %v2765 = vadd.f32 0.0, %v2764
    %v2766 = vpop.f32.mrb[0].mxu0
    %2767 = vmatprep.mubr.f32.mxu0 0.0
    %2768 = vmatmul.mubr.f32.gmra.mrb[0].mxu0 %v2587
    %v2769 = vpop.f32.mrb[0].mxu0
    %v2770 = vadd.f32 0.0, %v2769
    %v2771 = vpop.f32.mrb[0].mxu0
    %2772 = vmatprep.mubr.f32.mxu0 0.0
    %2773 = vmatmul.mubr.f32.gmra.mrb[0].mxu0 %v2590
    %v2774 = vpop.f32.mrb[0].mxu0
    %v2775 = vadd.f32 0.0, %v2774
    %v2776 = vpop.f32.mrb[0].mxu0
    %2777 = vmatprep.mubr.f32.mxu0 0.0
    %2778 = vmatmul.mubr.f32.gmra.mrb[0].mxu0 %v2593
    %v2779 = vpop.f32.mrb[0].mxu0
    %v2780 = vadd.f32 0.0, %v2779
    %v2781 = vpop.f32.mrb[0].mxu0
    %2782 = vmatprep.mubr.f32.mxu0 0.0
    %2783 = vmatmul.mubr.f32.gmra.mrb[0].mxu0 %v2596
    %v2784 = vpop.f32.mrb[0].mxu0
    %v2785 = vadd.f32 0.0, %v2784
    %v2786 = vpop.f32.mrb[0].mxu0
    %2787 = vdwg.mxu0
    %v2788 = vmax.f32 %v2665, %v2760
    %v2789 = vmax.f32 %v2670, %v2765
    %v2790 = vmax.f32 %v2675, %v2770
    %v2791 = vmax.f32 %v2680, %v2775
    %v2792 = vmax.f32 %v2685, %v2780
    %v2793 = vmax.f32 %v2690, %v2785
    %2794 = vmatprep.subr.mxu0 0.0
    %2795 = vmatpush1.msra.mxu0 %v2788
    %2796 = vmatprep.subr.mxu0 0.0
    %2797 = vmatpush1.msra.mxu0 %v2789
    %2798 = vmatprep.subr.mxu0 0.0
    %2799 = vmatpush1.msra.mxu0 %v2790
    %2800 = vmatprep.subr.mxu0 0.0
    %2801 = vmatpush1.msra.mxu0 %v2791
    %2802 = vmatprep.subr.mxu0 0.0
    %2803 = vmatpush1.msra.mxu0 %v2792
    %2804 = vmatprep.subr.mxu0 0.0
    %2805 = vmatpush1.msra.mxu0 %v2793
    %2806 = vmatprep.subr.mxu0 0.0
    %2807 = vmatpush1.msra.mxu0 0.0
    %2808 = vmatprep.subr.mxu0 0.0
    %2809 = vmatpush1.msra.mxu0 0.0
    %2810 = vmatprep.subr.mxu0 0.0
    %2811 = vmatpush1.msra.mxu0 0.0
    %2812 = vmatprep.subr.mxu0 0.0
    %2813 = vmatpush1.msra.mxu0 0.0
    %2814 = vmatprep.subr.mxu0 0.0
    %2815 = vmatpush1.msra.mxu0 0.0
    %2816 = vmatprep.subr.mxu0 0.0
    %2817 = vmatpush1.msra.mxu0 0.0
    %2818 = vmatprep.subr.mxu0 0.0
    %2819 = vmatpush1.msra.mxu0 0.0
    %2820 = vmatprep.subr.mxu0 0.0
    %2821 = vmatpush1.msra.mxu0 0.0
    %2822 = vmatprep.subr.mxu0 0.0
    %2823 = vmatpush1.msra.mxu0 0.0
    %2824 = vmatprep.subr.mxu0 0.0
    %2825 = vmatpush1.msra.mxu0 0.0
    %2826 = vmatprep.subr.mxu0 0.0
    %2827 = vmatpush1.msra.mxu0 0.0
    %2828 = vmatprep.subr.mxu0 0.0
    %2829 = vmatpush1.msra.mxu0 0.0
    %2830 = vmatprep.subr.mxu0 0.0
    %2831 = vmatpush1.msra.mxu0 0.0
    %2832 = vmatprep.subr.mxu0 0.0
    %2833 = vmatpush1.msra.mxu0 0.0
    %2834 = vmatprep.subr.mxu0 0.0
    %2835 = vmatpush1.msra.mxu0 0.0
    %2836 = vmatprep.subr.mxu0 0.0
    %2837 = vmatpush1.msra.mxu0 0.0
    %2838 = vmatprep.subr.mxu0 0.0
    %2839 = vmatpush1.msra.mxu0 0.0
    %2840 = vmatprep.subr.mxu0 0.0
    %2841 = vmatpush1.msra.mxu0 0.0
    %2842 = vmatprep.subr.mxu0 0.0
    %2843 = vmatpush1.msra.mxu0 0.0
    %2844 = vmatprep.subr.mxu0 0.0
    %2845 = vmatpush1.msra.mxu0 0.0
    %2846 = vmatprep.subr.mxu0 0.0
    %2847 = vmatpush1.msra.mxu0 0.0
    %2848 = vmatprep.subr.mxu0 0.0
    %2849 = vmatpush1.msra.mxu0 0.0
    %2850 = vmatprep.subr.mxu0 0.0
    %2851 = vmatpush1.msra.mxu0 0.0
    %2852 = vmatprep.subr.mxu0 0.0
    %2853 = vmatpush1.msra.mxu0 0.0
    %2854 = vmatprep.subr.mxu0 0.0
    %2855 = vmatpush1.msra.mxu0 0.0
    %2856 = vmatprep.subr.mxu0 0.0
    %2857 = vmatpush1.msra.mxu0 0.0
    %2858 = vmatprep.mubr.f32.mxu0 0.0
    %2859 = vmatmul.mubr.f32.gmra.mrb[0].mxu0 %v1269
    %v2860 = vpop.f32.mrb[0].mxu0
    %v2861 = vadd.f32 0.0, %v2860
    %v2862 = vpop.f32.mrb[0].mxu0
    %2863 = vmatprep.mubr.f32.mxu0 0.0
    %2864 = vmatmul.mubr.f32.gmra.mrb[0].mxu0 %v1272
    %v2865 = vpop.f32.mrb[0].mxu0
    %v2866 = vadd.f32 0.0, %v2865
    %v2867 = vpop.f32.mrb[0].mxu0
    %2868 = vmatprep.mubr.f32.mxu0 0.0
    %2869 = vmatmul.mubr.f32.gmra.mrb[0].mxu0 %v1275
    %v2870 = vpop.f32.mrb[0].mxu0
    %v2871 = vadd.f32 0.0, %v2870
    %v2872 = vpop.f32.mrb[0].mxu0
    %2873 = vdwg.mxu0
    %2874 = vmatprep.subr.mxu0 0.0
    %2875 = vmatpush1.msra.mxu0 %v2788
    %2876 = vmatprep.subr.mxu0 0.0
    %2877 = vmatpush1.msra.mxu0 %v2789
    %2878 = vmatprep.subr.mxu0 0.0
    %2879 = vmatpush1.msra.mxu0 %v2790
    %2880 = vmatprep.subr.mxu0 0.0
    %2881 = vmatpush1.msra.mxu0 %v2791
    %2882 = vmatprep.subr.mxu0 0.0
    %2883 = vmatpush1.msra.mxu0 %v2792
    %2884 = vmatprep.subr.mxu0 0.0
    %2885 = vmatpush1.msra.mxu0 %v2793
    %2886 = vmatprep.subr.mxu0 0.0
    %2887 = vmatpush1.msra.mxu0 0.0
    %2888 = vmatprep.subr.mxu0 0.0
    %2889 = vmatpush1.msra.mxu0 0.0
    %2890 = vmatprep.subr.mxu0 0.0
    %2891 = vmatpush1.msra.mxu0 0.0
    %2892 = vmatprep.subr.mxu0 0.0
    %2893 = vmatpush1.msra.mxu0 0.0
    %2894 = vmatprep.subr.mxu0 0.0
    %2895 = vmatpush1.msra.mxu0 0.0
    %2896 = vmatprep.subr.mxu0 0.0
    %2897 = vmatpush1.msra.mxu0 0.0
    %2898 = vmatprep.subr.mxu0 0.0
    %2899 = vmatpush1.msra.mxu0 0.0
    %2900 = vmatprep.subr.mxu0 0.0
    %2901 = vmatpush1.msra.mxu0 0.0
    %2902 = vmatprep.subr.mxu0 0.0
    %2903 = vmatpush1.msra.mxu0 0.0
    %2904 = vmatprep.subr.mxu0 0.0
    %2905 = vmatpush1.msra.mxu0 0.0
    %2906 = vmatprep.subr.mxu0 0.0
    %2907 = vmatpush1.msra.mxu0 0.0
    %2908 = vmatprep.subr.mxu0 0.0
    %2909 = vmatpush1.msra.mxu0 0.0
    %2910 = vmatprep.subr.mxu0 0.0
    %2911 = vmatpush1.msra.mxu0 0.0
    %2912 = vmatprep.subr.mxu0 0.0
    %2913 = vmatpush1.msra.mxu0 0.0
    %2914 = vmatprep.subr.mxu0 0.0
    %2915 = vmatpush1.msra.mxu0 0.0
    %2916 = vmatprep.subr.mxu0 0.0
    %2917 = vmatpush1.msra.mxu0 0.0
    %2918 = vmatprep.subr.mxu0 0.0
    %2919 = vmatpush1.msra.mxu0 0.0
    %2920 = vmatprep.subr.mxu0 0.0
    %2921 = vmatpush1.msra.mxu0 0.0
    %2922 = vmatprep.subr.mxu0 0.0
    %2923 = vmatpush1.msra.mxu0 0.0
    %2924 = vmatprep.subr.mxu0 0.0
    %2925 = vmatpush1.msra.mxu0 0.0
    %2926 = vmatprep.subr.mxu0 0.0
    %2927 = vmatpush1.msra.mxu0 0.0
    %2928 = vmatprep.subr.mxu0 0.0
    %2929 = vmatpush1.msra.mxu0 0.0
    %2930 = vmatprep.subr.mxu0 0.0
    %2931 = vmatpush1.msra.mxu0 0.0
    %2932 = vmatprep.subr.mxu0 0.0
    %2933 = vmatpush1.msra.mxu0 0.0
    %2934 = vmatprep.subr.mxu0 0.0
    %2935 = vmatpush1.msra.mxu0 0.0
    %2936 = vmatprep.subr.mxu0 0.0
    %2937 = vmatpush1.msra.mxu0 0.0
    %2938 = vmatprep.mubr.f32.mxu0 0.0
    %2939 = vmatmul.mubr.f32.gmra.mrb[0].mxu0 %v1358
    %v2940 = vpop.f32.mrb[0].mxu0
    %v2941 = vadd.f32 0.0, %v2940
    %v2942 = vpop.f32.mrb[0].mxu0
    %2943 = vmatprep.mubr.f32.mxu0 0.0
    %2944 = vmatmul.mubr.f32.gmra.mrb[0].mxu0 %v1361
    %v2945 = vpop.f32.mrb[0].mxu0
    %v2946 = vadd.f32 0.0, %v2945
    %v2947 = vpop.f32.mrb[0].mxu0
    %2948 = vmatprep.mubr.f32.mxu0 0.0
    %2949 = vmatmul.mubr.f32.gmra.mrb[0].mxu0 %v1364
    %v2950 = vpop.f32.mrb[0].mxu0
    %v2951 = vadd.f32 0.0, %v2950
    %v2952 = vpop.f32.mrb[0].mxu0
    %2953 = vdwg.mxu0
    %v2954 = vmax.f32 %v2861, %v2941
    %v2955 = vmax.f32 %v2866, %v2946
    %v2956 = vmax.f32 %v2871, %v2951
    %v2958 = vsel %vm1052, %v996, 0
    %v2961 = vsel %vm1052, %v997, 0
    %v2964 = vsel %vm1052, %v998, 0
    %v2967 = vsel %vm1052, %v999, 0
    %v2970 = vsel %vm1052, %v1000, 0
    %v2973 = vsel %vm1052, %v1001, 0
    %2975 = vmatprep.subr.mxu0 0.0
    %2976 = vmatpush1.msra.mxu0 %v1015
    %2977 = vmatprep.subr.mxu0 0.0
    %2978 = vmatpush1.msra.mxu0 %v1016
    %2979 = vmatprep.subr.mxu0 0.0
    %2980 = vmatpush1.msra.mxu0 %v1017
    %2981 = vmatprep.subr.mxu0 0.0
    %2982 = vmatpush1.msra.mxu0 0.0
    %2983 = vmatprep.subr.mxu0 0.0
    %2984 = vmatpush1.msra.mxu0 0.0
    %2985 = vmatprep.subr.mxu0 0.0
    %2986 = vmatpush1.msra.mxu0 0.0
    %2987 = vmatprep.subr.mxu0 0.0
    %2988 = vmatpush1.msra.mxu0 0.0
    %2989 = vmatprep.subr.mxu0 0.0
    %2990 = vmatpush1.msra.mxu0 0.0
    %2991 = vmatprep.subr.mxu0 0.0
    %2992 = vmatpush1.msra.mxu0 0.0
    %2993 = vmatprep.subr.mxu0 0.0
    %2994 = vmatpush1.msra.mxu0 0.0
    %2995 = vmatprep.subr.mxu0 0.0
    %2996 = vmatpush1.msra.mxu0 0.0
    %2997 = vmatprep.subr.mxu0 0.0
    %2998 = vmatpush1.msra.mxu0 0.0
    %2999 = vmatprep.subr.mxu0 0.0
    %3000 = vmatpush1.msra.mxu0 0.0
    %3001 = vmatprep.subr.mxu0 0.0
    %3002 = vmatpush1.msra.mxu0 0.0
    %3003 = vmatprep.subr.mxu0 0.0
    %3004 = vmatpush1.msra.mxu0 0.0
    %3005 = vmatprep.subr.mxu0 0.0
    %3006 = vmatpush1.msra.mxu0 0.0
    %3007 = vmatprep.subr.mxu0 0.0
    %3008 = vmatpush1.msra.mxu0 0.0
    %3009 = vmatprep.subr.mxu0 0.0
    %3010 = vmatpush1.msra.mxu0 0.0
    %3011 = vmatprep.subr.mxu0 0.0
    %3012 = vmatpush1.msra.mxu0 0.0
    %3013 = vmatprep.subr.mxu0 0.0
    %3014 = vmatpush1.msra.mxu0 0.0
    %3015 = vmatprep.subr.mxu0 0.0
    %3016 = vmatpush1.msra.mxu0 0.0
    %3017 = vmatprep.subr.mxu0 0.0
    %3018 = vmatpush1.msra.mxu0 0.0
    %3019 = vmatprep.subr.mxu0 0.0
    %3020 = vmatpush1.msra.mxu0 0.0
    %3021 = vmatprep.subr.mxu0 0.0
    %3022 = vmatpush1.msra.mxu0 0.0
    %3023 = vmatprep.subr.mxu0 0.0
    %3024 = vmatpush1.msra.mxu0 0.0
    %3025 = vmatprep.subr.mxu0 0.0
    %3026 = vmatpush1.msra.mxu0 0.0
    %3027 = vmatprep.subr.mxu0 0.0
    %3028 = vmatpush1.msra.mxu0 0.0
    %3029 = vmatprep.subr.mxu0 0.0
    %3030 = vmatpush1.msra.mxu0 0.0
    %3031 = vmatprep.subr.mxu0 0.0
    %3032 = vmatpush1.msra.mxu0 0.0
    %3033 = vmatprep.subr.mxu0 0.0
    %3034 = vmatpush1.msra.mxu0 0.0
    %3035 = vmatprep.subr.mxu0 0.0
    %3036 = vmatpush1.msra.mxu0 0.0
    %3037 = vmatprep.subr.mxu0 0.0
    %3038 = vmatpush1.msra.mxu0 0.0
    %3039 = vmatprep.mubr.f32.mxu0 0.0
    %3040 = vmatmul.mubr.f32.gmra.mrb[0].mxu0 %v2958
    %v3041 = vpop.f32.mrb[0].mxu0
    %v3042 = vadd.f32 0.0, %v3041
    %v3043 = vpop.f32.mrb[0].mxu0
    %3044 = vmatprep.mubr.f32.mxu0 0.0
    %3045 = vmatmul.mubr.f32.gmra.mrb[0].mxu0 %v2961
    %v3046 = vpop.f32.mrb[0].mxu0
    %v3047 = vadd.f32 0.0, %v3046
    %v3048 = vpop.f32.mrb[0].mxu0
    %3049 = vmatprep.mubr.f32.mxu0 0.0
    %3050 = vmatmul.mubr.f32.gmra.mrb[0].mxu0 %v2964
    %v3051 = vpop.f32.mrb[0].mxu0
    %v3052 = vadd.f32 0.0, %v3051
    %v3053 = vpop.f32.mrb[0].mxu0
    %3054 = vmatprep.mubr.f32.mxu0 0.0
    %3055 = vmatmul.mubr.f32.gmra.mrb[0].mxu0 %v2967
    %v3056 = vpop.f32.mrb[0].mxu0
    %v3057 = vadd.f32 0.0, %v3056
    %v3058 = vpop.f32.mrb[0].mxu0
    %3059 = vmatprep.mubr.f32.mxu0 0.0
    %3060 = vmatmul.mubr.f32.gmra.mrb[0].mxu0 %v2970
    %v3061 = vpop.f32.mrb[0].mxu0
    %v3062 = vadd.f32 0.0, %v3061
    %v3063 = vpop.f32.mrb[0].mxu0
    %3064 = vmatprep.mubr.f32.mxu0 0.0
    %3065 = vmatmul.mubr.f32.gmra.mrb[0].mxu0 %v2973
    %v3066 = vpop.f32.mrb[0].mxu0
    %v3067 = vadd.f32 0.0, %v3066
    %v3068 = vpop.f32.mrb[0].mxu0
    %3069 = vdwg.mxu0
    %3070 = vmatprep.subr.mxu0 0.0
    %3071 = vmatpush1.msra.mxu0 %v1025
    %3072 = vmatprep.subr.mxu0 0.0
    %3073 = vmatpush1.msra.mxu0 %v1026
    %3074 = vmatprep.subr.mxu0 0.0
    %3075 = vmatpush1.msra.mxu0 %v1027
    %3076 = vmatprep.subr.mxu0 0.0
    %3077 = vmatpush1.msra.mxu0 0.0
    %3078 = vmatprep.subr.mxu0 0.0
    %3079 = vmatpush1.msra.mxu0 0.0
    %3080 = vmatprep.subr.mxu0 0.0
    %3081 = vmatpush1.msra.mxu0 0.0
    %3082 = vmatprep.subr.mxu0 0.0
    %3083 = vmatpush1.msra.mxu0 0.0
    %3084 = vmatprep.subr.mxu0 0.0
    %3085 = vmatpush1.msra.mxu0 0.0
    %3086 = vmatprep.subr.mxu0 0.0
    %3087 = vmatpush1.msra.mxu0 0.0
    %3088 = vmatprep.subr.mxu0 0.0
    %3089 = vmatpush1.msra.mxu0 0.0
    %3090 = vmatprep.subr.mxu0 0.0
    %3091 = vmatpush1.msra.mxu0 0.0
    %3092 = vmatprep.subr.mxu0 0.0
    %3093 = vmatpush1.msra.mxu0 0.0
    %3094 = vmatprep.subr.mxu0 0.0
    %3095 = vmatpush1.msra.mxu0 0.0
    %3096 = vmatprep.subr.mxu0 0.0
    %3097 = vmatpush1.msra.mxu0 0.0
    %3098 = vmatprep.subr.mxu0 0.0
    %3099 = vmatpush1.msra.mxu0 0.0
    %3100 = vmatprep.subr.mxu0 0.0
    %3101 = vmatpush1.msra.mxu0 0.0
    %3102 = vmatprep.subr.mxu0 0.0
    %3103 = vmatpush1.msra.mxu0 0.0
    %3104 = vmatprep.subr.mxu0 0.0
    %3105 = vmatpush1.msra.mxu0 0.0
    %3106 = vmatprep.subr.mxu0 0.0
    %3107 = vmatpush1.msra.mxu0 0.0
    %3108 = vmatprep.subr.mxu0 0.0
    %3109 = vmatpush1.msra.mxu0 0.0
    %3110 = vmatprep.subr.mxu0 0.0
    %3111 = vmatpush1.msra.mxu0 0.0
    %3112 = vmatprep.subr.mxu0 0.0
    %3113 = vmatpush1.msra.mxu0 0.0
    %3114 = vmatprep.subr.mxu0 0.0
    %3115 = vmatpush1.msra.mxu0 0.0
    %3116 = vmatprep.subr.mxu0 0.0
    %3117 = vmatpush1.msra.mxu0 0.0
    %3118 = vmatprep.subr.mxu0 0.0
    %3119 = vmatpush1.msra.mxu0 0.0
    %3120 = vmatprep.subr.mxu0 0.0
    %3121 = vmatpush1.msra.mxu0 0.0
    %3122 = vmatprep.subr.mxu0 0.0
    %3123 = vmatpush1.msra.mxu0 0.0
    %3124 = vmatprep.subr.mxu0 0.0
    %3125 = vmatpush1.msra.mxu0 0.0
    %3126 = vmatprep.subr.mxu0 0.0
    %3127 = vmatpush1.msra.mxu0 0.0
    %3128 = vmatprep.subr.mxu0 0.0
    %3129 = vmatpush1.msra.mxu0 0.0
    %3130 = vmatprep.subr.mxu0 0.0
    %3131 = vmatpush1.msra.mxu0 0.0
    %3132 = vmatprep.subr.mxu0 0.0
    %3133 = vmatpush1.msra.mxu0 0.0
    %3134 = vmatprep.mubr.f32.mxu0 0.0
    %3135 = vmatmul.mubr.f32.gmra.mrb[0].mxu0 %v2958
    %v3136 = vpop.f32.mrb[0].mxu0
    %v3137 = vadd.f32 0.0, %v3136
    %v3138 = vpop.f32.mrb[0].mxu0
    %3139 = vmatprep.mubr.f32.mxu0 0.0
    %3140 = vmatmul.mubr.f32.gmra.mrb[0].mxu0 %v2961
    %v3141 = vpop.f32.mrb[0].mxu0
    %v3142 = vadd.f32 0.0, %v3141
    %v3143 = vpop.f32.mrb[0].mxu0
    %3144 = vmatprep.mubr.f32.mxu0 0.0
    %3145 = vmatmul.mubr.f32.gmra.mrb[0].mxu0 %v2964
    %v3146 = vpop.f32.mrb[0].mxu0
    %v3147 = vadd.f32 0.0, %v3146
    %v3148 = vpop.f32.mrb[0].mxu0
    %3149 = vmatprep.mubr.f32.mxu0 0.0
    %3150 = vmatmul.mubr.f32.gmra.mrb[0].mxu0 %v2967
    %v3151 = vpop.f32.mrb[0].mxu0
    %v3152 = vadd.f32 0.0, %v3151
    %v3153 = vpop.f32.mrb[0].mxu0
    %3154 = vmatprep.mubr.f32.mxu0 0.0
    %3155 = vmatmul.mubr.f32.gmra.mrb[0].mxu0 %v2970
    %v3156 = vpop.f32.mrb[0].mxu0
    %v3157 = vadd.f32 0.0, %v3156
    %v3158 = vpop.f32.mrb[0].mxu0
    %3159 = vmatprep.mubr.f32.mxu0 0.0
    %3160 = vmatmul.mubr.f32.gmra.mrb[0].mxu0 %v2973
    %v3161 = vpop.f32.mrb[0].mxu0
    %v3162 = vadd.f32 0.0, %v3161
    %v3163 = vpop.f32.mrb[0].mxu0
    %3164 = vdwg.mxu0
    %v3165 = vmax.f32 %v3042, %v3137
    %v3166 = vmax.f32 %v3047, %v3142
    %v3167 = vmax.f32 %v3052, %v3147
    %v3168 = vmax.f32 %v3057, %v3152
    %v3169 = vmax.f32 %v3062, %v3157
    %v3170 = vmax.f32 %v3067, %v3162
    %3171 = vmatprep.subr.mxu0 0.0
    %3172 = vmatpush1.msra.mxu0 %v3165
    %3173 = vmatprep.subr.mxu0 0.0
    %3174 = vmatpush1.msra.mxu0 %v3166
    %3175 = vmatprep.subr.mxu0 0.0
    %3176 = vmatpush1.msra.mxu0 %v3167
    %3177 = vmatprep.subr.mxu0 0.0
    %3178 = vmatpush1.msra.mxu0 %v3168
    %3179 = vmatprep.subr.mxu0 0.0
    %3180 = vmatpush1.msra.mxu0 %v3169
    %3181 = vmatprep.subr.mxu0 0.0
    %3182 = vmatpush1.msra.mxu0 %v3170
    %3183 = vmatprep.subr.mxu0 0.0
    %3184 = vmatpush1.msra.mxu0 0.0
    %3185 = vmatprep.subr.mxu0 0.0
    %3186 = vmatpush1.msra.mxu0 0.0
    %3187 = vmatprep.subr.mxu0 0.0
    %3188 = vmatpush1.msra.mxu0 0.0
    %3189 = vmatprep.subr.mxu0 0.0
    %3190 = vmatpush1.msra.mxu0 0.0
    %3191 = vmatprep.subr.mxu0 0.0
    %3192 = vmatpush1.msra.mxu0 0.0
    %3193 = vmatprep.subr.mxu0 0.0
    %3194 = vmatpush1.msra.mxu0 0.0
    %3195 = vmatprep.subr.mxu0 0.0
    %3196 = vmatpush1.msra.mxu0 0.0
    %3197 = vmatprep.subr.mxu0 0.0
    %3198 = vmatpush1.msra.mxu0 0.0
    %3199 = vmatprep.subr.mxu0 0.0
    %3200 = vmatpush1.msra.mxu0 0.0
    %3201 = vmatprep.subr.mxu0 0.0
    %3202 = vmatpush1.msra.mxu0 0.0
    %3203 = vmatprep.subr.mxu0 0.0
    %3204 = vmatpush1.msra.mxu0 0.0
    %3205 = vmatprep.subr.mxu0 0.0
    %3206 = vmatpush1.msra.mxu0 0.0
    %3207 = vmatprep.subr.mxu0 0.0
    %3208 = vmatpush1.msra.mxu0 0.0
    %3209 = vmatprep.subr.mxu0 0.0
    %3210 = vmatpush1.msra.mxu0 0.0
    %3211 = vmatprep.subr.mxu0 0.0
    %3212 = vmatpush1.msra.mxu0 0.0
    %3213 = vmatprep.subr.mxu0 0.0
    %3214 = vmatpush1.msra.mxu0 0.0
    %3215 = vmatprep.subr.mxu0 0.0
    %3216 = vmatpush1.msra.mxu0 0.0
    %3217 = vmatprep.subr.mxu0 0.0
    %3218 = vmatpush1.msra.mxu0 0.0
    %3219 = vmatprep.subr.mxu0 0.0
    %3220 = vmatpush1.msra.mxu0 0.0
    %3221 = vmatprep.subr.mxu0 0.0
    %3222 = vmatpush1.msra.mxu0 0.0
    %3223 = vmatprep.subr.mxu0 0.0
    %3224 = vmatpush1.msra.mxu0 0.0
    %3225 = vmatprep.subr.mxu0 0.0
    %3226 = vmatpush1.msra.mxu0 0.0
    %3227 = vmatprep.subr.mxu0 0.0
    %3228 = vmatpush1.msra.mxu0 0.0
    %3229 = vmatprep.subr.mxu0 0.0
    %3230 = vmatpush1.msra.mxu0 0.0
    %3231 = vmatprep.subr.mxu0 0.0
    %3232 = vmatpush1.msra.mxu0 0.0
    %3233 = vmatprep.subr.mxu0 0.0
    %3234 = vmatpush1.msra.mxu0 0.0
    %3235 = vmatprep.mubr.f32.mxu0 0.0
    %3236 = vmatmul.mubr.f32.gmra.mrb[0].mxu0 %v1269
    %v3237 = vpop.f32.mrb[0].mxu0
    %v3238 = vadd.f32 0.0, %v3237
    %v3239 = vpop.f32.mrb[0].mxu0
    %3240 = vmatprep.mubr.f32.mxu0 0.0
    %3241 = vmatmul.mubr.f32.gmra.mrb[0].mxu0 %v1272
    %v3242 = vpop.f32.mrb[0].mxu0
    %v3243 = vadd.f32 0.0, %v3242
    %v3244 = vpop.f32.mrb[0].mxu0
    %3245 = vmatprep.mubr.f32.mxu0 0.0
    %3246 = vmatmul.mubr.f32.gmra.mrb[0].mxu0 %v1275
    %v3247 = vpop.f32.mrb[0].mxu0
    %v3248 = vadd.f32 0.0, %v3247
    %v3249 = vpop.f32.mrb[0].mxu0
    %3250 = vdwg.mxu0
    %3251 = vmatprep.subr.mxu0 0.0
    %3252 = vmatpush1.msra.mxu0 %v3165
    %3253 = vmatprep.subr.mxu0 0.0
    %3254 = vmatpush1.msra.mxu0 %v3166
    %3255 = vmatprep.subr.mxu0 0.0
    %3256 = vmatpush1.msra.mxu0 %v3167
    %3257 = vmatprep.subr.mxu0 0.0
    %3258 = vmatpush1.msra.mxu0 %v3168
    %3259 = vmatprep.subr.mxu0 0.0
    %3260 = vmatpush1.msra.mxu0 %v3169
    %3261 = vmatprep.subr.mxu0 0.0
    %3262 = vmatpush1.msra.mxu0 %v3170
    %3263 = vmatprep.subr.mxu0 0.0
    %3264 = vmatpush1.msra.mxu0 0.0
    %3265 = vmatprep.subr.mxu0 0.0
    %3266 = vmatpush1.msra.mxu0 0.0
    %3267 = vmatprep.subr.mxu0 0.0
    %3268 = vmatpush1.msra.mxu0 0.0
    %3269 = vmatprep.subr.mxu0 0.0
    %3270 = vmatpush1.msra.mxu0 0.0
    %3271 = vmatprep.subr.mxu0 0.0
    %3272 = vmatpush1.msra.mxu0 0.0
    %3273 = vmatprep.subr.mxu0 0.0
    %3274 = vmatpush1.msra.mxu0 0.0
    %3275 = vmatprep.subr.mxu0 0.0
    %3276 = vmatpush1.msra.mxu0 0.0
    %3277 = vmatprep.subr.mxu0 0.0
    %3278 = vmatpush1.msra.mxu0 0.0
    %3279 = vmatprep.subr.mxu0 0.0
    %3280 = vmatpush1.msra.mxu0 0.0
    %3281 = vmatprep.subr.mxu0 0.0
    %3282 = vmatpush1.msra.mxu0 0.0
    %3283 = vmatprep.subr.mxu0 0.0
    %3284 = vmatpush1.msra.mxu0 0.0
    %3285 = vmatprep.subr.mxu0 0.0
    %3286 = vmatpush1.msra.mxu0 0.0
    %3287 = vmatprep.subr.mxu0 0.0
    %3288 = vmatpush1.msra.mxu0 0.0
    %3289 = vmatprep.subr.mxu0 0.0
    %3290 = vmatpush1.msra.mxu0 0.0
    %3291 = vmatprep.subr.mxu0 0.0
    %3292 = vmatpush1.msra.mxu0 0.0
    %3293 = vmatprep.subr.mxu0 0.0
    %3294 = vmatpush1.msra.mxu0 0.0
    %3295 = vmatprep.subr.mxu0 0.0
    %3296 = vmatpush1.msra.mxu0 0.0
    %3297 = vmatprep.subr.mxu0 0.0
    %3298 = vmatpush1.msra.mxu0 0.0
    %3299 = vmatprep.subr.mxu0 0.0
    %3300 = vmatpush1.msra.mxu0 0.0
    %3301 = vmatprep.subr.mxu0 0.0
    %3302 = vmatpush1.msra.mxu0 0.0
    %3303 = vmatprep.subr.mxu0 0.0
    %3304 = vmatpush1.msra.mxu0 0.0
    %3305 = vmatprep.subr.mxu0 0.0
    %3306 = vmatpush1.msra.mxu0 0.0
    %3307 = vmatprep.subr.mxu0 0.0
    %3308 = vmatpush1.msra.mxu0 0.0
    %3309 = vmatprep.subr.mxu0 0.0
    %3310 = vmatpush1.msra.mxu0 0.0
    %3311 = vmatprep.subr.mxu0 0.0
    %3312 = vmatpush1.msra.mxu0 0.0
    %3313 = vmatprep.subr.mxu0 0.0
    %3314 = vmatpush1.msra.mxu0 0.0
    %3315 = vmatprep.mubr.f32.mxu0 0.0
    %3316 = vmatmul.mubr.f32.gmra.mrb[0].mxu0 %v1358
    %v3317 = vpop.f32.mrb[0].mxu0
    %v3318 = vadd.f32 0.0, %v3317
    %v3319 = vpop.f32.mrb[0].mxu0
    %3320 = vmatprep.mubr.f32.mxu0 0.0
    %3321 = vmatmul.mubr.f32.gmra.mrb[0].mxu0 %v1361
    %v3322 = vpop.f32.mrb[0].mxu0
    %v3323 = vadd.f32 0.0, %v3322
    %v3324 = vpop.f32.mrb[0].mxu0
    %3325 = vmatprep.mubr.f32.mxu0 0.0
    %3326 = vmatmul.mubr.f32.gmra.mrb[0].mxu0 %v1364
    %v3327 = vpop.f32.mrb[0].mxu0
    %v3328 = vadd.f32 0.0, %v3327
    %v3329 = vpop.f32.mrb[0].mxu0
    %3330 = vdwg.mxu0
    %v3331 = vmax.f32 %v3238, %v3318
    %v3332 = vmax.f32 %v3243, %v3323
    %v3333 = vmax.f32 %v3248, %v3328
    %v3336 = vrot.slane %v1447, 4
    %v3337 = vrot.slane %v1448, 4
    %v3338 = vsel %vm125, %v3336, %v3337
    %v3341 = vrot.slane %v1446, 1
    %v3342 = vrot.slane %v1447, 1
    %v3343 = vsel %vm80, %v3341, %v3342
    %vm3344 = vcmask 1042432
    %v3345 = vrot.slane %v1447, 5
    %v3346 = vrot.slane %v1448, 5
    %v3347 = vsel %vm3344, %v3345, %v3346
    %v3348 = vrot.slane %v1446, 2
    %v3349 = vrot.slane %v1447, 2
    %v3350 = vsel %vm95, %v3348, %v3349
    %vm3351 = vcmask 1041408
    %v3352 = vrot.slane %v1447, 6
    %v3353 = vrot.slane %v1448, 6
    %v3354 = vsel %vm3351, %v3352, %v3353
    %v3355 = vrot.slane %v1446, 3
    %v3356 = vrot.slane %v1447, 3
    %v3357 = vsel %vm110, %v3355, %v3356
    %vm3358 = vcmask 1040384
    %v3359 = vrot.slane %v1447, 7
    %v3360 = vrot.slane %v1448, 7
    %v3361 = vsel %vm3358, %v3359, %v3360
    %v3362 = vrot.slane %v1446, 4
    %v3363 = vsel %vm125, %v3362, %v3336
    %v3366 = vrot.slane %v1824, 4
    %v3367 = vrot.slane %v1825, 4
    %v3368 = vsel %vm125, %v3366, %v3367
    %v3370 = vrot.slane %v1823, 1
    %v3371 = vrot.slane %v1824, 1
    %v3372 = vsel %vm80, %v3370, %v3371
    %v3373 = vrot.slane %v1824, 5
    %v3374 = vrot.slane %v1825, 5
    %v3375 = vsel %vm3344, %v3373, %v3374
    %v3376 = vrot.slane %v1823, 2
    %v3377 = vrot.slane %v1824, 2
    %v3378 = vsel %vm95, %v3376, %v3377
    %v3379 = vrot.slane %v1824, 6
    %v3380 = vrot.slane %v1825, 6
    %v3381 = vsel %vm3351, %v3379, %v3380
    %v3382 = vrot.slane %v1823, 3
    %v3383 = vrot.slane %v1824, 3
    %v3384 = vsel %vm110, %v3382, %v3383
    %v3385 = vrot.slane %v1824, 7
    %v3386 = vrot.slane %v1825, 7
    %v3387 = vsel %vm3358, %v3385, %v3386
    %v3388 = vrot.slane %v1823, 4
    %v3389 = vsel %vm125, %v3388, %v3366
    %v3392 = vrot.slane %v2201, 4
    %v3393 = vrot.slane %v2202, 4
    %v3394 = vsel %vm125, %v3392, %v3393
    %v3396 = vrot.slane %v2200, 1
    %v3397 = vrot.slane %v2201, 1
    %v3398 = vsel %vm80, %v3396, %v3397
    %v3399 = vrot.slane %v2201, 5
    %v3400 = vrot.slane %v2202, 5
    %v3401 = vsel %vm3344, %v3399, %v3400
    %v3402 = vrot.slane %v2200, 2
    %v3403 = vrot.slane %v2201, 2
    %v3404 = vsel %vm95, %v3402, %v3403
    %v3405 = vrot.slane %v2201, 6
    %v3406 = vrot.slane %v2202, 6
    %v3407 = vsel %vm3351, %v3405, %v3406
    %v3408 = vrot.slane %v2200, 3
    %v3409 = vrot.slane %v2201, 3
    %v3410 = vsel %vm110, %v3408, %v3409
    %v3411 = vrot.slane %v2201, 7
    %v3412 = vrot.slane %v2202, 7
    %v3413 = vsel %vm3358, %v3411, %v3412
    %v3414 = vrot.slane %v2200, 4
    %v3415 = vsel %vm125, %v3414, %v3392
    %v3418 = vrot.slane %v2578, 4
    %v3419 = vrot.slane %v2579, 4
    %v3420 = vsel %vm125, %v3418, %v3419
    %v3422 = vrot.slane %v2577, 1
    %v3423 = vrot.slane %v2578, 1
    %v3424 = vsel %vm80, %v3422, %v3423
    %v3426 = vrot.slane %v2578, 5
    %v3427 = vrot.slane %v2579, 5
    %v3428 = vsel %vm3344, %v3426, %v3427
    %v3430 = vrot.slane %v2577, 2
    %v3431 = vrot.slane %v2578, 2
    %v3432 = vsel %vm95, %v3430, %v3431
    %v3433 = vrot.slane %v2578, 6
    %v3434 = vrot.slane %v2579, 6
    %v3435 = vsel %vm3351, %v3433, %v3434
    %v3436 = vrot.slane %v2577, 3
    %v3437 = vrot.slane %v2578, 3
    %v3438 = vsel %vm110, %v3436, %v3437
    %v3439 = vrot.slane %v2578, 7
    %v3440 = vrot.slane %v2579, 7
    %v3441 = vsel %vm3358, %v3439, %v3440
    %v3442 = vrot.slane %v2577, 4
    %v3443 = vsel %vm125, %v3442, %v3418
    %v3446 = vrot.slane %v2955, 4
    %v3447 = vrot.slane %v2956, 4
    %v3448 = vsel %vm125, %v3446, %v3447
    %v3450 = vrot.slane %v2954, 1
    %v3451 = vrot.slane %v2955, 1
    %v3452 = vsel %vm80, %v3450, %v3451
    %v3453 = vrot.slane %v2955, 5
    %v3454 = vrot.slane %v2956, 5
    %v3455 = vsel %vm3344, %v3453, %v3454
    %v3456 = vrot.slane %v2954, 2
    %v3457 = vrot.slane %v2955, 2
    %v3458 = vsel %vm95, %v3456, %v3457
    %v3459 = vrot.slane %v2955, 6
    %v3460 = vrot.slane %v2956, 6
    %v3461 = vsel %vm3351, %v3459, %v3460
    %v3462 = vrot.slane %v2954, 3
    %v3463 = vrot.slane %v2955, 3
    %v3464 = vsel %vm110, %v3462, %v3463
    %v3465 = vrot.slane %v2955, 7
    %v3466 = vrot.slane %v2956, 7
    %v3467 = vsel %vm3358, %v3465, %v3466
    %v3468 = vrot.slane %v2954, 4
    %v3469 = vsel %vm125, %v3468, %v3446
    %v3472 = vrot.slane %v3332, 4
    %v3473 = vrot.slane %v3333, 4
    %v3474 = vsel %vm125, %v3472, %v3473
    %v3476 = vrot.slane %v3331, 1
    %v3477 = vrot.slane %v3332, 1
    %v3478 = vsel %vm80, %v3476, %v3477
    %v3479 = vrot.slane %v3332, 5
    %v3480 = vrot.slane %v3333, 5
    %v3481 = vsel %vm3344, %v3479, %v3480
    %v3482 = vrot.slane %v3331, 2
    %v3483 = vrot.slane %v3332, 2
    %v3484 = vsel %vm95, %v3482, %v3483
    %v3485 = vrot.slane %v3332, 6
    %v3486 = vrot.slane %v3333, 6
    %v3487 = vsel %vm3351, %v3485, %v3486
    %v3488 = vrot.slane %v3331, 3
    %v3489 = vrot.slane %v3332, 3
    %v3490 = vsel %vm110, %v3488, %v3489
    %v3491 = vrot.slane %v3332, 7
    %v3492 = vrot.slane %v3333, 7
    %v3493 = vsel %vm3358, %v3491, %v3492
    %v3494 = vrot.slane %v3331, 4
    %v3495 = vsel %vm125, %v3494, %v3472
    %3496 = vrot.lane.b32.xlu0 %v3343, 12
    %v3497 = vpop.permute.xlu0 %3496
    %3498 = vrot.lane.b32.xlu0 %v3347, 12
    %v3499 = vpop.permute.xlu0 %3498
    %3502 = vrot.lane.b32.xlu0 %v3350, 24
    %v3503 = vpop.permute.xlu0 %3502
    %3504 = vrot.lane.b32.xlu0 %v3354, 24
    %v3505 = vpop.permute.xlu0 %3504
    %3508 = vrot.lane.b32.xlu0 %v3357, 36
    %v3509 = vpop.permute.xlu0 %3508
    %3510 = vrot.lane.b32.xlu0 %v3361, 36
    %v3511 = vpop.permute.xlu0 %3510
    %3514 = vrot.lane.b32.xlu0 %v3363, 48
    %v3515 = vpop.permute.xlu0 %3514
    %3516 = vrot.lane.b32.xlu0 %v1448, 48
    %v3517 = vpop.permute.xlu0 %3516
    %3520 = vrot.lane.b32.xlu0 %v1823, 60
    %v3521 = vpop.permute.xlu0 %3520
    %3522 = vrot.lane.b32.xlu0 %v3368, 60
    %v3523 = vpop.permute.xlu0 %3522
    %3526 = vrot.lane.b32.xlu0 %v3372, 72
    %v3527 = vpop.permute.xlu0 %3526
    %3528 = vrot.lane.b32.xlu0 %v3375, 72
    %v3529 = vpop.permute.xlu0 %3528
    %3532 = vrot.lane.b32.xlu0 %v3378, 84
    %v3533 = vpop.permute.xlu0 %3532
    %3534 = vrot.lane.b32.xlu0 %v3381, 84
    %v3535 = vpop.permute.xlu0 %3534
    %3538 = vrot.lane.b32.xlu0 %v3384, 96
    %v3539 = vpop.permute.xlu0 %3538
    %3540 = vrot.lane.b32.xlu0 %v3387, 96
    %v3541 = vpop.permute.xlu0 %3540
    %3544 = vrot.lane.b32.xlu0 %v3389, 108
    %v3545 = vpop.permute.xlu0 %3544
    %3546 = vrot.lane.b32.xlu0 %v1825, 108
    %v3547 = vpop.permute.xlu0 %3546
    %3550 = vrot.lane.b32.xlu0 %v2200, 120
    %v3551 = vpop.permute.xlu0 %3550
    %3552 = vrot.lane.b32.xlu0 %v3394, 120
    %v3553 = vpop.permute.xlu0 %3552
    %3556 = vrot.lane.b32.xlu0 %v3398, 4
    %v3557 = vpop.permute.xlu0 %3556
    %3558 = vrot.lane.b32.xlu0 %v3401, 4
    %v3559 = vpop.permute.xlu0 %3558
    %3562 = vrot.lane.b32.xlu0 %v3404, 16
    %v3563 = vpop.permute.xlu0 %3562
    %3564 = vrot.lane.b32.xlu0 %v3407, 16
    %v3565 = vpop.permute.xlu0 %3564
    %3568 = vrot.lane.b32.xlu0 %v3410, 28
    %v3569 = vpop.permute.xlu0 %3568
    %3570 = vrot.lane.b32.xlu0 %v3413, 28
    %v3571 = vpop.permute.xlu0 %3570
    %3574 = vrot.lane.b32.xlu0 %v3415, 40
    %v3575 = vpop.permute.xlu0 %3574
    %3576 = vrot.lane.b32.xlu0 %v2202, 40
    %v3577 = vpop.permute.xlu0 %3576
    %3580 = vrot.lane.b32.xlu0 %v2577, 52
    %v3581 = vpop.permute.xlu0 %3580
    %3582 = vrot.lane.b32.xlu0 %v3420, 52
    %v3583 = vpop.permute.xlu0 %3582
    %v3586 = vsel %vm260, %v1446, %v3497
    %v3587 = vsel %vm260, %v3338, %v3499
    %v3588 = vsel %vm1052, %v3586, %v3503
    %v3589 = vsel %vm1052, %v3587, %v3505
    %vm3590 = vcmask 293888
    %v3591 = vsel %vm3590, %v3588, %v3509
    %v3592 = vsel %vm3590, %v3589, %v3511
    %v3593 = vsel %vm1267, %v3591, %v3515
    %v3594 = vsel %vm1267, %v3592, %v3517
    %vm3595 = vcmask 490496
    %v3596 = vsel %vm3595, %v3593, %v3521
    %v3597 = vsel %vm3595, %v3594, %v3523
    %vm3598 = vcmask 588800
    %v3599 = vsel %vm3598, %v3596, %v3527
    %v3600 = vsel %vm3598, %v3597, %v3529
    %v3601 = vsel %vm226, %v3599, %v3533
    %v3602 = vsel %vm226, %v3600, %v3535
    %vm3603 = vcmask 785408
    %v3604 = vsel %vm3603, %v3601, %v3539
    %v3605 = vsel %vm3603, %v3602, %v3541
    %vm3606 = vcmask 883712
    %v3607 = vsel %vm3606, %v3604, %v3545
    %v3608 = vsel %vm3606, %v3605, %v3547
    %vm3609 = vcmask 982016
    %v3610 = vsel %vm3609, %v3607, %v3551
    %v3611 = vsel %vm3609, %v3608, %v3553
    %vm3612 = vcmask 31744
    %v3613 = vsel %vm3612, %v3551, %v3557
    %v3614 = vsel %vm3612, %v3553, %v3559
    %vm3615 = vcmask 130048
    %v3616 = vsel %vm3615, %v3613, %v3563
    %v3617 = vsel %vm3615, %v3614, %v3565
    %v3618 = vsel %vm212, %v3616, %v3569
    %v3619 = vsel %vm212, %v3617, %v3571
    %vm3620 = vcmask 326656
    %v3621 = vsel %vm3620, %v3618, %v3575
    %v3622 = vsel %vm3620, %v3619, %v3577
    %vm3623 = vcmask 424960
    %v3624 = vsel %vm3623, %v3621, %v3581
    %v3625 = vsel %vm3623, %v3622, %v3583
    %3626 = vrot.lane.b32.xlu0 %v3432, 12
    %v3627 = vpop.permute.xlu0 %3626
    %3628 = vrot.lane.b32.xlu0 %v3435, 12
    %v3629 = vpop.permute.xlu0 %3628
    %3632 = vrot.lane.b32.xlu0 %v3438, 24
    %v3633 = vpop.permute.xlu0 %3632
    %3634 = vrot.lane.b32.xlu0 %v3441, 24
    %v3635 = vpop.permute.xlu0 %3634
    %3638 = vrot.lane.b32.xlu0 %v3443, 36
    %v3639 = vpop.permute.xlu0 %3638
    %3640 = vrot.lane.b32.xlu0 %v2579, 36
    %v3641 = vpop.permute.xlu0 %3640
    %3644 = vrot.lane.b32.xlu0 %v2954, 48
    %v3645 = vpop.permute.xlu0 %3644
    %3646 = vrot.lane.b32.xlu0 %v3448, 48
    %v3647 = vpop.permute.xlu0 %3646
    %3650 = vrot.lane.b32.xlu0 %v3452, 60
    %v3651 = vpop.permute.xlu0 %3650
    %3652 = vrot.lane.b32.xlu0 %v3455, 60
    %v3653 = vpop.permute.xlu0 %3652
    %3656 = vrot.lane.b32.xlu0 %v3458, 72
    %v3657 = vpop.permute.xlu0 %3656
    %3658 = vrot.lane.b32.xlu0 %v3461, 72
    %v3659 = vpop.permute.xlu0 %3658
    %3662 = vrot.lane.b32.xlu0 %v3464, 84
    %v3663 = vpop.permute.xlu0 %3662
    %3664 = vrot.lane.b32.xlu0 %v3467, 84
    %v3665 = vpop.permute.xlu0 %3664
    %3668 = vrot.lane.b32.xlu0 %v3469, 96
    %v3669 = vpop.permute.xlu0 %3668
    %3670 = vrot.lane.b32.xlu0 %v2956, 96
    %v3671 = vpop.permute.xlu0 %3670
    %3674 = vrot.lane.b32.xlu0 %v3331, 108
    %v3675 = vpop.permute.xlu0 %3674
    %3676 = vrot.lane.b32.xlu0 %v3474, 108
    %v3677 = vpop.permute.xlu0 %3676
    %3680 = vrot.lane.b32.xlu0 %v3478, 120
    %v3681 = vpop.permute.xlu0 %3680
    %3682 = vrot.lane.b32.xlu0 %v3481, 120
    %v3683 = vpop.permute.xlu0 %3682
    %3686 = vrot.lane.b32.xlu0 %v3484, 4
    %v3687 = vpop.permute.xlu0 %3686
    %3688 = vrot.lane.b32.xlu0 %v3487, 4
    %v3689 = vpop.permute.xlu0 %3688
    %3692 = vrot.lane.b32.xlu0 %v3490, 16
    %v3693 = vpop.permute.xlu0 %3692
    %3694 = vrot.lane.b32.xlu0 %v3493, 16
    %v3695 = vpop.permute.xlu0 %3694
    %3698 = vrot.lane.b32.xlu0 %v3495, 28
    %v3699 = vpop.permute.xlu0 %3698
    %3700 = vrot.lane.b32.xlu0 %v3333, 28
    %v3701 = vpop.permute.xlu0 %3700
    %v3704 = vsel %vm260, %v3424, %v3627
    %v3705 = vsel %vm260, %v3428, %v3629
    %v3706 = vsel %vm1052, %v3704, %v3633
    %v3707 = vsel %vm1052, %v3705, %v3635
    %v3708 = vsel %vm3590, %v3706, %v3639
    %v3709 = vsel %vm3590, %v3707, %v3641
    %v3710 = vsel %vm1267, %v3708, %v3645
    %v3711 = vsel %vm1267, %v3709, %v3647
    %v3712 = vsel %vm3595, %v3710, %v3651
    %v3713 = vsel %vm3595, %v3711, %v3653
    %v3714 = vsel %vm3598, %v3712, %v3657
    %v3715 = vsel %vm3598, %v3713, %v3659
    %v3716 = vsel %vm226, %v3714, %v3663
    %v3717 = vsel %vm226, %v3715, %v3665
    %v3718 = vsel %vm3603, %v3716, %v3669
    %v3719 = vsel %vm3603, %v3717, %v3671
    %v3720 = vsel %vm3606, %v3718, %v3675
    %v3721 = vsel %vm3606, %v3719, %v3677
    %v3722 = vsel %vm3609, %v3720, %v3681
    %v3723 = vsel %vm3609, %v3721, %v3683
    %v3724 = vsel %vm3612, %v3681, %v3687
    %v3725 = vsel %vm3612, %v3683, %v3689
    %v3726 = vsel %vm3615, %v3724, %v3693
    %v3727 = vsel %vm3615, %v3725, %v3695
    %v3728 = vsel %vm212, %v3726, %v3699
    %v3729 = vsel %vm212, %v3727, %v3701
    %3734 = vrot.lane.b32.xlu0 %v3722, 64
    %v3735 = vpop.permute.xlu0 %3734
    %3736 = vrot.lane.b32.xlu0 %v3728, 64
    %v3737 = vpop.permute.xlu0 %3736
    %3738 = vrot.lane.b32.xlu0 %v3723, 64
    %v3739 = vpop.permute.xlu0 %3738
    %3740 = vrot.lane.b32.xlu0 %v3729, 64
    %v3741 = vpop.permute.xlu0 %3740
    %vm3742 = vcmask 523264
    %v3743 = vsel %vm3742, %v3735, %v3737
    %v3744 = vsel %vm3742, %v3739, %v3741
    %v3747 = vsel %vm3742, %v3624, %v3735
    %v3748 = vsel %vm3742, %v3625, %v3739
    %v3749 = vld [vmem:[%s3] sm:$0xff]
    %v3750 = vld [vmem:[%s3 + $0x8] sm:$0xff]
    %v3751 = vld [vmem:[%s3 + $0x10] sm:$0xff]
    %v3752 = vld [vmem:[%s3 + $0x18] sm:$0xff]
    %v3753 = vld [vmem:[%s3 + $0x20] sm:$0xff]
    %v3754 = vld [vmem:[%s3 + $0x28] sm:$0xff]
    %v3755 = vld [vmem:[%s3 + $0x30] sm:$0xff]
    %v3756 = vld [vmem:[%s3 + $0x38] sm:$0xff]
    %v3757 = vld [vmem:[%s3 + $0x40] sm:$0xff]
    %v3758 = vld [vmem:[%s3 + $0x48] sm:$0xff]
    %v3759 = vld [vmem:[%s3 + $0x50] sm:$0xff]
    %v3760 = vld [vmem:[%s3 + $0x58] sm:$0xff]
    %v3761 = vld [vmem:[%s3 + $0x60] sm:$0xff]
    %v3762 = vld [vmem:[%s3 + $0x68] sm:$0xff]
    %v3763 = vld [vmem:[%s3 + $0x70] sm:$0xff]
    %v3764 = vld [vmem:[%s3 + $0x78] sm:$0xff]
    %v3765 = vld [vmem:[%s3 + $0x80] sm:$0xff]
    %v3766 = vld [vmem:[%s3 + $0x88] sm:$0xff]
    %v3767 = vld [vmem:[%s3 + $0x90] sm:$0xff]
    %v3768 = vld [vmem:[%s3 + $0x98] sm:$0xff]
    %v3769 = vld [vmem:[%s3 + $0xa0] sm:$0xff]
    %v3770 = vld [vmem:[%s3 + $0xa8] sm:$0xff]
    %v3771 = vld [vmem:[%s3 + $0xb0] sm:$0xff]
    %v3772 = vld [vmem:[%s3 + $0xb8] sm:$0xff]
    %v3773 = vld [vmem:[%s3 + $0xc0] sm:$0xff]
    %v3774 = vld [vmem:[%s3 + $0xc8] sm:$0xff]
    %v3775 = vld [vmem:[%s3 + $0xd0] sm:$0xff]
    %v3776 = vld [vmem:[%s3 + $0xd8] sm:$0xff]
    %v3777 = vld [vmem:[%s3 + $0xe0] sm:$0xff]
    %v3778 = vld [vmem:[%s3 + $0xe8] sm:$0xff]
    %v3779 = vld [vmem:[%s3 + $0xf0] sm:$0xff]
    %v3780 = vld [vmem:[%s3 + $0xf8] sm:$0xff]
    %v3781 = vld [vmem:[%s3 + $0x100] sm:$0xff]
    %v3782 = vld [vmem:[%s3 + $0x108] sm:$0xff]
    %v3783 = vld [vmem:[%s3 + $0x110] sm:$0xff]
    %v3784 = vld [vmem:[%s3 + $0x118] sm:$0xff]
    %v3785 = vld [vmem:[%s3 + $0x120] sm:$0xff]
    %v3786 = vld [vmem:[%s3 + $0x128] sm:$0xff]
    %v3787 = vld [vmem:[%s3 + $0x130] sm:$0xff]
    %v3788 = vld [vmem:[%s3 + $0x138] sm:$0xff]
    %v3789 = vld [vmem:[%s3 + $0x140] sm:$0xff]
    %v3790 = vld [vmem:[%s3 + $0x148] sm:$0xff]
    %v3791 = vld [vmem:[%s3 + $0x150] sm:$0xff]
    %v3792 = vld [vmem:[%s3 + $0x158] sm:$0xff]
    %v3793 = vld [vmem:[%s3 + $0x160] sm:$0xff]
    %s3794 = sld [smem:[#allocation5]]
    %v3795 = vstv %s3794
    %vm3796 = vcmask 850944
    %v3797 = vsel %vm3796, %v3743, 0
    %v3799 = vsel %vm3796, %v3744, 0
    %3801 = vmatprep.subr.mxu0 0.0
    %3802 = vmatpush1.msra.mxu0 %v3749
    %3803 = vmatprep.subr.mxu0 0.0
    %3804 = vmatpush1.msra.mxu0 %v3750
    %3805 = vmatprep.subr.mxu0 0.0
    %3806 = vmatpush1.msra.mxu0 %v3751
    %3807 = vmatprep.subr.mxu0 0.0
    %3808 = vmatpush1.msra.mxu0 %v3752
    %3809 = vmatprep.subr.mxu0 0.0
    %3810 = vmatpush1.msra.mxu0 %v3753
    %3811 = vmatprep.subr.mxu0 0.0
    %3812 = vmatpush1.msra.mxu0 %v3754
    %3813 = vmatprep.subr.mxu0 0.0
    %3814 = vmatpush1.msra.mxu0 %v3755
    %3815 = vmatprep.subr.mxu0 0.0
    %3816 = vmatpush1.msra.mxu0 %v3756
    %3817 = vmatprep.subr.mxu0 0.0
    %3818 = vmatpush1.msra.mxu0 %v3757
    %3819 = vmatprep.subr.mxu0 0.0
    %3820 = vmatpush1.msra.mxu0 %v3758
    %3821 = vmatprep.subr.mxu0 0.0
    %3822 = vmatpush1.msra.mxu0 %v3759
    %3823 = vmatprep.subr.mxu0 0.0
    %3824 = vmatpush1.msra.mxu0 %v3760
    %3825 = vmatprep.subr.mxu0 0.0
    %3826 = vmatpush1.msra.mxu0 %v3761
    %3827 = vmatprep.subr.mxu0 0.0
    %3828 = vmatpush1.msra.mxu0 %v3762
    %3829 = vmatprep.subr.mxu0 0.0
    %3830 = vmatpush1.msra.mxu0 %v3763
    %3831 = vmatprep.subr.mxu0 0.0
    %3832 = vmatpush1.msra.mxu0 %v3764
    %3833 = vmatprep.subr.mxu0 0.0
    %3834 = vmatpush1.msra.mxu0 %v3765
    %3835 = vmatprep.subr.mxu0 0.0
    %3836 = vmatpush1.msra.mxu0 %v3766
    %3837 = vmatprep.subr.mxu0 0.0
    %3838 = vmatpush1.msra.mxu0 %v3767
    %3839 = vmatprep.subr.mxu0 0.0
    %3840 = vmatpush1.msra.mxu0 %v3768
    %3841 = vmatprep.subr.mxu0 0.0
    %3842 = vmatpush1.msra.mxu0 %v3769
    %3843 = vmatprep.subr.mxu0 0.0
    %3844 = vmatpush1.msra.mxu0 %v3770
    %3845 = vmatprep.subr.mxu0 0.0
    %3846 = vmatpush1.msra.mxu0 %v3771
    %3847 = vmatprep.subr.mxu0 0.0
    %3848 = vmatpush1.msra.mxu0 %v3772
    %3849 = vmatprep.subr.mxu0 0.0
    %3850 = vmatpush1.msra.mxu0 %v3773
    %3851 = vmatprep.subr.mxu0 0.0
    %3852 = vmatpush1.msra.mxu0 %v3774
    %3853 = vmatprep.subr.mxu0 0.0
    %3854 = vmatpush1.msra.mxu0 %v3775
    %3855 = vmatprep.subr.mxu0 0.0
    %3856 = vmatpush1.msra.mxu0 %v3776
    %3857 = vmatprep.subr.mxu0 0.0
    %3858 = vmatpush1.msra.mxu0 %v3777
    %3859 = vmatprep.subr.mxu0 0.0
    %3860 = vmatpush1.msra.mxu0 %v3778
    %3861 = vmatprep.subr.mxu0 0.0
    %3862 = vmatpush1.msra.mxu0 %v3779
    %3863 = vmatprep.subr.mxu0 0.0
    %3864 = vmatpush1.msra.mxu0 %v3780
    %3865 = vmatprep.mubr.f32.mxu0 %v3747
    %3866 = vmatmul.mubr.f32.gmra.mrb[0].mxu0 %v3610
    %v3867 = vpop.f32.mrb[0].mxu0
    %v3868 = vadd.f32 %v3795, %v3867
    %v3869 = vpop.f32.mrb[0].mxu0
    %3870 = vmatprep.mubr.f32.mxu0 %v3748
    %3871 = vmatmul.mubr.f32.gmra.mrb[0].mxu0 %v3611
    %v3872 = vpop.f32.mrb[0].mxu0
    %v3873 = vadd.f32 %v3795, %v3872
    %v3874 = vpop.f32.mrb[0].mxu0
    %3875 = vdwg.mxu0
    %3876 = vmatprep.subr.mxu0 0.0
    %3877 = vmatpush1.msra.mxu0 %v3781
    %3878 = vmatprep.subr.mxu0 0.0
    %3879 = vmatpush1.msra.mxu0 %v3782
    %3880 = vmatprep.subr.mxu0 0.0
    %3881 = vmatpush1.msra.mxu0 %v3783
    %3882 = vmatprep.subr.mxu0 0.0
    %3883 = vmatpush1.msra.mxu0 %v3784
    %3884 = vmatprep.subr.mxu0 0.0
    %3885 = vmatpush1.msra.mxu0 %v3785
    %3886 = vmatprep.subr.mxu0 0.0
    %3887 = vmatpush1.msra.mxu0 %v3786
    %3888 = vmatprep.subr.mxu0 0.0
    %3889 = vmatpush1.msra.mxu0 %v3787
    %3890 = vmatprep.subr.mxu0 0.0
    %3891 = vmatpush1.msra.mxu0 %v3788
    %3892 = vmatprep.subr.mxu0 0.0
    %3893 = vmatpush1.msra.mxu0 %v3789
    %3894 = vmatprep.subr.mxu0 0.0
    %3895 = vmatpush1.msra.mxu0 %v3790
    %3896 = vmatprep.subr.mxu0 0.0
    %3897 = vmatpush1.msra.mxu0 %v3791
    %3898 = vmatprep.subr.mxu0 0.0
    %3899 = vmatpush1.msra.mxu0 %v3792
    %3900 = vmatprep.subr.mxu0 0.0
    %3901 = vmatpush1.msra.mxu0 %v3793
    %3902 = vmatprep.subr.mxu0 0.0
    %3903 = vmatpush1.msra.mxu0 0.0
    %3904 = vmatprep.subr.mxu0 0.0
    %3905 = vmatpush1.msra.mxu0 0.0
    %3906 = vmatprep.subr.mxu0 0.0
    %3907 = vmatpush1.msra.mxu0 0.0
    %3908 = vmatprep.subr.mxu0 0.0
    %3909 = vmatpush1.msra.mxu0 0.0
    %3910 = vmatprep.subr.mxu0 0.0
    %3911 = vmatpush1.msra.mxu0 0.0
    %3912 = vmatprep.subr.mxu0 0.0
    %3913 = vmatpush1.msra.mxu0 0.0
    %3914 = vmatprep.subr.mxu0 0.0
    %3915 = vmatpush1.msra.mxu0 0.0
    %3916 = vmatprep.subr.mxu0 0.0
    %3917 = vmatpush1.msra.mxu0 0.0
    %3918 = vmatprep.subr.mxu0 0.0
    %3919 = vmatpush1.msra.mxu0 0.0
    %3920 = vmatprep.subr.mxu0 0.0
    %3921 = vmatpush1.msra.mxu0 0.0
    %3922 = vmatprep.subr.mxu0 0.0
    %3923 = vmatpush1.msra.mxu0 0.0
    %3924 = vmatprep.subr.mxu0 0.0
    %3925 = vmatpush1.msra.mxu0 0.0
    %3926 = vmatprep.subr.mxu0 0.0
    %3927 = vmatpush1.msra.mxu0 0.0
    %3928 = vmatprep.subr.mxu0 0.0
    %3929 = vmatpush1.msra.mxu0 0.0
    %3930 = vmatprep.subr.mxu0 0.0
    %3931 = vmatpush1.msra.mxu0 0.0
    %3932 = vmatprep.subr.mxu0 0.0
    %3933 = vmatpush1.msra.mxu0 0.0
    %3934 = vmatprep.subr.mxu0 0.0
    %3935 = vmatpush1.msra.mxu0 0.0
    %3936 = vmatprep.subr.mxu0 0.0
    %3937 = vmatpush1.msra.mxu0 0.0
    %3938 = vmatprep.subr.mxu0 0.0
    %3939 = vmatpush1.msra.mxu0 0.0
    %3940 = vmatprep.mubr.f32.mxu0 0.0
    %3941 = vmatmul.mubr.f32.gmra.mrb[0].mxu0 %v3797
    %v3942 = vpop.f32.mrb[0].mxu0
    %v3943 = vadd.f32 %v3868, %v3942
    %v3944 = vpop.f32.mrb[0].mxu0
    %3945 = vmatprep.mubr.f32.mxu0 0.0
    %3946 = vmatmul.mubr.f32.gmra.mrb[0].mxu0 %v3799
    %v3947 = vpop.f32.mrb[0].mxu0
    %v3948 = vadd.f32 %v3873, %v3947
    %v3949 = vpop.f32.mrb[0].mxu0
    %3950 = vdwg.mxu0
    %v3951 = vmax.f32 %v3943, 0.0
    %v3952 = vmax.f32 %v3948, 0.0
    %s3953 = scalar_lea.vmem %s3, 360
    %v3954 = vld [vmem:[%s3953] sm:$0xff]
    %v3955 = vld [vmem:[%s3953 + $0x8] sm:$0xff]
    %v3956 = vld [vmem:[%s3953 + $0x10] sm:$0xff]
    %v3957 = vld [vmem:[%s3953 + $0x18] sm:$0xff]
    %v3958 = vld [vmem:[%s3953 + $0x20] sm:$0xff]
    %v3959 = vld [vmem:[%s3953 + $0x28] sm:$0xff]
    %v3960 = vld [vmem:[%s3953 + $0x30] sm:$0xff]
    %v3961 = vld [vmem:[%s3953 + $0x38] sm:$0xff]
    %v3962 = vld [vmem:[%s3953 + $0x40] sm:$0xff]
    %v3963 = vld [vmem:[%s3953 + $0x48] sm:$0xff]
    %v3964 = vld [vmem:[%s3953 + $0x50] sm:$0xff]
    %v3965 = vld [vmem:[%s3953 + $0x58] sm:$0xff]
    %v3966 = vld [vmem:[%s3953 + $0x60] sm:$0xff]
    %v3967 = vld [vmem:[%s3953 + $0x68] sm:$0xff]
    %v3968 = vld [vmem:[%s3953 + $0x70] sm:$0xff]
    %v3969 = vld [vmem:[%s3953 + $0x78] sm:$0xff]
    %v3970 = vld [vmem:[%s3953 + $0x80] sm:$0xff]
    %v3971 = vld [vmem:[%s3953 + $0x88] sm:$0xff]
    %v3972 = vld [vmem:[%s3953 + $0x90] sm:$0xff]
    %v3973 = vld [vmem:[%s3953 + $0x98] sm:$0xff]
    %v3974 = vld [vmem:[%s3953 + $0xa0] sm:$0xff]
    %v3975 = vld [vmem:[%s3953 + $0xa8] sm:$0xff]
    %v3976 = vld [vmem:[%s3953 + $0xb0] sm:$0xff]
    %v3977 = vld [vmem:[%s3953 + $0xb8] sm:$0xff]
    %v3978 = vld [vmem:[%s3953 + $0xc0] sm:$0xff]
    %v3979 = vld [vmem:[%s3953 + $0xc8] sm:$0xff]
    %v3980 = vld [vmem:[%s3953 + $0xd0] sm:$0xff]
    %v3981 = vld [vmem:[%s3953 + $0xd8] sm:$0xff]
    %v3982 = vld [vmem:[%s3953 + $0xe0] sm:$0xff]
    %v3983 = vld [vmem:[%s3953 + $0xe8] sm:$0xff]
    %v3984 = vld [vmem:[%s3953 + $0xf0] sm:$0xff]
    %v3985 = vld [vmem:[%s3953 + $0xf8] sm:$0xff]
    %v3986 = vld [vmem:[%s3953 + $0x100] sm:$0xff]
    %v3987 = vld [vmem:[%s3953 + $0x108] sm:$0xff]
    %v3988 = vld [vmem:[%s3953 + $0x110] sm:$0xff]
    %v3989 = vld [vmem:[%s3953 + $0x118] sm:$0xff]
    %v3990 = vld [vmem:[%s3953 + $0x120] sm:$0xff]
    %v3991 = vld [vmem:[%s3953 + $0x128] sm:$0xff]
    %v3992 = vld [vmem:[%s3953 + $0x130] sm:$0xff]
    %v3993 = vld [vmem:[%s3953 + $0x138] sm:$0xff]
    %v3994 = vld [vmem:[%s3953 + $0x140] sm:$0xff]
    %v3995 = vld [vmem:[%s3953 + $0x148] sm:$0xff]
    %v3996 = vld [vmem:[%s3953 + $0x150] sm:$0xff]
    %v3997 = vld [vmem:[%s3953 + $0x158] sm:$0xff]
    %v3998 = vld [vmem:[%s3953 + $0x160] sm:$0xff]
    %s3999 = sld [smem:[#allocation5 + $0x1]]
    %v4000 = vstv %s3999
    %4001 = vmatprep.subr.mxu0 0.0
    %4002 = vmatpush1.msra.mxu0 %v3954
    %4003 = vmatprep.subr.mxu0 0.0
    %4004 = vmatpush1.msra.mxu0 %v3955
    %4005 = vmatprep.subr.mxu0 0.0
    %4006 = vmatpush1.msra.mxu0 %v3956
    %4007 = vmatprep.subr.mxu0 0.0
    %4008 = vmatpush1.msra.mxu0 %v3957
    %4009 = vmatprep.subr.mxu0 0.0
    %4010 = vmatpush1.msra.mxu0 %v3958
    %4011 = vmatprep.subr.mxu0 0.0
    %4012 = vmatpush1.msra.mxu0 %v3959
    %4013 = vmatprep.subr.mxu0 0.0
    %4014 = vmatpush1.msra.mxu0 %v3960
    %4015 = vmatprep.subr.mxu0 0.0
    %4016 = vmatpush1.msra.mxu0 %v3961
    %4017 = vmatprep.subr.mxu0 0.0
    %4018 = vmatpush1.msra.mxu0 %v3962
    %4019 = vmatprep.subr.mxu0 0.0
    %4020 = vmatpush1.msra.mxu0 %v3963
    %4021 = vmatprep.subr.mxu0 0.0
    %4022 = vmatpush1.msra.mxu0 %v3964
    %4023 = vmatprep.subr.mxu0 0.0
    %4024 = vmatpush1.msra.mxu0 %v3965
    %4025 = vmatprep.subr.mxu0 0.0
    %4026 = vmatpush1.msra.mxu0 %v3966
    %4027 = vmatprep.subr.mxu0 0.0
    %4028 = vmatpush1.msra.mxu0 %v3967
    %4029 = vmatprep.subr.mxu0 0.0
    %4030 = vmatpush1.msra.mxu0 %v3968
    %4031 = vmatprep.subr.mxu0 0.0
    %4032 = vmatpush1.msra.mxu0 %v3969
    %4033 = vmatprep.subr.mxu0 0.0
    %4034 = vmatpush1.msra.mxu0 %v3970
    %4035 = vmatprep.subr.mxu0 0.0
    %4036 = vmatpush1.msra.mxu0 %v3971
    %4037 = vmatprep.subr.mxu0 0.0
    %4038 = vmatpush1.msra.mxu0 %v3972
    %4039 = vmatprep.subr.mxu0 0.0
    %4040 = vmatpush1.msra.mxu0 %v3973
    %4041 = vmatprep.subr.mxu0 0.0
    %4042 = vmatpush1.msra.mxu0 %v3974
    %4043 = vmatprep.subr.mxu0 0.0
    %4044 = vmatpush1.msra.mxu0 %v3975
    %4045 = vmatprep.subr.mxu0 0.0
    %4046 = vmatpush1.msra.mxu0 %v3976
    %4047 = vmatprep.subr.mxu0 0.0
    %4048 = vmatpush1.msra.mxu0 %v3977
    %4049 = vmatprep.subr.mxu0 0.0
    %4050 = vmatpush1.msra.mxu0 %v3978
    %4051 = vmatprep.subr.mxu0 0.0
    %4052 = vmatpush1.msra.mxu0 %v3979
    %4053 = vmatprep.subr.mxu0 0.0
    %4054 = vmatpush1.msra.mxu0 %v3980
    %4055 = vmatprep.subr.mxu0 0.0
    %4056 = vmatpush1.msra.mxu0 %v3981
    %4057 = vmatprep.subr.mxu0 0.0
    %4058 = vmatpush1.msra.mxu0 %v3982
    %4059 = vmatprep.subr.mxu0 0.0
    %4060 = vmatpush1.msra.mxu0 %v3983
    %4061 = vmatprep.subr.mxu0 0.0
    %4062 = vmatpush1.msra.mxu0 %v3984
    %4063 = vmatprep.subr.mxu0 0.0
    %4064 = vmatpush1.msra.mxu0 %v3985
    %4065 = vmatprep.mubr.f32.mxu0 %v3747
    %4066 = vmatmul.mubr.f32.gmra.mrb[0].mxu0 %v3610
    %v4067 = vpop.f32.mrb[0].mxu0
    %v4068 = vadd.f32 %v4000, %v4067
    %v4069 = vpop.f32.mrb[0].mxu0
    %4070 = vmatprep.mubr.f32.mxu0 %v3748
    %4071 = vmatmul.mubr.f32.gmra.mrb[0].mxu0 %v3611
    %v4072 = vpop.f32.mrb[0].mxu0
    %v4073 = vadd.f32 %v4000, %v4072
    %v4074 = vpop.f32.mrb[0].mxu0
    %4075 = vdwg.mxu0
    %4076 = vmatprep.subr.mxu0 0.0
    %4077 = vmatpush1.msra.mxu0 %v3986
    %4078 = vmatprep.subr.mxu0 0.0
    %4079 = vmatpush1.msra.mxu0 %v3987
    %4080 = vmatprep.subr.mxu0 0.0
    %4081 = vmatpush1.msra.mxu0 %v3988
    %4082 = vmatprep.subr.mxu0 0.0
    %4083 = vmatpush1.msra.mxu0 %v3989
    %4084 = vmatprep.subr.mxu0 0.0
    %4085 = vmatpush1.msra.mxu0 %v3990
    %4086 = vmatprep.subr.mxu0 0.0
    %4087 = vmatpush1.msra.mxu0 %v3991
    %4088 = vmatprep.subr.mxu0 0.0
    %4089 = vmatpush1.msra.mxu0 %v3992
    %4090 = vmatprep.subr.mxu0 0.0
    %4091 = vmatpush1.msra.mxu0 %v3993
    %4092 = vmatprep.subr.mxu0 0.0
    %4093 = vmatpush1.msra.mxu0 %v3994
    %4094 = vmatprep.subr.mxu0 0.0
    %4095 = vmatpush1.msra.mxu0 %v3995
    %4096 = vmatprep.subr.mxu0 0.0
    %4097 = vmatpush1.msra.mxu0 %v3996
    %4098 = vmatprep.subr.mxu0 0.0
    %4099 = vmatpush1.msra.mxu0 %v3997
    %4100 = vmatprep.subr.mxu0 0.0
    %4101 = vmatpush1.msra.mxu0 %v3998
    %4102 = vmatprep.subr.mxu0 0.0
    %4103 = vmatpush1.msra.mxu0 0.0
    %4104 = vmatprep.subr.mxu0 0.0
    %4105 = vmatpush1.msra.mxu0 0.0
    %4106 = vmatprep.subr.mxu0 0.0
    %4107 = vmatpush1.msra.mxu0 0.0
    %4108 = vmatprep.subr.mxu0 0.0
    %4109 = vmatpush1.msra.mxu0 0.0
    %4110 = vmatprep.subr.mxu0 0.0
    %4111 = vmatpush1.msra.mxu0 0.0
    %4112 = vmatprep.subr.mxu0 0.0
    %4113 = vmatpush1.msra.mxu0 0.0
    %4114 = vmatprep.subr.mxu0 0.0
    %4115 = vmatpush1.msra.mxu0 0.0
    %4116 = vmatprep.subr.mxu0 0.0
    %4117 = vmatpush1.msra.mxu0 0.0
    %4118 = vmatprep.subr.mxu0 0.0
    %4119 = vmatpush1.msra.mxu0 0.0
    %4120 = vmatprep.subr.mxu0 0.0
    %4121 = vmatpush1.msra.mxu0 0.0
    %4122 = vmatprep.subr.mxu0 0.0
    %4123 = vmatpush1.msra.mxu0 0.0
    %4124 = vmatprep.subr.mxu0 0.0
    %4125 = vmatpush1.msra.mxu0 0.0
    %4126 = vmatprep.subr.mxu0 0.0
    %4127 = vmatpush1.msra.mxu0 0.0
    %4128 = vmatprep.subr.mxu0 0.0
    %4129 = vmatpush1.msra.mxu0 0.0
    %4130 = vmatprep.subr.mxu0 0.0
    %4131 = vmatpush1.msra.mxu0 0.0
    %4132 = vmatprep.subr.mxu0 0.0
    %4133 = vmatpush1.msra.mxu0 0.0
    %4134 = vmatprep.subr.mxu0 0.0
    %4135 = vmatpush1.msra.mxu0 0.0
    %4136 = vmatprep.subr.mxu0 0.0
    %4137 = vmatpush1.msra.mxu0 0.0
    %4138 = vmatprep.subr.mxu0 0.0
    %4139 = vmatpush1.msra.mxu0 0.0
    %4140 = vmatprep.mubr.f32.mxu0 0.0
    %4141 = vmatmul.mubr.f32.gmra.mrb[0].mxu0 %v3797
    %v4142 = vpop.f32.mrb[0].mxu0
    %v4143 = vadd.f32 %v4068, %v4142
    %v4144 = vpop.f32.mrb[0].mxu0
    %4145 = vmatprep.mubr.f32.mxu0 0.0
    %4146 = vmatmul.mubr.f32.gmra.mrb[0].mxu0 %v3799
    %v4147 = vpop.f32.mrb[0].mxu0
    %v4148 = vadd.f32 %v4073, %v4147
    %v4149 = vpop.f32.mrb[0].mxu0
    %4150 = vdwg.mxu0
    %v4151 = vmax.f32 %v4143, 0.0
    %v4152 = vmax.f32 %v4148, 0.0
    %s4153 = scalar_lea.vmem %s3, 720
    %v4154 = vld [vmem:[%s4153] sm:$0xff]
    %v4155 = vld [vmem:[%s4153 + $0x8] sm:$0xff]
    %v4156 = vld [vmem:[%s4153 + $0x10] sm:$0xff]
    %v4157 = vld [vmem:[%s4153 + $0x18] sm:$0xff]
    %v4158 = vld [vmem:[%s4153 + $0x20] sm:$0xff]
    %v4159 = vld [vmem:[%s4153 + $0x28] sm:$0xff]
    %v4160 = vld [vmem:[%s4153 + $0x30] sm:$0xff]
    %v4161 = vld [vmem:[%s4153 + $0x38] sm:$0xff]
    %v4162 = vld [vmem:[%s4153 + $0x40] sm:$0xff]
    %v4163 = vld [vmem:[%s4153 + $0x48] sm:$0xff]
    %v4164 = vld [vmem:[%s4153 + $0x50] sm:$0xff]
    %v4165 = vld [vmem:[%s4153 + $0x58] sm:$0xff]
    %v4166 = vld [vmem:[%s4153 + $0x60] sm:$0xff]
    %v4167 = vld [vmem:[%s4153 + $0x68] sm:$0xff]
    %v4168 = vld [vmem:[%s4153 + $0x70] sm:$0xff]
    %v4169 = vld [vmem:[%s4153 + $0x78] sm:$0xff]
    %v4170 = vld [vmem:[%s4153 + $0x80] sm:$0xff]
    %v4171 = vld [vmem:[%s4153 + $0x88] sm:$0xff]
    %v4172 = vld [vmem:[%s4153 + $0x90] sm:$0xff]
    %v4173 = vld [vmem:[%s4153 + $0x98] sm:$0xff]
    %v4174 = vld [vmem:[%s4153 + $0xa0] sm:$0xff]
    %v4175 = vld [vmem:[%s4153 + $0xa8] sm:$0xff]
    %v4176 = vld [vmem:[%s4153 + $0xb0] sm:$0xff]
    %v4177 = vld [vmem:[%s4153 + $0xb8] sm:$0xff]
    %v4178 = vld [vmem:[%s4153 + $0xc0] sm:$0xff]
    %v4179 = vld [vmem:[%s4153 + $0xc8] sm:$0xff]
    %v4180 = vld [vmem:[%s4153 + $0xd0] sm:$0xff]
    %v4181 = vld [vmem:[%s4153 + $0xd8] sm:$0xff]
    %v4182 = vld [vmem:[%s4153 + $0xe0] sm:$0xff]
    %v4183 = vld [vmem:[%s4153 + $0xe8] sm:$0xff]
    %v4184 = vld [vmem:[%s4153 + $0xf0] sm:$0xff]
    %v4185 = vld [vmem:[%s4153 + $0xf8] sm:$0xff]
    %v4186 = vld [vmem:[%s4153 + $0x100] sm:$0xff]
    %v4187 = vld [vmem:[%s4153 + $0x108] sm:$0xff]
    %v4188 = vld [vmem:[%s4153 + $0x110] sm:$0xff]
    %v4189 = vld [vmem:[%s4153 + $0x118] sm:$0xff]
    %v4190 = vld [vmem:[%s4153 + $0x120] sm:$0xff]
    %v4191 = vld [vmem:[%s4153 + $0x128] sm:$0xff]
    %v4192 = vld [vmem:[%s4153 + $0x130] sm:$0xff]
    %v4193 = vld [vmem:[%s4153 + $0x138] sm:$0xff]
    %v4194 = vld [vmem:[%s4153 + $0x140] sm:$0xff]
    %v4195 = vld [vmem:[%s4153 + $0x148] sm:$0xff]
    %v4196 = vld [vmem:[%s4153 + $0x150] sm:$0xff]
    %v4197 = vld [vmem:[%s4153 + $0x158] sm:$0xff]
    %v4198 = vld [vmem:[%s4153 + $0x160] sm:$0xff]
    %s4199 = sld [smem:[#allocation5 + $0x2]]
    %v4200 = vstv %s4199
    %4201 = vmatprep.subr.mxu0 0.0
    %4202 = vmatpush1.msra.mxu0 %v4154
    %4203 = vmatprep.subr.mxu0 0.0
    %4204 = vmatpush1.msra.mxu0 %v4155
    %4205 = vmatprep.subr.mxu0 0.0
    %4206 = vmatpush1.msra.mxu0 %v4156
    %4207 = vmatprep.subr.mxu0 0.0
    %4208 = vmatpush1.msra.mxu0 %v4157
    %4209 = vmatprep.subr.mxu0 0.0
    %4210 = vmatpush1.msra.mxu0 %v4158
    %4211 = vmatprep.subr.mxu0 0.0
    %4212 = vmatpush1.msra.mxu0 %v4159
    %4213 = vmatprep.subr.mxu0 0.0
    %4214 = vmatpush1.msra.mxu0 %v4160
    %4215 = vmatprep.subr.mxu0 0.0
    %4216 = vmatpush1.msra.mxu0 %v4161
    %4217 = vmatprep.subr.mxu0 0.0
    %4218 = vmatpush1.msra.mxu0 %v4162
    %4219 = vmatprep.subr.mxu0 0.0
    %4220 = vmatpush1.msra.mxu0 %v4163
    %4221 = vmatprep.subr.mxu0 0.0
    %4222 = vmatpush1.msra.mxu0 %v4164
    %4223 = vmatprep.subr.mxu0 0.0
    %4224 = vmatpush1.msra.mxu0 %v4165
    %4225 = vmatprep.subr.mxu0 0.0
    %4226 = vmatpush1.msra.mxu0 %v4166
    %4227 = vmatprep.subr.mxu0 0.0
    %4228 = vmatpush1.msra.mxu0 %v4167
    %4229 = vmatprep.subr.mxu0 0.0
    %4230 = vmatpush1.msra.mxu0 %v4168
    %4231 = vmatprep.subr.mxu0 0.0
    %4232 = vmatpush1.msra.mxu0 %v4169
    %4233 = vmatprep.subr.mxu0 0.0
    %4234 = vmatpush1.msra.mxu0 %v4170
    %4235 = vmatprep.subr.mxu0 0.0
    %4236 = vmatpush1.msra.mxu0 %v4171
    %4237 = vmatprep.subr.mxu0 0.0
    %4238 = vmatpush1.msra.mxu0 %v4172
    %4239 = vmatprep.subr.mxu0 0.0
    %4240 = vmatpush1.msra.mxu0 %v4173
    %4241 = vmatprep.subr.mxu0 0.0
    %4242 = vmatpush1.msra.mxu0 %v4174
    %4243 = vmatprep.subr.mxu0 0.0
    %4244 = vmatpush1.msra.mxu0 %v4175
    %4245 = vmatprep.subr.mxu0 0.0
    %4246 = vmatpush1.msra.mxu0 %v4176
    %4247 = vmatprep.subr.mxu0 0.0
    %4248 = vmatpush1.msra.mxu0 %v4177
    %4249 = vmatprep.subr.mxu0 0.0
    %4250 = vmatpush1.msra.mxu0 %v4178
    %4251 = vmatprep.subr.mxu0 0.0
    %4252 = vmatpush1.msra.mxu0 %v4179
    %4253 = vmatprep.subr.mxu0 0.0
    %4254 = vmatpush1.msra.mxu0 %v4180
    %4255 = vmatprep.subr.mxu0 0.0
    %4256 = vmatpush1.msra.mxu0 %v4181
    %4257 = vmatprep.subr.mxu0 0.0
    %4258 = vmatpush1.msra.mxu0 %v4182
    %4259 = vmatprep.subr.mxu0 0.0
    %4260 = vmatpush1.msra.mxu0 %v4183
    %4261 = vmatprep.subr.mxu0 0.0
    %4262 = vmatpush1.msra.mxu0 %v4184
    %4263 = vmatprep.subr.mxu0 0.0
    %4264 = vmatpush1.msra.mxu0 %v4185
    %4265 = vmatprep.mubr.f32.mxu0 %v3747
    %4266 = vmatmul.mubr.f32.gmra.mrb[0].mxu0 %v3610
    %v4267 = vpop.f32.mrb[0].mxu0
    %v4268 = vadd.f32 %v4200, %v4267
    %v4269 = vpop.f32.mrb[0].mxu0
    %4270 = vmatprep.mubr.f32.mxu0 %v3748
    %4271 = vmatmul.mubr.f32.gmra.mrb[0].mxu0 %v3611
    %v4272 = vpop.f32.mrb[0].mxu0
    %v4273 = vadd.f32 %v4200, %v4272
    %v4274 = vpop.f32.mrb[0].mxu0
    %4275 = vdwg.mxu0
    %4276 = vmatprep.subr.mxu0 0.0
    %4277 = vmatpush1.msra.mxu0 %v4186
    %4278 = vmatprep.subr.mxu0 0.0
    %4279 = vmatpush1.msra.mxu0 %v4187
    %4280 = vmatprep.subr.mxu0 0.0
    %4281 = vmatpush1.msra.mxu0 %v4188
    %4282 = vmatprep.subr.mxu0 0.0
    %4283 = vmatpush1.msra.mxu0 %v4189
    %4284 = vmatprep.subr.mxu0 0.0
    %4285 = vmatpush1.msra.mxu0 %v4190
    %4286 = vmatprep.subr.mxu0 0.0
    %4287 = vmatpush1.msra.mxu0 %v4191
    %4288 = vmatprep.subr.mxu0 0.0
    %4289 = vmatpush1.msra.mxu0 %v4192
    %4290 = vmatprep.subr.mxu0 0.0
    %4291 = vmatpush1.msra.mxu0 %v4193
    %4292 = vmatprep.subr.mxu0 0.0
    %4293 = vmatpush1.msra.mxu0 %v4194
    %4294 = vmatprep.subr.mxu0 0.0
    %4295 = vmatpush1.msra.mxu0 %v4195
    %4296 = vmatprep.subr.mxu0 0.0
    %4297 = vmatpush1.msra.mxu0 %v4196
    %4298 = vmatprep.subr.mxu0 0.0
    %4299 = vmatpush1.msra.mxu0 %v4197
    %4300 = vmatprep.subr.mxu0 0.0
    %4301 = vmatpush1.msra.mxu0 %v4198
    %4302 = vmatprep.subr.mxu0 0.0
    %4303 = vmatpush1.msra.mxu0 0.0
    %4304 = vmatprep.subr.mxu0 0.0
    %4305 = vmatpush1.msra.mxu0 0.0
    %4306 = vmatprep.subr.mxu0 0.0
    %4307 = vmatpush1.msra.mxu0 0.0
    %4308 = vmatprep.subr.mxu0 0.0
    %4309 = vmatpush1.msra.mxu0 0.0
    %4310 = vmatprep.subr.mxu0 0.0
    %4311 = vmatpush1.msra.mxu0 0.0
    %4312 = vmatprep.subr.mxu0 0.0
    %4313 = vmatpush1.msra.mxu0 0.0
    %4314 = vmatprep.subr.mxu0 0.0
    %4315 = vmatpush1.msra.mxu0 0.0
    %4316 = vmatprep.subr.mxu0 0.0
    %4317 = vmatpush1.msra.mxu0 0.0
    %4318 = vmatprep.subr.mxu0 0.0
    %4319 = vmatpush1.msra.mxu0 0.0
    %4320 = vmatprep.subr.mxu0 0.0
    %4321 = vmatpush1.msra.mxu0 0.0
    %4322 = vmatprep.subr.mxu0 0.0
    %4323 = vmatpush1.msra.mxu0 0.0
    %4324 = vmatprep.subr.mxu0 0.0
    %4325 = vmatpush1.msra.mxu0 0.0
    %4326 = vmatprep.subr.mxu0 0.0
    %4327 = vmatpush1.msra.mxu0 0.0
    %4328 = vmatprep.subr.mxu0 0.0
    %4329 = vmatpush1.msra.mxu0 0.0
    %4330 = vmatprep.subr.mxu0 0.0
    %4331 = vmatpush1.msra.mxu0 0.0
    %4332 = vmatprep.subr.mxu0 0.0
    %4333 = vmatpush1.msra.mxu0 0.0
    %4334 = vmatprep.subr.mxu0 0.0
    %4335 = vmatpush1.msra.mxu0 0.0
    %4336 = vmatprep.subr.mxu0 0.0
    %4337 = vmatpush1.msra.mxu0 0.0
    %4338 = vmatprep.subr.mxu0 0.0
    %4339 = vmatpush1.msra.mxu0 0.0
    %4340 = vmatprep.mubr.f32.mxu0 0.0
    %4341 = vmatmul.mubr.f32.gmra.mrb[0].mxu0 %v3797
    %v4342 = vpop.f32.mrb[0].mxu0
    %v4343 = vadd.f32 %v4268, %v4342
    %v4344 = vpop.f32.mrb[0].mxu0
    %4345 = vmatprep.mubr.f32.mxu0 0.0
    %4346 = vmatmul.mubr.f32.gmra.mrb[0].mxu0 %v3799
    %v4347 = vpop.f32.mrb[0].mxu0
    %v4348 = vadd.f32 %v4273, %v4347
    %v4349 = vpop.f32.mrb[0].mxu0
    %4350 = vdwg.mxu0
    %v4351 = vmax.f32 %v4343, 0.0
    %v4352 = vmax.f32 %v4348, 0.0
    %s4353 = scalar_lea.vmem %s3, 1080
    %v4354 = vld [vmem:[%s4353] sm:$0xff]
    %v4355 = vld [vmem:[%s4353 + $0x8] sm:$0xff]
    %v4356 = vld [vmem:[%s4353 + $0x10] sm:$0xff]
    %v4357 = vld [vmem:[%s4353 + $0x18] sm:$0xff]
    %v4358 = vld [vmem:[%s4353 + $0x20] sm:$0xff]
    %v4359 = vld [vmem:[%s4353 + $0x28] sm:$0xff]
    %v4360 = vld [vmem:[%s4353 + $0x30] sm:$0xff]
    %v4361 = vld [vmem:[%s4353 + $0x38] sm:$0xff]
    %v4362 = vld [vmem:[%s4353 + $0x40] sm:$0xff]
    %v4363 = vld [vmem:[%s4353 + $0x48] sm:$0xff]
    %v4364 = vld [vmem:[%s4353 + $0x50] sm:$0xff]
    %v4365 = vld [vmem:[%s4353 + $0x58] sm:$0xff]
    %v4366 = vld [vmem:[%s4353 + $0x60] sm:$0xff]
    %v4367 = vld [vmem:[%s4353 + $0x68] sm:$0xff]
    %v4368 = vld [vmem:[%s4353 + $0x70] sm:$0xff]
    %v4369 = vld [vmem:[%s4353 + $0x78] sm:$0xff]
    %v4370 = vld [vmem:[%s4353 + $0x80] sm:$0xff]
    %v4371 = vld [vmem:[%s4353 + $0x88] sm:$0xff]
    %v4372 = vld [vmem:[%s4353 + $0x90] sm:$0xff]
    %v4373 = vld [vmem:[%s4353 + $0x98] sm:$0xff]
    %v4374 = vld [vmem:[%s4353 + $0xa0] sm:$0xff]
    %v4375 = vld [vmem:[%s4353 + $0xa8] sm:$0xff]
    %v4376 = vld [vmem:[%s4353 + $0xb0] sm:$0xff]
    %v4377 = vld [vmem:[%s4353 + $0xb8] sm:$0xff]
    %v4378 = vld [vmem:[%s4353 + $0xc0] sm:$0xff]
    %v4379 = vld [vmem:[%s4353 + $0xc8] sm:$0xff]
    %v4380 = vld [vmem:[%s4353 + $0xd0] sm:$0xff]
    %v4381 = vld [vmem:[%s4353 + $0xd8] sm:$0xff]
    %v4382 = vld [vmem:[%s4353 + $0xe0] sm:$0xff]
    %v4383 = vld [vmem:[%s4353 + $0xe8] sm:$0xff]
    %v4384 = vld [vmem:[%s4353 + $0xf0] sm:$0xff]
    %v4385 = vld [vmem:[%s4353 + $0xf8] sm:$0xff]
    %v4386 = vld [vmem:[%s4353 + $0x100] sm:$0xff]
    %v4387 = vld [vmem:[%s4353 + $0x108] sm:$0xff]
    %v4388 = vld [vmem:[%s4353 + $0x110] sm:$0xff]
    %v4389 = vld [vmem:[%s4353 + $0x118] sm:$0xff]
    %v4390 = vld [vmem:[%s4353 + $0x120] sm:$0xff]
    %v4391 = vld [vmem:[%s4353 + $0x128] sm:$0xff]
    %v4392 = vld [vmem:[%s4353 + $0x130] sm:$0xff]
    %v4393 = vld [vmem:[%s4353 + $0x138] sm:$0xff]
    %v4394 = vld [vmem:[%s4353 + $0x140] sm:$0xff]
    %v4395 = vld [vmem:[%s4353 + $0x148] sm:$0xff]
    %v4396 = vld [vmem:[%s4353 + $0x150] sm:$0xff]
    %v4397 = vld [vmem:[%s4353 + $0x158] sm:$0xff]
    %v4398 = vld [vmem:[%s4353 + $0x160] sm:$0xff]
    %s4399 = sld [smem:[#allocation5 + $0x3]]
    %v4400 = vstv %s4399
    %4401 = vmatprep.subr.mxu0 0.0
    %4402 = vmatpush1.msra.mxu0 %v4354
    %4403 = vmatprep.subr.mxu0 0.0
    %4404 = vmatpush1.msra.mxu0 %v4355
    %4405 = vmatprep.subr.mxu0 0.0
    %4406 = vmatpush1.msra.mxu0 %v4356
    %4407 = vmatprep.subr.mxu0 0.0
    %4408 = vmatpush1.msra.mxu0 %v4357
    %4409 = vmatprep.subr.mxu0 0.0
    %4410 = vmatpush1.msra.mxu0 %v4358
    %4411 = vmatprep.subr.mxu0 0.0
    %4412 = vmatpush1.msra.mxu0 %v4359
    %4413 = vmatprep.subr.mxu0 0.0
    %4414 = vmatpush1.msra.mxu0 %v4360
    %4415 = vmatprep.subr.mxu0 0.0
    %4416 = vmatpush1.msra.mxu0 %v4361
    %4417 = vmatprep.subr.mxu0 0.0
    %4418 = vmatpush1.msra.mxu0 %v4362
    %4419 = vmatprep.subr.mxu0 0.0
    %4420 = vmatpush1.msra.mxu0 %v4363
    %4421 = vmatprep.subr.mxu0 0.0
    %4422 = vmatpush1.msra.mxu0 %v4364
    %4423 = vmatprep.subr.mxu0 0.0
    %4424 = vmatpush1.msra.mxu0 %v4365
    %4425 = vmatprep.subr.mxu0 0.0
    %4426 = vmatpush1.msra.mxu0 %v4366
    %4427 = vmatprep.subr.mxu0 0.0
    %4428 = vmatpush1.msra.mxu0 %v4367
    %4429 = vmatprep.subr.mxu0 0.0
    %4430 = vmatpush1.msra.mxu0 %v4368
    %4431 = vmatprep.subr.mxu0 0.0
    %4432 = vmatpush1.msra.mxu0 %v4369
    %4433 = vmatprep.subr.mxu0 0.0
    %4434 = vmatpush1.msra.mxu0 %v4370
    %4435 = vmatprep.subr.mxu0 0.0
    %4436 = vmatpush1.msra.mxu0 %v4371
    %4437 = vmatprep.subr.mxu0 0.0
    %4438 = vmatpush1.msra.mxu0 %v4372
    %4439 = vmatprep.subr.mxu0 0.0
    %4440 = vmatpush1.msra.mxu0 %v4373
    %4441 = vmatprep.subr.mxu0 0.0
    %4442 = vmatpush1.msra.mxu0 %v4374
    %4443 = vmatprep.subr.mxu0 0.0
    %4444 = vmatpush1.msra.mxu0 %v4375
    %4445 = vmatprep.subr.mxu0 0.0
    %4446 = vmatpush1.msra.mxu0 %v4376
    %4447 = vmatprep.subr.mxu0 0.0
    %4448 = vmatpush1.msra.mxu0 %v4377
    %4449 = vmatprep.subr.mxu0 0.0
    %4450 = vmatpush1.msra.mxu0 %v4378
    %4451 = vmatprep.subr.mxu0 0.0
    %4452 = vmatpush1.msra.mxu0 %v4379
    %4453 = vmatprep.subr.mxu0 0.0
    %4454 = vmatpush1.msra.mxu0 %v4380
    %4455 = vmatprep.subr.mxu0 0.0
    %4456 = vmatpush1.msra.mxu0 %v4381
    %4457 = vmatprep.subr.mxu0 0.0
    %4458 = vmatpush1.msra.mxu0 %v4382
    %4459 = vmatprep.subr.mxu0 0.0
    %4460 = vmatpush1.msra.mxu0 %v4383
    %4461 = vmatprep.subr.mxu0 0.0
    %4462 = vmatpush1.msra.mxu0 %v4384
    %4463 = vmatprep.subr.mxu0 0.0
    %4464 = vmatpush1.msra.mxu0 %v4385
    %4465 = vmatprep.mubr.f32.mxu0 %v3747
    %4466 = vmatmul.mubr.f32.gmra.mrb[0].mxu0 %v3610
    %v4467 = vpop.f32.mrb[0].mxu0
    %v4468 = vadd.f32 %v4400, %v4467
    %v4469 = vpop.f32.mrb[0].mxu0
    %4470 = vmatprep.mubr.f32.mxu0 %v3748
    %4471 = vmatmul.mubr.f32.gmra.mrb[0].mxu0 %v3611
    %v4472 = vpop.f32.mrb[0].mxu0
    %v4473 = vadd.f32 %v4400, %v4472
    %v4474 = vpop.f32.mrb[0].mxu0
    %4475 = vdwg.mxu0
    %4476 = vmatprep.subr.mxu0 0.0
    %4477 = vmatpush1.msra.mxu0 %v4386
    %4478 = vmatprep.subr.mxu0 0.0
    %4479 = vmatpush1.msra.mxu0 %v4387
    %4480 = vmatprep.subr.mxu0 0.0
    %4481 = vmatpush1.msra.mxu0 %v4388
    %4482 = vmatprep.subr.mxu0 0.0
    %4483 = vmatpush1.msra.mxu0 %v4389
    %4484 = vmatprep.subr.mxu0 0.0
    %4485 = vmatpush1.msra.mxu0 %v4390
    %4486 = vmatprep.subr.mxu0 0.0
    %4487 = vmatpush1.msra.mxu0 %v4391
    %4488 = vmatprep.subr.mxu0 0.0
    %4489 = vmatpush1.msra.mxu0 %v4392
    %4490 = vmatprep.subr.mxu0 0.0
    %4491 = vmatpush1.msra.mxu0 %v4393
    %4492 = vmatprep.subr.mxu0 0.0
    %4493 = vmatpush1.msra.mxu0 %v4394
    %4494 = vmatprep.subr.mxu0 0.0
    %4495 = vmatpush1.msra.mxu0 %v4395
    %4496 = vmatprep.subr.mxu0 0.0
    %4497 = vmatpush1.msra.mxu0 %v4396
    %4498 = vmatprep.subr.mxu0 0.0
    %4499 = vmatpush1.msra.mxu0 %v4397
    %4500 = vmatprep.subr.mxu0 0.0
    %4501 = vmatpush1.msra.mxu0 %v4398
    %4502 = vmatprep.subr.mxu0 0.0
    %4503 = vmatpush1.msra.mxu0 0.0
    %4504 = vmatprep.subr.mxu0 0.0
    %4505 = vmatpush1.msra.mxu0 0.0
    %4506 = vmatprep.subr.mxu0 0.0
    %4507 = vmatpush1.msra.mxu0 0.0
    %4508 = vmatprep.subr.mxu0 0.0
    %4509 = vmatpush1.msra.mxu0 0.0
    %4510 = vmatprep.subr.mxu0 0.0
    %4511 = vmatpush1.msra.mxu0 0.0
    %4512 = vmatprep.subr.mxu0 0.0
    %4513 = vmatpush1.msra.mxu0 0.0
    %4514 = vmatprep.subr.mxu0 0.0
    %4515 = vmatpush1.msra.mxu0 0.0
    %4516 = vmatprep.subr.mxu0 0.0
    %4517 = vmatpush1.msra.mxu0 0.0
    %4518 = vmatprep.subr.mxu0 0.0
    %4519 = vmatpush1.msra.mxu0 0.0
    %4520 = vmatprep.subr.mxu0 0.0
    %4521 = vmatpush1.msra.mxu0 0.0
    %4522 = vmatprep.subr.mxu0 0.0
    %4523 = vmatpush1.msra.mxu0 0.0
    %4524 = vmatprep.subr.mxu0 0.0
    %4525 = vmatpush1.msra.mxu0 0.0
    %4526 = vmatprep.subr.mxu0 0.0
    %4527 = vmatpush1.msra.mxu0 0.0
    %4528 = vmatprep.subr.mxu0 0.0
    %4529 = vmatpush1.msra.mxu0 0.0
    %4530 = vmatprep.subr.mxu0 0.0
    %4531 = vmatpush1.msra.mxu0 0.0
    %4532 = vmatprep.subr.mxu0 0.0
    %4533 = vmatpush1.msra.mxu0 0.0
    %4534 = vmatprep.subr.mxu0 0.0
    %4535 = vmatpush1.msra.mxu0 0.0
    %4536 = vmatprep.subr.mxu0 0.0
    %4537 = vmatpush1.msra.mxu0 0.0
    %4538 = vmatprep.subr.mxu0 0.0
    %4539 = vmatpush1.msra.mxu0 0.0
    %4540 = vmatprep.mubr.f32.mxu0 0.0
    %4541 = vmatmul.mubr.f32.gmra.mrb[0].mxu0 %v3797
    %v4542 = vpop.f32.mrb[0].mxu0
    %v4543 = vadd.f32 %v4468, %v4542
    %v4544 = vpop.f32.mrb[0].mxu0
    %4545 = vmatprep.mubr.f32.mxu0 0.0
    %4546 = vmatmul.mubr.f32.gmra.mrb[0].mxu0 %v3799
    %v4547 = vpop.f32.mrb[0].mxu0
    %v4548 = vadd.f32 %v4473, %v4547
    %v4549 = vpop.f32.mrb[0].mxu0
    %4550 = vdwg.mxu0
    %v4551 = vmax.f32 %v4543, 0.0
    %v4552 = vmax.f32 %v4548, 0.0
    %s4553 = scalar_lea.vmem %s3, 1440
    %v4554 = vld [vmem:[%s4553] sm:$0xff]
    %v4555 = vld [vmem:[%s4553 + $0x8] sm:$0xff]
    %v4556 = vld [vmem:[%s4553 + $0x10] sm:$0xff]
    %v4557 = vld [vmem:[%s4553 + $0x18] sm:$0xff]
    %v4558 = vld [vmem:[%s4553 + $0x20] sm:$0xff]
    %v4559 = vld [vmem:[%s4553 + $0x28] sm:$0xff]
    %v4560 = vld [vmem:[%s4553 + $0x30] sm:$0xff]
    %v4561 = vld [vmem:[%s4553 + $0x38] sm:$0xff]
    %v4562 = vld [vmem:[%s4553 + $0x40] sm:$0xff]
    %v4563 = vld [vmem:[%s4553 + $0x48] sm:$0xff]
    %v4564 = vld [vmem:[%s4553 + $0x50] sm:$0xff]
    %v4565 = vld [vmem:[%s4553 + $0x58] sm:$0xff]
    %v4566 = vld [vmem:[%s4553 + $0x60] sm:$0xff]
    %v4567 = vld [vmem:[%s4553 + $0x68] sm:$0xff]
    %v4568 = vld [vmem:[%s4553 + $0x70] sm:$0xff]
    %v4569 = vld [vmem:[%s4553 + $0x78] sm:$0xff]
    %v4570 = vld [vmem:[%s4553 + $0x80] sm:$0xff]
    %v4571 = vld [vmem:[%s4553 + $0x88] sm:$0xff]
    %v4572 = vld [vmem:[%s4553 + $0x90] sm:$0xff]
    %v4573 = vld [vmem:[%s4553 + $0x98] sm:$0xff]
    %v4574 = vld [vmem:[%s4553 + $0xa0] sm:$0xff]
    %v4575 = vld [vmem:[%s4553 + $0xa8] sm:$0xff]
    %v4576 = vld [vmem:[%s4553 + $0xb0] sm:$0xff]
    %v4577 = vld [vmem:[%s4553 + $0xb8] sm:$0xff]
    %v4578 = vld [vmem:[%s4553 + $0xc0] sm:$0xff]
    %v4579 = vld [vmem:[%s4553 + $0xc8] sm:$0xff]
    %v4580 = vld [vmem:[%s4553 + $0xd0] sm:$0xff]
    %v4581 = vld [vmem:[%s4553 + $0xd8] sm:$0xff]
    %v4582 = vld [vmem:[%s4553 + $0xe0] sm:$0xff]
    %v4583 = vld [vmem:[%s4553 + $0xe8] sm:$0xff]
    %v4584 = vld [vmem:[%s4553 + $0xf0] sm:$0xff]
    %v4585 = vld [vmem:[%s4553 + $0xf8] sm:$0xff]
    %v4586 = vld [vmem:[%s4553 + $0x100] sm:$0xff]
    %v4587 = vld [vmem:[%s4553 + $0x108] sm:$0xff]
    %v4588 = vld [vmem:[%s4553 + $0x110] sm:$0xff]
    %v4589 = vld [vmem:[%s4553 + $0x118] sm:$0xff]
    %v4590 = vld [vmem:[%s4553 + $0x120] sm:$0xff]
    %v4591 = vld [vmem:[%s4553 + $0x128] sm:$0xff]
    %v4592 = vld [vmem:[%s4553 + $0x130] sm:$0xff]
    %v4593 = vld [vmem:[%s4553 + $0x138] sm:$0xff]
    %v4594 = vld [vmem:[%s4553 + $0x140] sm:$0xff]
    %v4595 = vld [vmem:[%s4553 + $0x148] sm:$0xff]
    %v4596 = vld [vmem:[%s4553 + $0x150] sm:$0xff]
    %v4597 = vld [vmem:[%s4553 + $0x158] sm:$0xff]
    %v4598 = vld [vmem:[%s4553 + $0x160] sm:$0xff]
    %s4599 = sld [smem:[#allocation5 + $0x4]]
    %v4600 = vstv %s4599
    %4601 = vmatprep.subr.mxu0 0.0
    %4602 = vmatpush1.msra.mxu0 %v4554
    %4603 = vmatprep.subr.mxu0 0.0
    %4604 = vmatpush1.msra.mxu0 %v4555
    %4605 = vmatprep.subr.mxu0 0.0
    %4606 = vmatpush1.msra.mxu0 %v4556
    %4607 = vmatprep.subr.mxu0 0.0
    %4608 = vmatpush1.msra.mxu0 %v4557
    %4609 = vmatprep.subr.mxu0 0.0
    %4610 = vmatpush1.msra.mxu0 %v4558
    %4611 = vmatprep.subr.mxu0 0.0
    %4612 = vmatpush1.msra.mxu0 %v4559
    %4613 = vmatprep.subr.mxu0 0.0
    %4614 = vmatpush1.msra.mxu0 %v4560
    %4615 = vmatprep.subr.mxu0 0.0
    %4616 = vmatpush1.msra.mxu0 %v4561
    %4617 = vmatprep.subr.mxu0 0.0
    %4618 = vmatpush1.msra.mxu0 %v4562
    %4619 = vmatprep.subr.mxu0 0.0
    %4620 = vmatpush1.msra.mxu0 %v4563
    %4621 = vmatprep.subr.mxu0 0.0
    %4622 = vmatpush1.msra.mxu0 %v4564
    %4623 = vmatprep.subr.mxu0 0.0
    %4624 = vmatpush1.msra.mxu0 %v4565
    %4625 = vmatprep.subr.mxu0 0.0
    %4626 = vmatpush1.msra.mxu0 %v4566
    %4627 = vmatprep.subr.mxu0 0.0
    %4628 = vmatpush1.msra.mxu0 %v4567
    %4629 = vmatprep.subr.mxu0 0.0
    %4630 = vmatpush1.msra.mxu0 %v4568
    %4631 = vmatprep.subr.mxu0 0.0
    %4632 = vmatpush1.msra.mxu0 %v4569
    %4633 = vmatprep.subr.mxu0 0.0
    %4634 = vmatpush1.msra.mxu0 %v4570
    %4635 = vmatprep.subr.mxu0 0.0
    %4636 = vmatpush1.msra.mxu0 %v4571
    %4637 = vmatprep.subr.mxu0 0.0
    %4638 = vmatpush1.msra.mxu0 %v4572
    %4639 = vmatprep.subr.mxu0 0.0
    %4640 = vmatpush1.msra.mxu0 %v4573
    %4641 = vmatprep.subr.mxu0 0.0
    %4642 = vmatpush1.msra.mxu0 %v4574
    %4643 = vmatprep.subr.mxu0 0.0
    %4644 = vmatpush1.msra.mxu0 %v4575
    %4645 = vmatprep.subr.mxu0 0.0
    %4646 = vmatpush1.msra.mxu0 %v4576
    %4647 = vmatprep.subr.mxu0 0.0
    %4648 = vmatpush1.msra.mxu0 %v4577
    %4649 = vmatprep.subr.mxu0 0.0
    %4650 = vmatpush1.msra.mxu0 %v4578
    %4651 = vmatprep.subr.mxu0 0.0
    %4652 = vmatpush1.msra.mxu0 %v4579
    %4653 = vmatprep.subr.mxu0 0.0
    %4654 = vmatpush1.msra.mxu0 %v4580
    %4655 = vmatprep.subr.mxu0 0.0
    %4656 = vmatpush1.msra.mxu0 %v4581
    %4657 = vmatprep.subr.mxu0 0.0
    %4658 = vmatpush1.msra.mxu0 %v4582
    %4659 = vmatprep.subr.mxu0 0.0
    %4660 = vmatpush1.msra.mxu0 %v4583
    %4661 = vmatprep.subr.mxu0 0.0
    %4662 = vmatpush1.msra.mxu0 %v4584
    %4663 = vmatprep.subr.mxu0 0.0
    %4664 = vmatpush1.msra.mxu0 %v4585
    %4665 = vmatprep.mubr.f32.mxu0 %v3747
    %4666 = vmatmul.mubr.f32.gmra.mrb[0].mxu0 %v3610
    %v4667 = vpop.f32.mrb[0].mxu0
    %v4668 = vadd.f32 %v4600, %v4667
    %v4669 = vpop.f32.mrb[0].mxu0
    %4670 = vmatprep.mubr.f32.mxu0 %v3748
    %4671 = vmatmul.mubr.f32.gmra.mrb[0].mxu0 %v3611
    %v4672 = vpop.f32.mrb[0].mxu0
    %v4673 = vadd.f32 %v4600, %v4672
    %v4674 = vpop.f32.mrb[0].mxu0
    %4675 = vdwg.mxu0
    %4676 = vmatprep.subr.mxu0 0.0
    %4677 = vmatpush1.msra.mxu0 %v4586
    %4678 = vmatprep.subr.mxu0 0.0
    %4679 = vmatpush1.msra.mxu0 %v4587
    %4680 = vmatprep.subr.mxu0 0.0
    %4681 = vmatpush1.msra.mxu0 %v4588
    %4682 = vmatprep.subr.mxu0 0.0
    %4683 = vmatpush1.msra.mxu0 %v4589
    %4684 = vmatprep.subr.mxu0 0.0
    %4685 = vmatpush1.msra.mxu0 %v4590
    %4686 = vmatprep.subr.mxu0 0.0
    %4687 = vmatpush1.msra.mxu0 %v4591
    %4688 = vmatprep.subr.mxu0 0.0
    %4689 = vmatpush1.msra.mxu0 %v4592
    %4690 = vmatprep.subr.mxu0 0.0
    %4691 = vmatpush1.msra.mxu0 %v4593
    %4692 = vmatprep.subr.mxu0 0.0
    %4693 = vmatpush1.msra.mxu0 %v4594
    %4694 = vmatprep.subr.mxu0 0.0
    %4695 = vmatpush1.msra.mxu0 %v4595
    %4696 = vmatprep.subr.mxu0 0.0
    %4697 = vmatpush1.msra.mxu0 %v4596
    %4698 = vmatprep.subr.mxu0 0.0
    %4699 = vmatpush1.msra.mxu0 %v4597
    %4700 = vmatprep.subr.mxu0 0.0
    %4701 = vmatpush1.msra.mxu0 %v4598
    %4702 = vmatprep.subr.mxu0 0.0
    %4703 = vmatpush1.msra.mxu0 0.0
    %4704 = vmatprep.subr.mxu0 0.0
    %4705 = vmatpush1.msra.mxu0 0.0
    %4706 = vmatprep.subr.mxu0 0.0
    %4707 = vmatpush1.msra.mxu0 0.0
    %4708 = vmatprep.subr.mxu0 0.0
    %4709 = vmatpush1.msra.mxu0 0.0
    %4710 = vmatprep.subr.mxu0 0.0
    %4711 = vmatpush1.msra.mxu0 0.0
    %4712 = vmatprep.subr.mxu0 0.0
    %4713 = vmatpush1.msra.mxu0 0.0
    %4714 = vmatprep.subr.mxu0 0.0
    %4715 = vmatpush1.msra.mxu0 0.0
    %4716 = vmatprep.subr.mxu0 0.0
    %4717 = vmatpush1.msra.mxu0 0.0
    %4718 = vmatprep.subr.mxu0 0.0
    %4719 = vmatpush1.msra.mxu0 0.0
    %4720 = vmatprep.subr.mxu0 0.0
    %4721 = vmatpush1.msra.mxu0 0.0
    %4722 = vmatprep.subr.mxu0 0.0
    %4723 = vmatpush1.msra.mxu0 0.0
    %4724 = vmatprep.subr.mxu0 0.0
    %4725 = vmatpush1.msra.mxu0 0.0
    %4726 = vmatprep.subr.mxu0 0.0
    %4727 = vmatpush1.msra.mxu0 0.0
    %4728 = vmatprep.subr.mxu0 0.0
    %4729 = vmatpush1.msra.mxu0 0.0
    %4730 = vmatprep.subr.mxu0 0.0
    %4731 = vmatpush1.msra.mxu0 0.0
    %4732 = vmatprep.subr.mxu0 0.0
    %4733 = vmatpush1.msra.mxu0 0.0
    %4734 = vmatprep.subr.mxu0 0.0
    %4735 = vmatpush1.msra.mxu0 0.0
    %4736 = vmatprep.subr.mxu0 0.0
    %4737 = vmatpush1.msra.mxu0 0.0
    %4738 = vmatprep.subr.mxu0 0.0
    %4739 = vmatpush1.msra.mxu0 0.0
    %4740 = vmatprep.mubr.f32.mxu0 0.0
    %4741 = vmatmul.mubr.f32.gmra.mrb[0].mxu0 %v3797
    %v4742 = vpop.f32.mrb[0].mxu0
    %v4743 = vadd.f32 %v4668, %v4742
    %v4744 = vpop.f32.mrb[0].mxu0
    %4745 = vmatprep.mubr.f32.mxu0 0.0
    %4746 = vmatmul.mubr.f32.gmra.mrb[0].mxu0 %v3799
    %v4747 = vpop.f32.mrb[0].mxu0
    %v4748 = vadd.f32 %v4673, %v4747
    %v4749 = vpop.f32.mrb[0].mxu0
    %4750 = vdwg.mxu0
    %v4751 = vmax.f32 %v4743, 0.0
    %v4752 = vmax.f32 %v4748, 0.0
    %s4753 = scalar_lea.vmem %s3, 1800
    %v4754 = vld [vmem:[%s4753] sm:$0xff]
    %v4755 = vld [vmem:[%s4753 + $0x8] sm:$0xff]
    %v4756 = vld [vmem:[%s4753 + $0x10] sm:$0xff]
    %v4757 = vld [vmem:[%s4753 + $0x18] sm:$0xff]
    %v4758 = vld [vmem:[%s4753 + $0x20] sm:$0xff]
    %v4759 = vld [vmem:[%s4753 + $0x28] sm:$0xff]
    %v4760 = vld [vmem:[%s4753 + $0x30] sm:$0xff]
    %v4761 = vld [vmem:[%s4753 + $0x38] sm:$0xff]
    %v4762 = vld [vmem:[%s4753 + $0x40] sm:$0xff]
    %v4763 = vld [vmem:[%s4753 + $0x48] sm:$0xff]
    %v4764 = vld [vmem:[%s4753 + $0x50] sm:$0xff]
    %v4765 = vld [vmem:[%s4753 + $0x58] sm:$0xff]
    %v4766 = vld [vmem:[%s4753 + $0x60] sm:$0xff]
    %v4767 = vld [vmem:[%s4753 + $0x68] sm:$0xff]
    %v4768 = vld [vmem:[%s4753 + $0x70] sm:$0xff]
    %v4769 = vld [vmem:[%s4753 + $0x78] sm:$0xff]
    %v4770 = vld [vmem:[%s4753 + $0x80] sm:$0xff]
    %v4771 = vld [vmem:[%s4753 + $0x88] sm:$0xff]
    %v4772 = vld [vmem:[%s4753 + $0x90] sm:$0xff]
    %v4773 = vld [vmem:[%s4753 + $0x98] sm:$0xff]
    %v4774 = vld [vmem:[%s4753 + $0xa0] sm:$0xff]
    %v4775 = vld [vmem:[%s4753 + $0xa8] sm:$0xff]
    %v4776 = vld [vmem:[%s4753 + $0xb0] sm:$0xff]
    %v4777 = vld [vmem:[%s4753 + $0xb8] sm:$0xff]
    %v4778 = vld [vmem:[%s4753 + $0xc0] sm:$0xff]
    %v4779 = vld [vmem:[%s4753 + $0xc8] sm:$0xff]
    %v4780 = vld [vmem:[%s4753 + $0xd0] sm:$0xff]
    %v4781 = vld [vmem:[%s4753 + $0xd8] sm:$0xff]
    %v4782 = vld [vmem:[%s4753 + $0xe0] sm:$0xff]
    %v4783 = vld [vmem:[%s4753 + $0xe8] sm:$0xff]
    %v4784 = vld [vmem:[%s4753 + $0xf0] sm:$0xff]
    %v4785 = vld [vmem:[%s4753 + $0xf8] sm:$0xff]
    %v4786 = vld [vmem:[%s4753 + $0x100] sm:$0xff]
    %v4787 = vld [vmem:[%s4753 + $0x108] sm:$0xff]
    %v4788 = vld [vmem:[%s4753 + $0x110] sm:$0xff]
    %v4789 = vld [vmem:[%s4753 + $0x118] sm:$0xff]
    %v4790 = vld [vmem:[%s4753 + $0x120] sm:$0xff]
    %v4791 = vld [vmem:[%s4753 + $0x128] sm:$0xff]
    %v4792 = vld [vmem:[%s4753 + $0x130] sm:$0xff]
    %v4793 = vld [vmem:[%s4753 + $0x138] sm:$0xff]
    %v4794 = vld [vmem:[%s4753 + $0x140] sm:$0xff]
    %v4795 = vld [vmem:[%s4753 + $0x148] sm:$0xff]
    %v4796 = vld [vmem:[%s4753 + $0x150] sm:$0xff]
    %v4797 = vld [vmem:[%s4753 + $0x158] sm:$0xff]
    %v4798 = vld [vmem:[%s4753 + $0x160] sm:$0xff]
    %s4799 = sld [smem:[#allocation5 + $0x5]]
    %v4800 = vstv %s4799
    %4801 = vmatprep.subr.mxu0 0.0
    %4802 = vmatpush1.msra.mxu0 %v4754
    %4803 = vmatprep.subr.mxu0 0.0
    %4804 = vmatpush1.msra.mxu0 %v4755
    %4805 = vmatprep.subr.mxu0 0.0
    %4806 = vmatpush1.msra.mxu0 %v4756
    %4807 = vmatprep.subr.mxu0 0.0
    %4808 = vmatpush1.msra.mxu0 %v4757
    %4809 = vmatprep.subr.mxu0 0.0
    %4810 = vmatpush1.msra.mxu0 %v4758
    %4811 = vmatprep.subr.mxu0 0.0
    %4812 = vmatpush1.msra.mxu0 %v4759
    %4813 = vmatprep.subr.mxu0 0.0
    %4814 = vmatpush1.msra.mxu0 %v4760
    %4815 = vmatprep.subr.mxu0 0.0
    %4816 = vmatpush1.msra.mxu0 %v4761
    %4817 = vmatprep.subr.mxu0 0.0
    %4818 = vmatpush1.msra.mxu0 %v4762
    %4819 = vmatprep.subr.mxu0 0.0
    %4820 = vmatpush1.msra.mxu0 %v4763
    %4821 = vmatprep.subr.mxu0 0.0
    %4822 = vmatpush1.msra.mxu0 %v4764
    %4823 = vmatprep.subr.mxu0 0.0
    %4824 = vmatpush1.msra.mxu0 %v4765
    %4825 = vmatprep.subr.mxu0 0.0
    %4826 = vmatpush1.msra.mxu0 %v4766
    %4827 = vmatprep.subr.mxu0 0.0
    %4828 = vmatpush1.msra.mxu0 %v4767
    %4829 = vmatprep.subr.mxu0 0.0
    %4830 = vmatpush1.msra.mxu0 %v4768
    %4831 = vmatprep.subr.mxu0 0.0
    %4832 = vmatpush1.msra.mxu0 %v4769
    %4833 = vmatprep.subr.mxu0 0.0
    %4834 = vmatpush1.msra.mxu0 %v4770
    %4835 = vmatprep.subr.mxu0 0.0
    %4836 = vmatpush1.msra.mxu0 %v4771
    %4837 = vmatprep.subr.mxu0 0.0
    %4838 = vmatpush1.msra.mxu0 %v4772
    %4839 = vmatprep.subr.mxu0 0.0
    %4840 = vmatpush1.msra.mxu0 %v4773
    %4841 = vmatprep.subr.mxu0 0.0
    %4842 = vmatpush1.msra.mxu0 %v4774
    %4843 = vmatprep.subr.mxu0 0.0
    %4844 = vmatpush1.msra.mxu0 %v4775
    %4845 = vmatprep.subr.mxu0 0.0
    %4846 = vmatpush1.msra.mxu0 %v4776
    %4847 = vmatprep.subr.mxu0 0.0
    %4848 = vmatpush1.msra.mxu0 %v4777
    %4849 = vmatprep.subr.mxu0 0.0
    %4850 = vmatpush1.msra.mxu0 %v4778
    %4851 = vmatprep.subr.mxu0 0.0
    %4852 = vmatpush1.msra.mxu0 %v4779
    %4853 = vmatprep.subr.mxu0 0.0
    %4854 = vmatpush1.msra.mxu0 %v4780
    %4855 = vmatprep.subr.mxu0 0.0
    %4856 = vmatpush1.msra.mxu0 %v4781
    %4857 = vmatprep.subr.mxu0 0.0
    %4858 = vmatpush1.msra.mxu0 %v4782
    %4859 = vmatprep.subr.mxu0 0.0
    %4860 = vmatpush1.msra.mxu0 %v4783
    %4861 = vmatprep.subr.mxu0 0.0
    %4862 = vmatpush1.msra.mxu0 %v4784
    %4863 = vmatprep.subr.mxu0 0.0
    %4864 = vmatpush1.msra.mxu0 %v4785
    %4865 = vmatprep.mubr.f32.mxu0 %v3747
    %4866 = vmatmul.mubr.f32.gmra.mrb[0].mxu0 %v3610
    %v4867 = vpop.f32.mrb[0].mxu0
    %v4868 = vadd.f32 %v4800, %v4867
    %v4869 = vpop.f32.mrb[0].mxu0
    %4870 = vmatprep.mubr.f32.mxu0 %v3748
    %4871 = vmatmul.mubr.f32.gmra.mrb[0].mxu0 %v3611
    %v4872 = vpop.f32.mrb[0].mxu0
    %v4873 = vadd.f32 %v4800, %v4872
    %v4874 = vpop.f32.mrb[0].mxu0
    %4875 = vdwg.mxu0
    %4876 = vmatprep.subr.mxu0 0.0
    %4877 = vmatpush1.msra.mxu0 %v4786
    %4878 = vmatprep.subr.mxu0 0.0
    %4879 = vmatpush1.msra.mxu0 %v4787
    %4880 = vmatprep.subr.mxu0 0.0
    %4881 = vmatpush1.msra.mxu0 %v4788
    %4882 = vmatprep.subr.mxu0 0.0
    %4883 = vmatpush1.msra.mxu0 %v4789
    %4884 = vmatprep.subr.mxu0 0.0
    %4885 = vmatpush1.msra.mxu0 %v4790
    %4886 = vmatprep.subr.mxu0 0.0
    %4887 = vmatpush1.msra.mxu0 %v4791
    %4888 = vmatprep.subr.mxu0 0.0
    %4889 = vmatpush1.msra.mxu0 %v4792
    %4890 = vmatprep.subr.mxu0 0.0
    %4891 = vmatpush1.msra.mxu0 %v4793
    %4892 = vmatprep.subr.mxu0 0.0
    %4893 = vmatpush1.msra.mxu0 %v4794
    %4894 = vmatprep.subr.mxu0 0.0
    %4895 = vmatpush1.msra.mxu0 %v4795
    %4896 = vmatprep.subr.mxu0 0.0
    %4897 = vmatpush1.msra.mxu0 %v4796
    %4898 = vmatprep.subr.mxu0 0.0
    %4899 = vmatpush1.msra.mxu0 %v4797
    %4900 = vmatprep.subr.mxu0 0.0
    %4901 = vmatpush1.msra.mxu0 %v4798
    %4902 = vmatprep.subr.mxu0 0.0
    %4903 = vmatpush1.msra.mxu0 0.0
    %4904 = vmatprep.subr.mxu0 0.0
    %4905 = vmatpush1.msra.mxu0 0.0
    %4906 = vmatprep.subr.mxu0 0.0
    %4907 = vmatpush1.msra.mxu0 0.0
    %4908 = vmatprep.subr.mxu0 0.0
    %4909 = vmatpush1.msra.mxu0 0.0
    %4910 = vmatprep.subr.mxu0 0.0
    %4911 = vmatpush1.msra.mxu0 0.0
    %4912 = vmatprep.subr.mxu0 0.0
    %4913 = vmatpush1.msra.mxu0 0.0
    %4914 = vmatprep.subr.mxu0 0.0
    %4915 = vmatpush1.msra.mxu0 0.0
    %4916 = vmatprep.subr.mxu0 0.0
    %4917 = vmatpush1.msra.mxu0 0.0
    %4918 = vmatprep.subr.mxu0 0.0
    %4919 = vmatpush1.msra.mxu0 0.0
    %4920 = vmatprep.subr.mxu0 0.0
    %4921 = vmatpush1.msra.mxu0 0.0
    %4922 = vmatprep.subr.mxu0 0.0
    %4923 = vmatpush1.msra.mxu0 0.0
    %4924 = vmatprep.subr.mxu0 0.0
    %4925 = vmatpush1.msra.mxu0 0.0
    %4926 = vmatprep.subr.mxu0 0.0
    %4927 = vmatpush1.msra.mxu0 0.0
    %4928 = vmatprep.subr.mxu0 0.0
    %4929 = vmatpush1.msra.mxu0 0.0
    %4930 = vmatprep.subr.mxu0 0.0
    %4931 = vmatpush1.msra.mxu0 0.0
    %4932 = vmatprep.subr.mxu0 0.0
    %4933 = vmatpush1.msra.mxu0 0.0
    %4934 = vmatprep.subr.mxu0 0.0
    %4935 = vmatpush1.msra.mxu0 0.0
    %4936 = vmatprep.subr.mxu0 0.0
    %4937 = vmatpush1.msra.mxu0 0.0
    %4938 = vmatprep.subr.mxu0 0.0
    %4939 = vmatpush1.msra.mxu0 0.0
    %4940 = vmatprep.mubr.f32.mxu0 0.0
    %4941 = vmatmul.mubr.f32.gmra.mrb[0].mxu0 %v3797
    %v4942 = vpop.f32.mrb[0].mxu0
    %v4943 = vadd.f32 %v4868, %v4942
    %v4944 = vpop.f32.mrb[0].mxu0
    %4945 = vmatprep.mubr.f32.mxu0 0.0
    %4946 = vmatmul.mubr.f32.gmra.mrb[0].mxu0 %v3799
    %v4947 = vpop.f32.mrb[0].mxu0
    %v4948 = vadd.f32 %v4873, %v4947
    %v4949 = vpop.f32.mrb[0].mxu0
    %4950 = vdwg.mxu0
    %v4951 = vmax.f32 %v4943, 0.0
    %v4952 = vmax.f32 %v4948, 0.0
    %s4953 = scalar_lea.vmem %s3, 2160
    %v4954 = vld [vmem:[%s4953] sm:$0xff]
    %v4955 = vld [vmem:[%s4953 + $0x8] sm:$0xff]
    %v4956 = vld [vmem:[%s4953 + $0x10] sm:$0xff]
    %v4957 = vld [vmem:[%s4953 + $0x18] sm:$0xff]
    %v4958 = vld [vmem:[%s4953 + $0x20] sm:$0xff]
    %v4959 = vld [vmem:[%s4953 + $0x28] sm:$0xff]
    %v4960 = vld [vmem:[%s4953 + $0x30] sm:$0xff]
    %v4961 = vld [vmem:[%s4953 + $0x38] sm:$0xff]
    %v4962 = vld [vmem:[%s4953 + $0x40] sm:$0xff]
    %v4963 = vld [vmem:[%s4953 + $0x48] sm:$0xff]
    %v4964 = vld [vmem:[%s4953 + $0x50] sm:$0xff]
    %v4965 = vld [vmem:[%s4953 + $0x58] sm:$0xff]
    %v4966 = vld [vmem:[%s4953 + $0x60] sm:$0xff]
    %v4967 = vld [vmem:[%s4953 + $0x68] sm:$0xff]
    %v4968 = vld [vmem:[%s4953 + $0x70] sm:$0xff]
    %v4969 = vld [vmem:[%s4953 + $0x78] sm:$0xff]
    %v4970 = vld [vmem:[%s4953 + $0x80] sm:$0xff]
    %v4971 = vld [vmem:[%s4953 + $0x88] sm:$0xff]
    %v4972 = vld [vmem:[%s4953 + $0x90] sm:$0xff]
    %v4973 = vld [vmem:[%s4953 + $0x98] sm:$0xff]
    %v4974 = vld [vmem:[%s4953 + $0xa0] sm:$0xff]
    %v4975 = vld [vmem:[%s4953 + $0xa8] sm:$0xff]
    %v4976 = vld [vmem:[%s4953 + $0xb0] sm:$0xff]
    %v4977 = vld [vmem:[%s4953 + $0xb8] sm:$0xff]
    %v4978 = vld [vmem:[%s4953 + $0xc0] sm:$0xff]
    %v4979 = vld [vmem:[%s4953 + $0xc8] sm:$0xff]
    %v4980 = vld [vmem:[%s4953 + $0xd0] sm:$0xff]
    %v4981 = vld [vmem:[%s4953 + $0xd8] sm:$0xff]
    %v4982 = vld [vmem:[%s4953 + $0xe0] sm:$0xff]
    %v4983 = vld [vmem:[%s4953 + $0xe8] sm:$0xff]
    %v4984 = vld [vmem:[%s4953 + $0xf0] sm:$0xff]
    %v4985 = vld [vmem:[%s4953 + $0xf8] sm:$0xff]
    %v4986 = vld [vmem:[%s4953 + $0x100] sm:$0xff]
    %v4987 = vld [vmem:[%s4953 + $0x108] sm:$0xff]
    %v4988 = vld [vmem:[%s4953 + $0x110] sm:$0xff]
    %v4989 = vld [vmem:[%s4953 + $0x118] sm:$0xff]
    %v4990 = vld [vmem:[%s4953 + $0x120] sm:$0xff]
    %v4991 = vld [vmem:[%s4953 + $0x128] sm:$0xff]
    %v4992 = vld [vmem:[%s4953 + $0x130] sm:$0xff]
    %v4993 = vld [vmem:[%s4953 + $0x138] sm:$0xff]
    %v4994 = vld [vmem:[%s4953 + $0x140] sm:$0xff]
    %v4995 = vld [vmem:[%s4953 + $0x148] sm:$0xff]
    %v4996 = vld [vmem:[%s4953 + $0x150] sm:$0xff]
    %v4997 = vld [vmem:[%s4953 + $0x158] sm:$0xff]
    %v4998 = vld [vmem:[%s4953 + $0x160] sm:$0xff]
    %s4999 = sld [smem:[#allocation5 + $0x6]]
    %v5000 = vstv %s4999
    %5001 = vmatprep.subr.mxu0 0.0
    %5002 = vmatpush1.msra.mxu0 %v4954
    %5003 = vmatprep.subr.mxu0 0.0
    %5004 = vmatpush1.msra.mxu0 %v4955
    %5005 = vmatprep.subr.mxu0 0.0
    %5006 = vmatpush1.msra.mxu0 %v4956
    %5007 = vmatprep.subr.mxu0 0.0
    %5008 = vmatpush1.msra.mxu0 %v4957
    %5009 = vmatprep.subr.mxu0 0.0
    %5010 = vmatpush1.msra.mxu0 %v4958
    %5011 = vmatprep.subr.mxu0 0.0
    %5012 = vmatpush1.msra.mxu0 %v4959
    %5013 = vmatprep.subr.mxu0 0.0
    %5014 = vmatpush1.msra.mxu0 %v4960
    %5015 = vmatprep.subr.mxu0 0.0
    %5016 = vmatpush1.msra.mxu0 %v4961
    %5017 = vmatprep.subr.mxu0 0.0
    %5018 = vmatpush1.msra.mxu0 %v4962
    %5019 = vmatprep.subr.mxu0 0.0
    %5020 = vmatpush1.msra.mxu0 %v4963
    %5021 = vmatprep.subr.mxu0 0.0
    %5022 = vmatpush1.msra.mxu0 %v4964
    %5023 = vmatprep.subr.mxu0 0.0
    %5024 = vmatpush1.msra.mxu0 %v4965
    %5025 = vmatprep.subr.mxu0 0.0
    %5026 = vmatpush1.msra.mxu0 %v4966
    %5027 = vmatprep.subr.mxu0 0.0
    %5028 = vmatpush1.msra.mxu0 %v4967
    %5029 = vmatprep.subr.mxu0 0.0
    %5030 = vmatpush1.msra.mxu0 %v4968
    %5031 = vmatprep.subr.mxu0 0.0
    %5032 = vmatpush1.msra.mxu0 %v4969
    %5033 = vmatprep.subr.mxu0 0.0
    %5034 = vmatpush1.msra.mxu0 %v4970
    %5035 = vmatprep.subr.mxu0 0.0
    %5036 = vmatpush1.msra.mxu0 %v4971
    %5037 = vmatprep.subr.mxu0 0.0
    %5038 = vmatpush1.msra.mxu0 %v4972
    %5039 = vmatprep.subr.mxu0 0.0
    %5040 = vmatpush1.msra.mxu0 %v4973
    %5041 = vmatprep.subr.mxu0 0.0
    %5042 = vmatpush1.msra.mxu0 %v4974
    %5043 = vmatprep.subr.mxu0 0.0
    %5044 = vmatpush1.msra.mxu0 %v4975
    %5045 = vmatprep.subr.mxu0 0.0
    %5046 = vmatpush1.msra.mxu0 %v4976
    %5047 = vmatprep.subr.mxu0 0.0
    %5048 = vmatpush1.msra.mxu0 %v4977
    %5049 = vmatprep.subr.mxu0 0.0
    %5050 = vmatpush1.msra.mxu0 %v4978
    %5051 = vmatprep.subr.mxu0 0.0
    %5052 = vmatpush1.msra.mxu0 %v4979
    %5053 = vmatprep.subr.mxu0 0.0
    %5054 = vmatpush1.msra.mxu0 %v4980
    %5055 = vmatprep.subr.mxu0 0.0
    %5056 = vmatpush1.msra.mxu0 %v4981
    %5057 = vmatprep.subr.mxu0 0.0
    %5058 = vmatpush1.msra.mxu0 %v4982
    %5059 = vmatprep.subr.mxu0 0.0
    %5060 = vmatpush1.msra.mxu0 %v4983
    %5061 = vmatprep.subr.mxu0 0.0
    %5062 = vmatpush1.msra.mxu0 %v4984
    %5063 = vmatprep.subr.mxu0 0.0
    %5064 = vmatpush1.msra.mxu0 %v4985
    %5065 = vmatprep.mubr.f32.mxu0 %v3747
    %5066 = vmatmul.mubr.f32.gmra.mrb[0].mxu0 %v3610
    %v5067 = vpop.f32.mrb[0].mxu0
    %v5068 = vadd.f32 %v5000, %v5067
    %v5069 = vpop.f32.mrb[0].mxu0
    %5070 = vmatprep.mubr.f32.mxu0 %v3748
    %5071 = vmatmul.mubr.f32.gmra.mrb[0].mxu0 %v3611
    %v5072 = vpop.f32.mrb[0].mxu0
    %v5073 = vadd.f32 %v5000, %v5072
    %v5074 = vpop.f32.mrb[0].mxu0
    %5075 = vdwg.mxu0
    %5076 = vmatprep.subr.mxu0 0.0
    %5077 = vmatpush1.msra.mxu0 %v4986
    %5078 = vmatprep.subr.mxu0 0.0
    %5079 = vmatpush1.msra.mxu0 %v4987
    %5080 = vmatprep.subr.mxu0 0.0
    %5081 = vmatpush1.msra.mxu0 %v4988
    %5082 = vmatprep.subr.mxu0 0.0
    %5083 = vmatpush1.msra.mxu0 %v4989
    %5084 = vmatprep.subr.mxu0 0.0
    %5085 = vmatpush1.msra.mxu0 %v4990
    %5086 = vmatprep.subr.mxu0 0.0
    %5087 = vmatpush1.msra.mxu0 %v4991
    %5088 = vmatprep.subr.mxu0 0.0
    %5089 = vmatpush1.msra.mxu0 %v4992
    %5090 = vmatprep.subr.mxu0 0.0
    %5091 = vmatpush1.msra.mxu0 %v4993
    %5092 = vmatprep.subr.mxu0 0.0
    %5093 = vmatpush1.msra.mxu0 %v4994
    %5094 = vmatprep.subr.mxu0 0.0
    %5095 = vmatpush1.msra.mxu0 %v4995
    %5096 = vmatprep.subr.mxu0 0.0
    %5097 = vmatpush1.msra.mxu0 %v4996
    %5098 = vmatprep.subr.mxu0 0.0
    %5099 = vmatpush1.msra.mxu0 %v4997
    %5100 = vmatprep.subr.mxu0 0.0
    %5101 = vmatpush1.msra.mxu0 %v4998
    %5102 = vmatprep.subr.mxu0 0.0
    %5103 = vmatpush1.msra.mxu0 0.0
    %5104 = vmatprep.subr.mxu0 0.0
    %5105 = vmatpush1.msra.mxu0 0.0
    %5106 = vmatprep.subr.mxu0 0.0
    %5107 = vmatpush1.msra.mxu0 0.0
    %5108 = vmatprep.subr.mxu0 0.0
    %5109 = vmatpush1.msra.mxu0 0.0
    %5110 = vmatprep.subr.mxu0 0.0
    %5111 = vmatpush1.msra.mxu0 0.0
    %5112 = vmatprep.subr.mxu0 0.0
    %5113 = vmatpush1.msra.mxu0 0.0
    %5114 = vmatprep.subr.mxu0 0.0
    %5115 = vmatpush1.msra.mxu0 0.0
    %5116 = vmatprep.subr.mxu0 0.0
    %5117 = vmatpush1.msra.mxu0 0.0
    %5118 = vmatprep.subr.mxu0 0.0
    %5119 = vmatpush1.msra.mxu0 0.0
    %5120 = vmatprep.subr.mxu0 0.0
    %5121 = vmatpush1.msra.mxu0 0.0
    %5122 = vmatprep.subr.mxu0 0.0
    %5123 = vmatpush1.msra.mxu0 0.0
    %5124 = vmatprep.subr.mxu0 0.0
    %5125 = vmatpush1.msra.mxu0 0.0
    %5126 = vmatprep.subr.mxu0 0.0
    %5127 = vmatpush1.msra.mxu0 0.0
    %5128 = vmatprep.subr.mxu0 0.0
    %5129 = vmatpush1.msra.mxu0 0.0
    %5130 = vmatprep.subr.mxu0 0.0
    %5131 = vmatpush1.msra.mxu0 0.0
    %5132 = vmatprep.subr.mxu0 0.0
    %5133 = vmatpush1.msra.mxu0 0.0
    %5134 = vmatprep.subr.mxu0 0.0
    %5135 = vmatpush1.msra.mxu0 0.0
    %5136 = vmatprep.subr.mxu0 0.0
    %5137 = vmatpush1.msra.mxu0 0.0
    %5138 = vmatprep.subr.mxu0 0.0
    %5139 = vmatpush1.msra.mxu0 0.0
    %5140 = vmatprep.mubr.f32.mxu0 0.0
    %5141 = vmatmul.mubr.f32.gmra.mrb[0].mxu0 %v3797
    %v5142 = vpop.f32.mrb[0].mxu0
    %v5143 = vadd.f32 %v5068, %v5142
    %v5144 = vpop.f32.mrb[0].mxu0
    %5145 = vmatprep.mubr.f32.mxu0 0.0
    %5146 = vmatmul.mubr.f32.gmra.mrb[0].mxu0 %v3799
    %v5147 = vpop.f32.mrb[0].mxu0
    %v5148 = vadd.f32 %v5073, %v5147
    %v5149 = vpop.f32.mrb[0].mxu0
    %5150 = vdwg.mxu0
    %v5151 = vmax.f32 %v5143, 0.0
    %v5152 = vmax.f32 %v5148, 0.0
    %s5153 = scalar_lea.vmem %s3, 2520
    %v5154 = vld [vmem:[%s5153] sm:$0xff]
    %v5155 = vld [vmem:[%s5153 + $0x8] sm:$0xff]
    %v5156 = vld [vmem:[%s5153 + $0x10] sm:$0xff]
    %v5157 = vld [vmem:[%s5153 + $0x18] sm:$0xff]
    %v5158 = vld [vmem:[%s5153 + $0x20] sm:$0xff]
    %v5159 = vld [vmem:[%s5153 + $0x28] sm:$0xff]
    %v5160 = vld [vmem:[%s5153 + $0x30] sm:$0xff]
    %v5161 = vld [vmem:[%s5153 + $0x38] sm:$0xff]
    %v5162 = vld [vmem:[%s5153 + $0x40] sm:$0xff]
    %v5163 = vld [vmem:[%s5153 + $0x48] sm:$0xff]
    %v5164 = vld [vmem:[%s5153 + $0x50] sm:$0xff]
    %v5165 = vld [vmem:[%s5153 + $0x58] sm:$0xff]
    %v5166 = vld [vmem:[%s5153 + $0x60] sm:$0xff]
    %v5167 = vld [vmem:[%s5153 + $0x68] sm:$0xff]
    %v5168 = vld [vmem:[%s5153 + $0x70] sm:$0xff]
    %v5169 = vld [vmem:[%s5153 + $0x78] sm:$0xff]
    %v5170 = vld [vmem:[%s5153 + $0x80] sm:$0xff]
    %v5171 = vld [vmem:[%s5153 + $0x88] sm:$0xff]
    %v5172 = vld [vmem:[%s5153 + $0x90] sm:$0xff]
    %v5173 = vld [vmem:[%s5153 + $0x98] sm:$0xff]
    %v5174 = vld [vmem:[%s5153 + $0xa0] sm:$0xff]
    %v5175 = vld [vmem:[%s5153 + $0xa8] sm:$0xff]
    %v5176 = vld [vmem:[%s5153 + $0xb0] sm:$0xff]
    %v5177 = vld [vmem:[%s5153 + $0xb8] sm:$0xff]
    %v5178 = vld [vmem:[%s5153 + $0xc0] sm:$0xff]
    %v5179 = vld [vmem:[%s5153 + $0xc8] sm:$0xff]
    %v5180 = vld [vmem:[%s5153 + $0xd0] sm:$0xff]
    %v5181 = vld [vmem:[%s5153 + $0xd8] sm:$0xff]
    %v5182 = vld [vmem:[%s5153 + $0xe0] sm:$0xff]
    %v5183 = vld [vmem:[%s5153 + $0xe8] sm:$0xff]
    %v5184 = vld [vmem:[%s5153 + $0xf0] sm:$0xff]
    %v5185 = vld [vmem:[%s5153 + $0xf8] sm:$0xff]
    %v5186 = vld [vmem:[%s5153 + $0x100] sm:$0xff]
    %v5187 = vld [vmem:[%s5153 + $0x108] sm:$0xff]
    %v5188 = vld [vmem:[%s5153 + $0x110] sm:$0xff]
    %v5189 = vld [vmem:[%s5153 + $0x118] sm:$0xff]
    %v5190 = vld [vmem:[%s5153 + $0x120] sm:$0xff]
    %v5191 = vld [vmem:[%s5153 + $0x128] sm:$0xff]
    %v5192 = vld [vmem:[%s5153 + $0x130] sm:$0xff]
    %v5193 = vld [vmem:[%s5153 + $0x138] sm:$0xff]
    %v5194 = vld [vmem:[%s5153 + $0x140] sm:$0xff]
    %v5195 = vld [vmem:[%s5153 + $0x148] sm:$0xff]
    %v5196 = vld [vmem:[%s5153 + $0x150] sm:$0xff]
    %v5197 = vld [vmem:[%s5153 + $0x158] sm:$0xff]
    %v5198 = vld [vmem:[%s5153 + $0x160] sm:$0xff]
    %s5199 = sld [smem:[#allocation5 + $0x7]]
    %v5200 = vstv %s5199
    %5201 = vmatprep.subr.mxu0 0.0
    %5202 = vmatpush1.msra.mxu0 %v5154
    %5203 = vmatprep.subr.mxu0 0.0
    %5204 = vmatpush1.msra.mxu0 %v5155
    %5205 = vmatprep.subr.mxu0 0.0
    %5206 = vmatpush1.msra.mxu0 %v5156
    %5207 = vmatprep.subr.mxu0 0.0
    %5208 = vmatpush1.msra.mxu0 %v5157
    %5209 = vmatprep.subr.mxu0 0.0
    %5210 = vmatpush1.msra.mxu0 %v5158
    %5211 = vmatprep.subr.mxu0 0.0
    %5212 = vmatpush1.msra.mxu0 %v5159
    %5213 = vmatprep.subr.mxu0 0.0
    %5214 = vmatpush1.msra.mxu0 %v5160
    %5215 = vmatprep.subr.mxu0 0.0
    %5216 = vmatpush1.msra.mxu0 %v5161
    %5217 = vmatprep.subr.mxu0 0.0
    %5218 = vmatpush1.msra.mxu0 %v5162
    %5219 = vmatprep.subr.mxu0 0.0
    %5220 = vmatpush1.msra.mxu0 %v5163
    %5221 = vmatprep.subr.mxu0 0.0
    %5222 = vmatpush1.msra.mxu0 %v5164
    %5223 = vmatprep.subr.mxu0 0.0
    %5224 = vmatpush1.msra.mxu0 %v5165
    %5225 = vmatprep.subr.mxu0 0.0
    %5226 = vmatpush1.msra.mxu0 %v5166
    %5227 = vmatprep.subr.mxu0 0.0
    %5228 = vmatpush1.msra.mxu0 %v5167
    %5229 = vmatprep.subr.mxu0 0.0
    %5230 = vmatpush1.msra.mxu0 %v5168
    %5231 = vmatprep.subr.mxu0 0.0
    %5232 = vmatpush1.msra.mxu0 %v5169
    %5233 = vmatprep.subr.mxu0 0.0
    %5234 = vmatpush1.msra.mxu0 %v5170
    %5235 = vmatprep.subr.mxu0 0.0
    %5236 = vmatpush1.msra.mxu0 %v5171
    %5237 = vmatprep.subr.mxu0 0.0
    %5238 = vmatpush1.msra.mxu0 %v5172
    %5239 = vmatprep.subr.mxu0 0.0
    %5240 = vmatpush1.msra.mxu0 %v5173
    %5241 = vmatprep.subr.mxu0 0.0
    %5242 = vmatpush1.msra.mxu0 %v5174
    %5243 = vmatprep.subr.mxu0 0.0
    %5244 = vmatpush1.msra.mxu0 %v5175
    %5245 = vmatprep.subr.mxu0 0.0
    %5246 = vmatpush1.msra.mxu0 %v5176
    %5247 = vmatprep.subr.mxu0 0.0
    %5248 = vmatpush1.msra.mxu0 %v5177
    %5249 = vmatprep.subr.mxu0 0.0
    %5250 = vmatpush1.msra.mxu0 %v5178
    %5251 = vmatprep.subr.mxu0 0.0
    %5252 = vmatpush1.msra.mxu0 %v5179
    %5253 = vmatprep.subr.mxu0 0.0
    %5254 = vmatpush1.msra.mxu0 %v5180
    %5255 = vmatprep.subr.mxu0 0.0
    %5256 = vmatpush1.msra.mxu0 %v5181
    %5257 = vmatprep.subr.mxu0 0.0
    %5258 = vmatpush1.msra.mxu0 %v5182
    %5259 = vmatprep.subr.mxu0 0.0
    %5260 = vmatpush1.msra.mxu0 %v5183
    %5261 = vmatprep.subr.mxu0 0.0
    %5262 = vmatpush1.msra.mxu0 %v5184
    %5263 = vmatprep.subr.mxu0 0.0
    %5264 = vmatpush1.msra.mxu0 %v5185
    %5265 = vmatprep.mubr.f32.mxu0 %v3747
    %5266 = vmatmul.mubr.f32.gmra.mrb[0].mxu0 %v3610
    %v5267 = vpop.f32.mrb[0].mxu0
    %v5268 = vadd.f32 %v5200, %v5267
    %v5269 = vpop.f32.mrb[0].mxu0
    %5270 = vmatprep.mubr.f32.mxu0 %v3748
    %5271 = vmatmul.mubr.f32.gmra.mrb[0].mxu0 %v3611
    %v5272 = vpop.f32.mrb[0].mxu0
    %v5273 = vadd.f32 %v5200, %v5272
    %v5274 = vpop.f32.mrb[0].mxu0
    %5275 = vdwg.mxu0
    %5276 = vmatprep.subr.mxu0 0.0
    %5277 = vmatpush1.msra.mxu0 %v5186
    %5278 = vmatprep.subr.mxu0 0.0
    %5279 = vmatpush1.msra.mxu0 %v5187
    %5280 = vmatprep.subr.mxu0 0.0
    %5281 = vmatpush1.msra.mxu0 %v5188
    %5282 = vmatprep.subr.mxu0 0.0
    %5283 = vmatpush1.msra.mxu0 %v5189
    %5284 = vmatprep.subr.mxu0 0.0
    %5285 = vmatpush1.msra.mxu0 %v5190
    %5286 = vmatprep.subr.mxu0 0.0
    %5287 = vmatpush1.msra.mxu0 %v5191
    %5288 = vmatprep.subr.mxu0 0.0
    %5289 = vmatpush1.msra.mxu0 %v5192
    %5290 = vmatprep.subr.mxu0 0.0
    %5291 = vmatpush1.msra.mxu0 %v5193
    %5292 = vmatprep.subr.mxu0 0.0
    %5293 = vmatpush1.msra.mxu0 %v5194
    %5294 = vmatprep.subr.mxu0 0.0
    %5295 = vmatpush1.msra.mxu0 %v5195
    %5296 = vmatprep.subr.mxu0 0.0
    %5297 = vmatpush1.msra.mxu0 %v5196
    %5298 = vmatprep.subr.mxu0 0.0
    %5299 = vmatpush1.msra.mxu0 %v5197
    %5300 = vmatprep.subr.mxu0 0.0
    %5301 = vmatpush1.msra.mxu0 %v5198
    %5302 = vmatprep.subr.mxu0 0.0
    %5303 = vmatpush1.msra.mxu0 0.0
    %5304 = vmatprep.subr.mxu0 0.0
    %5305 = vmatpush1.msra.mxu0 0.0
    %5306 = vmatprep.subr.mxu0 0.0
    %5307 = vmatpush1.msra.mxu0 0.0
    %5308 = vmatprep.subr.mxu0 0.0
    %5309 = vmatpush1.msra.mxu0 0.0
    %5310 = vmatprep.subr.mxu0 0.0
    %5311 = vmatpush1.msra.mxu0 0.0
    %5312 = vmatprep.subr.mxu0 0.0
    %5313 = vmatpush1.msra.mxu0 0.0
    %5314 = vmatprep.subr.mxu0 0.0
    %5315 = vmatpush1.msra.mxu0 0.0
    %5316 = vmatprep.subr.mxu0 0.0
    %5317 = vmatpush1.msra.mxu0 0.0
    %5318 = vmatprep.subr.mxu0 0.0
    %5319 = vmatpush1.msra.mxu0 0.0
    %5320 = vmatprep.subr.mxu0 0.0
    %5321 = vmatpush1.msra.mxu0 0.0
    %5322 = vmatprep.subr.mxu0 0.0
    %5323 = vmatpush1.msra.mxu0 0.0
    %5324 = vmatprep.subr.mxu0 0.0
    %5325 = vmatpush1.msra.mxu0 0.0
    %5326 = vmatprep.subr.mxu0 0.0
    %5327 = vmatpush1.msra.mxu0 0.0
    %5328 = vmatprep.subr.mxu0 0.0
    %5329 = vmatpush1.msra.mxu0 0.0
    %5330 = vmatprep.subr.mxu0 0.0
    %5331 = vmatpush1.msra.mxu0 0.0
    %5332 = vmatprep.subr.mxu0 0.0
    %5333 = vmatpush1.msra.mxu0 0.0
    %5334 = vmatprep.subr.mxu0 0.0
    %5335 = vmatpush1.msra.mxu0 0.0
    %5336 = vmatprep.subr.mxu0 0.0
    %5337 = vmatpush1.msra.mxu0 0.0
    %5338 = vmatprep.subr.mxu0 0.0
    %5339 = vmatpush1.msra.mxu0 0.0
    %5340 = vmatprep.mubr.f32.mxu0 0.0
    %5341 = vmatmul.mubr.f32.gmra.mrb[0].mxu0 %v3797
    %v5342 = vpop.f32.mrb[0].mxu0
    %v5343 = vadd.f32 %v5268, %v5342
    %v5344 = vpop.f32.mrb[0].mxu0
    %5345 = vmatprep.mubr.f32.mxu0 0.0
    %5346 = vmatmul.mubr.f32.gmra.mrb[0].mxu0 %v3799
    %v5347 = vpop.f32.mrb[0].mxu0
    %v5348 = vadd.f32 %v5273, %v5347
    %v5349 = vpop.f32.mrb[0].mxu0
    %5350 = vdwg.mxu0
    %v5351 = vmax.f32 %v5343, 0.0
    %v5352 = vmax.f32 %v5348, 0.0
    %s5353 = scalar_lea.vmem %s3, 2880
    %v5354 = vld [vmem:[%s5353] sm:$0xff]
    %v5355 = vld [vmem:[%s5353 + $0x8] sm:$0xff]
    %v5356 = vld [vmem:[%s5353 + $0x10] sm:$0xff]
    %v5357 = vld [vmem:[%s5353 + $0x18] sm:$0xff]
    %v5358 = vld [vmem:[%s5353 + $0x20] sm:$0xff]
    %v5359 = vld [vmem:[%s5353 + $0x28] sm:$0xff]
    %v5360 = vld [vmem:[%s5353 + $0x30] sm:$0xff]
    %v5361 = vld [vmem:[%s5353 + $0x38] sm:$0xff]
    %v5362 = vld [vmem:[%s5353 + $0x40] sm:$0xff]
    %v5363 = vld [vmem:[%s5353 + $0x48] sm:$0xff]
    %v5364 = vld [vmem:[%s5353 + $0x50] sm:$0xff]
    %v5365 = vld [vmem:[%s5353 + $0x58] sm:$0xff]
    %v5366 = vld [vmem:[%s5353 + $0x60] sm:$0xff]
    %v5367 = vld [vmem:[%s5353 + $0x68] sm:$0xff]
    %v5368 = vld [vmem:[%s5353 + $0x70] sm:$0xff]
    %v5369 = vld [vmem:[%s5353 + $0x78] sm:$0xff]
    %v5370 = vld [vmem:[%s5353 + $0x80] sm:$0xff]
    %v5371 = vld [vmem:[%s5353 + $0x88] sm:$0xff]
    %v5372 = vld [vmem:[%s5353 + $0x90] sm:$0xff]
    %v5373 = vld [vmem:[%s5353 + $0x98] sm:$0xff]
    %v5374 = vld [vmem:[%s5353 + $0xa0] sm:$0xff]
    %v5375 = vld [vmem:[%s5353 + $0xa8] sm:$0xff]
    %v5376 = vld [vmem:[%s5353 + $0xb0] sm:$0xff]
    %v5377 = vld [vmem:[%s5353 + $0xb8] sm:$0xff]
    %v5378 = vld [vmem:[%s5353 + $0xc0] sm:$0xff]
    %v5379 = vld [vmem:[%s5353 + $0xc8] sm:$0xff]
    %v5380 = vld [vmem:[%s5353 + $0xd0] sm:$0xff]
    %v5381 = vld [vmem:[%s5353 + $0xd8] sm:$0xff]
    %v5382 = vld [vmem:[%s5353 + $0xe0] sm:$0xff]
    %v5383 = vld [vmem:[%s5353 + $0xe8] sm:$0xff]
    %v5384 = vld [vmem:[%s5353 + $0xf0] sm:$0xff]
    %v5385 = vld [vmem:[%s5353 + $0xf8] sm:$0xff]
    %v5386 = vld [vmem:[%s5353 + $0x100] sm:$0xff]
    %v5387 = vld [vmem:[%s5353 + $0x108] sm:$0xff]
    %v5388 = vld [vmem:[%s5353 + $0x110] sm:$0xff]
    %v5389 = vld [vmem:[%s5353 + $0x118] sm:$0xff]
    %v5390 = vld [vmem:[%s5353 + $0x120] sm:$0xff]
    %v5391 = vld [vmem:[%s5353 + $0x128] sm:$0xff]
    %v5392 = vld [vmem:[%s5353 + $0x130] sm:$0xff]
    %v5393 = vld [vmem:[%s5353 + $0x138] sm:$0xff]
    %v5394 = vld [vmem:[%s5353 + $0x140] sm:$0xff]
    %v5395 = vld [vmem:[%s5353 + $0x148] sm:$0xff]
    %v5396 = vld [vmem:[%s5353 + $0x150] sm:$0xff]
    %v5397 = vld [vmem:[%s5353 + $0x158] sm:$0xff]
    %v5398 = vld [vmem:[%s5353 + $0x160] sm:$0xff]
    %s5399 = sld [smem:[#allocation5 + $0x8]]
    %v5400 = vstv %s5399
    %5401 = vmatprep.subr.mxu0 0.0
    %5402 = vmatpush1.msra.mxu0 %v5354
    %5403 = vmatprep.subr.mxu0 0.0
    %5404 = vmatpush1.msra.mxu0 %v5355
    %5405 = vmatprep.subr.mxu0 0.0
    %5406 = vmatpush1.msra.mxu0 %v5356
    %5407 = vmatprep.subr.mxu0 0.0
    %5408 = vmatpush1.msra.mxu0 %v5357
    %5409 = vmatprep.subr.mxu0 0.0
    %5410 = vmatpush1.msra.mxu0 %v5358
    %5411 = vmatprep.subr.mxu0 0.0
    %5412 = vmatpush1.msra.mxu0 %v5359
    %5413 = vmatprep.subr.mxu0 0.0
    %5414 = vmatpush1.msra.mxu0 %v5360
    %5415 = vmatprep.subr.mxu0 0.0
    %5416 = vmatpush1.msra.mxu0 %v5361
    %5417 = vmatprep.subr.mxu0 0.0
    %5418 = vmatpush1.msra.mxu0 %v5362
    %5419 = vmatprep.subr.mxu0 0.0
    %5420 = vmatpush1.msra.mxu0 %v5363
    %5421 = vmatprep.subr.mxu0 0.0
    %5422 = vmatpush1.msra.mxu0 %v5364
    %5423 = vmatprep.subr.mxu0 0.0
    %5424 = vmatpush1.msra.mxu0 %v5365
    %5425 = vmatprep.subr.mxu0 0.0
    %5426 = vmatpush1.msra.mxu0 %v5366
    %5427 = vmatprep.subr.mxu0 0.0
    %5428 = vmatpush1.msra.mxu0 %v5367
    %5429 = vmatprep.subr.mxu0 0.0
    %5430 = vmatpush1.msra.mxu0 %v5368
    %5431 = vmatprep.subr.mxu0 0.0
    %5432 = vmatpush1.msra.mxu0 %v5369
    %5433 = vmatprep.subr.mxu0 0.0
    %5434 = vmatpush1.msra.mxu0 %v5370
    %5435 = vmatprep.subr.mxu0 0.0
    %5436 = vmatpush1.msra.mxu0 %v5371
    %5437 = vmatprep.subr.mxu0 0.0
    %5438 = vmatpush1.msra.mxu0 %v5372
    %5439 = vmatprep.subr.mxu0 0.0
    %5440 = vmatpush1.msra.mxu0 %v5373
    %5441 = vmatprep.subr.mxu0 0.0
    %5442 = vmatpush1.msra.mxu0 %v5374
    %5443 = vmatprep.subr.mxu0 0.0
    %5444 = vmatpush1.msra.mxu0 %v5375
    %5445 = vmatprep.subr.mxu0 0.0
    %5446 = vmatpush1.msra.mxu0 %v5376
    %5447 = vmatprep.subr.mxu0 0.0
    %5448 = vmatpush1.msra.mxu0 %v5377
    %5449 = vmatprep.subr.mxu0 0.0
    %5450 = vmatpush1.msra.mxu0 %v5378
    %5451 = vmatprep.subr.mxu0 0.0
    %5452 = vmatpush1.msra.mxu0 %v5379
    %5453 = vmatprep.subr.mxu0 0.0
    %5454 = vmatpush1.msra.mxu0 %v5380
    %5455 = vmatprep.subr.mxu0 0.0
    %5456 = vmatpush1.msra.mxu0 %v5381
    %5457 = vmatprep.subr.mxu0 0.0
    %5458 = vmatpush1.msra.mxu0 %v5382
    %5459 = vmatprep.subr.mxu0 0.0
    %5460 = vmatpush1.msra.mxu0 %v5383
    %5461 = vmatprep.subr.mxu0 0.0
    %5462 = vmatpush1.msra.mxu0 %v5384
    %5463 = vmatprep.subr.mxu0 0.0
    %5464 = vmatpush1.msra.mxu0 %v5385
    %5465 = vmatprep.mubr.f32.mxu0 %v3747
    %5466 = vmatmul.mubr.f32.gmra.mrb[0].mxu0 %v3610
    %v5467 = vpop.f32.mrb[0].mxu0
    %v5468 = vadd.f32 %v5400, %v5467
    %v5469 = vpop.f32.mrb[0].mxu0
    %5470 = vmatprep.mubr.f32.mxu0 %v3748
    %5471 = vmatmul.mubr.f32.gmra.mrb[0].mxu0 %v3611
    %v5472 = vpop.f32.mrb[0].mxu0
    %v5473 = vadd.f32 %v5400, %v5472
    %v5474 = vpop.f32.mrb[0].mxu0
    %5475 = vdwg.mxu0
    %5476 = vmatprep.subr.mxu0 0.0
    %5477 = vmatpush1.msra.mxu0 %v5386
    %5478 = vmatprep.subr.mxu0 0.0
    %5479 = vmatpush1.msra.mxu0 %v5387
    %5480 = vmatprep.subr.mxu0 0.0
    %5481 = vmatpush1.msra.mxu0 %v5388
    %5482 = vmatprep.subr.mxu0 0.0
    %5483 = vmatpush1.msra.mxu0 %v5389
    %5484 = vmatprep.subr.mxu0 0.0
    %5485 = vmatpush1.msra.mxu0 %v5390
    %5486 = vmatprep.subr.mxu0 0.0
    %5487 = vmatpush1.msra.mxu0 %v5391
    %5488 = vmatprep.subr.mxu0 0.0
    %5489 = vmatpush1.msra.mxu0 %v5392
    %5490 = vmatprep.subr.mxu0 0.0
    %5491 = vmatpush1.msra.mxu0 %v5393
    %5492 = vmatprep.subr.mxu0 0.0
    %5493 = vmatpush1.msra.mxu0 %v5394
    %5494 = vmatprep.subr.mxu0 0.0
    %5495 = vmatpush1.msra.mxu0 %v5395
    %5496 = vmatprep.subr.mxu0 0.0
    %5497 = vmatpush1.msra.mxu0 %v5396
    %5498 = vmatprep.subr.mxu0 0.0
    %5499 = vmatpush1.msra.mxu0 %v5397
    %5500 = vmatprep.subr.mxu0 0.0
    %5501 = vmatpush1.msra.mxu0 %v5398
    %5502 = vmatprep.subr.mxu0 0.0
    %5503 = vmatpush1.msra.mxu0 0.0
    %5504 = vmatprep.subr.mxu0 0.0
    %5505 = vmatpush1.msra.mxu0 0.0
    %5506 = vmatprep.subr.mxu0 0.0
    %5507 = vmatpush1.msra.mxu0 0.0
    %5508 = vmatprep.subr.mxu0 0.0
    %5509 = vmatpush1.msra.mxu0 0.0
    %5510 = vmatprep.subr.mxu0 0.0
    %5511 = vmatpush1.msra.mxu0 0.0
    %5512 = vmatprep.subr.mxu0 0.0
    %5513 = vmatpush1.msra.mxu0 0.0
    %5514 = vmatprep.subr.mxu0 0.0
    %5515 = vmatpush1.msra.mxu0 0.0
    %5516 = vmatprep.subr.mxu0 0.0
    %5517 = vmatpush1.msra.mxu0 0.0
    %5518 = vmatprep.subr.mxu0 0.0
    %5519 = vmatpush1.msra.mxu0 0.0
    %5520 = vmatprep.subr.mxu0 0.0
    %5521 = vmatpush1.msra.mxu0 0.0
    %5522 = vmatprep.subr.mxu0 0.0
    %5523 = vmatpush1.msra.mxu0 0.0
    %5524 = vmatprep.subr.mxu0 0.0
    %5525 = vmatpush1.msra.mxu0 0.0
    %5526 = vmatprep.subr.mxu0 0.0
    %5527 = vmatpush1.msra.mxu0 0.0
    %5528 = vmatprep.subr.mxu0 0.0
    %5529 = vmatpush1.msra.mxu0 0.0
    %5530 = vmatprep.subr.mxu0 0.0
    %5531 = vmatpush1.msra.mxu0 0.0
    %5532 = vmatprep.subr.mxu0 0.0
    %5533 = vmatpush1.msra.mxu0 0.0
    %5534 = vmatprep.subr.mxu0 0.0
    %5535 = vmatpush1.msra.mxu0 0.0
    %5536 = vmatprep.subr.mxu0 0.0
    %5537 = vmatpush1.msra.mxu0 0.0
    %5538 = vmatprep.subr.mxu0 0.0
    %5539 = vmatpush1.msra.mxu0 0.0
    %5540 = vmatprep.mubr.f32.mxu0 0.0
    %5541 = vmatmul.mubr.f32.gmra.mrb[0].mxu0 %v3797
    %v5542 = vpop.f32.mrb[0].mxu0
    %v5543 = vadd.f32 %v5468, %v5542
    %v5544 = vpop.f32.mrb[0].mxu0
    %5545 = vmatprep.mubr.f32.mxu0 0.0
    %5546 = vmatmul.mubr.f32.gmra.mrb[0].mxu0 %v3799
    %v5547 = vpop.f32.mrb[0].mxu0
    %v5548 = vadd.f32 %v5473, %v5547
    %v5549 = vpop.f32.mrb[0].mxu0
    %5550 = vdwg.mxu0
    %v5551 = vmax.f32 %v5543, 0.0
    %v5552 = vmax.f32 %v5548, 0.0
    %s5553 = scalar_lea.vmem %s3, 3240
    %v5554 = vld [vmem:[%s5553] sm:$0xff]
    %v5555 = vld [vmem:[%s5553 + $0x8] sm:$0xff]
    %v5556 = vld [vmem:[%s5553 + $0x10] sm:$0xff]
    %v5557 = vld [vmem:[%s5553 + $0x18] sm:$0xff]
    %v5558 = vld [vmem:[%s5553 + $0x20] sm:$0xff]
    %v5559 = vld [vmem:[%s5553 + $0x28] sm:$0xff]
    %v5560 = vld [vmem:[%s5553 + $0x30] sm:$0xff]
    %v5561 = vld [vmem:[%s5553 + $0x38] sm:$0xff]
    %v5562 = vld [vmem:[%s5553 + $0x40] sm:$0xff]
    %v5563 = vld [vmem:[%s5553 + $0x48] sm:$0xff]
    %v5564 = vld [vmem:[%s5553 + $0x50] sm:$0xff]
    %v5565 = vld [vmem:[%s5553 + $0x58] sm:$0xff]
    %v5566 = vld [vmem:[%s5553 + $0x60] sm:$0xff]
    %v5567 = vld [vmem:[%s5553 + $0x68] sm:$0xff]
    %v5568 = vld [vmem:[%s5553 + $0x70] sm:$0xff]
    %v5569 = vld [vmem:[%s5553 + $0x78] sm:$0xff]
    %v5570 = vld [vmem:[%s5553 + $0x80] sm:$0xff]
    %v5571 = vld [vmem:[%s5553 + $0x88] sm:$0xff]
    %v5572 = vld [vmem:[%s5553 + $0x90] sm:$0xff]
    %v5573 = vld [vmem:[%s5553 + $0x98] sm:$0xff]
    %v5574 = vld [vmem:[%s5553 + $0xa0] sm:$0xff]
    %v5575 = vld [vmem:[%s5553 + $0xa8] sm:$0xff]
    %v5576 = vld [vmem:[%s5553 + $0xb0] sm:$0xff]
    %v5577 = vld [vmem:[%s5553 + $0xb8] sm:$0xff]
    %v5578 = vld [vmem:[%s5553 + $0xc0] sm:$0xff]
    %v5579 = vld [vmem:[%s5553 + $0xc8] sm:$0xff]
    %v5580 = vld [vmem:[%s5553 + $0xd0] sm:$0xff]
    %v5581 = vld [vmem:[%s5553 + $0xd8] sm:$0xff]
    %v5582 = vld [vmem:[%s5553 + $0xe0] sm:$0xff]
    %v5583 = vld [vmem:[%s5553 + $0xe8] sm:$0xff]
    %v5584 = vld [vmem:[%s5553 + $0xf0] sm:$0xff]
    %v5585 = vld [vmem:[%s5553 + $0xf8] sm:$0xff]
    %v5586 = vld [vmem:[%s5553 + $0x100] sm:$0xff]
    %v5587 = vld [vmem:[%s5553 + $0x108] sm:$0xff]
    %v5588 = vld [vmem:[%s5553 + $0x110] sm:$0xff]
    %v5589 = vld [vmem:[%s5553 + $0x118] sm:$0xff]
    %v5590 = vld [vmem:[%s5553 + $0x120] sm:$0xff]
    %v5591 = vld [vmem:[%s5553 + $0x128] sm:$0xff]
    %v5592 = vld [vmem:[%s5553 + $0x130] sm:$0xff]
    %v5593 = vld [vmem:[%s5553 + $0x138] sm:$0xff]
    %v5594 = vld [vmem:[%s5553 + $0x140] sm:$0xff]
    %v5595 = vld [vmem:[%s5553 + $0x148] sm:$0xff]
    %v5596 = vld [vmem:[%s5553 + $0x150] sm:$0xff]
    %v5597 = vld [vmem:[%s5553 + $0x158] sm:$0xff]
    %v5598 = vld [vmem:[%s5553 + $0x160] sm:$0xff]
    %s5599 = sld [smem:[#allocation5 + $0x9]]
    %v5600 = vstv %s5599
    %5601 = vmatprep.subr.mxu0 0.0
    %5602 = vmatpush1.msra.mxu0 %v5554
    %5603 = vmatprep.subr.mxu0 0.0
    %5604 = vmatpush1.msra.mxu0 %v5555
    %5605 = vmatprep.subr.mxu0 0.0
    %5606 = vmatpush1.msra.mxu0 %v5556
    %5607 = vmatprep.subr.mxu0 0.0
    %5608 = vmatpush1.msra.mxu0 %v5557
    %5609 = vmatprep.subr.mxu0 0.0
    %5610 = vmatpush1.msra.mxu0 %v5558
    %5611 = vmatprep.subr.mxu0 0.0
    %5612 = vmatpush1.msra.mxu0 %v5559
    %5613 = vmatprep.subr.mxu0 0.0
    %5614 = vmatpush1.msra.mxu0 %v5560
    %5615 = vmatprep.subr.mxu0 0.0
    %5616 = vmatpush1.msra.mxu0 %v5561
    %5617 = vmatprep.subr.mxu0 0.0
    %5618 = vmatpush1.msra.mxu0 %v5562
    %5619 = vmatprep.subr.mxu0 0.0
    %5620 = vmatpush1.msra.mxu0 %v5563
    %5621 = vmatprep.subr.mxu0 0.0
    %5622 = vmatpush1.msra.mxu0 %v5564
    %5623 = vmatprep.subr.mxu0 0.0
    %5624 = vmatpush1.msra.mxu0 %v5565
    %5625 = vmatprep.subr.mxu0 0.0
    %5626 = vmatpush1.msra.mxu0 %v5566
    %5627 = vmatprep.subr.mxu0 0.0
    %5628 = vmatpush1.msra.mxu0 %v5567
    %5629 = vmatprep.subr.mxu0 0.0
    %5630 = vmatpush1.msra.mxu0 %v5568
    %5631 = vmatprep.subr.mxu0 0.0
    %5632 = vmatpush1.msra.mxu0 %v5569
    %5633 = vmatprep.subr.mxu0 0.0
    %5634 = vmatpush1.msra.mxu0 %v5570
    %5635 = vmatprep.subr.mxu0 0.0
    %5636 = vmatpush1.msra.mxu0 %v5571
    %5637 = vmatprep.subr.mxu0 0.0
    %5638 = vmatpush1.msra.mxu0 %v5572
    %5639 = vmatprep.subr.mxu0 0.0
    %5640 = vmatpush1.msra.mxu0 %v5573
    %5641 = vmatprep.subr.mxu0 0.0
    %5642 = vmatpush1.msra.mxu0 %v5574
    %5643 = vmatprep.subr.mxu0 0.0
    %5644 = vmatpush1.msra.mxu0 %v5575
    %5645 = vmatprep.subr.mxu0 0.0
    %5646 = vmatpush1.msra.mxu0 %v5576
    %5647 = vmatprep.subr.mxu0 0.0
    %5648 = vmatpush1.msra.mxu0 %v5577
    %5649 = vmatprep.subr.mxu0 0.0
    %5650 = vmatpush1.msra.mxu0 %v5578
    %5651 = vmatprep.subr.mxu0 0.0
    %5652 = vmatpush1.msra.mxu0 %v5579
    %5653 = vmatprep.subr.mxu0 0.0
    %5654 = vmatpush1.msra.mxu0 %v5580
    %5655 = vmatprep.subr.mxu0 0.0
    %5656 = vmatpush1.msra.mxu0 %v5581
    %5657 = vmatprep.subr.mxu0 0.0
    %5658 = vmatpush1.msra.mxu0 %v5582
    %5659 = vmatprep.subr.mxu0 0.0
    %5660 = vmatpush1.msra.mxu0 %v5583
    %5661 = vmatprep.subr.mxu0 0.0
    %5662 = vmatpush1.msra.mxu0 %v5584
    %5663 = vmatprep.subr.mxu0 0.0
    %5664 = vmatpush1.msra.mxu0 %v5585
    %5665 = vmatprep.mubr.f32.mxu0 %v3747
    %5666 = vmatmul.mubr.f32.gmra.mrb[0].mxu0 %v3610
    %v5667 = vpop.f32.mrb[0].mxu0
    %v5668 = vadd.f32 %v5600, %v5667
    %v5669 = vpop.f32.mrb[0].mxu0
    %5670 = vmatprep.mubr.f32.mxu0 %v3748
    %5671 = vmatmul.mubr.f32.gmra.mrb[0].mxu0 %v3611
    %v5672 = vpop.f32.mrb[0].mxu0
    %v5673 = vadd.f32 %v5600, %v5672
    %v5674 = vpop.f32.mrb[0].mxu0
    %5675 = vdwg.mxu0
    %5676 = vmatprep.subr.mxu0 0.0
    %5677 = vmatpush1.msra.mxu0 %v5586
    %5678 = vmatprep.subr.mxu0 0.0
    %5679 = vmatpush1.msra.mxu0 %v5587
    %5680 = vmatprep.subr.mxu0 0.0
    %5681 = vmatpush1.msra.mxu0 %v5588
    %5682 = vmatprep.subr.mxu0 0.0
    %5683 = vmatpush1.msra.mxu0 %v5589
    %5684 = vmatprep.subr.mxu0 0.0
    %5685 = vmatpush1.msra.mxu0 %v5590
    %5686 = vmatprep.subr.mxu0 0.0
    %5687 = vmatpush1.msra.mxu0 %v5591
    %5688 = vmatprep.subr.mxu0 0.0
    %5689 = vmatpush1.msra.mxu0 %v5592
    %5690 = vmatprep.subr.mxu0 0.0
    %5691 = vmatpush1.msra.mxu0 %v5593
    %5692 = vmatprep.subr.mxu0 0.0
    %5693 = vmatpush1.msra.mxu0 %v5594
    %5694 = vmatprep.subr.mxu0 0.0
    %5695 = vmatpush1.msra.mxu0 %v5595
    %5696 = vmatprep.subr.mxu0 0.0
    %5697 = vmatpush1.msra.mxu0 %v5596
    %5698 = vmatprep.subr.mxu0 0.0
    %5699 = vmatpush1.msra.mxu0 %v5597
    %5700 = vmatprep.subr.mxu0 0.0
    %5701 = vmatpush1.msra.mxu0 %v5598
    %5702 = vmatprep.subr.mxu0 0.0
    %5703 = vmatpush1.msra.mxu0 0.0
    %5704 = vmatprep.subr.mxu0 0.0
    %5705 = vmatpush1.msra.mxu0 0.0
    %5706 = vmatprep.subr.mxu0 0.0
    %5707 = vmatpush1.msra.mxu0 0.0
    %5708 = vmatprep.subr.mxu0 0.0
    %5709 = vmatpush1.msra.mxu0 0.0
    %5710 = vmatprep.subr.mxu0 0.0
    %5711 = vmatpush1.msra.mxu0 0.0
    %5712 = vmatprep.subr.mxu0 0.0
    %5713 = vmatpush1.msra.mxu0 0.0
    %5714 = vmatprep.subr.mxu0 0.0
    %5715 = vmatpush1.msra.mxu0 0.0
    %5716 = vmatprep.subr.mxu0 0.0
    %5717 = vmatpush1.msra.mxu0 0.0
    %5718 = vmatprep.subr.mxu0 0.0
    %5719 = vmatpush1.msra.mxu0 0.0
    %5720 = vmatprep.subr.mxu0 0.0
    %5721 = vmatpush1.msra.mxu0 0.0
    %5722 = vmatprep.subr.mxu0 0.0
    %5723 = vmatpush1.msra.mxu0 0.0
    %5724 = vmatprep.subr.mxu0 0.0
    %5725 = vmatpush1.msra.mxu0 0.0
    %5726 = vmatprep.subr.mxu0 0.0
    %5727 = vmatpush1.msra.mxu0 0.0
    %5728 = vmatprep.subr.mxu0 0.0
    %5729 = vmatpush1.msra.mxu0 0.0
    %5730 = vmatprep.subr.mxu0 0.0
    %5731 = vmatpush1.msra.mxu0 0.0
    %5732 = vmatprep.subr.mxu0 0.0
    %5733 = vmatpush1.msra.mxu0 0.0
    %5734 = vmatprep.subr.mxu0 0.0
    %5735 = vmatpush1.msra.mxu0 0.0
    %5736 = vmatprep.subr.mxu0 0.0
    %5737 = vmatpush1.msra.mxu0 0.0
    %5738 = vmatprep.subr.mxu0 0.0
    %5739 = vmatpush1.msra.mxu0 0.0
    %5740 = vmatprep.mubr.f32.mxu0 0.0
    %5741 = vmatmul.mubr.f32.gmra.mrb[0].mxu0 %v3797
    %v5742 = vpop.f32.mrb[0].mxu0
    %v5743 = vadd.f32 %v5668, %v5742
    %v5744 = vpop.f32.mrb[0].mxu0
    %5745 = vmatprep.mubr.f32.mxu0 0.0
    %5746 = vmatmul.mubr.f32.gmra.mrb[0].mxu0 %v3799
    %v5747 = vpop.f32.mrb[0].mxu0
    %v5748 = vadd.f32 %v5673, %v5747
    %v5749 = vpop.f32.mrb[0].mxu0
    %5750 = vdwg.mxu0
    %v5751 = vmax.f32 %v5743, 0.0
    %v5752 = vmax.f32 %v5748, 0.0
    %s5753 = scalar_lea.vmem %s3, 3600
    %v5754 = vld [vmem:[%s5753] sm:$0xff]
    %v5755 = vld [vmem:[%s5753 + $0x8] sm:$0xff]
    %v5756 = vld [vmem:[%s5753 + $0x10] sm:$0xff]
    %v5757 = vld [vmem:[%s5753 + $0x18] sm:$0xff]
    %v5758 = vld [vmem:[%s5753 + $0x20] sm:$0xff]
    %v5759 = vld [vmem:[%s5753 + $0x28] sm:$0xff]
    %v5760 = vld [vmem:[%s5753 + $0x30] sm:$0xff]
    %v5761 = vld [vmem:[%s5753 + $0x38] sm:$0xff]
    %v5762 = vld [vmem:[%s5753 + $0x40] sm:$0xff]
    %v5763 = vld [vmem:[%s5753 + $0x48] sm:$0xff]
    %v5764 = vld [vmem:[%s5753 + $0x50] sm:$0xff]
    %v5765 = vld [vmem:[%s5753 + $0x58] sm:$0xff]
    %v5766 = vld [vmem:[%s5753 + $0x60] sm:$0xff]
    %v5767 = vld [vmem:[%s5753 + $0x68] sm:$0xff]
    %v5768 = vld [vmem:[%s5753 + $0x70] sm:$0xff]
    %v5769 = vld [vmem:[%s5753 + $0x78] sm:$0xff]
    %v5770 = vld [vmem:[%s5753 + $0x80] sm:$0xff]
    %v5771 = vld [vmem:[%s5753 + $0x88] sm:$0xff]
    %v5772 = vld [vmem:[%s5753 + $0x90] sm:$0xff]
    %v5773 = vld [vmem:[%s5753 + $0x98] sm:$0xff]
    %v5774 = vld [vmem:[%s5753 + $0xa0] sm:$0xff]
    %v5775 = vld [vmem:[%s5753 + $0xa8] sm:$0xff]
    %v5776 = vld [vmem:[%s5753 + $0xb0] sm:$0xff]
    %v5777 = vld [vmem:[%s5753 + $0xb8] sm:$0xff]
    %v5778 = vld [vmem:[%s5753 + $0xc0] sm:$0xff]
    %v5779 = vld [vmem:[%s5753 + $0xc8] sm:$0xff]
    %v5780 = vld [vmem:[%s5753 + $0xd0] sm:$0xff]
    %v5781 = vld [vmem:[%s5753 + $0xd8] sm:$0xff]
    %v5782 = vld [vmem:[%s5753 + $0xe0] sm:$0xff]
    %v5783 = vld [vmem:[%s5753 + $0xe8] sm:$0xff]
    %v5784 = vld [vmem:[%s5753 + $0xf0] sm:$0xff]
    %v5785 = vld [vmem:[%s5753 + $0xf8] sm:$0xff]
    %v5786 = vld [vmem:[%s5753 + $0x100] sm:$0xff]
    %v5787 = vld [vmem:[%s5753 + $0x108] sm:$0xff]
    %v5788 = vld [vmem:[%s5753 + $0x110] sm:$0xff]
    %v5789 = vld [vmem:[%s5753 + $0x118] sm:$0xff]
    %v5790 = vld [vmem:[%s5753 + $0x120] sm:$0xff]
    %v5791 = vld [vmem:[%s5753 + $0x128] sm:$0xff]
    %v5792 = vld [vmem:[%s5753 + $0x130] sm:$0xff]
    %v5793 = vld [vmem:[%s5753 + $0x138] sm:$0xff]
    %v5794 = vld [vmem:[%s5753 + $0x140] sm:$0xff]
    %v5795 = vld [vmem:[%s5753 + $0x148] sm:$0xff]
    %v5796 = vld [vmem:[%s5753 + $0x150] sm:$0xff]
    %v5797 = vld [vmem:[%s5753 + $0x158] sm:$0xff]
    %v5798 = vld [vmem:[%s5753 + $0x160] sm:$0xff]
    %s5799 = sld [smem:[#allocation5 + $0xa]]
    %v5800 = vstv %s5799
    %5801 = vmatprep.subr.mxu0 0.0
    %5802 = vmatpush1.msra.mxu0 %v5754
    %5803 = vmatprep.subr.mxu0 0.0
    %5804 = vmatpush1.msra.mxu0 %v5755
    %5805 = vmatprep.subr.mxu0 0.0
    %5806 = vmatpush1.msra.mxu0 %v5756
    %5807 = vmatprep.subr.mxu0 0.0
    %5808 = vmatpush1.msra.mxu0 %v5757
    %5809 = vmatprep.subr.mxu0 0.0
    %5810 = vmatpush1.msra.mxu0 %v5758
    %5811 = vmatprep.subr.mxu0 0.0
    %5812 = vmatpush1.msra.mxu0 %v5759
    %5813 = vmatprep.subr.mxu0 0.0
    %5814 = vmatpush1.msra.mxu0 %v5760
    %5815 = vmatprep.subr.mxu0 0.0
    %5816 = vmatpush1.msra.mxu0 %v5761
    %5817 = vmatprep.subr.mxu0 0.0
    %5818 = vmatpush1.msra.mxu0 %v5762
    %5819 = vmatprep.subr.mxu0 0.0
    %5820 = vmatpush1.msra.mxu0 %v5763
    %5821 = vmatprep.subr.mxu0 0.0
    %5822 = vmatpush1.msra.mxu0 %v5764
    %5823 = vmatprep.subr.mxu0 0.0
    %5824 = vmatpush1.msra.mxu0 %v5765
    %5825 = vmatprep.subr.mxu0 0.0
    %5826 = vmatpush1.msra.mxu0 %v5766
    %5827 = vmatprep.subr.mxu0 0.0
    %5828 = vmatpush1.msra.mxu0 %v5767
    %5829 = vmatprep.subr.mxu0 0.0
    %5830 = vmatpush1.msra.mxu0 %v5768
    %5831 = vmatprep.subr.mxu0 0.0
    %5832 = vmatpush1.msra.mxu0 %v5769
    %5833 = vmatprep.subr.mxu0 0.0
    %5834 = vmatpush1.msra.mxu0 %v5770
    %5835 = vmatprep.subr.mxu0 0.0
    %5836 = vmatpush1.msra.mxu0 %v5771
    %5837 = vmatprep.subr.mxu0 0.0
    %5838 = vmatpush1.msra.mxu0 %v5772
    %5839 = vmatprep.subr.mxu0 0.0
    %5840 = vmatpush1.msra.mxu0 %v5773
    %5841 = vmatprep.subr.mxu0 0.0
    %5842 = vmatpush1.msra.mxu0 %v5774
    %5843 = vmatprep.subr.mxu0 0.0
    %5844 = vmatpush1.msra.mxu0 %v5775
    %5845 = vmatprep.subr.mxu0 0.0
    %5846 = vmatpush1.msra.mxu0 %v5776
    %5847 = vmatprep.subr.mxu0 0.0
    %5848 = vmatpush1.msra.mxu0 %v5777
    %5849 = vmatprep.subr.mxu0 0.0
    %5850 = vmatpush1.msra.mxu0 %v5778
    %5851 = vmatprep.subr.mxu0 0.0
    %5852 = vmatpush1.msra.mxu0 %v5779
    %5853 = vmatprep.subr.mxu0 0.0
    %5854 = vmatpush1.msra.mxu0 %v5780
    %5855 = vmatprep.subr.mxu0 0.0
    %5856 = vmatpush1.msra.mxu0 %v5781
    %5857 = vmatprep.subr.mxu0 0.0
    %5858 = vmatpush1.msra.mxu0 %v5782
    %5859 = vmatprep.subr.mxu0 0.0
    %5860 = vmatpush1.msra.mxu0 %v5783
    %5861 = vmatprep.subr.mxu0 0.0
    %5862 = vmatpush1.msra.mxu0 %v5784
    %5863 = vmatprep.subr.mxu0 0.0
    %5864 = vmatpush1.msra.mxu0 %v5785
    %5865 = vmatprep.mubr.f32.mxu0 %v3747
    %5866 = vmatmul.mubr.f32.gmra.mrb[0].mxu0 %v3610
    %v5867 = vpop.f32.mrb[0].mxu0
    %v5868 = vadd.f32 %v5800, %v5867
    %v5869 = vpop.f32.mrb[0].mxu0
    %5870 = vmatprep.mubr.f32.mxu0 %v3748
    %5871 = vmatmul.mubr.f32.gmra.mrb[0].mxu0 %v3611
    %v5872 = vpop.f32.mrb[0].mxu0
    %v5873 = vadd.f32 %v5800, %v5872
    %v5874 = vpop.f32.mrb[0].mxu0
    %5875 = vdwg.mxu0
    %5876 = vmatprep.subr.mxu0 0.0
    %5877 = vmatpush1.msra.mxu0 %v5786
    %5878 = vmatprep.subr.mxu0 0.0
    %5879 = vmatpush1.msra.mxu0 %v5787
    %5880 = vmatprep.subr.mxu0 0.0
    %5881 = vmatpush1.msra.mxu0 %v5788
    %5882 = vmatprep.subr.mxu0 0.0
    %5883 = vmatpush1.msra.mxu0 %v5789
    %5884 = vmatprep.subr.mxu0 0.0
    %5885 = vmatpush1.msra.mxu0 %v5790
    %5886 = vmatprep.subr.mxu0 0.0
    %5887 = vmatpush1.msra.mxu0 %v5791
    %5888 = vmatprep.subr.mxu0 0.0
    %5889 = vmatpush1.msra.mxu0 %v5792
    %5890 = vmatprep.subr.mxu0 0.0
    %5891 = vmatpush1.msra.mxu0 %v5793
    %5892 = vmatprep.subr.mxu0 0.0
    %5893 = vmatpush1.msra.mxu0 %v5794
    %5894 = vmatprep.subr.mxu0 0.0
    %5895 = vmatpush1.msra.mxu0 %v5795
    %5896 = vmatprep.subr.mxu0 0.0
    %5897 = vmatpush1.msra.mxu0 %v5796
    %5898 = vmatprep.subr.mxu0 0.0
    %5899 = vmatpush1.msra.mxu0 %v5797
    %5900 = vmatprep.subr.mxu0 0.0
    %5901 = vmatpush1.msra.mxu0 %v5798
    %5902 = vmatprep.subr.mxu0 0.0
    %5903 = vmatpush1.msra.mxu0 0.0
    %5904 = vmatprep.subr.mxu0 0.0
    %5905 = vmatpush1.msra.mxu0 0.0
    %5906 = vmatprep.subr.mxu0 0.0
    %5907 = vmatpush1.msra.mxu0 0.0
    %5908 = vmatprep.subr.mxu0 0.0
    %5909 = vmatpush1.msra.mxu0 0.0
    %5910 = vmatprep.subr.mxu0 0.0
    %5911 = vmatpush1.msra.mxu0 0.0
    %5912 = vmatprep.subr.mxu0 0.0
    %5913 = vmatpush1.msra.mxu0 0.0
    %5914 = vmatprep.subr.mxu0 0.0
    %5915 = vmatpush1.msra.mxu0 0.0
    %5916 = vmatprep.subr.mxu0 0.0
    %5917 = vmatpush1.msra.mxu0 0.0
    %5918 = vmatprep.subr.mxu0 0.0
    %5919 = vmatpush1.msra.mxu0 0.0
    %5920 = vmatprep.subr.mxu0 0.0
    %5921 = vmatpush1.msra.mxu0 0.0
    %5922 = vmatprep.subr.mxu0 0.0
    %5923 = vmatpush1.msra.mxu0 0.0
    %5924 = vmatprep.subr.mxu0 0.0
    %5925 = vmatpush1.msra.mxu0 0.0
    %5926 = vmatprep.subr.mxu0 0.0
    %5927 = vmatpush1.msra.mxu0 0.0
    %5928 = vmatprep.subr.mxu0 0.0
    %5929 = vmatpush1.msra.mxu0 0.0
    %5930 = vmatprep.subr.mxu0 0.0
    %5931 = vmatpush1.msra.mxu0 0.0
    %5932 = vmatprep.subr.mxu0 0.0
    %5933 = vmatpush1.msra.mxu0 0.0
    %5934 = vmatprep.subr.mxu0 0.0
    %5935 = vmatpush1.msra.mxu0 0.0
    %5936 = vmatprep.subr.mxu0 0.0
    %5937 = vmatpush1.msra.mxu0 0.0
    %5938 = vmatprep.subr.mxu0 0.0
    %5939 = vmatpush1.msra.mxu0 0.0
    %5940 = vmatprep.mubr.f32.mxu0 0.0
    %5941 = vmatmul.mubr.f32.gmra.mrb[0].mxu0 %v3797
    %v5942 = vpop.f32.mrb[0].mxu0
    %v5943 = vadd.f32 %v5868, %v5942
    %v5944 = vpop.f32.mrb[0].mxu0
    %5945 = vmatprep.mubr.f32.mxu0 0.0
    %5946 = vmatmul.mubr.f32.gmra.mrb[0].mxu0 %v3799
    %v5947 = vpop.f32.mrb[0].mxu0
    %v5948 = vadd.f32 %v5873, %v5947
    %v5949 = vpop.f32.mrb[0].mxu0
    %5950 = vdwg.mxu0
    %v5951 = vmax.f32 %v5943, 0.0
    %v5952 = vmax.f32 %v5948, 0.0
    %s5953 = scalar_lea.vmem %s3, 3960
    %v5954 = vld [vmem:[%s5953] sm:$0xff]
    %v5955 = vld [vmem:[%s5953 + $0x8] sm:$0xff]
    %v5956 = vld [vmem:[%s5953 + $0x10] sm:$0xff]
    %v5957 = vld [vmem:[%s5953 + $0x18] sm:$0xff]
    %v5958 = vld [vmem:[%s5953 + $0x20] sm:$0xff]
    %v5959 = vld [vmem:[%s5953 + $0x28] sm:$0xff]
    %v5960 = vld [vmem:[%s5953 + $0x30] sm:$0xff]
    %v5961 = vld [vmem:[%s5953 + $0x38] sm:$0xff]
    %v5962 = vld [vmem:[%s5953 + $0x40] sm:$0xff]
    %v5963 = vld [vmem:[%s5953 + $0x48] sm:$0xff]
    %v5964 = vld [vmem:[%s5953 + $0x50] sm:$0xff]
    %v5965 = vld [vmem:[%s5953 + $0x58] sm:$0xff]
    %v5966 = vld [vmem:[%s5953 + $0x60] sm:$0xff]
    %v5967 = vld [vmem:[%s5953 + $0x68] sm:$0xff]
    %v5968 = vld [vmem:[%s5953 + $0x70] sm:$0xff]
    %v5969 = vld [vmem:[%s5953 + $0x78] sm:$0xff]
    %v5970 = vld [vmem:[%s5953 + $0x80] sm:$0xff]
    %v5971 = vld [vmem:[%s5953 + $0x88] sm:$0xff]
    %v5972 = vld [vmem:[%s5953 + $0x90] sm:$0xff]
    %v5973 = vld [vmem:[%s5953 + $0x98] sm:$0xff]
    %v5974 = vld [vmem:[%s5953 + $0xa0] sm:$0xff]
    %v5975 = vld [vmem:[%s5953 + $0xa8] sm:$0xff]
    %v5976 = vld [vmem:[%s5953 + $0xb0] sm:$0xff]
    %v5977 = vld [vmem:[%s5953 + $0xb8] sm:$0xff]
    %v5978 = vld [vmem:[%s5953 + $0xc0] sm:$0xff]
    %v5979 = vld [vmem:[%s5953 + $0xc8] sm:$0xff]
    %v5980 = vld [vmem:[%s5953 + $0xd0] sm:$0xff]
    %v5981 = vld [vmem:[%s5953 + $0xd8] sm:$0xff]
    %v5982 = vld [vmem:[%s5953 + $0xe0] sm:$0xff]
    %v5983 = vld [vmem:[%s5953 + $0xe8] sm:$0xff]
    %v5984 = vld [vmem:[%s5953 + $0xf0] sm:$0xff]
    %v5985 = vld [vmem:[%s5953 + $0xf8] sm:$0xff]
    %v5986 = vld [vmem:[%s5953 + $0x100] sm:$0xff]
    %v5987 = vld [vmem:[%s5953 + $0x108] sm:$0xff]
    %v5988 = vld [vmem:[%s5953 + $0x110] sm:$0xff]
    %v5989 = vld [vmem:[%s5953 + $0x118] sm:$0xff]
    %v5990 = vld [vmem:[%s5953 + $0x120] sm:$0xff]
    %v5991 = vld [vmem:[%s5953 + $0x128] sm:$0xff]
    %v5992 = vld [vmem:[%s5953 + $0x130] sm:$0xff]
    %v5993 = vld [vmem:[%s5953 + $0x138] sm:$0xff]
    %v5994 = vld [vmem:[%s5953 + $0x140] sm:$0xff]
    %v5995 = vld [vmem:[%s5953 + $0x148] sm:$0xff]
    %v5996 = vld [vmem:[%s5953 + $0x150] sm:$0xff]
    %v5997 = vld [vmem:[%s5953 + $0x158] sm:$0xff]
    %v5998 = vld [vmem:[%s5953 + $0x160] sm:$0xff]
    %s5999 = sld [smem:[#allocation5 + $0xb]]
    %v6000 = vstv %s5999
    %6001 = vmatprep.subr.mxu0 0.0
    %6002 = vmatpush1.msra.mxu0 %v5954
    %6003 = vmatprep.subr.mxu0 0.0
    %6004 = vmatpush1.msra.mxu0 %v5955
    %6005 = vmatprep.subr.mxu0 0.0
    %6006 = vmatpush1.msra.mxu0 %v5956
    %6007 = vmatprep.subr.mxu0 0.0
    %6008 = vmatpush1.msra.mxu0 %v5957
    %6009 = vmatprep.subr.mxu0 0.0
    %6010 = vmatpush1.msra.mxu0 %v5958
    %6011 = vmatprep.subr.mxu0 0.0
    %6012 = vmatpush1.msra.mxu0 %v5959
    %6013 = vmatprep.subr.mxu0 0.0
    %6014 = vmatpush1.msra.mxu0 %v5960
    %6015 = vmatprep.subr.mxu0 0.0
    %6016 = vmatpush1.msra.mxu0 %v5961
    %6017 = vmatprep.subr.mxu0 0.0
    %6018 = vmatpush1.msra.mxu0 %v5962
    %6019 = vmatprep.subr.mxu0 0.0
    %6020 = vmatpush1.msra.mxu0 %v5963
    %6021 = vmatprep.subr.mxu0 0.0
    %6022 = vmatpush1.msra.mxu0 %v5964
    %6023 = vmatprep.subr.mxu0 0.0
    %6024 = vmatpush1.msra.mxu0 %v5965
    %6025 = vmatprep.subr.mxu0 0.0
    %6026 = vmatpush1.msra.mxu0 %v5966
    %6027 = vmatprep.subr.mxu0 0.0
    %6028 = vmatpush1.msra.mxu0 %v5967
    %6029 = vmatprep.subr.mxu0 0.0
    %6030 = vmatpush1.msra.mxu0 %v5968
    %6031 = vmatprep.subr.mxu0 0.0
    %6032 = vmatpush1.msra.mxu0 %v5969
    %6033 = vmatprep.subr.mxu0 0.0
    %6034 = vmatpush1.msra.mxu0 %v5970
    %6035 = vmatprep.subr.mxu0 0.0
    %6036 = vmatpush1.msra.mxu0 %v5971
    %6037 = vmatprep.subr.mxu0 0.0
    %6038 = vmatpush1.msra.mxu0 %v5972
    %6039 = vmatprep.subr.mxu0 0.0
    %6040 = vmatpush1.msra.mxu0 %v5973
    %6041 = vmatprep.subr.mxu0 0.0
    %6042 = vmatpush1.msra.mxu0 %v5974
    %6043 = vmatprep.subr.mxu0 0.0
    %6044 = vmatpush1.msra.mxu0 %v5975
    %6045 = vmatprep.subr.mxu0 0.0
    %6046 = vmatpush1.msra.mxu0 %v5976
    %6047 = vmatprep.subr.mxu0 0.0
    %6048 = vmatpush1.msra.mxu0 %v5977
    %6049 = vmatprep.subr.mxu0 0.0
    %6050 = vmatpush1.msra.mxu0 %v5978
    %6051 = vmatprep.subr.mxu0 0.0
    %6052 = vmatpush1.msra.mxu0 %v5979
    %6053 = vmatprep.subr.mxu0 0.0
    %6054 = vmatpush1.msra.mxu0 %v5980
    %6055 = vmatprep.subr.mxu0 0.0
    %6056 = vmatpush1.msra.mxu0 %v5981
    %6057 = vmatprep.subr.mxu0 0.0
    %6058 = vmatpush1.msra.mxu0 %v5982
    %6059 = vmatprep.subr.mxu0 0.0
    %6060 = vmatpush1.msra.mxu0 %v5983
    %6061 = vmatprep.subr.mxu0 0.0
    %6062 = vmatpush1.msra.mxu0 %v5984
    %6063 = vmatprep.subr.mxu0 0.0
    %6064 = vmatpush1.msra.mxu0 %v5985
    %6065 = vmatprep.mubr.f32.mxu0 %v3747
    %6066 = vmatmul.mubr.f32.gmra.mrb[0].mxu0 %v3610
    %v6067 = vpop.f32.mrb[0].mxu0
    %v6068 = vadd.f32 %v6000, %v6067
    %v6069 = vpop.f32.mrb[0].mxu0
    %6070 = vmatprep.mubr.f32.mxu0 %v3748
    %6071 = vmatmul.mubr.f32.gmra.mrb[0].mxu0 %v3611
    %v6072 = vpop.f32.mrb[0].mxu0
    %v6073 = vadd.f32 %v6000, %v6072
    %v6074 = vpop.f32.mrb[0].mxu0
    %6075 = vdwg.mxu0
    %6076 = vmatprep.subr.mxu0 0.0
    %6077 = vmatpush1.msra.mxu0 %v5986
    %6078 = vmatprep.subr.mxu0 0.0
    %6079 = vmatpush1.msra.mxu0 %v5987
    %6080 = vmatprep.subr.mxu0 0.0
    %6081 = vmatpush1.msra.mxu0 %v5988
    %6082 = vmatprep.subr.mxu0 0.0
    %6083 = vmatpush1.msra.mxu0 %v5989
    %6084 = vmatprep.subr.mxu0 0.0
    %6085 = vmatpush1.msra.mxu0 %v5990
    %6086 = vmatprep.subr.mxu0 0.0
    %6087 = vmatpush1.msra.mxu0 %v5991
    %6088 = vmatprep.subr.mxu0 0.0
    %6089 = vmatpush1.msra.mxu0 %v5992
    %6090 = vmatprep.subr.mxu0 0.0
    %6091 = vmatpush1.msra.mxu0 %v5993
    %6092 = vmatprep.subr.mxu0 0.0
    %6093 = vmatpush1.msra.mxu0 %v5994
    %6094 = vmatprep.subr.mxu0 0.0
    %6095 = vmatpush1.msra.mxu0 %v5995
    %6096 = vmatprep.subr.mxu0 0.0
    %6097 = vmatpush1.msra.mxu0 %v5996
    %6098 = vmatprep.subr.mxu0 0.0
    %6099 = vmatpush1.msra.mxu0 %v5997
    %6100 = vmatprep.subr.mxu0 0.0
    %6101 = vmatpush1.msra.mxu0 %v5998
    %6102 = vmatprep.subr.mxu0 0.0
    %6103 = vmatpush1.msra.mxu0 0.0
    %6104 = vmatprep.subr.mxu0 0.0
    %6105 = vmatpush1.msra.mxu0 0.0
    %6106 = vmatprep.subr.mxu0 0.0
    %6107 = vmatpush1.msra.mxu0 0.0
    %6108 = vmatprep.subr.mxu0 0.0
    %6109 = vmatpush1.msra.mxu0 0.0
    %6110 = vmatprep.subr.mxu0 0.0
    %6111 = vmatpush1.msra.mxu0 0.0
    %6112 = vmatprep.subr.mxu0 0.0
    %6113 = vmatpush1.msra.mxu0 0.0
    %6114 = vmatprep.subr.mxu0 0.0
    %6115 = vmatpush1.msra.mxu0 0.0
    %6116 = vmatprep.subr.mxu0 0.0
    %6117 = vmatpush1.msra.mxu0 0.0
    %6118 = vmatprep.subr.mxu0 0.0
    %6119 = vmatpush1.msra.mxu0 0.0
    %6120 = vmatprep.subr.mxu0 0.0
    %6121 = vmatpush1.msra.mxu0 0.0
    %6122 = vmatprep.subr.mxu0 0.0
    %6123 = vmatpush1.msra.mxu0 0.0
    %6124 = vmatprep.subr.mxu0 0.0
    %6125 = vmatpush1.msra.mxu0 0.0
    %6126 = vmatprep.subr.mxu0 0.0
    %6127 = vmatpush1.msra.mxu0 0.0
    %6128 = vmatprep.subr.mxu0 0.0
    %6129 = vmatpush1.msra.mxu0 0.0
    %6130 = vmatprep.subr.mxu0 0.0
    %6131 = vmatpush1.msra.mxu0 0.0
    %6132 = vmatprep.subr.mxu0 0.0
    %6133 = vmatpush1.msra.mxu0 0.0
    %6134 = vmatprep.subr.mxu0 0.0
    %6135 = vmatpush1.msra.mxu0 0.0
    %6136 = vmatprep.subr.mxu0 0.0
    %6137 = vmatpush1.msra.mxu0 0.0
    %6138 = vmatprep.subr.mxu0 0.0
    %6139 = vmatpush1.msra.mxu0 0.0
    %6140 = vmatprep.mubr.f32.mxu0 0.0
    %6141 = vmatmul.mubr.f32.gmra.mrb[0].mxu0 %v3797
    %v6142 = vpop.f32.mrb[0].mxu0
    %v6143 = vadd.f32 %v6068, %v6142
    %v6144 = vpop.f32.mrb[0].mxu0
    %6145 = vmatprep.mubr.f32.mxu0 0.0
    %6146 = vmatmul.mubr.f32.gmra.mrb[0].mxu0 %v3799
    %v6147 = vpop.f32.mrb[0].mxu0
    %v6148 = vadd.f32 %v6073, %v6147
    %v6149 = vpop.f32.mrb[0].mxu0
    %6150 = vdwg.mxu0
    %v6151 = vmax.f32 %v6143, 0.0
    %v6152 = vmax.f32 %v6148, 0.0
    %vm6153 = vcmask 64512
    %v6155 = vsel %vm6153, %v3951, 0
    %v6158 = vsel %vm6153, %v3952, 0
    %6160 = vmatprep.subr.mxu0 0.0
    %6161 = vmatpush1.msra.mxu0 %v1015
    %6162 = vmatprep.subr.mxu0 0.0
    %6163 = vmatpush1.msra.mxu0 0.0
    %6164 = vmatprep.subr.mxu0 0.0
    %6165 = vmatpush1.msra.mxu0 0.0
    %6166 = vmatprep.subr.mxu0 0.0
    %6167 = vmatpush1.msra.mxu0 0.0
    %6168 = vmatprep.subr.mxu0 0.0
    %6169 = vmatpush1.msra.mxu0 0.0
    %6170 = vmatprep.subr.mxu0 0.0
    %6171 = vmatpush1.msra.mxu0 0.0
    %6172 = vmatprep.subr.mxu0 0.0
    %6173 = vmatpush1.msra.mxu0 0.0
    %6174 = vmatprep.subr.mxu0 0.0
    %6175 = vmatpush1.msra.mxu0 0.0
    %6176 = vmatprep.subr.mxu0 0.0
    %6177 = vmatpush1.msra.mxu0 0.0
    %6178 = vmatprep.subr.mxu0 0.0
    %6179 = vmatpush1.msra.mxu0 0.0
    %6180 = vmatprep.subr.mxu0 0.0
    %6181 = vmatpush1.msra.mxu0 0.0
    %6182 = vmatprep.subr.mxu0 0.0
    %6183 = vmatpush1.msra.mxu0 0.0
    %6184 = vmatprep.subr.mxu0 0.0
    %6185 = vmatpush1.msra.mxu0 0.0
    %6186 = vmatprep.subr.mxu0 0.0
    %6187 = vmatpush1.msra.mxu0 0.0
    %6188 = vmatprep.subr.mxu0 0.0
    %6189 = vmatpush1.msra.mxu0 0.0
    %6190 = vmatprep.subr.mxu0 0.0
    %6191 = vmatpush1.msra.mxu0 0.0
    %6192 = vmatprep.subr.mxu0 0.0
    %6193 = vmatpush1.msra.mxu0 0.0
    %6194 = vmatprep.subr.mxu0 0.0
    %6195 = vmatpush1.msra.mxu0 0.0
    %6196 = vmatprep.subr.mxu0 0.0
    %6197 = vmatpush1.msra.mxu0 0.0
    %6198 = vmatprep.subr.mxu0 0.0
    %6199 = vmatpush1.msra.mxu0 0.0
    %6200 = vmatprep.subr.mxu0 0.0
    %6201 = vmatpush1.msra.mxu0 0.0
    %6202 = vmatprep.subr.mxu0 0.0
    %6203 = vmatpush1.msra.mxu0 0.0
    %6204 = vmatprep.subr.mxu0 0.0
    %6205 = vmatpush1.msra.mxu0 0.0
    %6206 = vmatprep.subr.mxu0 0.0
    %6207 = vmatpush1.msra.mxu0 0.0
    %6208 = vmatprep.subr.mxu0 0.0
    %6209 = vmatpush1.msra.mxu0 0.0
    %6210 = vmatprep.subr.mxu0 0.0
    %6211 = vmatpush1.msra.mxu0 0.0
    %6212 = vmatprep.subr.mxu0 0.0
    %6213 = vmatpush1.msra.mxu0 0.0
    %6214 = vmatprep.subr.mxu0 0.0
    %6215 = vmatpush1.msra.mxu0 0.0
    %6216 = vmatprep.subr.mxu0 0.0
    %6217 = vmatpush1.msra.mxu0 0.0
    %6218 = vmatprep.subr.mxu0 0.0
    %6219 = vmatpush1.msra.mxu0 0.0
    %6220 = vmatprep.subr.mxu0 0.0
    %6221 = vmatpush1.msra.mxu0 0.0
    %6222 = vmatprep.subr.mxu0 0.0
    %6223 = vmatpush1.msra.mxu0 0.0
    %6224 = vmatprep.mubr.f32.mxu0 0.0
    %6225 = vmatmul.mubr.f32.gmra.mrb[0].mxu0 %v6155
    %v6226 = vpop.f32.mrb[0].mxu0
    %v6227 = vadd.f32 0.0, %v6226
    %v6228 = vpop.f32.mrb[0].mxu0
    %6229 = vmatprep.mubr.f32.mxu0 0.0
    %6230 = vmatmul.mubr.f32.gmra.mrb[0].mxu0 %v6158
    %v6231 = vpop.f32.mrb[0].mxu0
    %v6232 = vadd.f32 0.0, %v6231
    %v6233 = vpop.f32.mrb[0].mxu0
    %6234 = vdwg.mxu0
    %6235 = vmatprep.subr.mxu0 0.0
    %6236 = vmatpush1.msra.mxu0 %v1025
    %6237 = vmatprep.subr.mxu0 0.0
    %6238 = vmatpush1.msra.mxu0 0.0
    %6239 = vmatprep.subr.mxu0 0.0
    %6240 = vmatpush1.msra.mxu0 0.0
    %6241 = vmatprep.subr.mxu0 0.0
    %6242 = vmatpush1.msra.mxu0 0.0
    %6243 = vmatprep.subr.mxu0 0.0
    %6244 = vmatpush1.msra.mxu0 0.0
    %6245 = vmatprep.subr.mxu0 0.0
    %6246 = vmatpush1.msra.mxu0 0.0
    %6247 = vmatprep.subr.mxu0 0.0
    %6248 = vmatpush1.msra.mxu0 0.0
    %6249 = vmatprep.subr.mxu0 0.0
    %6250 = vmatpush1.msra.mxu0 0.0
    %6251 = vmatprep.subr.mxu0 0.0
    %6252 = vmatpush1.msra.mxu0 0.0
    %6253 = vmatprep.subr.mxu0 0.0
    %6254 = vmatpush1.msra.mxu0 0.0
    %6255 = vmatprep.subr.mxu0 0.0
    %6256 = vmatpush1.msra.mxu0 0.0
    %6257 = vmatprep.subr.mxu0 0.0
    %6258 = vmatpush1.msra.mxu0 0.0
    %6259 = vmatprep.subr.mxu0 0.0
    %6260 = vmatpush1.msra.mxu0 0.0
    %6261 = vmatprep.subr.mxu0 0.0
    %6262 = vmatpush1.msra.mxu0 0.0
    %6263 = vmatprep.subr.mxu0 0.0
    %6264 = vmatpush1.msra.mxu0 0.0
    %6265 = vmatprep.subr.mxu0 0.0
    %6266 = vmatpush1.msra.mxu0 0.0
    %6267 = vmatprep.subr.mxu0 0.0
    %6268 = vmatpush1.msra.mxu0 0.0
    %6269 = vmatprep.subr.mxu0 0.0
    %6270 = vmatpush1.msra.mxu0 0.0
    %6271 = vmatprep.subr.mxu0 0.0
    %6272 = vmatpush1.msra.mxu0 0.0
    %6273 = vmatprep.subr.mxu0 0.0
    %6274 = vmatpush1.msra.mxu0 0.0
    %6275 = vmatprep.subr.mxu0 0.0
    %6276 = vmatpush1.msra.mxu0 0.0
    %6277 = vmatprep.subr.mxu0 0.0
    %6278 = vmatpush1.msra.mxu0 0.0
    %6279 = vmatprep.subr.mxu0 0.0
    %6280 = vmatpush1.msra.mxu0 0.0
    %6281 = vmatprep.subr.mxu0 0.0
    %6282 = vmatpush1.msra.mxu0 0.0
    %6283 = vmatprep.subr.mxu0 0.0
    %6284 = vmatpush1.msra.mxu0 0.0
    %6285 = vmatprep.subr.mxu0 0.0
    %6286 = vmatpush1.msra.mxu0 0.0
    %6287 = vmatprep.subr.mxu0 0.0
    %6288 = vmatpush1.msra.mxu0 0.0
    %6289 = vmatprep.subr.mxu0 0.0
    %6290 = vmatpush1.msra.mxu0 0.0
    %6291 = vmatprep.subr.mxu0 0.0
    %6292 = vmatpush1.msra.mxu0 0.0
    %6293 = vmatprep.subr.mxu0 0.0
    %6294 = vmatpush1.msra.mxu0 0.0
    %6295 = vmatprep.subr.mxu0 0.0
    %6296 = vmatpush1.msra.mxu0 0.0
    %6297 = vmatprep.subr.mxu0 0.0
    %6298 = vmatpush1.msra.mxu0 0.0
    %6299 = vmatprep.mubr.f32.mxu0 0.0
    %6300 = vmatmul.mubr.f32.gmra.mrb[0].mxu0 %v6155
    %v6301 = vpop.f32.mrb[0].mxu0
    %v6302 = vadd.f32 0.0, %v6301
    %v6303 = vpop.f32.mrb[0].mxu0
    %6304 = vmatprep.mubr.f32.mxu0 0.0
    %6305 = vmatmul.mubr.f32.gmra.mrb[0].mxu0 %v6158
    %v6306 = vpop.f32.mrb[0].mxu0
    %v6307 = vadd.f32 0.0, %v6306
    %v6308 = vpop.f32.mrb[0].mxu0
    %6309 = vdwg.mxu0
    %v6310 = vmax.f32 %v6227, %v6302
    %v6311 = vmax.f32 %v6232, %v6307
    %v6312 = vsel %vm3615, %v1037, 0
    %6314 = vmatprep.subr.mxu0 0.0
    %6315 = vmatpush1.msra.mxu0 %v6310
    %6316 = vmatprep.subr.mxu0 0.0
    %6317 = vmatpush1.msra.mxu0 %v6311
    %6318 = vmatprep.subr.mxu0 0.0
    %6319 = vmatpush1.msra.mxu0 0.0
    %6320 = vmatprep.subr.mxu0 0.0
    %6321 = vmatpush1.msra.mxu0 0.0
    %6322 = vmatprep.subr.mxu0 0.0
    %6323 = vmatpush1.msra.mxu0 0.0
    %6324 = vmatprep.subr.mxu0 0.0
    %6325 = vmatpush1.msra.mxu0 0.0
    %6326 = vmatprep.subr.mxu0 0.0
    %6327 = vmatpush1.msra.mxu0 0.0
    %6328 = vmatprep.subr.mxu0 0.0
    %6329 = vmatpush1.msra.mxu0 0.0
    %6330 = vmatprep.subr.mxu0 0.0
    %6331 = vmatpush1.msra.mxu0 0.0
    %6332 = vmatprep.subr.mxu0 0.0
    %6333 = vmatpush1.msra.mxu0 0.0
    %6334 = vmatprep.subr.mxu0 0.0
    %6335 = vmatpush1.msra.mxu0 0.0
    %6336 = vmatprep.subr.mxu0 0.0
    %6337 = vmatpush1.msra.mxu0 0.0
    %6338 = vmatprep.subr.mxu0 0.0
    %6339 = vmatpush1.msra.mxu0 0.0
    %6340 = vmatprep.subr.mxu0 0.0
    %6341 = vmatpush1.msra.mxu0 0.0
    %6342 = vmatprep.subr.mxu0 0.0
    %6343 = vmatpush1.msra.mxu0 0.0
    %6344 = vmatprep.subr.mxu0 0.0
    %6345 = vmatpush1.msra.mxu0 0.0
    %6346 = vmatprep.subr.mxu0 0.0
    %6347 = vmatpush1.msra.mxu0 0.0
    %6348 = vmatprep.subr.mxu0 0.0
    %6349 = vmatpush1.msra.mxu0 0.0
    %6350 = vmatprep.subr.mxu0 0.0
    %6351 = vmatpush1.msra.mxu0 0.0
    %6352 = vmatprep.subr.mxu0 0.0
    %6353 = vmatpush1.msra.mxu0 0.0
    %6354 = vmatprep.subr.mxu0 0.0
    %6355 = vmatpush1.msra.mxu0 0.0
    %6356 = vmatprep.subr.mxu0 0.0
    %6357 = vmatpush1.msra.mxu0 0.0
    %6358 = vmatprep.subr.mxu0 0.0
    %6359 = vmatpush1.msra.mxu0 0.0
    %6360 = vmatprep.subr.mxu0 0.0
    %6361 = vmatpush1.msra.mxu0 0.0
    %6362 = vmatprep.subr.mxu0 0.0
    %6363 = vmatpush1.msra.mxu0 0.0
    %6364 = vmatprep.subr.mxu0 0.0
    %6365 = vmatpush1.msra.mxu0 0.0
    %6366 = vmatprep.subr.mxu0 0.0
    %6367 = vmatpush1.msra.mxu0 0.0
    %6368 = vmatprep.subr.mxu0 0.0
    %6369 = vmatpush1.msra.mxu0 0.0
    %6370 = vmatprep.subr.mxu0 0.0
    %6371 = vmatpush1.msra.mxu0 0.0
    %6372 = vmatprep.subr.mxu0 0.0
    %6373 = vmatpush1.msra.mxu0 0.0
    %6374 = vmatprep.subr.mxu0 0.0
    %6375 = vmatpush1.msra.mxu0 0.0
    %6376 = vmatprep.subr.mxu0 0.0
    %6377 = vmatpush1.msra.mxu0 0.0
    %6378 = vmatprep.mubr.f32.mxu0 0.0
    %6379 = vmatmul.mubr.f32.gmra.mrb[0].mxu0 %v6312
    %v6380 = vpop.f32.mrb[0].mxu0
    %v6381 = vadd.f32 0.0, %v6380
    %v6382 = vpop.f32.mrb[0].mxu0
    %6383 = vdwg.mxu0
    %v6384 = vsel %vm3615, %v1049, 0
    %6386 = vmatprep.subr.mxu0 0.0
    %6387 = vmatpush1.msra.mxu0 %v6310
    %6388 = vmatprep.subr.mxu0 0.0
    %6389 = vmatpush1.msra.mxu0 %v6311
    %6390 = vmatprep.subr.mxu0 0.0
    %6391 = vmatpush1.msra.mxu0 0.0
    %6392 = vmatprep.subr.mxu0 0.0
    %6393 = vmatpush1.msra.mxu0 0.0
    %6394 = vmatprep.subr.mxu0 0.0
    %6395 = vmatpush1.msra.mxu0 0.0
    %6396 = vmatprep.subr.mxu0 0.0
    %6397 = vmatpush1.msra.mxu0 0.0
    %6398 = vmatprep.subr.mxu0 0.0
    %6399 = vmatpush1.msra.mxu0 0.0
    %6400 = vmatprep.subr.mxu0 0.0
    %6401 = vmatpush1.msra.mxu0 0.0
    %6402 = vmatprep.subr.mxu0 0.0
    %6403 = vmatpush1.msra.mxu0 0.0
    %6404 = vmatprep.subr.mxu0 0.0
    %6405 = vmatpush1.msra.mxu0 0.0
    %6406 = vmatprep.subr.mxu0 0.0
    %6407 = vmatpush1.msra.mxu0 0.0
    %6408 = vmatprep.subr.mxu0 0.0
    %6409 = vmatpush1.msra.mxu0 0.0
    %6410 = vmatprep.subr.mxu0 0.0
    %6411 = vmatpush1.msra.mxu0 0.0
    %6412 = vmatprep.subr.mxu0 0.0
    %6413 = vmatpush1.msra.mxu0 0.0
    %6414 = vmatprep.subr.mxu0 0.0
    %6415 = vmatpush1.msra.mxu0 0.0
    %6416 = vmatprep.subr.mxu0 0.0
    %6417 = vmatpush1.msra.mxu0 0.0
    %6418 = vmatprep.subr.mxu0 0.0
    %6419 = vmatpush1.msra.mxu0 0.0
    %6420 = vmatprep.subr.mxu0 0.0
    %6421 = vmatpush1.msra.mxu0 0.0
    %6422 = vmatprep.subr.mxu0 0.0
    %6423 = vmatpush1.msra.mxu0 0.0
    %6424 = vmatprep.subr.mxu0 0.0
    %6425 = vmatpush1.msra.mxu0 0.0
    %6426 = vmatprep.subr.mxu0 0.0
    %6427 = vmatpush1.msra.mxu0 0.0
    %6428 = vmatprep.subr.mxu0 0.0
    %6429 = vmatpush1.msra.mxu0 0.0
    %6430 = vmatprep.subr.mxu0 0.0
    %6431 = vmatpush1.msra.mxu0 0.0
    %6432 = vmatprep.subr.mxu0 0.0
    %6433 = vmatpush1.msra.mxu0 0.0
    %6434 = vmatprep.subr.mxu0 0.0
    %6435 = vmatpush1.msra.mxu0 0.0
    %6436 = vmatprep.subr.mxu0 0.0
    %6437 = vmatpush1.msra.mxu0 0.0
    %6438 = vmatprep.subr.mxu0 0.0
    %6439 = vmatpush1.msra.mxu0 0.0
    %6440 = vmatprep.subr.mxu0 0.0
    %6441 = vmatpush1.msra.mxu0 0.0
    %6442 = vmatprep.subr.mxu0 0.0
    %6443 = vmatpush1.msra.mxu0 0.0
    %6444 = vmatprep.subr.mxu0 0.0
    %6445 = vmatpush1.msra.mxu0 0.0
    %6446 = vmatprep.subr.mxu0 0.0
    %6447 = vmatpush1.msra.mxu0 0.0
    %6448 = vmatprep.subr.mxu0 0.0
    %6449 = vmatpush1.msra.mxu0 0.0
    %6450 = vmatprep.mubr.f32.mxu0 0.0
    %6451 = vmatmul.mubr.f32.gmra.mrb[0].mxu0 %v6384
    %v6452 = vpop.f32.mrb[0].mxu0
    %v6453 = vadd.f32 0.0, %v6452
    %v6454 = vpop.f32.mrb[0].mxu0
    %6455 = vdwg.mxu0
    %v6456 = vmax.f32 %v6381, %v6453
    %v6458 = vsel %vm6153, %v4151, 0
    %v6461 = vsel %vm6153, %v4152, 0
    %6463 = vmatprep.subr.mxu0 0.0
    %6464 = vmatpush1.msra.mxu0 %v1015
    %6465 = vmatprep.subr.mxu0 0.0
    %6466 = vmatpush1.msra.mxu0 0.0
    %6467 = vmatprep.subr.mxu0 0.0
    %6468 = vmatpush1.msra.mxu0 0.0
    %6469 = vmatprep.subr.mxu0 0.0
    %6470 = vmatpush1.msra.mxu0 0.0
    %6471 = vmatprep.subr.mxu0 0.0
    %6472 = vmatpush1.msra.mxu0 0.0
    %6473 = vmatprep.subr.mxu0 0.0
    %6474 = vmatpush1.msra.mxu0 0.0
    %6475 = vmatprep.subr.mxu0 0.0
    %6476 = vmatpush1.msra.mxu0 0.0
    %6477 = vmatprep.subr.mxu0 0.0
    %6478 = vmatpush1.msra.mxu0 0.0
    %6479 = vmatprep.subr.mxu0 0.0
    %6480 = vmatpush1.msra.mxu0 0.0
    %6481 = vmatprep.subr.mxu0 0.0
    %6482 = vmatpush1.msra.mxu0 0.0
    %6483 = vmatprep.subr.mxu0 0.0
    %6484 = vmatpush1.msra.mxu0 0.0
    %6485 = vmatprep.subr.mxu0 0.0
    %6486 = vmatpush1.msra.mxu0 0.0
    %6487 = vmatprep.subr.mxu0 0.0
    %6488 = vmatpush1.msra.mxu0 0.0
    %6489 = vmatprep.subr.mxu0 0.0
    %6490 = vmatpush1.msra.mxu0 0.0
    %6491 = vmatprep.subr.mxu0 0.0
    %6492 = vmatpush1.msra.mxu0 0.0
    %6493 = vmatprep.subr.mxu0 0.0
    %6494 = vmatpush1.msra.mxu0 0.0
    %6495 = vmatprep.subr.mxu0 0.0
    %6496 = vmatpush1.msra.mxu0 0.0
    %6497 = vmatprep.subr.mxu0 0.0
    %6498 = vmatpush1.msra.mxu0 0.0
    %6499 = vmatprep.subr.mxu0 0.0
    %6500 = vmatpush1.msra.mxu0 0.0
    %6501 = vmatprep.subr.mxu0 0.0
    %6502 = vmatpush1.msra.mxu0 0.0
    %6503 = vmatprep.subr.mxu0 0.0
    %6504 = vmatpush1.msra.mxu0 0.0
    %6505 = vmatprep.subr.mxu0 0.0
    %6506 = vmatpush1.msra.mxu0 0.0
    %6507 = vmatprep.subr.mxu0 0.0
    %6508 = vmatpush1.msra.mxu0 0.0
    %6509 = vmatprep.subr.mxu0 0.0
    %6510 = vmatpush1.msra.mxu0 0.0
    %6511 = vmatprep.subr.mxu0 0.0
    %6512 = vmatpush1.msra.mxu0 0.0
    %6513 = vmatprep.subr.mxu0 0.0
    %6514 = vmatpush1.msra.mxu0 0.0
    %6515 = vmatprep.subr.mxu0 0.0
    %6516 = vmatpush1.msra.mxu0 0.0
    %6517 = vmatprep.subr.mxu0 0.0
    %6518 = vmatpush1.msra.mxu0 0.0
    %6519 = vmatprep.subr.mxu0 0.0
    %6520 = vmatpush1.msra.mxu0 0.0
    %6521 = vmatprep.subr.mxu0 0.0
    %6522 = vmatpush1.msra.mxu0 0.0
    %6523 = vmatprep.subr.mxu0 0.0
    %6524 = vmatpush1.msra.mxu0 0.0
    %6525 = vmatprep.subr.mxu0 0.0
    %6526 = vmatpush1.msra.mxu0 0.0
    %6527 = vmatprep.mubr.f32.mxu0 0.0
    %6528 = vmatmul.mubr.f32.gmra.mrb[0].mxu0 %v6458
    %v6529 = vpop.f32.mrb[0].mxu0
    %v6530 = vadd.f32 0.0, %v6529
    %v6531 = vpop.f32.mrb[0].mxu0
    %6532 = vmatprep.mubr.f32.mxu0 0.0
    %6533 = vmatmul.mubr.f32.gmra.mrb[0].mxu0 %v6461
    %v6534 = vpop.f32.mrb[0].mxu0
    %v6535 = vadd.f32 0.0, %v6534
    %v6536 = vpop.f32.mrb[0].mxu0
    %6537 = vdwg.mxu0
    %6538 = vmatprep.subr.mxu0 0.0
    %6539 = vmatpush1.msra.mxu0 %v1025
    %6540 = vmatprep.subr.mxu0 0.0
    %6541 = vmatpush1.msra.mxu0 0.0
    %6542 = vmatprep.subr.mxu0 0.0
    %6543 = vmatpush1.msra.mxu0 0.0
    %6544 = vmatprep.subr.mxu0 0.0
    %6545 = vmatpush1.msra.mxu0 0.0
    %6546 = vmatprep.subr.mxu0 0.0
    %6547 = vmatpush1.msra.mxu0 0.0
    %6548 = vmatprep.subr.mxu0 0.0
    %6549 = vmatpush1.msra.mxu0 0.0
    %6550 = vmatprep.subr.mxu0 0.0
    %6551 = vmatpush1.msra.mxu0 0.0
    %6552 = vmatprep.subr.mxu0 0.0
    %6553 = vmatpush1.msra.mxu0 0.0
    %6554 = vmatprep.subr.mxu0 0.0
    %6555 = vmatpush1.msra.mxu0 0.0
    %6556 = vmatprep.subr.mxu0 0.0
    %6557 = vmatpush1.msra.mxu0 0.0
    %6558 = vmatprep.subr.mxu0 0.0
    %6559 = vmatpush1.msra.mxu0 0.0
    %6560 = vmatprep.subr.mxu0 0.0
    %6561 = vmatpush1.msra.mxu0 0.0
    %6562 = vmatprep.subr.mxu0 0.0
    %6563 = vmatpush1.msra.mxu0 0.0
    %6564 = vmatprep.subr.mxu0 0.0
    %6565 = vmatpush1.msra.mxu0 0.0
    %6566 = vmatprep.subr.mxu0 0.0
    %6567 = vmatpush1.msra.mxu0 0.0
    %6568 = vmatprep.subr.mxu0 0.0
    %6569 = vmatpush1.msra.mxu0 0.0
    %6570 = vmatprep.subr.mxu0 0.0
    %6571 = vmatpush1.msra.mxu0 0.0
    %6572 = vmatprep.subr.mxu0 0.0
    %6573 = vmatpush1.msra.mxu0 0.0
    %6574 = vmatprep.subr.mxu0 0.0
    %6575 = vmatpush1.msra.mxu0 0.0
    %6576 = vmatprep.subr.mxu0 0.0
    %6577 = vmatpush1.msra.mxu0 0.0
    %6578 = vmatprep.subr.mxu0 0.0
    %6579 = vmatpush1.msra.mxu0 0.0
    %6580 = vmatprep.subr.mxu0 0.0
    %6581 = vmatpush1.msra.mxu0 0.0
    %6582 = vmatprep.subr.mxu0 0.0
    %6583 = vmatpush1.msra.mxu0 0.0
    %6584 = vmatprep.subr.mxu0 0.0
    %6585 = vmatpush1.msra.mxu0 0.0
    %6586 = vmatprep.subr.mxu0 0.0
    %6587 = vmatpush1.msra.mxu0 0.0
    %6588 = vmatprep.subr.mxu0 0.0
    %6589 = vmatpush1.msra.mxu0 0.0
    %6590 = vmatprep.subr.mxu0 0.0
    %6591 = vmatpush1.msra.mxu0 0.0
    %6592 = vmatprep.subr.mxu0 0.0
    %6593 = vmatpush1.msra.mxu0 0.0
    %6594 = vmatprep.subr.mxu0 0.0
    %6595 = vmatpush1.msra.mxu0 0.0
    %6596 = vmatprep.subr.mxu0 0.0
    %6597 = vmatpush1.msra.mxu0 0.0
    %6598 = vmatprep.subr.mxu0 0.0
    %6599 = vmatpush1.msra.mxu0 0.0
    %6600 = vmatprep.subr.mxu0 0.0
    %6601 = vmatpush1.msra.mxu0 0.0
    %6602 = vmatprep.mubr.f32.mxu0 0.0
    %6603 = vmatmul.mubr.f32.gmra.mrb[0].mxu0 %v6458
    %v6604 = vpop.f32.mrb[0].mxu0
    %v6605 = vadd.f32 0.0, %v6604
    %v6606 = vpop.f32.mrb[0].mxu0
    %6607 = vmatprep.mubr.f32.mxu0 0.0
    %6608 = vmatmul.mubr.f32.gmra.mrb[0].mxu0 %v6461
    %v6609 = vpop.f32.mrb[0].mxu0
    %v6610 = vadd.f32 0.0, %v6609
    %v6611 = vpop.f32.mrb[0].mxu0
    %6612 = vdwg.mxu0
    %v6613 = vmax.f32 %v6530, %v6605
    %v6614 = vmax.f32 %v6535, %v6610
    %6615 = vmatprep.subr.mxu0 0.0
    %6616 = vmatpush1.msra.mxu0 %v6613
    %6617 = vmatprep.subr.mxu0 0.0
    %6618 = vmatpush1.msra.mxu0 %v6614
    %6619 = vmatprep.subr.mxu0 0.0
    %6620 = vmatpush1.msra.mxu0 0.0
    %6621 = vmatprep.subr.mxu0 0.0
    %6622 = vmatpush1.msra.mxu0 0.0
    %6623 = vmatprep.subr.mxu0 0.0
    %6624 = vmatpush1.msra.mxu0 0.0
    %6625 = vmatprep.subr.mxu0 0.0
    %6626 = vmatpush1.msra.mxu0 0.0
    %6627 = vmatprep.subr.mxu0 0.0
    %6628 = vmatpush1.msra.mxu0 0.0
    %6629 = vmatprep.subr.mxu0 0.0
    %6630 = vmatpush1.msra.mxu0 0.0
    %6631 = vmatprep.subr.mxu0 0.0
    %6632 = vmatpush1.msra.mxu0 0.0
    %6633 = vmatprep.subr.mxu0 0.0
    %6634 = vmatpush1.msra.mxu0 0.0
    %6635 = vmatprep.subr.mxu0 0.0
    %6636 = vmatpush1.msra.mxu0 0.0
    %6637 = vmatprep.subr.mxu0 0.0
    %6638 = vmatpush1.msra.mxu0 0.0
    %6639 = vmatprep.subr.mxu0 0.0
    %6640 = vmatpush1.msra.mxu0 0.0
    %6641 = vmatprep.subr.mxu0 0.0
    %6642 = vmatpush1.msra.mxu0 0.0
    %6643 = vmatprep.subr.mxu0 0.0
    %6644 = vmatpush1.msra.mxu0 0.0
    %6645 = vmatprep.subr.mxu0 0.0
    %6646 = vmatpush1.msra.mxu0 0.0
    %6647 = vmatprep.subr.mxu0 0.0
    %6648 = vmatpush1.msra.mxu0 0.0
    %6649 = vmatprep.subr.mxu0 0.0
    %6650 = vmatpush1.msra.mxu0 0.0
    %6651 = vmatprep.subr.mxu0 0.0
    %6652 = vmatpush1.msra.mxu0 0.0
    %6653 = vmatprep.subr.mxu0 0.0
    %6654 = vmatpush1.msra.mxu0 0.0
    %6655 = vmatprep.subr.mxu0 0.0
    %6656 = vmatpush1.msra.mxu0 0.0
    %6657 = vmatprep.subr.mxu0 0.0
    %6658 = vmatpush1.msra.mxu0 0.0
    %6659 = vmatprep.subr.mxu0 0.0
    %6660 = vmatpush1.msra.mxu0 0.0
    %6661 = vmatprep.subr.mxu0 0.0
    %6662 = vmatpush1.msra.mxu0 0.0
    %6663 = vmatprep.subr.mxu0 0.0
    %6664 = vmatpush1.msra.mxu0 0.0
    %6665 = vmatprep.subr.mxu0 0.0
    %6666 = vmatpush1.msra.mxu0 0.0
    %6667 = vmatprep.subr.mxu0 0.0
    %6668 = vmatpush1.msra.mxu0 0.0
    %6669 = vmatprep.subr.mxu0 0.0
    %6670 = vmatpush1.msra.mxu0 0.0
    %6671 = vmatprep.subr.mxu0 0.0
    %6672 = vmatpush1.msra.mxu0 0.0
    %6673 = vmatprep.subr.mxu0 0.0
    %6674 = vmatpush1.msra.mxu0 0.0
    %6675 = vmatprep.subr.mxu0 0.0
    %6676 = vmatpush1.msra.mxu0 0.0
    %6677 = vmatprep.subr.mxu0 0.0
    %6678 = vmatpush1.msra.mxu0 0.0
    %6679 = vmatprep.mubr.f32.mxu0 0.0
    %6680 = vmatmul.mubr.f32.gmra.mrb[0].mxu0 %v6312
    %v6681 = vpop.f32.mrb[0].mxu0
    %v6682 = vadd.f32 0.0, %v6681
    %v6683 = vpop.f32.mrb[0].mxu0
    %6684 = vdwg.mxu0
    %6685 = vmatprep.subr.mxu0 0.0
    %6686 = vmatpush1.msra.mxu0 %v6613
    %6687 = vmatprep.subr.mxu0 0.0
    %6688 = vmatpush1.msra.mxu0 %v6614
    %6689 = vmatprep.subr.mxu0 0.0
    %6690 = vmatpush1.msra.mxu0 0.0
    %6691 = vmatprep.subr.mxu0 0.0
    %6692 = vmatpush1.msra.mxu0 0.0
    %6693 = vmatprep.subr.mxu0 0.0
    %6694 = vmatpush1.msra.mxu0 0.0
    %6695 = vmatprep.subr.mxu0 0.0
    %6696 = vmatpush1.msra.mxu0 0.0
    %6697 = vmatprep.subr.mxu0 0.0
    %6698 = vmatpush1.msra.mxu0 0.0
    %6699 = vmatprep.subr.mxu0 0.0
    %6700 = vmatpush1.msra.mxu0 0.0
    %6701 = vmatprep.subr.mxu0 0.0
    %6702 = vmatpush1.msra.mxu0 0.0
    %6703 = vmatprep.subr.mxu0 0.0
    %6704 = vmatpush1.msra.mxu0 0.0
    %6705 = vmatprep.subr.mxu0 0.0
    %6706 = vmatpush1.msra.mxu0 0.0
    %6707 = vmatprep.subr.mxu0 0.0
    %6708 = vmatpush1.msra.mxu0 0.0
    %6709 = vmatprep.subr.mxu0 0.0
    %6710 = vmatpush1.msra.mxu0 0.0
    %6711 = vmatprep.subr.mxu0 0.0
    %6712 = vmatpush1.msra.mxu0 0.0
    %6713 = vmatprep.subr.mxu0 0.0
    %6714 = vmatpush1.msra.mxu0 0.0
    %6715 = vmatprep.subr.mxu0 0.0
    %6716 = vmatpush1.msra.mxu0 0.0
    %6717 = vmatprep.subr.mxu0 0.0
    %6718 = vmatpush1.msra.mxu0 0.0
    %6719 = vmatprep.subr.mxu0 0.0
    %6720 = vmatpush1.msra.mxu0 0.0
    %6721 = vmatprep.subr.mxu0 0.0
    %6722 = vmatpush1.msra.mxu0 0.0
    %6723 = vmatprep.subr.mxu0 0.0
    %6724 = vmatpush1.msra.mxu0 0.0
    %6725 = vmatprep.subr.mxu0 0.0
    %6726 = vmatpush1.msra.mxu0 0.0
    %6727 = vmatprep.subr.mxu0 0.0
    %6728 = vmatpush1.msra.mxu0 0.0
    %6729 = vmatprep.subr.mxu0 0.0
    %6730 = vmatpush1.msra.mxu0 0.0
    %6731 = vmatprep.subr.mxu0 0.0
    %6732 = vmatpush1.msra.mxu0 0.0
    %6733 = vmatprep.subr.mxu0 0.0
    %6734 = vmatpush1.msra.mxu0 0.0
    %6735 = vmatprep.subr.mxu0 0.0
    %6736 = vmatpush1.msra.mxu0 0.0
    %6737 = vmatprep.subr.mxu0 0.0
    %6738 = vmatpush1.msra.mxu0 0.0
    %6739 = vmatprep.subr.mxu0 0.0
    %6740 = vmatpush1.msra.mxu0 0.0
    %6741 = vmatprep.subr.mxu0 0.0
    %6742 = vmatpush1.msra.mxu0 0.0
    %6743 = vmatprep.subr.mxu0 0.0
    %6744 = vmatpush1.msra.mxu0 0.0
    %6745 = vmatprep.subr.mxu0 0.0
    %6746 = vmatpush1.msra.mxu0 0.0
    %6747 = vmatprep.subr.mxu0 0.0
    %6748 = vmatpush1.msra.mxu0 0.0
    %6749 = vmatprep.mubr.f32.mxu0 0.0
    %6750 = vmatmul.mubr.f32.gmra.mrb[0].mxu0 %v6384
    %v6751 = vpop.f32.mrb[0].mxu0
    %v6752 = vadd.f32 0.0, %v6751
    %v6753 = vpop.f32.mrb[0].mxu0
    %6754 = vdwg.mxu0
    %v6755 = vmax.f32 %v6682, %v6752
    %v6757 = vsel %vm6153, %v4351, 0
    %v6760 = vsel %vm6153, %v4352, 0
    %6762 = vmatprep.subr.mxu0 0.0
    %6763 = vmatpush1.msra.mxu0 %v1015
    %6764 = vmatprep.subr.mxu0 0.0
    %6765 = vmatpush1.msra.mxu0 0.0
    %6766 = vmatprep.subr.mxu0 0.0
    %6767 = vmatpush1.msra.mxu0 0.0
    %6768 = vmatprep.subr.mxu0 0.0
    %6769 = vmatpush1.msra.mxu0 0.0
    %6770 = vmatprep.subr.mxu0 0.0
    %6771 = vmatpush1.msra.mxu0 0.0
    %6772 = vmatprep.subr.mxu0 0.0
    %6773 = vmatpush1.msra.mxu0 0.0
    %6774 = vmatprep.subr.mxu0 0.0
    %6775 = vmatpush1.msra.mxu0 0.0
    %6776 = vmatprep.subr.mxu0 0.0
    %6777 = vmatpush1.msra.mxu0 0.0
    %6778 = vmatprep.subr.mxu0 0.0
    %6779 = vmatpush1.msra.mxu0 0.0
    %6780 = vmatprep.subr.mxu0 0.0
    %6781 = vmatpush1.msra.mxu0 0.0
    %6782 = vmatprep.subr.mxu0 0.0
    %6783 = vmatpush1.msra.mxu0 0.0
    %6784 = vmatprep.subr.mxu0 0.0
    %6785 = vmatpush1.msra.mxu0 0.0
    %6786 = vmatprep.subr.mxu0 0.0
    %6787 = vmatpush1.msra.mxu0 0.0
    %6788 = vmatprep.subr.mxu0 0.0
    %6789 = vmatpush1.msra.mxu0 0.0
    %6790 = vmatprep.subr.mxu0 0.0
    %6791 = vmatpush1.msra.mxu0 0.0
    %6792 = vmatprep.subr.mxu0 0.0
    %6793 = vmatpush1.msra.mxu0 0.0
    %6794 = vmatprep.subr.mxu0 0.0
    %6795 = vmatpush1.msra.mxu0 0.0
    %6796 = vmatprep.subr.mxu0 0.0
    %6797 = vmatpush1.msra.mxu0 0.0
    %6798 = vmatprep.subr.mxu0 0.0
    %6799 = vmatpush1.msra.mxu0 0.0
    %6800 = vmatprep.subr.mxu0 0.0
    %6801 = vmatpush1.msra.mxu0 0.0
    %6802 = vmatprep.subr.mxu0 0.0
    %6803 = vmatpush1.msra.mxu0 0.0
    %6804 = vmatprep.subr.mxu0 0.0
    %6805 = vmatpush1.msra.mxu0 0.0
    %6806 = vmatprep.subr.mxu0 0.0
    %6807 = vmatpush1.msra.mxu0 0.0
    %6808 = vmatprep.subr.mxu0 0.0
    %6809 = vmatpush1.msra.mxu0 0.0
    %6810 = vmatprep.subr.mxu0 0.0
    %6811 = vmatpush1.msra.mxu0 0.0
    %6812 = vmatprep.subr.mxu0 0.0
    %6813 = vmatpush1.msra.mxu0 0.0
    %6814 = vmatprep.subr.mxu0 0.0
    %6815 = vmatpush1.msra.mxu0 0.0
    %6816 = vmatprep.subr.mxu0 0.0
    %6817 = vmatpush1.msra.mxu0 0.0
    %6818 = vmatprep.subr.mxu0 0.0
    %6819 = vmatpush1.msra.mxu0 0.0
    %6820 = vmatprep.subr.mxu0 0.0
    %6821 = vmatpush1.msra.mxu0 0.0
    %6822 = vmatprep.subr.mxu0 0.0
    %6823 = vmatpush1.msra.mxu0 0.0
    %6824 = vmatprep.subr.mxu0 0.0
    %6825 = vmatpush1.msra.mxu0 0.0
    %6826 = vmatprep.mubr.f32.mxu0 0.0
    %6827 = vmatmul.mubr.f32.gmra.mrb[0].mxu0 %v6757
    %v6828 = vpop.f32.mrb[0].mxu0
    %v6829 = vadd.f32 0.0, %v6828
    %v6830 = vpop.f32.mrb[0].mxu0
    %6831 = vmatprep.mubr.f32.mxu0 0.0
    %6832 = vmatmul.mubr.f32.gmra.mrb[0].mxu0 %v6760
    %v6833 = vpop.f32.mrb[0].mxu0
    %v6834 = vadd.f32 0.0, %v6833
    %v6835 = vpop.f32.mrb[0].mxu0
    %6836 = vdwg.mxu0
    %6837 = vmatprep.subr.mxu0 0.0
    %6838 = vmatpush1.msra.mxu0 %v1025
    %6839 = vmatprep.subr.mxu0 0.0
    %6840 = vmatpush1.msra.mxu0 0.0
    %6841 = vmatprep.subr.mxu0 0.0
    %6842 = vmatpush1.msra.mxu0 0.0
    %6843 = vmatprep.subr.mxu0 0.0
    %6844 = vmatpush1.msra.mxu0 0.0
    %6845 = vmatprep.subr.mxu0 0.0
    %6846 = vmatpush1.msra.mxu0 0.0
    %6847 = vmatprep.subr.mxu0 0.0
    %6848 = vmatpush1.msra.mxu0 0.0
    %6849 = vmatprep.subr.mxu0 0.0
    %6850 = vmatpush1.msra.mxu0 0.0
    %6851 = vmatprep.subr.mxu0 0.0
    %6852 = vmatpush1.msra.mxu0 0.0
    %6853 = vmatprep.subr.mxu0 0.0
    %6854 = vmatpush1.msra.mxu0 0.0
    %6855 = vmatprep.subr.mxu0 0.0
    %6856 = vmatpush1.msra.mxu0 0.0
    %6857 = vmatprep.subr.mxu0 0.0
    %6858 = vmatpush1.msra.mxu0 0.0
    %6859 = vmatprep.subr.mxu0 0.0
    %6860 = vmatpush1.msra.mxu0 0.0
    %6861 = vmatprep.subr.mxu0 0.0
    %6862 = vmatpush1.msra.mxu0 0.0
    %6863 = vmatprep.subr.mxu0 0.0
    %6864 = vmatpush1.msra.mxu0 0.0
    %6865 = vmatprep.subr.mxu0 0.0
    %6866 = vmatpush1.msra.mxu0 0.0
    %6867 = vmatprep.subr.mxu0 0.0
    %6868 = vmatpush1.msra.mxu0 0.0
    %6869 = vmatprep.subr.mxu0 0.0
    %6870 = vmatpush1.msra.mxu0 0.0
    %6871 = vmatprep.subr.mxu0 0.0
    %6872 = vmatpush1.msra.mxu0 0.0
    %6873 = vmatprep.subr.mxu0 0.0
    %6874 = vmatpush1.msra.mxu0 0.0
    %6875 = vmatprep.subr.mxu0 0.0
    %6876 = vmatpush1.msra.mxu0 0.0
    %6877 = vmatprep.subr.mxu0 0.0
    %6878 = vmatpush1.msra.mxu0 0.0
    %6879 = vmatprep.subr.mxu0 0.0
    %6880 = vmatpush1.msra.mxu0 0.0
    %6881 = vmatprep.subr.mxu0 0.0
    %6882 = vmatpush1.msra.mxu0 0.0
    %6883 = vmatprep.subr.mxu0 0.0
    %6884 = vmatpush1.msra.mxu0 0.0
    %6885 = vmatprep.subr.mxu0 0.0
    %6886 = vmatpush1.msra.mxu0 0.0
    %6887 = vmatprep.subr.mxu0 0.0
    %6888 = vmatpush1.msra.mxu0 0.0
    %6889 = vmatprep.subr.mxu0 0.0
    %6890 = vmatpush1.msra.mxu0 0.0
    %6891 = vmatprep.subr.mxu0 0.0
    %6892 = vmatpush1.msra.mxu0 0.0
    %6893 = vmatprep.subr.mxu0 0.0
    %6894 = vmatpush1.msra.mxu0 0.0
    %6895 = vmatprep.subr.mxu0 0.0
    %6896 = vmatpush1.msra.mxu0 0.0
    %6897 = vmatprep.subr.mxu0 0.0
    %6898 = vmatpush1.msra.mxu0 0.0
    %6899 = vmatprep.subr.mxu0 0.0
    %6900 = vmatpush1.msra.mxu0 0.0
    %6901 = vmatprep.mubr.f32.mxu0 0.0
    %6902 = vmatmul.mubr.f32.gmra.mrb[0].mxu0 %v6757
    %v6903 = vpop.f32.mrb[0].mxu0
    %v6904 = vadd.f32 0.0, %v6903
    %v6905 = vpop.f32.mrb[0].mxu0
    %6906 = vmatprep.mubr.f32.mxu0 0.0
    %6907 = vmatmul.mubr.f32.gmra.mrb[0].mxu0 %v6760
    %v6908 = vpop.f32.mrb[0].mxu0
    %v6909 = vadd.f32 0.0, %v6908
    %v6910 = vpop.f32.mrb[0].mxu0
    %6911 = vdwg.mxu0
    %v6912 = vmax.f32 %v6829, %v6904
    %v6913 = vmax.f32 %v6834, %v6909
    %6914 = vmatprep.subr.mxu0 0.0
    %6915 = vmatpush1.msra.mxu0 %v6912
    %6916 = vmatprep.subr.mxu0 0.0
    %6917 = vmatpush1.msra.mxu0 %v6913
    %6918 = vmatprep.subr.mxu0 0.0
    %6919 = vmatpush1.msra.mxu0 0.0
    %6920 = vmatprep.subr.mxu0 0.0
    %6921 = vmatpush1.msra.mxu0 0.0
    %6922 = vmatprep.subr.mxu0 0.0
    %6923 = vmatpush1.msra.mxu0 0.0
    %6924 = vmatprep.subr.mxu0 0.0
    %6925 = vmatpush1.msra.mxu0 0.0
    %6926 = vmatprep.subr.mxu0 0.0
    %6927 = vmatpush1.msra.mxu0 0.0
    %6928 = vmatprep.subr.mxu0 0.0
    %6929 = vmatpush1.msra.mxu0 0.0
    %6930 = vmatprep.subr.mxu0 0.0
    %6931 = vmatpush1.msra.mxu0 0.0
    %6932 = vmatprep.subr.mxu0 0.0
    %6933 = vmatpush1.msra.mxu0 0.0
    %6934 = vmatprep.subr.mxu0 0.0
    %6935 = vmatpush1.msra.mxu0 0.0
    %6936 = vmatprep.subr.mxu0 0.0
    %6937 = vmatpush1.msra.mxu0 0.0
    %6938 = vmatprep.subr.mxu0 0.0
    %6939 = vmatpush1.msra.mxu0 0.0
    %6940 = vmatprep.subr.mxu0 0.0
    %6941 = vmatpush1.msra.mxu0 0.0
    %6942 = vmatprep.subr.mxu0 0.0
    %6943 = vmatpush1.msra.mxu0 0.0
    %6944 = vmatprep.subr.mxu0 0.0
    %6945 = vmatpush1.msra.mxu0 0.0
    %6946 = vmatprep.subr.mxu0 0.0
    %6947 = vmatpush1.msra.mxu0 0.0
    %6948 = vmatprep.subr.mxu0 0.0
    %6949 = vmatpush1.msra.mxu0 0.0
    %6950 = vmatprep.subr.mxu0 0.0
    %6951 = vmatpush1.msra.mxu0 0.0
    %6952 = vmatprep.subr.mxu0 0.0
    %6953 = vmatpush1.msra.mxu0 0.0
    %6954 = vmatprep.subr.mxu0 0.0
    %6955 = vmatpush1.msra.mxu0 0.0
    %6956 = vmatprep.subr.mxu0 0.0
    %6957 = vmatpush1.msra.mxu0 0.0
    %6958 = vmatprep.subr.mxu0 0.0
    %6959 = vmatpush1.msra.mxu0 0.0
    %6960 = vmatprep.subr.mxu0 0.0
    %6961 = vmatpush1.msra.mxu0 0.0
    %6962 = vmatprep.subr.mxu0 0.0
    %6963 = vmatpush1.msra.mxu0 0.0
    %6964 = vmatprep.subr.mxu0 0.0
    %6965 = vmatpush1.msra.mxu0 0.0
    %6966 = vmatprep.subr.mxu0 0.0
    %6967 = vmatpush1.msra.mxu0 0.0
    %6968 = vmatprep.subr.mxu0 0.0
    %6969 = vmatpush1.msra.mxu0 0.0
    %6970 = vmatprep.subr.mxu0 0.0
    %6971 = vmatpush1.msra.mxu0 0.0
    %6972 = vmatprep.subr.mxu0 0.0
    %6973 = vmatpush1.msra.mxu0 0.0
    %6974 = vmatprep.subr.mxu0 0.0
    %6975 = vmatpush1.msra.mxu0 0.0
    %6976 = vmatprep.subr.mxu0 0.0
    %6977 = vmatpush1.msra.mxu0 0.0
    %6978 = vmatprep.mubr.f32.mxu0 0.0
    %6979 = vmatmul.mubr.f32.gmra.mrb[0].mxu0 %v6312
    %v6980 = vpop.f32.mrb[0].mxu0
    %v6981 = vadd.f32 0.0, %v6980
    %v6982 = vpop.f32.mrb[0].mxu0
    %6983 = vdwg.mxu0
    %6984 = vmatprep.subr.mxu0 0.0
    %6985 = vmatpush1.msra.mxu0 %v6912
    %6986 = vmatprep.subr.mxu0 0.0
    %6987 = vmatpush1.msra.mxu0 %v6913
    %6988 = vmatprep.subr.mxu0 0.0
    %6989 = vmatpush1.msra.mxu0 0.0
    %6990 = vmatprep.subr.mxu0 0.0
    %6991 = vmatpush1.msra.mxu0 0.0
    %6992 = vmatprep.subr.mxu0 0.0
    %6993 = vmatpush1.msra.mxu0 0.0
    %6994 = vmatprep.subr.mxu0 0.0
    %6995 = vmatpush1.msra.mxu0 0.0
    %6996 = vmatprep.subr.mxu0 0.0
    %6997 = vmatpush1.msra.mxu0 0.0
    %6998 = vmatprep.subr.mxu0 0.0
    %6999 = vmatpush1.msra.mxu0 0.0
    %7000 = vmatprep.subr.mxu0 0.0
    %7001 = vmatpush1.msra.mxu0 0.0
    %7002 = vmatprep.subr.mxu0 0.0
    %7003 = vmatpush1.msra.mxu0 0.0
    %7004 = vmatprep.subr.mxu0 0.0
    %7005 = vmatpush1.msra.mxu0 0.0
    %7006 = vmatprep.subr.mxu0 0.0
    %7007 = vmatpush1.msra.mxu0 0.0
    %7008 = vmatprep.subr.mxu0 0.0
    %7009 = vmatpush1.msra.mxu0 0.0
    %7010 = vmatprep.subr.mxu0 0.0
    %7011 = vmatpush1.msra.mxu0 0.0
    %7012 = vmatprep.subr.mxu0 0.0
    %7013 = vmatpush1.msra.mxu0 0.0
    %7014 = vmatprep.subr.mxu0 0.0
    %7015 = vmatpush1.msra.mxu0 0.0
    %7016 = vmatprep.subr.mxu0 0.0
    %7017 = vmatpush1.msra.mxu0 0.0
    %7018 = vmatprep.subr.mxu0 0.0
    %7019 = vmatpush1.msra.mxu0 0.0
    %7020 = vmatprep.subr.mxu0 0.0
    %7021 = vmatpush1.msra.mxu0 0.0
    %7022 = vmatprep.subr.mxu0 0.0
    %7023 = vmatpush1.msra.mxu0 0.0
    %7024 = vmatprep.subr.mxu0 0.0
    %7025 = vmatpush1.msra.mxu0 0.0
    %7026 = vmatprep.subr.mxu0 0.0
    %7027 = vmatpush1.msra.mxu0 0.0
    %7028 = vmatprep.subr.mxu0 0.0
    %7029 = vmatpush1.msra.mxu0 0.0
    %7030 = vmatprep.subr.mxu0 0.0
    %7031 = vmatpush1.msra.mxu0 0.0
    %7032 = vmatprep.subr.mxu0 0.0
    %7033 = vmatpush1.msra.mxu0 0.0
    %7034 = vmatprep.subr.mxu0 0.0
    %7035 = vmatpush1.msra.mxu0 0.0
    %7036 = vmatprep.subr.mxu0 0.0
    %7037 = vmatpush1.msra.mxu0 0.0
    %7038 = vmatprep.subr.mxu0 0.0
    %7039 = vmatpush1.msra.mxu0 0.0
    %7040 = vmatprep.subr.mxu0 0.0
    %7041 = vmatpush1.msra.mxu0 0.0
    %7042 = vmatprep.subr.mxu0 0.0
    %7043 = vmatpush1.msra.mxu0 0.0
    %7044 = vmatprep.subr.mxu0 0.0
    %7045 = vmatpush1.msra.mxu0 0.0
    %7046 = vmatprep.subr.mxu0 0.0
    %7047 = vmatpush1.msra.mxu0 0.0
    %7048 = vmatprep.mubr.f32.mxu0 0.0
    %7049 = vmatmul.mubr.f32.gmra.mrb[0].mxu0 %v6384
    %v7050 = vpop.f32.mrb[0].mxu0
    %v7051 = vadd.f32 0.0, %v7050
    %v7052 = vpop.f32.mrb[0].mxu0
    %7053 = vdwg.mxu0
    %v7054 = vmax.f32 %v6981, %v7051
    %v7056 = vsel %vm6153, %v4551, 0
    %v7059 = vsel %vm6153, %v4552, 0
    %7061 = vmatprep.subr.mxu0 0.0
    %7062 = vmatpush1.msra.mxu0 %v1015
    %7063 = vmatprep.subr.mxu0 0.0
    %7064 = vmatpush1.msra.mxu0 0.0
    %7065 = vmatprep.subr.mxu0 0.0
    %7066 = vmatpush1.msra.mxu0 0.0
    %7067 = vmatprep.subr.mxu0 0.0
    %7068 = vmatpush1.msra.mxu0 0.0
    %7069 = vmatprep.subr.mxu0 0.0
    %7070 = vmatpush1.msra.mxu0 0.0
    %7071 = vmatprep.subr.mxu0 0.0
    %7072 = vmatpush1.msra.mxu0 0.0
    %7073 = vmatprep.subr.mxu0 0.0
    %7074 = vmatpush1.msra.mxu0 0.0
    %7075 = vmatprep.subr.mxu0 0.0
    %7076 = vmatpush1.msra.mxu0 0.0
    %7077 = vmatprep.subr.mxu0 0.0
    %7078 = vmatpush1.msra.mxu0 0.0
    %7079 = vmatprep.subr.mxu0 0.0
    %7080 = vmatpush1.msra.mxu0 0.0
    %7081 = vmatprep.subr.mxu0 0.0
    %7082 = vmatpush1.msra.mxu0 0.0
    %7083 = vmatprep.subr.mxu0 0.0
    %7084 = vmatpush1.msra.mxu0 0.0
    %7085 = vmatprep.subr.mxu0 0.0
    %7086 = vmatpush1.msra.mxu0 0.0
    %7087 = vmatprep.subr.mxu0 0.0
    %7088 = vmatpush1.msra.mxu0 0.0
    %7089 = vmatprep.subr.mxu0 0.0
    %7090 = vmatpush1.msra.mxu0 0.0
    %7091 = vmatprep.subr.mxu0 0.0
    %7092 = vmatpush1.msra.mxu0 0.0
    %7093 = vmatprep.subr.mxu0 0.0
    %7094 = vmatpush1.msra.mxu0 0.0
    %7095 = vmatprep.subr.mxu0 0.0
    %7096 = vmatpush1.msra.mxu0 0.0
    %7097 = vmatprep.subr.mxu0 0.0
    %7098 = vmatpush1.msra.mxu0 0.0
    %7099 = vmatprep.subr.mxu0 0.0
    %7100 = vmatpush1.msra.mxu0 0.0
    %7101 = vmatprep.subr.mxu0 0.0
    %7102 = vmatpush1.msra.mxu0 0.0
    %7103 = vmatprep.subr.mxu0 0.0
    %7104 = vmatpush1.msra.mxu0 0.0
    %7105 = vmatprep.subr.mxu0 0.0
    %7106 = vmatpush1.msra.mxu0 0.0
    %7107 = vmatprep.subr.mxu0 0.0
    %7108 = vmatpush1.msra.mxu0 0.0
    %7109 = vmatprep.subr.mxu0 0.0
    %7110 = vmatpush1.msra.mxu0 0.0
    %7111 = vmatprep.subr.mxu0 0.0
    %7112 = vmatpush1.msra.mxu0 0.0
    %7113 = vmatprep.subr.mxu0 0.0
    %7114 = vmatpush1.msra.mxu0 0.0
    %7115 = vmatprep.subr.mxu0 0.0
    %7116 = vmatpush1.msra.mxu0 0.0
    %7117 = vmatprep.subr.mxu0 0.0
    %7118 = vmatpush1.msra.mxu0 0.0
    %7119 = vmatprep.subr.mxu0 0.0
    %7120 = vmatpush1.msra.mxu0 0.0
    %7121 = vmatprep.subr.mxu0 0.0
    %7122 = vmatpush1.msra.mxu0 0.0
    %7123 = vmatprep.subr.mxu0 0.0
    %7124 = vmatpush1.msra.mxu0 0.0
    %7125 = vmatprep.mubr.f32.mxu0 0.0
    %7126 = vmatmul.mubr.f32.gmra.mrb[0].mxu0 %v7056
    %v7127 = vpop.f32.mrb[0].mxu0
    %v7128 = vadd.f32 0.0, %v7127
    %v7129 = vpop.f32.mrb[0].mxu0
    %7130 = vmatprep.mubr.f32.mxu0 0.0
    %7131 = vmatmul.mubr.f32.gmra.mrb[0].mxu0 %v7059
    %v7132 = vpop.f32.mrb[0].mxu0
    %v7133 = vadd.f32 0.0, %v7132
    %v7134 = vpop.f32.mrb[0].mxu0
    %7135 = vdwg.mxu0
    %7136 = vmatprep.subr.mxu0 0.0
    %7137 = vmatpush1.msra.mxu0 %v1025
    %7138 = vmatprep.subr.mxu0 0.0
    %7139 = vmatpush1.msra.mxu0 0.0
    %7140 = vmatprep.subr.mxu0 0.0
    %7141 = vmatpush1.msra.mxu0 0.0
    %7142 = vmatprep.subr.mxu0 0.0
    %7143 = vmatpush1.msra.mxu0 0.0
    %7144 = vmatprep.subr.mxu0 0.0
    %7145 = vmatpush1.msra.mxu0 0.0
    %7146 = vmatprep.subr.mxu0 0.0
    %7147 = vmatpush1.msra.mxu0 0.0
    %7148 = vmatprep.subr.mxu0 0.0
    %7149 = vmatpush1.msra.mxu0 0.0
    %7150 = vmatprep.subr.mxu0 0.0
    %7151 = vmatpush1.msra.mxu0 0.0
    %7152 = vmatprep.subr.mxu0 0.0
    %7153 = vmatpush1.msra.mxu0 0.0
    %7154 = vmatprep.subr.mxu0 0.0
    %7155 = vmatpush1.msra.mxu0 0.0
    %7156 = vmatprep.subr.mxu0 0.0
    %7157 = vmatpush1.msra.mxu0 0.0
    %7158 = vmatprep.subr.mxu0 0.0
    %7159 = vmatpush1.msra.mxu0 0.0
    %7160 = vmatprep.subr.mxu0 0.0
    %7161 = vmatpush1.msra.mxu0 0.0
    %7162 = vmatprep.subr.mxu0 0.0
    %7163 = vmatpush1.msra.mxu0 0.0
    %7164 = vmatprep.subr.mxu0 0.0
    %7165 = vmatpush1.msra.mxu0 0.0
    %7166 = vmatprep.subr.mxu0 0.0
    %7167 = vmatpush1.msra.mxu0 0.0
    %7168 = vmatprep.subr.mxu0 0.0
    %7169 = vmatpush1.msra.mxu0 0.0
    %7170 = vmatprep.subr.mxu0 0.0
    %7171 = vmatpush1.msra.mxu0 0.0
    %7172 = vmatprep.subr.mxu0 0.0
    %7173 = vmatpush1.msra.mxu0 0.0
    %7174 = vmatprep.subr.mxu0 0.0
    %7175 = vmatpush1.msra.mxu0 0.0
    %7176 = vmatprep.subr.mxu0 0.0
    %7177 = vmatpush1.msra.mxu0 0.0
    %7178 = vmatprep.subr.mxu0 0.0
    %7179 = vmatpush1.msra.mxu0 0.0
    %7180 = vmatprep.subr.mxu0 0.0
    %7181 = vmatpush1.msra.mxu0 0.0
    %7182 = vmatprep.subr.mxu0 0.0
    %7183 = vmatpush1.msra.mxu0 0.0
    %7184 = vmatprep.subr.mxu0 0.0
    %7185 = vmatpush1.msra.mxu0 0.0
    %7186 = vmatprep.subr.mxu0 0.0
    %7187 = vmatpush1.msra.mxu0 0.0
    %7188 = vmatprep.subr.mxu0 0.0
    %7189 = vmatpush1.msra.mxu0 0.0
    %7190 = vmatprep.subr.mxu0 0.0
    %7191 = vmatpush1.msra.mxu0 0.0
    %7192 = vmatprep.subr.mxu0 0.0
    %7193 = vmatpush1.msra.mxu0 0.0
    %7194 = vmatprep.subr.mxu0 0.0
    %7195 = vmatpush1.msra.mxu0 0.0
    %7196 = vmatprep.subr.mxu0 0.0
    %7197 = vmatpush1.msra.mxu0 0.0
    %7198 = vmatprep.subr.mxu0 0.0
    %7199 = vmatpush1.msra.mxu0 0.0
    %7200 = vmatprep.mubr.f32.mxu0 0.0
    %7201 = vmatmul.mubr.f32.gmra.mrb[0].mxu0 %v7056
    %v7202 = vpop.f32.mrb[0].mxu0
    %v7203 = vadd.f32 0.0, %v7202
    %v7204 = vpop.f32.mrb[0].mxu0
    %7205 = vmatprep.mubr.f32.mxu0 0.0
    %7206 = vmatmul.mubr.f32.gmra.mrb[0].mxu0 %v7059
    %v7207 = vpop.f32.mrb[0].mxu0
    %v7208 = vadd.f32 0.0, %v7207
    %v7209 = vpop.f32.mrb[0].mxu0
    %7210 = vdwg.mxu0
    %v7211 = vmax.f32 %v7128, %v7203
    %v7212 = vmax.f32 %v7133, %v7208
    %7213 = vmatprep.subr.mxu0 0.0
    %7214 = vmatpush1.msra.mxu0 %v7211
    %7215 = vmatprep.subr.mxu0 0.0
    %7216 = vmatpush1.msra.mxu0 %v7212
    %7217 = vmatprep.subr.mxu0 0.0
    %7218 = vmatpush1.msra.mxu0 0.0
    %7219 = vmatprep.subr.mxu0 0.0
    %7220 = vmatpush1.msra.mxu0 0.0
    %7221 = vmatprep.subr.mxu0 0.0
    %7222 = vmatpush1.msra.mxu0 0.0
    %7223 = vmatprep.subr.mxu0 0.0
    %7224 = vmatpush1.msra.mxu0 0.0
    %7225 = vmatprep.subr.mxu0 0.0
    %7226 = vmatpush1.msra.mxu0 0.0
    %7227 = vmatprep.subr.mxu0 0.0
    %7228 = vmatpush1.msra.mxu0 0.0
    %7229 = vmatprep.subr.mxu0 0.0
    %7230 = vmatpush1.msra.mxu0 0.0
    %7231 = vmatprep.subr.mxu0 0.0
    %7232 = vmatpush1.msra.mxu0 0.0
    %7233 = vmatprep.subr.mxu0 0.0
    %7234 = vmatpush1.msra.mxu0 0.0
    %7235 = vmatprep.subr.mxu0 0.0
    %7236 = vmatpush1.msra.mxu0 0.0
    %7237 = vmatprep.subr.mxu0 0.0
    %7238 = vmatpush1.msra.mxu0 0.0
    %7239 = vmatprep.subr.mxu0 0.0
    %7240 = vmatpush1.msra.mxu0 0.0
    %7241 = vmatprep.subr.mxu0 0.0
    %7242 = vmatpush1.msra.mxu0 0.0
    %7243 = vmatprep.subr.mxu0 0.0
    %7244 = vmatpush1.msra.mxu0 0.0
    %7245 = vmatprep.subr.mxu0 0.0
    %7246 = vmatpush1.msra.mxu0 0.0
    %7247 = vmatprep.subr.mxu0 0.0
    %7248 = vmatpush1.msra.mxu0 0.0
    %7249 = vmatprep.subr.mxu0 0.0
    %7250 = vmatpush1.msra.mxu0 0.0
    %7251 = vmatprep.subr.mxu0 0.0
    %7252 = vmatpush1.msra.mxu0 0.0
    %7253 = vmatprep.subr.mxu0 0.0
    %7254 = vmatpush1.msra.mxu0 0.0
    %7255 = vmatprep.subr.mxu0 0.0
    %7256 = vmatpush1.msra.mxu0 0.0
    %7257 = vmatprep.subr.mxu0 0.0
    %7258 = vmatpush1.msra.mxu0 0.0
    %7259 = vmatprep.subr.mxu0 0.0
    %7260 = vmatpush1.msra.mxu0 0.0
    %7261 = vmatprep.subr.mxu0 0.0
    %7262 = vmatpush1.msra.mxu0 0.0
    %7263 = vmatprep.subr.mxu0 0.0
    %7264 = vmatpush1.msra.mxu0 0.0
    %7265 = vmatprep.subr.mxu0 0.0
    %7266 = vmatpush1.msra.mxu0 0.0
    %7267 = vmatprep.subr.mxu0 0.0
    %7268 = vmatpush1.msra.mxu0 0.0
    %7269 = vmatprep.subr.mxu0 0.0
    %7270 = vmatpush1.msra.mxu0 0.0
    %7271 = vmatprep.subr.mxu0 0.0
    %7272 = vmatpush1.msra.mxu0 0.0
    %7273 = vmatprep.subr.mxu0 0.0
    %7274 = vmatpush1.msra.mxu0 0.0
    %7275 = vmatprep.subr.mxu0 0.0
    %7276 = vmatpush1.msra.mxu0 0.0
    %7277 = vmatprep.mubr.f32.mxu0 0.0
    %7278 = vmatmul.mubr.f32.gmra.mrb[0].mxu0 %v6312
    %v7279 = vpop.f32.mrb[0].mxu0
    %v7280 = vadd.f32 0.0, %v7279
    %v7281 = vpop.f32.mrb[0].mxu0
    %7282 = vdwg.mxu0
    %7283 = vmatprep.subr.mxu0 0.0
    %7284 = vmatpush1.msra.mxu0 %v7211
    %7285 = vmatprep.subr.mxu0 0.0
    %7286 = vmatpush1.msra.mxu0 %v7212
    %7287 = vmatprep.subr.mxu0 0.0
    %7288 = vmatpush1.msra.mxu0 0.0
    %7289 = vmatprep.subr.mxu0 0.0
    %7290 = vmatpush1.msra.mxu0 0.0
    %7291 = vmatprep.subr.mxu0 0.0
    %7292 = vmatpush1.msra.mxu0 0.0
    %7293 = vmatprep.subr.mxu0 0.0
    %7294 = vmatpush1.msra.mxu0 0.0
    %7295 = vmatprep.subr.mxu0 0.0
    %7296 = vmatpush1.msra.mxu0 0.0
    %7297 = vmatprep.subr.mxu0 0.0
    %7298 = vmatpush1.msra.mxu0 0.0
    %7299 = vmatprep.subr.mxu0 0.0
    %7300 = vmatpush1.msra.mxu0 0.0
    %7301 = vmatprep.subr.mxu0 0.0
    %7302 = vmatpush1.msra.mxu0 0.0
    %7303 = vmatprep.subr.mxu0 0.0
    %7304 = vmatpush1.msra.mxu0 0.0
    %7305 = vmatprep.subr.mxu0 0.0
    %7306 = vmatpush1.msra.mxu0 0.0
    %7307 = vmatprep.subr.mxu0 0.0
    %7308 = vmatpush1.msra.mxu0 0.0
    %7309 = vmatprep.subr.mxu0 0.0
    %7310 = vmatpush1.msra.mxu0 0.0
    %7311 = vmatprep.subr.mxu0 0.0
    %7312 = vmatpush1.msra.mxu0 0.0
    %7313 = vmatprep.subr.mxu0 0.0
    %7314 = vmatpush1.msra.mxu0 0.0
    %7315 = vmatprep.subr.mxu0 0.0
    %7316 = vmatpush1.msra.mxu0 0.0
    %7317 = vmatprep.subr.mxu0 0.0
    %7318 = vmatpush1.msra.mxu0 0.0
    %7319 = vmatprep.subr.mxu0 0.0
    %7320 = vmatpush1.msra.mxu0 0.0
    %7321 = vmatprep.subr.mxu0 0.0
    %7322 = vmatpush1.msra.mxu0 0.0
    %7323 = vmatprep.subr.mxu0 0.0
    %7324 = vmatpush1.msra.mxu0 0.0
    %7325 = vmatprep.subr.mxu0 0.0
    %7326 = vmatpush1.msra.mxu0 0.0
    %7327 = vmatprep.subr.mxu0 0.0
    %7328 = vmatpush1.msra.mxu0 0.0
    %7329 = vmatprep.subr.mxu0 0.0
    %7330 = vmatpush1.msra.mxu0 0.0
    %7331 = vmatprep.subr.mxu0 0.0
    %7332 = vmatpush1.msra.mxu0 0.0
    %7333 = vmatprep.subr.mxu0 0.0
    %7334 = vmatpush1.msra.mxu0 0.0
    %7335 = vmatprep.subr.mxu0 0.0
    %7336 = vmatpush1.msra.mxu0 0.0
    %7337 = vmatprep.subr.mxu0 0.0
    %7338 = vmatpush1.msra.mxu0 0.0
    %7339 = vmatprep.subr.mxu0 0.0
    %7340 = vmatpush1.msra.mxu0 0.0
    %7341 = vmatprep.subr.mxu0 0.0
    %7342 = vmatpush1.msra.mxu0 0.0
    %7343 = vmatprep.subr.mxu0 0.0
    %7344 = vmatpush1.msra.mxu0 0.0
    %7345 = vmatprep.subr.mxu0 0.0
    %7346 = vmatpush1.msra.mxu0 0.0
    %7347 = vmatprep.mubr.f32.mxu0 0.0
    %7348 = vmatmul.mubr.f32.gmra.mrb[0].mxu0 %v6384
    %v7349 = vpop.f32.mrb[0].mxu0
    %v7350 = vadd.f32 0.0, %v7349
    %v7351 = vpop.f32.mrb[0].mxu0
    %7352 = vdwg.mxu0
    %v7353 = vmax.f32 %v7280, %v7350
    %v7355 = vsel %vm6153, %v4751, 0
    %v7358 = vsel %vm6153, %v4752, 0
    %7360 = vmatprep.subr.mxu0 0.0
    %7361 = vmatpush1.msra.mxu0 %v1015
    %7362 = vmatprep.subr.mxu0 0.0
    %7363 = vmatpush1.msra.mxu0 0.0
    %7364 = vmatprep.subr.mxu0 0.0
    %7365 = vmatpush1.msra.mxu0 0.0
    %7366 = vmatprep.subr.mxu0 0.0
    %7367 = vmatpush1.msra.mxu0 0.0
    %7368 = vmatprep.subr.mxu0 0.0
    %7369 = vmatpush1.msra.mxu0 0.0
    %7370 = vmatprep.subr.mxu0 0.0
    %7371 = vmatpush1.msra.mxu0 0.0
    %7372 = vmatprep.subr.mxu0 0.0
    %7373 = vmatpush1.msra.mxu0 0.0
    %7374 = vmatprep.subr.mxu0 0.0
    %7375 = vmatpush1.msra.mxu0 0.0
    %7376 = vmatprep.subr.mxu0 0.0
    %7377 = vmatpush1.msra.mxu0 0.0
    %7378 = vmatprep.subr.mxu0 0.0
    %7379 = vmatpush1.msra.mxu0 0.0
    %7380 = vmatprep.subr.mxu0 0.0
    %7381 = vmatpush1.msra.mxu0 0.0
    %7382 = vmatprep.subr.mxu0 0.0
    %7383 = vmatpush1.msra.mxu0 0.0
    %7384 = vmatprep.subr.mxu0 0.0
    %7385 = vmatpush1.msra.mxu0 0.0
    %7386 = vmatprep.subr.mxu0 0.0
    %7387 = vmatpush1.msra.mxu0 0.0
    %7388 = vmatprep.subr.mxu0 0.0
    %7389 = vmatpush1.msra.mxu0 0.0
    %7390 = vmatprep.subr.mxu0 0.0
    %7391 = vmatpush1.msra.mxu0 0.0
    %7392 = vmatprep.subr.mxu0 0.0
    %7393 = vmatpush1.msra.mxu0 0.0
    %7394 = vmatprep.subr.mxu0 0.0
    %7395 = vmatpush1.msra.mxu0 0.0
    %7396 = vmatprep.subr.mxu0 0.0
    %7397 = vmatpush1.msra.mxu0 0.0
    %7398 = vmatprep.subr.mxu0 0.0
    %7399 = vmatpush1.msra.mxu0 0.0
    %7400 = vmatprep.subr.mxu0 0.0
    %7401 = vmatpush1.msra.mxu0 0.0
    %7402 = vmatprep.subr.mxu0 0.0
    %7403 = vmatpush1.msra.mxu0 0.0
    %7404 = vmatprep.subr.mxu0 0.0
    %7405 = vmatpush1.msra.mxu0 0.0
    %7406 = vmatprep.subr.mxu0 0.0
    %7407 = vmatpush1.msra.mxu0 0.0
    %7408 = vmatprep.subr.mxu0 0.0
    %7409 = vmatpush1.msra.mxu0 0.0
    %7410 = vmatprep.subr.mxu0 0.0
    %7411 = vmatpush1.msra.mxu0 0.0
    %7412 = vmatprep.subr.mxu0 0.0
    %7413 = vmatpush1.msra.mxu0 0.0
    %7414 = vmatprep.subr.mxu0 0.0
    %7415 = vmatpush1.msra.mxu0 0.0
    %7416 = vmatprep.subr.mxu0 0.0
    %7417 = vmatpush1.msra.mxu0 0.0
    %7418 = vmatprep.subr.mxu0 0.0
    %7419 = vmatpush1.msra.mxu0 0.0
    %7420 = vmatprep.subr.mxu0 0.0
    %7421 = vmatpush1.msra.mxu0 0.0
    %7422 = vmatprep.subr.mxu0 0.0
    %7423 = vmatpush1.msra.mxu0 0.0
    %7424 = vmatprep.mubr.f32.mxu0 0.0
    %7425 = vmatmul.mubr.f32.gmra.mrb[0].mxu0 %v7355
    %v7426 = vpop.f32.mrb[0].mxu0
    %v7427 = vadd.f32 0.0, %v7426
    %v7428 = vpop.f32.mrb[0].mxu0
    %7429 = vmatprep.mubr.f32.mxu0 0.0
    %7430 = vmatmul.mubr.f32.gmra.mrb[0].mxu0 %v7358
    %v7431 = vpop.f32.mrb[0].mxu0
    %v7432 = vadd.f32 0.0, %v7431
    %v7433 = vpop.f32.mrb[0].mxu0
    %7434 = vdwg.mxu0
    %7435 = vmatprep.subr.mxu0 0.0
    %7436 = vmatpush1.msra.mxu0 %v1025
    %7437 = vmatprep.subr.mxu0 0.0
    %7438 = vmatpush1.msra.mxu0 0.0
    %7439 = vmatprep.subr.mxu0 0.0
    %7440 = vmatpush1.msra.mxu0 0.0
    %7441 = vmatprep.subr.mxu0 0.0
    %7442 = vmatpush1.msra.mxu0 0.0
    %7443 = vmatprep.subr.mxu0 0.0
    %7444 = vmatpush1.msra.mxu0 0.0
    %7445 = vmatprep.subr.mxu0 0.0
    %7446 = vmatpush1.msra.mxu0 0.0
    %7447 = vmatprep.subr.mxu0 0.0
    %7448 = vmatpush1.msra.mxu0 0.0
    %7449 = vmatprep.subr.mxu0 0.0
    %7450 = vmatpush1.msra.mxu0 0.0
    %7451 = vmatprep.subr.mxu0 0.0
    %7452 = vmatpush1.msra.mxu0 0.0
    %7453 = vmatprep.subr.mxu0 0.0
    %7454 = vmatpush1.msra.mxu0 0.0
    %7455 = vmatprep.subr.mxu0 0.0
    %7456 = vmatpush1.msra.mxu0 0.0
    %7457 = vmatprep.subr.mxu0 0.0
    %7458 = vmatpush1.msra.mxu0 0.0
    %7459 = vmatprep.subr.mxu0 0.0
    %7460 = vmatpush1.msra.mxu0 0.0
    %7461 = vmatprep.subr.mxu0 0.0
    %7462 = vmatpush1.msra.mxu0 0.0
    %7463 = vmatprep.subr.mxu0 0.0
    %7464 = vmatpush1.msra.mxu0 0.0
    %7465 = vmatprep.subr.mxu0 0.0
    %7466 = vmatpush1.msra.mxu0 0.0
    %7467 = vmatprep.subr.mxu0 0.0
    %7468 = vmatpush1.msra.mxu0 0.0
    %7469 = vmatprep.subr.mxu0 0.0
    %7470 = vmatpush1.msra.mxu0 0.0
    %7471 = vmatprep.subr.mxu0 0.0
    %7472 = vmatpush1.msra.mxu0 0.0
    %7473 = vmatprep.subr.mxu0 0.0
    %7474 = vmatpush1.msra.mxu0 0.0
    %7475 = vmatprep.subr.mxu0 0.0
    %7476 = vmatpush1.msra.mxu0 0.0
    %7477 = vmatprep.subr.mxu0 0.0
    %7478 = vmatpush1.msra.mxu0 0.0
    %7479 = vmatprep.subr.mxu0 0.0
    %7480 = vmatpush1.msra.mxu0 0.0
    %7481 = vmatprep.subr.mxu0 0.0
    %7482 = vmatpush1.msra.mxu0 0.0
    %7483 = vmatprep.subr.mxu0 0.0
    %7484 = vmatpush1.msra.mxu0 0.0
    %7485 = vmatprep.subr.mxu0 0.0
    %7486 = vmatpush1.msra.mxu0 0.0
    %7487 = vmatprep.subr.mxu0 0.0
    %7488 = vmatpush1.msra.mxu0 0.0
    %7489 = vmatprep.subr.mxu0 0.0
    %7490 = vmatpush1.msra.mxu0 0.0
    %7491 = vmatprep.subr.mxu0 0.0
    %7492 = vmatpush1.msra.mxu0 0.0
    %7493 = vmatprep.subr.mxu0 0.0
    %7494 = vmatpush1.msra.mxu0 0.0
    %7495 = vmatprep.subr.mxu0 0.0
    %7496 = vmatpush1.msra.mxu0 0.0
    %7497 = vmatprep.subr.mxu0 0.0
    %7498 = vmatpush1.msra.mxu0 0.0
    %7499 = vmatprep.mubr.f32.mxu0 0.0
    %7500 = vmatmul.mubr.f32.gmra.mrb[0].mxu0 %v7355
    %v7501 = vpop.f32.mrb[0].mxu0
    %v7502 = vadd.f32 0.0, %v7501
    %v7503 = vpop.f32.mrb[0].mxu0
    %7504 = vmatprep.mubr.f32.mxu0 0.0
    %7505 = vmatmul.mubr.f32.gmra.mrb[0].mxu0 %v7358
    %v7506 = vpop.f32.mrb[0].mxu0
    %v7507 = vadd.f32 0.0, %v7506
    %v7508 = vpop.f32.mrb[0].mxu0
    %7509 = vdwg.mxu0
    %v7510 = vmax.f32 %v7427, %v7502
    %v7511 = vmax.f32 %v7432, %v7507
    %7512 = vmatprep.subr.mxu0 0.0
    %7513 = vmatpush1.msra.mxu0 %v7510
    %7514 = vmatprep.subr.mxu0 0.0
    %7515 = vmatpush1.msra.mxu0 %v7511
    %7516 = vmatprep.subr.mxu0 0.0
    %7517 = vmatpush1.msra.mxu0 0.0
    %7518 = vmatprep.subr.mxu0 0.0
    %7519 = vmatpush1.msra.mxu0 0.0
    %7520 = vmatprep.subr.mxu0 0.0
    %7521 = vmatpush1.msra.mxu0 0.0
    %7522 = vmatprep.subr.mxu0 0.0
    %7523 = vmatpush1.msra.mxu0 0.0
    %7524 = vmatprep.subr.mxu0 0.0
    %7525 = vmatpush1.msra.mxu0 0.0
    %7526 = vmatprep.subr.mxu0 0.0
    %7527 = vmatpush1.msra.mxu0 0.0
    %7528 = vmatprep.subr.mxu0 0.0
    %7529 = vmatpush1.msra.mxu0 0.0
    %7530 = vmatprep.subr.mxu0 0.0
    %7531 = vmatpush1.msra.mxu0 0.0
    %7532 = vmatprep.subr.mxu0 0.0
    %7533 = vmatpush1.msra.mxu0 0.0
    %7534 = vmatprep.subr.mxu0 0.0
    %7535 = vmatpush1.msra.mxu0 0.0
    %7536 = vmatprep.subr.mxu0 0.0
    %7537 = vmatpush1.msra.mxu0 0.0
    %7538 = vmatprep.subr.mxu0 0.0
    %7539 = vmatpush1.msra.mxu0 0.0
    %7540 = vmatprep.subr.mxu0 0.0
    %7541 = vmatpush1.msra.mxu0 0.0
    %7542 = vmatprep.subr.mxu0 0.0
    %7543 = vmatpush1.msra.mxu0 0.0
    %7544 = vmatprep.subr.mxu0 0.0
    %7545 = vmatpush1.msra.mxu0 0.0
    %7546 = vmatprep.subr.mxu0 0.0
    %7547 = vmatpush1.msra.mxu0 0.0
    %7548 = vmatprep.subr.mxu0 0.0
    %7549 = vmatpush1.msra.mxu0 0.0
    %7550 = vmatprep.subr.mxu0 0.0
    %7551 = vmatpush1.msra.mxu0 0.0
    %7552 = vmatprep.subr.mxu0 0.0
    %7553 = vmatpush1.msra.mxu0 0.0
    %7554 = vmatprep.subr.mxu0 0.0
    %7555 = vmatpush1.msra.mxu0 0.0
    %7556 = vmatprep.subr.mxu0 0.0
    %7557 = vmatpush1.msra.mxu0 0.0
    %7558 = vmatprep.subr.mxu0 0.0
    %7559 = vmatpush1.msra.mxu0 0.0
    %7560 = vmatprep.subr.mxu0 0.0
    %7561 = vmatpush1.msra.mxu0 0.0
    %7562 = vmatprep.subr.mxu0 0.0
    %7563 = vmatpush1.msra.mxu0 0.0
    %7564 = vmatprep.subr.mxu0 0.0
    %7565 = vmatpush1.msra.mxu0 0.0
    %7566 = vmatprep.subr.mxu0 0.0
    %7567 = vmatpush1.msra.mxu0 0.0
    %7568 = vmatprep.subr.mxu0 0.0
    %7569 = vmatpush1.msra.mxu0 0.0
    %7570 = vmatprep.subr.mxu0 0.0
    %7571 = vmatpush1.msra.mxu0 0.0
    %7572 = vmatprep.subr.mxu0 0.0
    %7573 = vmatpush1.msra.mxu0 0.0
    %7574 = vmatprep.subr.mxu0 0.0
    %7575 = vmatpush1.msra.mxu0 0.0
    %7576 = vmatprep.mubr.f32.mxu0 0.0
    %7577 = vmatmul.mubr.f32.gmra.mrb[0].mxu0 %v6312
    %v7578 = vpop.f32.mrb[0].mxu0
    %v7579 = vadd.f32 0.0, %v7578
    %v7580 = vpop.f32.mrb[0].mxu0
    %7581 = vdwg.mxu0
    %7582 = vmatprep.subr.mxu0 0.0
    %7583 = vmatpush1.msra.mxu0 %v7510
    %7584 = vmatprep.subr.mxu0 0.0
    %7585 = vmatpush1.msra.mxu0 %v7511
    %7586 = vmatprep.subr.mxu0 0.0
    %7587 = vmatpush1.msra.mxu0 0.0
    %7588 = vmatprep.subr.mxu0 0.0
    %7589 = vmatpush1.msra.mxu0 0.0
    %7590 = vmatprep.subr.mxu0 0.0
    %7591 = vmatpush1.msra.mxu0 0.0
    %7592 = vmatprep.subr.mxu0 0.0
    %7593 = vmatpush1.msra.mxu0 0.0
    %7594 = vmatprep.subr.mxu0 0.0
    %7595 = vmatpush1.msra.mxu0 0.0
    %7596 = vmatprep.subr.mxu0 0.0
    %7597 = vmatpush1.msra.mxu0 0.0
    %7598 = vmatprep.subr.mxu0 0.0
    %7599 = vmatpush1.msra.mxu0 0.0
    %7600 = vmatprep.subr.mxu0 0.0
    %7601 = vmatpush1.msra.mxu0 0.0
    %7602 = vmatprep.subr.mxu0 0.0
    %7603 = vmatpush1.msra.mxu0 0.0
    %7604 = vmatprep.subr.mxu0 0.0
    %7605 = vmatpush1.msra.mxu0 0.0
    %7606 = vmatprep.subr.mxu0 0.0
    %7607 = vmatpush1.msra.mxu0 0.0
    %7608 = vmatprep.subr.mxu0 0.0
    %7609 = vmatpush1.msra.mxu0 0.0
    %7610 = vmatprep.subr.mxu0 0.0
    %7611 = vmatpush1.msra.mxu0 0.0
    %7612 = vmatprep.subr.mxu0 0.0
    %7613 = vmatpush1.msra.mxu0 0.0
    %7614 = vmatprep.subr.mxu0 0.0
    %7615 = vmatpush1.msra.mxu0 0.0
    %7616 = vmatprep.subr.mxu0 0.0
    %7617 = vmatpush1.msra.mxu0 0.0
    %7618 = vmatprep.subr.mxu0 0.0
    %7619 = vmatpush1.msra.mxu0 0.0
    %7620 = vmatprep.subr.mxu0 0.0
    %7621 = vmatpush1.msra.mxu0 0.0
    %7622 = vmatprep.subr.mxu0 0.0
    %7623 = vmatpush1.msra.mxu0 0.0
    %7624 = vmatprep.subr.mxu0 0.0
    %7625 = vmatpush1.msra.mxu0 0.0
    %7626 = vmatprep.subr.mxu0 0.0
    %7627 = vmatpush1.msra.mxu0 0.0
    %7628 = vmatprep.subr.mxu0 0.0
    %7629 = vmatpush1.msra.mxu0 0.0
    %7630 = vmatprep.subr.mxu0 0.0
    %7631 = vmatpush1.msra.mxu0 0.0
    %7632 = vmatprep.subr.mxu0 0.0
    %7633 = vmatpush1.msra.mxu0 0.0
    %7634 = vmatprep.subr.mxu0 0.0
    %7635 = vmatpush1.msra.mxu0 0.0
    %7636 = vmatprep.subr.mxu0 0.0
    %7637 = vmatpush1.msra.mxu0 0.0
    %7638 = vmatprep.subr.mxu0 0.0
    %7639 = vmatpush1.msra.mxu0 0.0
    %7640 = vmatprep.subr.mxu0 0.0
    %7641 = vmatpush1.msra.mxu0 0.0
    %7642 = vmatprep.subr.mxu0 0.0
    %7643 = vmatpush1.msra.mxu0 0.0
    %7644 = vmatprep.subr.mxu0 0.0
    %7645 = vmatpush1.msra.mxu0 0.0
    %7646 = vmatprep.mubr.f32.mxu0 0.0
    %7647 = vmatmul.mubr.f32.gmra.mrb[0].mxu0 %v6384
    %v7648 = vpop.f32.mrb[0].mxu0
    %v7649 = vadd.f32 0.0, %v7648
    %v7650 = vpop.f32.mrb[0].mxu0
    %7651 = vdwg.mxu0
    %v7652 = vmax.f32 %v7579, %v7649
    %v7654 = vsel %vm6153, %v4951, 0
    %v7657 = vsel %vm6153, %v4952, 0
    %7659 = vmatprep.subr.mxu0 0.0
    %7660 = vmatpush1.msra.mxu0 %v1015
    %7661 = vmatprep.subr.mxu0 0.0
    %7662 = vmatpush1.msra.mxu0 0.0
    %7663 = vmatprep.subr.mxu0 0.0
    %7664 = vmatpush1.msra.mxu0 0.0
    %7665 = vmatprep.subr.mxu0 0.0
    %7666 = vmatpush1.msra.mxu0 0.0
    %7667 = vmatprep.subr.mxu0 0.0
    %7668 = vmatpush1.msra.mxu0 0.0
    %7669 = vmatprep.subr.mxu0 0.0
    %7670 = vmatpush1.msra.mxu0 0.0
    %7671 = vmatprep.subr.mxu0 0.0
    %7672 = vmatpush1.msra.mxu0 0.0
    %7673 = vmatprep.subr.mxu0 0.0
    %7674 = vmatpush1.msra.mxu0 0.0
    %7675 = vmatprep.subr.mxu0 0.0
    %7676 = vmatpush1.msra.mxu0 0.0
    %7677 = vmatprep.subr.mxu0 0.0
    %7678 = vmatpush1.msra.mxu0 0.0
    %7679 = vmatprep.subr.mxu0 0.0
    %7680 = vmatpush1.msra.mxu0 0.0
    %7681 = vmatprep.subr.mxu0 0.0
    %7682 = vmatpush1.msra.mxu0 0.0
    %7683 = vmatprep.subr.mxu0 0.0
    %7684 = vmatpush1.msra.mxu0 0.0
    %7685 = vmatprep.subr.mxu0 0.0
    %7686 = vmatpush1.msra.mxu0 0.0
    %7687 = vmatprep.subr.mxu0 0.0
    %7688 = vmatpush1.msra.mxu0 0.0
    %7689 = vmatprep.subr.mxu0 0.0
    %7690 = vmatpush1.msra.mxu0 0.0
    %7691 = vmatprep.subr.mxu0 0.0
    %7692 = vmatpush1.msra.mxu0 0.0
    %7693 = vmatprep.subr.mxu0 0.0
    %7694 = vmatpush1.msra.mxu0 0.0
    %7695 = vmatprep.subr.mxu0 0.0
    %7696 = vmatpush1.msra.mxu0 0.0
    %7697 = vmatprep.subr.mxu0 0.0
    %7698 = vmatpush1.msra.mxu0 0.0
    %7699 = vmatprep.subr.mxu0 0.0
    %7700 = vmatpush1.msra.mxu0 0.0
    %7701 = vmatprep.subr.mxu0 0.0
    %7702 = vmatpush1.msra.mxu0 0.0
    %7703 = vmatprep.subr.mxu0 0.0
    %7704 = vmatpush1.msra.mxu0 0.0
    %7705 = vmatprep.subr.mxu0 0.0
    %7706 = vmatpush1.msra.mxu0 0.0
    %7707 = vmatprep.subr.mxu0 0.0
    %7708 = vmatpush1.msra.mxu0 0.0
    %7709 = vmatprep.subr.mxu0 0.0
    %7710 = vmatpush1.msra.mxu0 0.0
    %7711 = vmatprep.subr.mxu0 0.0
    %7712 = vmatpush1.msra.mxu0 0.0
    %7713 = vmatprep.subr.mxu0 0.0
    %7714 = vmatpush1.msra.mxu0 0.0
    %7715 = vmatprep.subr.mxu0 0.0
    %7716 = vmatpush1.msra.mxu0 0.0
    %7717 = vmatprep.subr.mxu0 0.0
    %7718 = vmatpush1.msra.mxu0 0.0
    %7719 = vmatprep.subr.mxu0 0.0
    %7720 = vmatpush1.msra.mxu0 0.0
    %7721 = vmatprep.subr.mxu0 0.0
    %7722 = vmatpush1.msra.mxu0 0.0
    %7723 = vmatprep.mubr.f32.mxu0 0.0
    %7724 = vmatmul.mubr.f32.gmra.mrb[0].mxu0 %v7654
    %v7725 = vpop.f32.mrb[0].mxu0
    %v7726 = vadd.f32 0.0, %v7725
    %v7727 = vpop.f32.mrb[0].mxu0
    %7728 = vmatprep.mubr.f32.mxu0 0.0
    %7729 = vmatmul.mubr.f32.gmra.mrb[0].mxu0 %v7657
    %v7730 = vpop.f32.mrb[0].mxu0
    %v7731 = vadd.f32 0.0, %v7730
    %v7732 = vpop.f32.mrb[0].mxu0
    %7733 = vdwg.mxu0
    %7734 = vmatprep.subr.mxu0 0.0
    %7735 = vmatpush1.msra.mxu0 %v1025
    %7736 = vmatprep.subr.mxu0 0.0
    %7737 = vmatpush1.msra.mxu0 0.0
    %7738 = vmatprep.subr.mxu0 0.0
    %7739 = vmatpush1.msra.mxu0 0.0
    %7740 = vmatprep.subr.mxu0 0.0
    %7741 = vmatpush1.msra.mxu0 0.0
    %7742 = vmatprep.subr.mxu0 0.0
    %7743 = vmatpush1.msra.mxu0 0.0
    %7744 = vmatprep.subr.mxu0 0.0
    %7745 = vmatpush1.msra.mxu0 0.0
    %7746 = vmatprep.subr.mxu0 0.0
    %7747 = vmatpush1.msra.mxu0 0.0
    %7748 = vmatprep.subr.mxu0 0.0
    %7749 = vmatpush1.msra.mxu0 0.0
    %7750 = vmatprep.subr.mxu0 0.0
    %7751 = vmatpush1.msra.mxu0 0.0
    %7752 = vmatprep.subr.mxu0 0.0
    %7753 = vmatpush1.msra.mxu0 0.0
    %7754 = vmatprep.subr.mxu0 0.0
    %7755 = vmatpush1.msra.mxu0 0.0
    %7756 = vmatprep.subr.mxu0 0.0
    %7757 = vmatpush1.msra.mxu0 0.0
    %7758 = vmatprep.subr.mxu0 0.0
    %7759 = vmatpush1.msra.mxu0 0.0
    %7760 = vmatprep.subr.mxu0 0.0
    %7761 = vmatpush1.msra.mxu0 0.0
    %7762 = vmatprep.subr.mxu0 0.0
    %7763 = vmatpush1.msra.mxu0 0.0
    %7764 = vmatprep.subr.mxu0 0.0
    %7765 = vmatpush1.msra.mxu0 0.0
    %7766 = vmatprep.subr.mxu0 0.0
    %7767 = vmatpush1.msra.mxu0 0.0
    %7768 = vmatprep.subr.mxu0 0.0
    %7769 = vmatpush1.msra.mxu0 0.0
    %7770 = vmatprep.subr.mxu0 0.0
    %7771 = vmatpush1.msra.mxu0 0.0
    %7772 = vmatprep.subr.mxu0 0.0
    %7773 = vmatpush1.msra.mxu0 0.0
    %7774 = vmatprep.subr.mxu0 0.0
    %7775 = vmatpush1.msra.mxu0 0.0
    %7776 = vmatprep.subr.mxu0 0.0
    %7777 = vmatpush1.msra.mxu0 0.0
    %7778 = vmatprep.subr.mxu0 0.0
    %7779 = vmatpush1.msra.mxu0 0.0
    %7780 = vmatprep.subr.mxu0 0.0
    %7781 = vmatpush1.msra.mxu0 0.0
    %7782 = vmatprep.subr.mxu0 0.0
    %7783 = vmatpush1.msra.mxu0 0.0
    %7784 = vmatprep.subr.mxu0 0.0
    %7785 = vmatpush1.msra.mxu0 0.0
    %7786 = vmatprep.subr.mxu0 0.0
    %7787 = vmatpush1.msra.mxu0 0.0
    %7788 = vmatprep.subr.mxu0 0.0
    %7789 = vmatpush1.msra.mxu0 0.0
    %7790 = vmatprep.subr.mxu0 0.0
    %7791 = vmatpush1.msra.mxu0 0.0
    %7792 = vmatprep.subr.mxu0 0.0
    %7793 = vmatpush1.msra.mxu0 0.0
    %7794 = vmatprep.subr.mxu0 0.0
    %7795 = vmatpush1.msra.mxu0 0.0
    %7796 = vmatprep.subr.mxu0 0.0
    %7797 = vmatpush1.msra.mxu0 0.0
    %7798 = vmatprep.mubr.f32.mxu0 0.0
    %7799 = vmatmul.mubr.f32.gmra.mrb[0].mxu0 %v7654
    %v7800 = vpop.f32.mrb[0].mxu0
    %v7801 = vadd.f32 0.0, %v7800
    %v7802 = vpop.f32.mrb[0].mxu0
    %7803 = vmatprep.mubr.f32.mxu0 0.0
    %7804 = vmatmul.mubr.f32.gmra.mrb[0].mxu0 %v7657
    %v7805 = vpop.f32.mrb[0].mxu0
    %v7806 = vadd.f32 0.0, %v7805
    %v7807 = vpop.f32.mrb[0].mxu0
    %7808 = vdwg.mxu0
    %v7809 = vmax.f32 %v7726, %v7801
    %v7810 = vmax.f32 %v7731, %v7806
    %7811 = vmatprep.subr.mxu0 0.0
    %7812 = vmatpush1.msra.mxu0 %v7809
    %7813 = vmatprep.subr.mxu0 0.0
    %7814 = vmatpush1.msra.mxu0 %v7810
    %7815 = vmatprep.subr.mxu0 0.0
    %7816 = vmatpush1.msra.mxu0 0.0
    %7817 = vmatprep.subr.mxu0 0.0
    %7818 = vmatpush1.msra.mxu0 0.0
    %7819 = vmatprep.subr.mxu0 0.0
    %7820 = vmatpush1.msra.mxu0 0.0
    %7821 = vmatprep.subr.mxu0 0.0
    %7822 = vmatpush1.msra.mxu0 0.0
    %7823 = vmatprep.subr.mxu0 0.0
    %7824 = vmatpush1.msra.mxu0 0.0
    %7825 = vmatprep.subr.mxu0 0.0
    %7826 = vmatpush1.msra.mxu0 0.0
    %7827 = vmatprep.subr.mxu0 0.0
    %7828 = vmatpush1.msra.mxu0 0.0
    %7829 = vmatprep.subr.mxu0 0.0
    %7830 = vmatpush1.msra.mxu0 0.0
    %7831 = vmatprep.subr.mxu0 0.0
    %7832 = vmatpush1.msra.mxu0 0.0
    %7833 = vmatprep.subr.mxu0 0.0
    %7834 = vmatpush1.msra.mxu0 0.0
    %7835 = vmatprep.subr.mxu0 0.0
    %7836 = vmatpush1.msra.mxu0 0.0
    %7837 = vmatprep.subr.mxu0 0.0
    %7838 = vmatpush1.msra.mxu0 0.0
    %7839 = vmatprep.subr.mxu0 0.0
    %7840 = vmatpush1.msra.mxu0 0.0
    %7841 = vmatprep.subr.mxu0 0.0
    %7842 = vmatpush1.msra.mxu0 0.0
    %7843 = vmatprep.subr.mxu0 0.0
    %7844 = vmatpush1.msra.mxu0 0.0
    %7845 = vmatprep.subr.mxu0 0.0
    %7846 = vmatpush1.msra.mxu0 0.0
    %7847 = vmatprep.subr.mxu0 0.0
    %7848 = vmatpush1.msra.mxu0 0.0
    %7849 = vmatprep.subr.mxu0 0.0
    %7850 = vmatpush1.msra.mxu0 0.0
    %7851 = vmatprep.subr.mxu0 0.0
    %7852 = vmatpush1.msra.mxu0 0.0
    %7853 = vmatprep.subr.mxu0 0.0
    %7854 = vmatpush1.msra.mxu0 0.0
    %7855 = vmatprep.subr.mxu0 0.0
    %7856 = vmatpush1.msra.mxu0 0.0
    %7857 = vmatprep.subr.mxu0 0.0
    %7858 = vmatpush1.msra.mxu0 0.0
    %7859 = vmatprep.subr.mxu0 0.0
    %7860 = vmatpush1.msra.mxu0 0.0
    %7861 = vmatprep.subr.mxu0 0.0
    %7862 = vmatpush1.msra.mxu0 0.0
    %7863 = vmatprep.subr.mxu0 0.0
    %7864 = vmatpush1.msra.mxu0 0.0
    %7865 = vmatprep.subr.mxu0 0.0
    %7866 = vmatpush1.msra.mxu0 0.0
    %7867 = vmatprep.subr.mxu0 0.0
    %7868 = vmatpush1.msra.mxu0 0.0
    %7869 = vmatprep.subr.mxu0 0.0
    %7870 = vmatpush1.msra.mxu0 0.0
    %7871 = vmatprep.subr.mxu0 0.0
    %7872 = vmatpush1.msra.mxu0 0.0
    %7873 = vmatprep.subr.mxu0 0.0
    %7874 = vmatpush1.msra.mxu0 0.0
    %7875 = vmatprep.mubr.f32.mxu0 0.0
    %7876 = vmatmul.mubr.f32.gmra.mrb[0].mxu0 %v6312
    %v7877 = vpop.f32.mrb[0].mxu0
    %v7878 = vadd.f32 0.0, %v7877
    %v7879 = vpop.f32.mrb[0].mxu0
    %7880 = vdwg.mxu0
    %7881 = vmatprep.subr.mxu0 0.0
    %7882 = vmatpush1.msra.mxu0 %v7809
    %7883 = vmatprep.subr.mxu0 0.0
    %7884 = vmatpush1.msra.mxu0 %v7810
    %7885 = vmatprep.subr.mxu0 0.0
    %7886 = vmatpush1.msra.mxu0 0.0
    %7887 = vmatprep.subr.mxu0 0.0
    %7888 = vmatpush1.msra.mxu0 0.0
    %7889 = vmatprep.subr.mxu0 0.0
    %7890 = vmatpush1.msra.mxu0 0.0
    %7891 = vmatprep.subr.mxu0 0.0
    %7892 = vmatpush1.msra.mxu0 0.0
    %7893 = vmatprep.subr.mxu0 0.0
    %7894 = vmatpush1.msra.mxu0 0.0
    %7895 = vmatprep.subr.mxu0 0.0
    %7896 = vmatpush1.msra.mxu0 0.0
    %7897 = vmatprep.subr.mxu0 0.0
    %7898 = vmatpush1.msra.mxu0 0.0
    %7899 = vmatprep.subr.mxu0 0.0
    %7900 = vmatpush1.msra.mxu0 0.0
    %7901 = vmatprep.subr.mxu0 0.0
    %7902 = vmatpush1.msra.mxu0 0.0
    %7903 = vmatprep.subr.mxu0 0.0
    %7904 = vmatpush1.msra.mxu0 0.0
    %7905 = vmatprep.subr.mxu0 0.0
    %7906 = vmatpush1.msra.mxu0 0.0
    %7907 = vmatprep.subr.mxu0 0.0
    %7908 = vmatpush1.msra.mxu0 0.0
    %7909 = vmatprep.subr.mxu0 0.0
    %7910 = vmatpush1.msra.mxu0 0.0
    %7911 = vmatprep.subr.mxu0 0.0
    %7912 = vmatpush1.msra.mxu0 0.0
    %7913 = vmatprep.subr.mxu0 0.0
    %7914 = vmatpush1.msra.mxu0 0.0
    %7915 = vmatprep.subr.mxu0 0.0
    %7916 = vmatpush1.msra.mxu0 0.0
    %7917 = vmatprep.subr.mxu0 0.0
    %7918 = vmatpush1.msra.mxu0 0.0
    %7919 = vmatprep.subr.mxu0 0.0
    %7920 = vmatpush1.msra.mxu0 0.0
    %7921 = vmatprep.subr.mxu0 0.0
    %7922 = vmatpush1.msra.mxu0 0.0
    %7923 = vmatprep.subr.mxu0 0.0
    %7924 = vmatpush1.msra.mxu0 0.0
    %7925 = vmatprep.subr.mxu0 0.0
    %7926 = vmatpush1.msra.mxu0 0.0
    %7927 = vmatprep.subr.mxu0 0.0
    %7928 = vmatpush1.msra.mxu0 0.0
    %7929 = vmatprep.subr.mxu0 0.0
    %7930 = vmatpush1.msra.mxu0 0.0
    %7931 = vmatprep.subr.mxu0 0.0
    %7932 = vmatpush1.msra.mxu0 0.0
    %7933 = vmatprep.subr.mxu0 0.0
    %7934 = vmatpush1.msra.mxu0 0.0
    %7935 = vmatprep.subr.mxu0 0.0
    %7936 = vmatpush1.msra.mxu0 0.0
    %7937 = vmatprep.subr.mxu0 0.0
    %7938 = vmatpush1.msra.mxu0 0.0
    %7939 = vmatprep.subr.mxu0 0.0
    %7940 = vmatpush1.msra.mxu0 0.0
    %7941 = vmatprep.subr.mxu0 0.0
    %7942 = vmatpush1.msra.mxu0 0.0
    %7943 = vmatprep.subr.mxu0 0.0
    %7944 = vmatpush1.msra.mxu0 0.0
    %7945 = vmatprep.mubr.f32.mxu0 0.0
    %7946 = vmatmul.mubr.f32.gmra.mrb[0].mxu0 %v6384
    %v7947 = vpop.f32.mrb[0].mxu0
    %v7948 = vadd.f32 0.0, %v7947
    %v7949 = vpop.f32.mrb[0].mxu0
    %7950 = vdwg.mxu0
    %v7951 = vmax.f32 %v7878, %v7948
    %v7953 = vsel %vm6153, %v5151, 0
    %v7956 = vsel %vm6153, %v5152, 0
    %7958 = vmatprep.subr.mxu0 0.0
    %7959 = vmatpush1.msra.mxu0 %v1015
    %7960 = vmatprep.subr.mxu0 0.0
    %7961 = vmatpush1.msra.mxu0 0.0
    %7962 = vmatprep.subr.mxu0 0.0
    %7963 = vmatpush1.msra.mxu0 0.0
    %7964 = vmatprep.subr.mxu0 0.0
    %7965 = vmatpush1.msra.mxu0 0.0
    %7966 = vmatprep.subr.mxu0 0.0
    %7967 = vmatpush1.msra.mxu0 0.0
    %7968 = vmatprep.subr.mxu0 0.0
    %7969 = vmatpush1.msra.mxu0 0.0
    %7970 = vmatprep.subr.mxu0 0.0
    %7971 = vmatpush1.msra.mxu0 0.0
    %7972 = vmatprep.subr.mxu0 0.0
    %7973 = vmatpush1.msra.mxu0 0.0
    %7974 = vmatprep.subr.mxu0 0.0
    %7975 = vmatpush1.msra.mxu0 0.0
    %7976 = vmatprep.subr.mxu0 0.0
    %7977 = vmatpush1.msra.mxu0 0.0
    %7978 = vmatprep.subr.mxu0 0.0
    %7979 = vmatpush1.msra.mxu0 0.0
    %7980 = vmatprep.subr.mxu0 0.0
    %7981 = vmatpush1.msra.mxu0 0.0
    %7982 = vmatprep.subr.mxu0 0.0
    %7983 = vmatpush1.msra.mxu0 0.0
    %7984 = vmatprep.subr.mxu0 0.0
    %7985 = vmatpush1.msra.mxu0 0.0
    %7986 = vmatprep.subr.mxu0 0.0
    %7987 = vmatpush1.msra.mxu0 0.0
    %7988 = vmatprep.subr.mxu0 0.0
    %7989 = vmatpush1.msra.mxu0 0.0
    %7990 = vmatprep.subr.mxu0 0.0
    %7991 = vmatpush1.msra.mxu0 0.0
    %7992 = vmatprep.subr.mxu0 0.0
    %7993 = vmatpush1.msra.mxu0 0.0
    %7994 = vmatprep.subr.mxu0 0.0
    %7995 = vmatpush1.msra.mxu0 0.0
    %7996 = vmatprep.subr.mxu0 0.0
    %7997 = vmatpush1.msra.mxu0 0.0
    %7998 = vmatprep.subr.mxu0 0.0
    %7999 = vmatpush1.msra.mxu0 0.0
    %8000 = vmatprep.subr.mxu0 0.0
    %8001 = vmatpush1.msra.mxu0 0.0
    %8002 = vmatprep.subr.mxu0 0.0
    %8003 = vmatpush1.msra.mxu0 0.0
    %8004 = vmatprep.subr.mxu0 0.0
    %8005 = vmatpush1.msra.mxu0 0.0
    %8006 = vmatprep.subr.mxu0 0.0
    %8007 = vmatpush1.msra.mxu0 0.0
    %8008 = vmatprep.subr.mxu0 0.0
    %8009 = vmatpush1.msra.mxu0 0.0
    %8010 = vmatprep.subr.mxu0 0.0
    %8011 = vmatpush1.msra.mxu0 0.0
    %8012 = vmatprep.subr.mxu0 0.0
    %8013 = vmatpush1.msra.mxu0 0.0
    %8014 = vmatprep.subr.mxu0 0.0
    %8015 = vmatpush1.msra.mxu0 0.0
    %8016 = vmatprep.subr.mxu0 0.0
    %8017 = vmatpush1.msra.mxu0 0.0
    %8018 = vmatprep.subr.mxu0 0.0
    %8019 = vmatpush1.msra.mxu0 0.0
    %8020 = vmatprep.subr.mxu0 0.0
    %8021 = vmatpush1.msra.mxu0 0.0
    %8022 = vmatprep.mubr.f32.mxu0 0.0
    %8023 = vmatmul.mubr.f32.gmra.mrb[0].mxu0 %v7953
    %v8024 = vpop.f32.mrb[0].mxu0
    %v8025 = vadd.f32 0.0, %v8024
    %v8026 = vpop.f32.mrb[0].mxu0
    %8027 = vmatprep.mubr.f32.mxu0 0.0
    %8028 = vmatmul.mubr.f32.gmra.mrb[0].mxu0 %v7956
    %v8029 = vpop.f32.mrb[0].mxu0
    %v8030 = vadd.f32 0.0, %v8029
    %v8031 = vpop.f32.mrb[0].mxu0
    %8032 = vdwg.mxu0
    %8033 = vmatprep.subr.mxu0 0.0
    %8034 = vmatpush1.msra.mxu0 %v1025
    %8035 = vmatprep.subr.mxu0 0.0
    %8036 = vmatpush1.msra.mxu0 0.0
    %8037 = vmatprep.subr.mxu0 0.0
    %8038 = vmatpush1.msra.mxu0 0.0
    %8039 = vmatprep.subr.mxu0 0.0
    %8040 = vmatpush1.msra.mxu0 0.0
    %8041 = vmatprep.subr.mxu0 0.0
    %8042 = vmatpush1.msra.mxu0 0.0
    %8043 = vmatprep.subr.mxu0 0.0
    %8044 = vmatpush1.msra.mxu0 0.0
    %8045 = vmatprep.subr.mxu0 0.0
    %8046 = vmatpush1.msra.mxu0 0.0
    %8047 = vmatprep.subr.mxu0 0.0
    %8048 = vmatpush1.msra.mxu0 0.0
    %8049 = vmatprep.subr.mxu0 0.0
    %8050 = vmatpush1.msra.mxu0 0.0
    %8051 = vmatprep.subr.mxu0 0.0
    %8052 = vmatpush1.msra.mxu0 0.0
    %8053 = vmatprep.subr.mxu0 0.0
    %8054 = vmatpush1.msra.mxu0 0.0
    %8055 = vmatprep.subr.mxu0 0.0
    %8056 = vmatpush1.msra.mxu0 0.0
    %8057 = vmatprep.subr.mxu0 0.0
    %8058 = vmatpush1.msra.mxu0 0.0
    %8059 = vmatprep.subr.mxu0 0.0
    %8060 = vmatpush1.msra.mxu0 0.0
    %8061 = vmatprep.subr.mxu0 0.0
    %8062 = vmatpush1.msra.mxu0 0.0
    %8063 = vmatprep.subr.mxu0 0.0
    %8064 = vmatpush1.msra.mxu0 0.0
    %8065 = vmatprep.subr.mxu0 0.0
    %8066 = vmatpush1.msra.mxu0 0.0
    %8067 = vmatprep.subr.mxu0 0.0
    %8068 = vmatpush1.msra.mxu0 0.0
    %8069 = vmatprep.subr.mxu0 0.0
    %8070 = vmatpush1.msra.mxu0 0.0
    %8071 = vmatprep.subr.mxu0 0.0
    %8072 = vmatpush1.msra.mxu0 0.0
    %8073 = vmatprep.subr.mxu0 0.0
    %8074 = vmatpush1.msra.mxu0 0.0
    %8075 = vmatprep.subr.mxu0 0.0
    %8076 = vmatpush1.msra.mxu0 0.0
    %8077 = vmatprep.subr.mxu0 0.0
    %8078 = vmatpush1.msra.mxu0 0.0
    %8079 = vmatprep.subr.mxu0 0.0
    %8080 = vmatpush1.msra.mxu0 0.0
    %8081 = vmatprep.subr.mxu0 0.0
    %8082 = vmatpush1.msra.mxu0 0.0
    %8083 = vmatprep.subr.mxu0 0.0
    %8084 = vmatpush1.msra.mxu0 0.0
    %8085 = vmatprep.subr.mxu0 0.0
    %8086 = vmatpush1.msra.mxu0 0.0
    %8087 = vmatprep.subr.mxu0 0.0
    %8088 = vmatpush1.msra.mxu0 0.0
    %8089 = vmatprep.subr.mxu0 0.0
    %8090 = vmatpush1.msra.mxu0 0.0
    %8091 = vmatprep.subr.mxu0 0.0
    %8092 = vmatpush1.msra.mxu0 0.0
    %8093 = vmatprep.subr.mxu0 0.0
    %8094 = vmatpush1.msra.mxu0 0.0
    %8095 = vmatprep.subr.mxu0 0.0
    %8096 = vmatpush1.msra.mxu0 0.0
    %8097 = vmatprep.mubr.f32.mxu0 0.0
    %8098 = vmatmul.mubr.f32.gmra.mrb[0].mxu0 %v7953
    %v8099 = vpop.f32.mrb[0].mxu0
    %v8100 = vadd.f32 0.0, %v8099
    %v8101 = vpop.f32.mrb[0].mxu0
    %8102 = vmatprep.mubr.f32.mxu0 0.0
    %8103 = vmatmul.mubr.f32.gmra.mrb[0].mxu0 %v7956
    %v8104 = vpop.f32.mrb[0].mxu0
    %v8105 = vadd.f32 0.0, %v8104
    %v8106 = vpop.f32.mrb[0].mxu0
    %8107 = vdwg.mxu0
    %v8108 = vmax.f32 %v8025, %v8100
    %v8109 = vmax.f32 %v8030, %v8105
    %8110 = vmatprep.subr.mxu0 0.0
    %8111 = vmatpush1.msra.mxu0 %v8108
    %8112 = vmatprep.subr.mxu0 0.0
    %8113 = vmatpush1.msra.mxu0 %v8109
    %8114 = vmatprep.subr.mxu0 0.0
    %8115 = vmatpush1.msra.mxu0 0.0
    %8116 = vmatprep.subr.mxu0 0.0
    %8117 = vmatpush1.msra.mxu0 0.0
    %8118 = vmatprep.subr.mxu0 0.0
    %8119 = vmatpush1.msra.mxu0 0.0
    %8120 = vmatprep.subr.mxu0 0.0
    %8121 = vmatpush1.msra.mxu0 0.0
    %8122 = vmatprep.subr.mxu0 0.0
    %8123 = vmatpush1.msra.mxu0 0.0
    %8124 = vmatprep.subr.mxu0 0.0
    %8125 = vmatpush1.msra.mxu0 0.0
    %8126 = vmatprep.subr.mxu0 0.0
    %8127 = vmatpush1.msra.mxu0 0.0
    %8128 = vmatprep.subr.mxu0 0.0
    %8129 = vmatpush1.msra.mxu0 0.0
    %8130 = vmatprep.subr.mxu0 0.0
    %8131 = vmatpush1.msra.mxu0 0.0
    %8132 = vmatprep.subr.mxu0 0.0
    %8133 = vmatpush1.msra.mxu0 0.0
    %8134 = vmatprep.subr.mxu0 0.0
    %8135 = vmatpush1.msra.mxu0 0.0
    %8136 = vmatprep.subr.mxu0 0.0
    %8137 = vmatpush1.msra.mxu0 0.0
    %8138 = vmatprep.subr.mxu0 0.0
    %8139 = vmatpush1.msra.mxu0 0.0
    %8140 = vmatprep.subr.mxu0 0.0
    %8141 = vmatpush1.msra.mxu0 0.0
    %8142 = vmatprep.subr.mxu0 0.0
    %8143 = vmatpush1.msra.mxu0 0.0
    %8144 = vmatprep.subr.mxu0 0.0
    %8145 = vmatpush1.msra.mxu0 0.0
    %8146 = vmatprep.subr.mxu0 0.0
    %8147 = vmatpush1.msra.mxu0 0.0
    %8148 = vmatprep.subr.mxu0 0.0
    %8149 = vmatpush1.msra.mxu0 0.0
    %8150 = vmatprep.subr.mxu0 0.0
    %8151 = vmatpush1.msra.mxu0 0.0
    %8152 = vmatprep.subr.mxu0 0.0
    %8153 = vmatpush1.msra.mxu0 0.0
    %8154 = vmatprep.subr.mxu0 0.0
    %8155 = vmatpush1.msra.mxu0 0.0
    %8156 = vmatprep.subr.mxu0 0.0
    %8157 = vmatpush1.msra.mxu0 0.0
    %8158 = vmatprep.subr.mxu0 0.0
    %8159 = vmatpush1.msra.mxu0 0.0
    %8160 = vmatprep.subr.mxu0 0.0
    %8161 = vmatpush1.msra.mxu0 0.0
    %8162 = vmatprep.subr.mxu0 0.0
    %8163 = vmatpush1.msra.mxu0 0.0
    %8164 = vmatprep.subr.mxu0 0.0
    %8165 = vmatpush1.msra.mxu0 0.0
    %8166 = vmatprep.subr.mxu0 0.0
    %8167 = vmatpush1.msra.mxu0 0.0
    %8168 = vmatprep.subr.mxu0 0.0
    %8169 = vmatpush1.msra.mxu0 0.0
    %8170 = vmatprep.subr.mxu0 0.0
    %8171 = vmatpush1.msra.mxu0 0.0
    %8172 = vmatprep.subr.mxu0 0.0
    %8173 = vmatpush1.msra.mxu0 0.0
    %8174 = vmatprep.mubr.f32.mxu0 0.0
    %8175 = vmatmul.mubr.f32.gmra.mrb[0].mxu0 %v6312
    %v8176 = vpop.f32.mrb[0].mxu0
    %v8177 = vadd.f32 0.0, %v8176
    %v8178 = vpop.f32.mrb[0].mxu0
    %8179 = vdwg.mxu0
    %8180 = vmatprep.subr.mxu0 0.0
    %8181 = vmatpush1.msra.mxu0 %v8108
    %8182 = vmatprep.subr.mxu0 0.0
    %8183 = vmatpush1.msra.mxu0 %v8109
    %8184 = vmatprep.subr.mxu0 0.0
    %8185 = vmatpush1.msra.mxu0 0.0
    %8186 = vmatprep.subr.mxu0 0.0
    %8187 = vmatpush1.msra.mxu0 0.0
    %8188 = vmatprep.subr.mxu0 0.0
    %8189 = vmatpush1.msra.mxu0 0.0
    %8190 = vmatprep.subr.mxu0 0.0
    %8191 = vmatpush1.msra.mxu0 0.0
    %8192 = vmatprep.subr.mxu0 0.0
    %8193 = vmatpush1.msra.mxu0 0.0
    %8194 = vmatprep.subr.mxu0 0.0
    %8195 = vmatpush1.msra.mxu0 0.0
    %8196 = vmatprep.subr.mxu0 0.0
    %8197 = vmatpush1.msra.mxu0 0.0
    %8198 = vmatprep.subr.mxu0 0.0
    %8199 = vmatpush1.msra.mxu0 0.0
    %8200 = vmatprep.subr.mxu0 0.0
    %8201 = vmatpush1.msra.mxu0 0.0
    %8202 = vmatprep.subr.mxu0 0.0
    %8203 = vmatpush1.msra.mxu0 0.0
    %8204 = vmatprep.subr.mxu0 0.0
    %8205 = vmatpush1.msra.mxu0 0.0
    %8206 = vmatprep.subr.mxu0 0.0
    %8207 = vmatpush1.msra.mxu0 0.0
    %8208 = vmatprep.subr.mxu0 0.0
    %8209 = vmatpush1.msra.mxu0 0.0
    %8210 = vmatprep.subr.mxu0 0.0
    %8211 = vmatpush1.msra.mxu0 0.0
    %8212 = vmatprep.subr.mxu0 0.0
    %8213 = vmatpush1.msra.mxu0 0.0
    %8214 = vmatprep.subr.mxu0 0.0
    %8215 = vmatpush1.msra.mxu0 0.0
    %8216 = vmatprep.subr.mxu0 0.0
    %8217 = vmatpush1.msra.mxu0 0.0
    %8218 = vmatprep.subr.mxu0 0.0
    %8219 = vmatpush1.msra.mxu0 0.0
    %8220 = vmatprep.subr.mxu0 0.0
    %8221 = vmatpush1.msra.mxu0 0.0
    %8222 = vmatprep.subr.mxu0 0.0
    %8223 = vmatpush1.msra.mxu0 0.0
    %8224 = vmatprep.subr.mxu0 0.0
    %8225 = vmatpush1.msra.mxu0 0.0
    %8226 = vmatprep.subr.mxu0 0.0
    %8227 = vmatpush1.msra.mxu0 0.0
    %8228 = vmatprep.subr.mxu0 0.0
    %8229 = vmatpush1.msra.mxu0 0.0
    %8230 = vmatprep.subr.mxu0 0.0
    %8231 = vmatpush1.msra.mxu0 0.0
    %8232 = vmatprep.subr.mxu0 0.0
    %8233 = vmatpush1.msra.mxu0 0.0
    %8234 = vmatprep.subr.mxu0 0.0
    %8235 = vmatpush1.msra.mxu0 0.0
    %8236 = vmatprep.subr.mxu0 0.0
    %8237 = vmatpush1.msra.mxu0 0.0
    %8238 = vmatprep.subr.mxu0 0.0
    %8239 = vmatpush1.msra.mxu0 0.0
    %8240 = vmatprep.subr.mxu0 0.0
    %8241 = vmatpush1.msra.mxu0 0.0
    %8242 = vmatprep.subr.mxu0 0.0
    %8243 = vmatpush1.msra.mxu0 0.0
    %8244 = vmatprep.mubr.f32.mxu0 0.0
    %8245 = vmatmul.mubr.f32.gmra.mrb[0].mxu0 %v6384
    %v8246 = vpop.f32.mrb[0].mxu0
    %v8247 = vadd.f32 0.0, %v8246
    %v8248 = vpop.f32.mrb[0].mxu0
    %8249 = vdwg.mxu0
    %v8250 = vmax.f32 %v8177, %v8247
    %v8252 = vsel %vm6153, %v5351, 0
    %v8255 = vsel %vm6153, %v5352, 0
    %8257 = vmatprep.subr.mxu0 0.0
    %8258 = vmatpush1.msra.mxu0 %v1015
    %8259 = vmatprep.subr.mxu0 0.0
    %8260 = vmatpush1.msra.mxu0 0.0
    %8261 = vmatprep.subr.mxu0 0.0
    %8262 = vmatpush1.msra.mxu0 0.0
    %8263 = vmatprep.subr.mxu0 0.0
    %8264 = vmatpush1.msra.mxu0 0.0
    %8265 = vmatprep.subr.mxu0 0.0
    %8266 = vmatpush1.msra.mxu0 0.0
    %8267 = vmatprep.subr.mxu0 0.0
    %8268 = vmatpush1.msra.mxu0 0.0
    %8269 = vmatprep.subr.mxu0 0.0
    %8270 = vmatpush1.msra.mxu0 0.0
    %8271 = vmatprep.subr.mxu0 0.0
    %8272 = vmatpush1.msra.mxu0 0.0
    %8273 = vmatprep.subr.mxu0 0.0
    %8274 = vmatpush1.msra.mxu0 0.0
    %8275 = vmatprep.subr.mxu0 0.0
    %8276 = vmatpush1.msra.mxu0 0.0
    %8277 = vmatprep.subr.mxu0 0.0
    %8278 = vmatpush1.msra.mxu0 0.0
    %8279 = vmatprep.subr.mxu0 0.0
    %8280 = vmatpush1.msra.mxu0 0.0
    %8281 = vmatprep.subr.mxu0 0.0
    %8282 = vmatpush1.msra.mxu0 0.0
    %8283 = vmatprep.subr.mxu0 0.0
    %8284 = vmatpush1.msra.mxu0 0.0
    %8285 = vmatprep.subr.mxu0 0.0
    %8286 = vmatpush1.msra.mxu0 0.0
    %8287 = vmatprep.subr.mxu0 0.0
    %8288 = vmatpush1.msra.mxu0 0.0
    %8289 = vmatprep.subr.mxu0 0.0
    %8290 = vmatpush1.msra.mxu0 0.0
    %8291 = vmatprep.subr.mxu0 0.0
    %8292 = vmatpush1.msra.mxu0 0.0
    %8293 = vmatprep.subr.mxu0 0.0
    %8294 = vmatpush1.msra.mxu0 0.0
    %8295 = vmatprep.subr.mxu0 0.0
    %8296 = vmatpush1.msra.mxu0 0.0
    %8297 = vmatprep.subr.mxu0 0.0
    %8298 = vmatpush1.msra.mxu0 0.0
    %8299 = vmatprep.subr.mxu0 0.0
    %8300 = vmatpush1.msra.mxu0 0.0
    %8301 = vmatprep.subr.mxu0 0.0
    %8302 = vmatpush1.msra.mxu0 0.0
    %8303 = vmatprep.subr.mxu0 0.0
    %8304 = vmatpush1.msra.mxu0 0.0
    %8305 = vmatprep.subr.mxu0 0.0
    %8306 = vmatpush1.msra.mxu0 0.0
    %8307 = vmatprep.subr.mxu0 0.0
    %8308 = vmatpush1.msra.mxu0 0.0
    %8309 = vmatprep.subr.mxu0 0.0
    %8310 = vmatpush1.msra.mxu0 0.0
    %8311 = vmatprep.subr.mxu0 0.0
    %8312 = vmatpush1.msra.mxu0 0.0
    %8313 = vmatprep.subr.mxu0 0.0
    %8314 = vmatpush1.msra.mxu0 0.0
    %8315 = vmatprep.subr.mxu0 0.0
    %8316 = vmatpush1.msra.mxu0 0.0
    %8317 = vmatprep.subr.mxu0 0.0
    %8318 = vmatpush1.msra.mxu0 0.0
    %8319 = vmatprep.subr.mxu0 0.0
    %8320 = vmatpush1.msra.mxu0 0.0
    %8321 = vmatprep.mubr.f32.mxu0 0.0
    %8322 = vmatmul.mubr.f32.gmra.mrb[0].mxu0 %v8252
    %v8323 = vpop.f32.mrb[0].mxu0
    %v8324 = vadd.f32 0.0, %v8323
    %v8325 = vpop.f32.mrb[0].mxu0
    %8326 = vmatprep.mubr.f32.mxu0 0.0
    %8327 = vmatmul.mubr.f32.gmra.mrb[0].mxu0 %v8255
    %v8328 = vpop.f32.mrb[0].mxu0
    %v8329 = vadd.f32 0.0, %v8328
    %v8330 = vpop.f32.mrb[0].mxu0
    %8331 = vdwg.mxu0
    %8332 = vmatprep.subr.mxu0 0.0
    %8333 = vmatpush1.msra.mxu0 %v1025
    %8334 = vmatprep.subr.mxu0 0.0
    %8335 = vmatpush1.msra.mxu0 0.0
    %8336 = vmatprep.subr.mxu0 0.0
    %8337 = vmatpush1.msra.mxu0 0.0
    %8338 = vmatprep.subr.mxu0 0.0
    %8339 = vmatpush1.msra.mxu0 0.0
    %8340 = vmatprep.subr.mxu0 0.0
    %8341 = vmatpush1.msra.mxu0 0.0
    %8342 = vmatprep.subr.mxu0 0.0
    %8343 = vmatpush1.msra.mxu0 0.0
    %8344 = vmatprep.subr.mxu0 0.0
    %8345 = vmatpush1.msra.mxu0 0.0
    %8346 = vmatprep.subr.mxu0 0.0
    %8347 = vmatpush1.msra.mxu0 0.0
    %8348 = vmatprep.subr.mxu0 0.0
    %8349 = vmatpush1.msra.mxu0 0.0
    %8350 = vmatprep.subr.mxu0 0.0
    %8351 = vmatpush1.msra.mxu0 0.0
    %8352 = vmatprep.subr.mxu0 0.0
    %8353 = vmatpush1.msra.mxu0 0.0
    %8354 = vmatprep.subr.mxu0 0.0
    %8355 = vmatpush1.msra.mxu0 0.0
    %8356 = vmatprep.subr.mxu0 0.0
    %8357 = vmatpush1.msra.mxu0 0.0
    %8358 = vmatprep.subr.mxu0 0.0
    %8359 = vmatpush1.msra.mxu0 0.0
    %8360 = vmatprep.subr.mxu0 0.0
    %8361 = vmatpush1.msra.mxu0 0.0
    %8362 = vmatprep.subr.mxu0 0.0
    %8363 = vmatpush1.msra.mxu0 0.0
    %8364 = vmatprep.subr.mxu0 0.0
    %8365 = vmatpush1.msra.mxu0 0.0
    %8366 = vmatprep.subr.mxu0 0.0
    %8367 = vmatpush1.msra.mxu0 0.0
    %8368 = vmatprep.subr.mxu0 0.0
    %8369 = vmatpush1.msra.mxu0 0.0
    %8370 = vmatprep.subr.mxu0 0.0
    %8371 = vmatpush1.msra.mxu0 0.0
    %8372 = vmatprep.subr.mxu0 0.0
    %8373 = vmatpush1.msra.mxu0 0.0
    %8374 = vmatprep.subr.mxu0 0.0
    %8375 = vmatpush1.msra.mxu0 0.0
    %8376 = vmatprep.subr.mxu0 0.0
    %8377 = vmatpush1.msra.mxu0 0.0
    %8378 = vmatprep.subr.mxu0 0.0
    %8379 = vmatpush1.msra.mxu0 0.0
    %8380 = vmatprep.subr.mxu0 0.0
    %8381 = vmatpush1.msra.mxu0 0.0
    %8382 = vmatprep.subr.mxu0 0.0
    %8383 = vmatpush1.msra.mxu0 0.0
    %8384 = vmatprep.subr.mxu0 0.0
    %8385 = vmatpush1.msra.mxu0 0.0
    %8386 = vmatprep.subr.mxu0 0.0
    %8387 = vmatpush1.msra.mxu0 0.0
    %8388 = vmatprep.subr.mxu0 0.0
    %8389 = vmatpush1.msra.mxu0 0.0
    %8390 = vmatprep.subr.mxu0 0.0
    %8391 = vmatpush1.msra.mxu0 0.0
    %8392 = vmatprep.subr.mxu0 0.0
    %8393 = vmatpush1.msra.mxu0 0.0
    %8394 = vmatprep.subr.mxu0 0.0
    %8395 = vmatpush1.msra.mxu0 0.0
    %8396 = vmatprep.mubr.f32.mxu0 0.0
    %8397 = vmatmul.mubr.f32.gmra.mrb[0].mxu0 %v8252
    %v8398 = vpop.f32.mrb[0].mxu0
    %v8399 = vadd.f32 0.0, %v8398
    %v8400 = vpop.f32.mrb[0].mxu0
    %8401 = vmatprep.mubr.f32.mxu0 0.0
    %8402 = vmatmul.mubr.f32.gmra.mrb[0].mxu0 %v8255
    %v8403 = vpop.f32.mrb[0].mxu0
    %v8404 = vadd.f32 0.0, %v8403
    %v8405 = vpop.f32.mrb[0].mxu0
    %8406 = vdwg.mxu0
    %v8407 = vmax.f32 %v8324, %v8399
    %v8408 = vmax.f32 %v8329, %v8404
    %8409 = vmatprep.subr.mxu0 0.0
    %8410 = vmatpush1.msra.mxu0 %v8407
    %8411 = vmatprep.subr.mxu0 0.0
    %8412 = vmatpush1.msra.mxu0 %v8408
    %8413 = vmatprep.subr.mxu0 0.0
    %8414 = vmatpush1.msra.mxu0 0.0
    %8415 = vmatprep.subr.mxu0 0.0
    %8416 = vmatpush1.msra.mxu0 0.0
    %8417 = vmatprep.subr.mxu0 0.0
    %8418 = vmatpush1.msra.mxu0 0.0
    %8419 = vmatprep.subr.mxu0 0.0
    %8420 = vmatpush1.msra.mxu0 0.0
    %8421 = vmatprep.subr.mxu0 0.0
    %8422 = vmatpush1.msra.mxu0 0.0
    %8423 = vmatprep.subr.mxu0 0.0
    %8424 = vmatpush1.msra.mxu0 0.0
    %8425 = vmatprep.subr.mxu0 0.0
    %8426 = vmatpush1.msra.mxu0 0.0
    %8427 = vmatprep.subr.mxu0 0.0
    %8428 = vmatpush1.msra.mxu0 0.0
    %8429 = vmatprep.subr.mxu0 0.0
    %8430 = vmatpush1.msra.mxu0 0.0
    %8431 = vmatprep.subr.mxu0 0.0
    %8432 = vmatpush1.msra.mxu0 0.0
    %8433 = vmatprep.subr.mxu0 0.0
    %8434 = vmatpush1.msra.mxu0 0.0
    %8435 = vmatprep.subr.mxu0 0.0
    %8436 = vmatpush1.msra.mxu0 0.0
    %8437 = vmatprep.subr.mxu0 0.0
    %8438 = vmatpush1.msra.mxu0 0.0
    %8439 = vmatprep.subr.mxu0 0.0
    %8440 = vmatpush1.msra.mxu0 0.0
    %8441 = vmatprep.subr.mxu0 0.0
    %8442 = vmatpush1.msra.mxu0 0.0
    %8443 = vmatprep.subr.mxu0 0.0
    %8444 = vmatpush1.msra.mxu0 0.0
    %8445 = vmatprep.subr.mxu0 0.0
    %8446 = vmatpush1.msra.mxu0 0.0
    %8447 = vmatprep.subr.mxu0 0.0
    %8448 = vmatpush1.msra.mxu0 0.0
    %8449 = vmatprep.subr.mxu0 0.0
    %8450 = vmatpush1.msra.mxu0 0.0
    %8451 = vmatprep.subr.mxu0 0.0
    %8452 = vmatpush1.msra.mxu0 0.0
    %8453 = vmatprep.subr.mxu0 0.0
    %8454 = vmatpush1.msra.mxu0 0.0
    %8455 = vmatprep.subr.mxu0 0.0
    %8456 = vmatpush1.msra.mxu0 0.0
    %8457 = vmatprep.subr.mxu0 0.0
    %8458 = vmatpush1.msra.mxu0 0.0
    %8459 = vmatprep.subr.mxu0 0.0
    %8460 = vmatpush1.msra.mxu0 0.0
    %8461 = vmatprep.subr.mxu0 0.0
    %8462 = vmatpush1.msra.mxu0 0.0
    %8463 = vmatprep.subr.mxu0 0.0
    %8464 = vmatpush1.msra.mxu0 0.0
    %8465 = vmatprep.subr.mxu0 0.0
    %8466 = vmatpush1.msra.mxu0 0.0
    %8467 = vmatprep.subr.mxu0 0.0
    %8468 = vmatpush1.msra.mxu0 0.0
    %8469 = vmatprep.subr.mxu0 0.0
    %8470 = vmatpush1.msra.mxu0 0.0
    %8471 = vmatprep.subr.mxu0 0.0
    %8472 = vmatpush1.msra.mxu0 0.0
    %8473 = vmatprep.mubr.f32.mxu0 0.0
    %8474 = vmatmul.mubr.f32.gmra.mrb[0].mxu0 %v6312
    %v8475 = vpop.f32.mrb[0].mxu0
    %v8476 = vadd.f32 0.0, %v8475
    %v8477 = vpop.f32.mrb[0].mxu0
    %8478 = vdwg.mxu0
    %8479 = vmatprep.subr.mxu0 0.0
    %8480 = vmatpush1.msra.mxu0 %v8407
    %8481 = vmatprep.subr.mxu0 0.0
    %8482 = vmatpush1.msra.mxu0 %v8408
    %8483 = vmatprep.subr.mxu0 0.0
    %8484 = vmatpush1.msra.mxu0 0.0
    %8485 = vmatprep.subr.mxu0 0.0
    %8486 = vmatpush1.msra.mxu0 0.0
    %8487 = vmatprep.subr.mxu0 0.0
    %8488 = vmatpush1.msra.mxu0 0.0
    %8489 = vmatprep.subr.mxu0 0.0
    %8490 = vmatpush1.msra.mxu0 0.0
    %8491 = vmatprep.subr.mxu0 0.0
    %8492 = vmatpush1.msra.mxu0 0.0
    %8493 = vmatprep.subr.mxu0 0.0
    %8494 = vmatpush1.msra.mxu0 0.0
    %8495 = vmatprep.subr.mxu0 0.0
    %8496 = vmatpush1.msra.mxu0 0.0
    %8497 = vmatprep.subr.mxu0 0.0
    %8498 = vmatpush1.msra.mxu0 0.0
    %8499 = vmatprep.subr.mxu0 0.0
    %8500 = vmatpush1.msra.mxu0 0.0
    %8501 = vmatprep.subr.mxu0 0.0
    %8502 = vmatpush1.msra.mxu0 0.0
    %8503 = vmatprep.subr.mxu0 0.0
    %8504 = vmatpush1.msra.mxu0 0.0
    %8505 = vmatprep.subr.mxu0 0.0
    %8506 = vmatpush1.msra.mxu0 0.0
    %8507 = vmatprep.subr.mxu0 0.0
    %8508 = vmatpush1.msra.mxu0 0.0
    %8509 = vmatprep.subr.mxu0 0.0
    %8510 = vmatpush1.msra.mxu0 0.0
    %8511 = vmatprep.subr.mxu0 0.0
    %8512 = vmatpush1.msra.mxu0 0.0
    %8513 = vmatprep.subr.mxu0 0.0
    %8514 = vmatpush1.msra.mxu0 0.0
    %8515 = vmatprep.subr.mxu0 0.0
    %8516 = vmatpush1.msra.mxu0 0.0
    %8517 = vmatprep.subr.mxu0 0.0
    %8518 = vmatpush1.msra.mxu0 0.0
    %8519 = vmatprep.subr.mxu0 0.0
    %8520 = vmatpush1.msra.mxu0 0.0
    %8521 = vmatprep.subr.mxu0 0.0
    %8522 = vmatpush1.msra.mxu0 0.0
    %8523 = vmatprep.subr.mxu0 0.0
    %8524 = vmatpush1.msra.mxu0 0.0
    %8525 = vmatprep.subr.mxu0 0.0
    %8526 = vmatpush1.msra.mxu0 0.0
    %8527 = vmatprep.subr.mxu0 0.0
    %8528 = vmatpush1.msra.mxu0 0.0
    %8529 = vmatprep.subr.mxu0 0.0
    %8530 = vmatpush1.msra.mxu0 0.0
    %8531 = vmatprep.subr.mxu0 0.0
    %8532 = vmatpush1.msra.mxu0 0.0
    %8533 = vmatprep.subr.mxu0 0.0
    %8534 = vmatpush1.msra.mxu0 0.0
    %8535 = vmatprep.subr.mxu0 0.0
    %8536 = vmatpush1.msra.mxu0 0.0
    %8537 = vmatprep.subr.mxu0 0.0
    %8538 = vmatpush1.msra.mxu0 0.0
    %8539 = vmatprep.subr.mxu0 0.0
    %8540 = vmatpush1.msra.mxu0 0.0
    %8541 = vmatprep.subr.mxu0 0.0
    %8542 = vmatpush1.msra.mxu0 0.0
    %8543 = vmatprep.mubr.f32.mxu0 0.0
    %8544 = vmatmul.mubr.f32.gmra.mrb[0].mxu0 %v6384
    %v8545 = vpop.f32.mrb[0].mxu0
    %v8546 = vadd.f32 0.0, %v8545
    %v8547 = vpop.f32.mrb[0].mxu0
    %8548 = vdwg.mxu0
    %v8549 = vmax.f32 %v8476, %v8546
    %v8551 = vsel %vm6153, %v5551, 0
    %v8554 = vsel %vm6153, %v5552, 0
    %8556 = vmatprep.subr.mxu0 0.0
    %8557 = vmatpush1.msra.mxu0 %v1015
    %8558 = vmatprep.subr.mxu0 0.0
    %8559 = vmatpush1.msra.mxu0 0.0
    %8560 = vmatprep.subr.mxu0 0.0
    %8561 = vmatpush1.msra.mxu0 0.0
    %8562 = vmatprep.subr.mxu0 0.0
    %8563 = vmatpush1.msra.mxu0 0.0
    %8564 = vmatprep.subr.mxu0 0.0
    %8565 = vmatpush1.msra.mxu0 0.0
    %8566 = vmatprep.subr.mxu0 0.0
    %8567 = vmatpush1.msra.mxu0 0.0
    %8568 = vmatprep.subr.mxu0 0.0
    %8569 = vmatpush1.msra.mxu0 0.0
    %8570 = vmatprep.subr.mxu0 0.0
    %8571 = vmatpush1.msra.mxu0 0.0
    %8572 = vmatprep.subr.mxu0 0.0
    %8573 = vmatpush1.msra.mxu0 0.0
    %8574 = vmatprep.subr.mxu0 0.0
    %8575 = vmatpush1.msra.mxu0 0.0
    %8576 = vmatprep.subr.mxu0 0.0
    %8577 = vmatpush1.msra.mxu0 0.0
    %8578 = vmatprep.subr.mxu0 0.0
    %8579 = vmatpush1.msra.mxu0 0.0
    %8580 = vmatprep.subr.mxu0 0.0
    %8581 = vmatpush1.msra.mxu0 0.0
    %8582 = vmatprep.subr.mxu0 0.0
    %8583 = vmatpush1.msra.mxu0 0.0
    %8584 = vmatprep.subr.mxu0 0.0
    %8585 = vmatpush1.msra.mxu0 0.0
    %8586 = vmatprep.subr.mxu0 0.0
    %8587 = vmatpush1.msra.mxu0 0.0
    %8588 = vmatprep.subr.mxu0 0.0
    %8589 = vmatpush1.msra.mxu0 0.0
    %8590 = vmatprep.subr.mxu0 0.0
    %8591 = vmatpush1.msra.mxu0 0.0
    %8592 = vmatprep.subr.mxu0 0.0
    %8593 = vmatpush1.msra.mxu0 0.0
    %8594 = vmatprep.subr.mxu0 0.0
    %8595 = vmatpush1.msra.mxu0 0.0
    %8596 = vmatprep.subr.mxu0 0.0
    %8597 = vmatpush1.msra.mxu0 0.0
    %8598 = vmatprep.subr.mxu0 0.0
    %8599 = vmatpush1.msra.mxu0 0.0
    %8600 = vmatprep.subr.mxu0 0.0
    %8601 = vmatpush1.msra.mxu0 0.0
    %8602 = vmatprep.subr.mxu0 0.0
    %8603 = vmatpush1.msra.mxu0 0.0
    %8604 = vmatprep.subr.mxu0 0.0
    %8605 = vmatpush1.msra.mxu0 0.0
    %8606 = vmatprep.subr.mxu0 0.0
    %8607 = vmatpush1.msra.mxu0 0.0
    %8608 = vmatprep.subr.mxu0 0.0
    %8609 = vmatpush1.msra.mxu0 0.0
    %8610 = vmatprep.subr.mxu0 0.0
    %8611 = vmatpush1.msra.mxu0 0.0
    %8612 = vmatprep.subr.mxu0 0.0
    %8613 = vmatpush1.msra.mxu0 0.0
    %8614 = vmatprep.subr.mxu0 0.0
    %8615 = vmatpush1.msra.mxu0 0.0
    %8616 = vmatprep.subr.mxu0 0.0
    %8617 = vmatpush1.msra.mxu0 0.0
    %8618 = vmatprep.subr.mxu0 0.0
    %8619 = vmatpush1.msra.mxu0 0.0
    %8620 = vmatprep.mubr.f32.mxu0 0.0
    %8621 = vmatmul.mubr.f32.gmra.mrb[0].mxu0 %v8551
    %v8622 = vpop.f32.mrb[0].mxu0
    %v8623 = vadd.f32 0.0, %v8622
    %v8624 = vpop.f32.mrb[0].mxu0
    %8625 = vmatprep.mubr.f32.mxu0 0.0
    %8626 = vmatmul.mubr.f32.gmra.mrb[0].mxu0 %v8554
    %v8627 = vpop.f32.mrb[0].mxu0
    %v8628 = vadd.f32 0.0, %v8627
    %v8629 = vpop.f32.mrb[0].mxu0
    %8630 = vdwg.mxu0
    %8631 = vmatprep.subr.mxu0 0.0
    %8632 = vmatpush1.msra.mxu0 %v1025
    %8633 = vmatprep.subr.mxu0 0.0
    %8634 = vmatpush1.msra.mxu0 0.0
    %8635 = vmatprep.subr.mxu0 0.0
    %8636 = vmatpush1.msra.mxu0 0.0
    %8637 = vmatprep.subr.mxu0 0.0
    %8638 = vmatpush1.msra.mxu0 0.0
    %8639 = vmatprep.subr.mxu0 0.0
    %8640 = vmatpush1.msra.mxu0 0.0
    %8641 = vmatprep.subr.mxu0 0.0
    %8642 = vmatpush1.msra.mxu0 0.0
    %8643 = vmatprep.subr.mxu0 0.0
    %8644 = vmatpush1.msra.mxu0 0.0
    %8645 = vmatprep.subr.mxu0 0.0
    %8646 = vmatpush1.msra.mxu0 0.0
    %8647 = vmatprep.subr.mxu0 0.0
    %8648 = vmatpush1.msra.mxu0 0.0
    %8649 = vmatprep.subr.mxu0 0.0
    %8650 = vmatpush1.msra.mxu0 0.0
    %8651 = vmatprep.subr.mxu0 0.0
    %8652 = vmatpush1.msra.mxu0 0.0
    %8653 = vmatprep.subr.mxu0 0.0
    %8654 = vmatpush1.msra.mxu0 0.0
    %8655 = vmatprep.subr.mxu0 0.0
    %8656 = vmatpush1.msra.mxu0 0.0
    %8657 = vmatprep.subr.mxu0 0.0
    %8658 = vmatpush1.msra.mxu0 0.0
    %8659 = vmatprep.subr.mxu0 0.0
    %8660 = vmatpush1.msra.mxu0 0.0
    %8661 = vmatprep.subr.mxu0 0.0
    %8662 = vmatpush1.msra.mxu0 0.0
    %8663 = vmatprep.subr.mxu0 0.0
    %8664 = vmatpush1.msra.mxu0 0.0
    %8665 = vmatprep.subr.mxu0 0.0
    %8666 = vmatpush1.msra.mxu0 0.0
    %8667 = vmatprep.subr.mxu0 0.0
    %8668 = vmatpush1.msra.mxu0 0.0
    %8669 = vmatprep.subr.mxu0 0.0
    %8670 = vmatpush1.msra.mxu0 0.0
    %8671 = vmatprep.subr.mxu0 0.0
    %8672 = vmatpush1.msra.mxu0 0.0
    %8673 = vmatprep.subr.mxu0 0.0
    %8674 = vmatpush1.msra.mxu0 0.0
    %8675 = vmatprep.subr.mxu0 0.0
    %8676 = vmatpush1.msra.mxu0 0.0
    %8677 = vmatprep.subr.mxu0 0.0
    %8678 = vmatpush1.msra.mxu0 0.0
    %8679 = vmatprep.subr.mxu0 0.0
    %8680 = vmatpush1.msra.mxu0 0.0
    %8681 = vmatprep.subr.mxu0 0.0
    %8682 = vmatpush1.msra.mxu0 0.0
    %8683 = vmatprep.subr.mxu0 0.0
    %8684 = vmatpush1.msra.mxu0 0.0
    %8685 = vmatprep.subr.mxu0 0.0
    %8686 = vmatpush1.msra.mxu0 0.0
    %8687 = vmatprep.subr.mxu0 0.0
    %8688 = vmatpush1.msra.mxu0 0.0
    %8689 = vmatprep.subr.mxu0 0.0
    %8690 = vmatpush1.msra.mxu0 0.0
    %8691 = vmatprep.subr.mxu0 0.0
    %8692 = vmatpush1.msra.mxu0 0.0
    %8693 = vmatprep.subr.mxu0 0.0
    %8694 = vmatpush1.msra.mxu0 0.0
    %8695 = vmatprep.mubr.f32.mxu0 0.0
    %8696 = vmatmul.mubr.f32.gmra.mrb[0].mxu0 %v8551
    %v8697 = vpop.f32.mrb[0].mxu0
    %v8698 = vadd.f32 0.0, %v8697
    %v8699 = vpop.f32.mrb[0].mxu0
    %8700 = vmatprep.mubr.f32.mxu0 0.0
    %8701 = vmatmul.mubr.f32.gmra.mrb[0].mxu0 %v8554
    %v8702 = vpop.f32.mrb[0].mxu0
    %v8703 = vadd.f32 0.0, %v8702
    %v8704 = vpop.f32.mrb[0].mxu0
    %8705 = vdwg.mxu0
    %v8706 = vmax.f32 %v8623, %v8698
    %v8707 = vmax.f32 %v8628, %v8703
    %8708 = vmatprep.subr.mxu0 0.0
    %8709 = vmatpush1.msra.mxu0 %v8706
    %8710 = vmatprep.subr.mxu0 0.0
    %8711 = vmatpush1.msra.mxu0 %v8707
    %8712 = vmatprep.subr.mxu0 0.0
    %8713 = vmatpush1.msra.mxu0 0.0
    %8714 = vmatprep.subr.mxu0 0.0
    %8715 = vmatpush1.msra.mxu0 0.0
    %8716 = vmatprep.subr.mxu0 0.0
    %8717 = vmatpush1.msra.mxu0 0.0
    %8718 = vmatprep.subr.mxu0 0.0
    %8719 = vmatpush1.msra.mxu0 0.0
    %8720 = vmatprep.subr.mxu0 0.0
    %8721 = vmatpush1.msra.mxu0 0.0
    %8722 = vmatprep.subr.mxu0 0.0
    %8723 = vmatpush1.msra.mxu0 0.0
    %8724 = vmatprep.subr.mxu0 0.0
    %8725 = vmatpush1.msra.mxu0 0.0
    %8726 = vmatprep.subr.mxu0 0.0
    %8727 = vmatpush1.msra.mxu0 0.0
    %8728 = vmatprep.subr.mxu0 0.0
    %8729 = vmatpush1.msra.mxu0 0.0
    %8730 = vmatprep.subr.mxu0 0.0
    %8731 = vmatpush1.msra.mxu0 0.0
    %8732 = vmatprep.subr.mxu0 0.0
    %8733 = vmatpush1.msra.mxu0 0.0
    %8734 = vmatprep.subr.mxu0 0.0
    %8735 = vmatpush1.msra.mxu0 0.0
    %8736 = vmatprep.subr.mxu0 0.0
    %8737 = vmatpush1.msra.mxu0 0.0
    %8738 = vmatprep.subr.mxu0 0.0
    %8739 = vmatpush1.msra.mxu0 0.0
    %8740 = vmatprep.subr.mxu0 0.0
    %8741 = vmatpush1.msra.mxu0 0.0
    %8742 = vmatprep.subr.mxu0 0.0
    %8743 = vmatpush1.msra.mxu0 0.0
    %8744 = vmatprep.subr.mxu0 0.0
    %8745 = vmatpush1.msra.mxu0 0.0
    %8746 = vmatprep.subr.mxu0 0.0
    %8747 = vmatpush1.msra.mxu0 0.0
    %8748 = vmatprep.subr.mxu0 0.0
    %8749 = vmatpush1.msra.mxu0 0.0
    %8750 = vmatprep.subr.mxu0 0.0
    %8751 = vmatpush1.msra.mxu0 0.0
    %8752 = vmatprep.subr.mxu0 0.0
    %8753 = vmatpush1.msra.mxu0 0.0
    %8754 = vmatprep.subr.mxu0 0.0
    %8755 = vmatpush1.msra.mxu0 0.0
    %8756 = vmatprep.subr.mxu0 0.0
    %8757 = vmatpush1.msra.mxu0 0.0
    %8758 = vmatprep.subr.mxu0 0.0
    %8759 = vmatpush1.msra.mxu0 0.0
    %8760 = vmatprep.subr.mxu0 0.0
    %8761 = vmatpush1.msra.mxu0 0.0
    %8762 = vmatprep.subr.mxu0 0.0
    %8763 = vmatpush1.msra.mxu0 0.0
    %8764 = vmatprep.subr.mxu0 0.0
    %8765 = vmatpush1.msra.mxu0 0.0
    %8766 = vmatprep.subr.mxu0 0.0
    %8767 = vmatpush1.msra.mxu0 0.0
    %8768 = vmatprep.subr.mxu0 0.0
    %8769 = vmatpush1.msra.mxu0 0.0
    %8770 = vmatprep.subr.mxu0 0.0
    %8771 = vmatpush1.msra.mxu0 0.0
    %8772 = vmatprep.mubr.f32.mxu0 0.0
    %8773 = vmatmul.mubr.f32.gmra.mrb[0].mxu0 %v6312
    %v8774 = vpop.f32.mrb[0].mxu0
    %v8775 = vadd.f32 0.0, %v8774
    %v8776 = vpop.f32.mrb[0].mxu0
    %8777 = vdwg.mxu0
    %8778 = vmatprep.subr.mxu0 0.0
    %8779 = vmatpush1.msra.mxu0 %v8706
    %8780 = vmatprep.subr.mxu0 0.0
    %8781 = vmatpush1.msra.mxu0 %v8707
    %8782 = vmatprep.subr.mxu0 0.0
    %8783 = vmatpush1.msra.mxu0 0.0
    %8784 = vmatprep.subr.mxu0 0.0
    %8785 = vmatpush1.msra.mxu0 0.0
    %8786 = vmatprep.subr.mxu0 0.0
    %8787 = vmatpush1.msra.mxu0 0.0
    %8788 = vmatprep.subr.mxu0 0.0
    %8789 = vmatpush1.msra.mxu0 0.0
    %8790 = vmatprep.subr.mxu0 0.0
    %8791 = vmatpush1.msra.mxu0 0.0
    %8792 = vmatprep.subr.mxu0 0.0
    %8793 = vmatpush1.msra.mxu0 0.0
    %8794 = vmatprep.subr.mxu0 0.0
    %8795 = vmatpush1.msra.mxu0 0.0
    %8796 = vmatprep.subr.mxu0 0.0
    %8797 = vmatpush1.msra.mxu0 0.0
    %8798 = vmatprep.subr.mxu0 0.0
    %8799 = vmatpush1.msra.mxu0 0.0
    %8800 = vmatprep.subr.mxu0 0.0
    %8801 = vmatpush1.msra.mxu0 0.0
    %8802 = vmatprep.subr.mxu0 0.0
    %8803 = vmatpush1.msra.mxu0 0.0
    %8804 = vmatprep.subr.mxu0 0.0
    %8805 = vmatpush1.msra.mxu0 0.0
    %8806 = vmatprep.subr.mxu0 0.0
    %8807 = vmatpush1.msra.mxu0 0.0
    %8808 = vmatprep.subr.mxu0 0.0
    %8809 = vmatpush1.msra.mxu0 0.0
    %8810 = vmatprep.subr.mxu0 0.0
    %8811 = vmatpush1.msra.mxu0 0.0
    %8812 = vmatprep.subr.mxu0 0.0
    %8813 = vmatpush1.msra.mxu0 0.0
    %8814 = vmatprep.subr.mxu0 0.0
    %8815 = vmatpush1.msra.mxu0 0.0
    %8816 = vmatprep.subr.mxu0 0.0
    %8817 = vmatpush1.msra.mxu0 0.0
    %8818 = vmatprep.subr.mxu0 0.0
    %8819 = vmatpush1.msra.mxu0 0.0
    %8820 = vmatprep.subr.mxu0 0.0
    %8821 = vmatpush1.msra.mxu0 0.0
    %8822 = vmatprep.subr.mxu0 0.0
    %8823 = vmatpush1.msra.mxu0 0.0
    %8824 = vmatprep.subr.mxu0 0.0
    %8825 = vmatpush1.msra.mxu0 0.0
    %8826 = vmatprep.subr.mxu0 0.0
    %8827 = vmatpush1.msra.mxu0 0.0
    %8828 = vmatprep.subr.mxu0 0.0
    %8829 = vmatpush1.msra.mxu0 0.0
    %8830 = vmatprep.subr.mxu0 0.0
    %8831 = vmatpush1.msra.mxu0 0.0
    %8832 = vmatprep.subr.mxu0 0.0
    %8833 = vmatpush1.msra.mxu0 0.0
    %8834 = vmatprep.subr.mxu0 0.0
    %8835 = vmatpush1.msra.mxu0 0.0
    %8836 = vmatprep.subr.mxu0 0.0
    %8837 = vmatpush1.msra.mxu0 0.0
    %8838 = vmatprep.subr.mxu0 0.0
    %8839 = vmatpush1.msra.mxu0 0.0
    %8840 = vmatprep.subr.mxu0 0.0
    %8841 = vmatpush1.msra.mxu0 0.0
    %8842 = vmatprep.mubr.f32.mxu0 0.0
    %8843 = vmatmul.mubr.f32.gmra.mrb[0].mxu0 %v6384
    %v8844 = vpop.f32.mrb[0].mxu0
    %v8845 = vadd.f32 0.0, %v8844
    %v8846 = vpop.f32.mrb[0].mxu0
    %8847 = vdwg.mxu0
    %v8848 = vmax.f32 %v8775, %v8845
    %v8850 = vsel %vm6153, %v5751, 0
    %v8853 = vsel %vm6153, %v5752, 0
    %8855 = vmatprep.subr.mxu0 0.0
    %8856 = vmatpush1.msra.mxu0 %v1015
    %8857 = vmatprep.subr.mxu0 0.0
    %8858 = vmatpush1.msra.mxu0 0.0
    %8859 = vmatprep.subr.mxu0 0.0
    %8860 = vmatpush1.msra.mxu0 0.0
    %8861 = vmatprep.subr.mxu0 0.0
    %8862 = vmatpush1.msra.mxu0 0.0
    %8863 = vmatprep.subr.mxu0 0.0
    %8864 = vmatpush1.msra.mxu0 0.0
    %8865 = vmatprep.subr.mxu0 0.0
    %8866 = vmatpush1.msra.mxu0 0.0
    %8867 = vmatprep.subr.mxu0 0.0
    %8868 = vmatpush1.msra.mxu0 0.0
    %8869 = vmatprep.subr.mxu0 0.0
    %8870 = vmatpush1.msra.mxu0 0.0
    %8871 = vmatprep.subr.mxu0 0.0
    %8872 = vmatpush1.msra.mxu0 0.0
    %8873 = vmatprep.subr.mxu0 0.0
    %8874 = vmatpush1.msra.mxu0 0.0
    %8875 = vmatprep.subr.mxu0 0.0
    %8876 = vmatpush1.msra.mxu0 0.0
    %8877 = vmatprep.subr.mxu0 0.0
    %8878 = vmatpush1.msra.mxu0 0.0
    %8879 = vmatprep.subr.mxu0 0.0
    %8880 = vmatpush1.msra.mxu0 0.0
    %8881 = vmatprep.subr.mxu0 0.0
    %8882 = vmatpush1.msra.mxu0 0.0
    %8883 = vmatprep.subr.mxu0 0.0
    %8884 = vmatpush1.msra.mxu0 0.0
    %8885 = vmatprep.subr.mxu0 0.0
    %8886 = vmatpush1.msra.mxu0 0.0
    %8887 = vmatprep.subr.mxu0 0.0
    %8888 = vmatpush1.msra.mxu0 0.0
    %8889 = vmatprep.subr.mxu0 0.0
    %8890 = vmatpush1.msra.mxu0 0.0
    %8891 = vmatprep.subr.mxu0 0.0
    %8892 = vmatpush1.msra.mxu0 0.0
    %8893 = vmatprep.subr.mxu0 0.0
    %8894 = vmatpush1.msra.mxu0 0.0
    %8895 = vmatprep.subr.mxu0 0.0
    %8896 = vmatpush1.msra.mxu0 0.0
    %8897 = vmatprep.subr.mxu0 0.0
    %8898 = vmatpush1.msra.mxu0 0.0
    %8899 = vmatprep.subr.mxu0 0.0
    %8900 = vmatpush1.msra.mxu0 0.0
    %8901 = vmatprep.subr.mxu0 0.0
    %8902 = vmatpush1.msra.mxu0 0.0
    %8903 = vmatprep.subr.mxu0 0.0
    %8904 = vmatpush1.msra.mxu0 0.0
    %8905 = vmatprep.subr.mxu0 0.0
    %8906 = vmatpush1.msra.mxu0 0.0
    %8907 = vmatprep.subr.mxu0 0.0
    %8908 = vmatpush1.msra.mxu0 0.0
    %8909 = vmatprep.subr.mxu0 0.0
    %8910 = vmatpush1.msra.mxu0 0.0
    %8911 = vmatprep.subr.mxu0 0.0
    %8912 = vmatpush1.msra.mxu0 0.0
    %8913 = vmatprep.subr.mxu0 0.0
    %8914 = vmatpush1.msra.mxu0 0.0
    %8915 = vmatprep.subr.mxu0 0.0
    %8916 = vmatpush1.msra.mxu0 0.0
    %8917 = vmatprep.subr.mxu0 0.0
    %8918 = vmatpush1.msra.mxu0 0.0
    %8919 = vmatprep.mubr.f32.mxu0 0.0
    %8920 = vmatmul.mubr.f32.gmra.mrb[0].mxu0 %v8850
    %v8921 = vpop.f32.mrb[0].mxu0
    %v8922 = vadd.f32 0.0, %v8921
    %v8923 = vpop.f32.mrb[0].mxu0
    %8924 = vmatprep.mubr.f32.mxu0 0.0
    %8925 = vmatmul.mubr.f32.gmra.mrb[0].mxu0 %v8853
    %v8926 = vpop.f32.mrb[0].mxu0
    %v8927 = vadd.f32 0.0, %v8926
    %v8928 = vpop.f32.mrb[0].mxu0
    %8929 = vdwg.mxu0
    %8930 = vmatprep.subr.mxu0 0.0
    %8931 = vmatpush1.msra.mxu0 %v1025
    %8932 = vmatprep.subr.mxu0 0.0
    %8933 = vmatpush1.msra.mxu0 0.0
    %8934 = vmatprep.subr.mxu0 0.0
    %8935 = vmatpush1.msra.mxu0 0.0
    %8936 = vmatprep.subr.mxu0 0.0
    %8937 = vmatpush1.msra.mxu0 0.0
    %8938 = vmatprep.subr.mxu0 0.0
    %8939 = vmatpush1.msra.mxu0 0.0
    %8940 = vmatprep.subr.mxu0 0.0
    %8941 = vmatpush1.msra.mxu0 0.0
    %8942 = vmatprep.subr.mxu0 0.0
    %8943 = vmatpush1.msra.mxu0 0.0
    %8944 = vmatprep.subr.mxu0 0.0
    %8945 = vmatpush1.msra.mxu0 0.0
    %8946 = vmatprep.subr.mxu0 0.0
    %8947 = vmatpush1.msra.mxu0 0.0
    %8948 = vmatprep.subr.mxu0 0.0
    %8949 = vmatpush1.msra.mxu0 0.0
    %8950 = vmatprep.subr.mxu0 0.0
    %8951 = vmatpush1.msra.mxu0 0.0
    %8952 = vmatprep.subr.mxu0 0.0
    %8953 = vmatpush1.msra.mxu0 0.0
    %8954 = vmatprep.subr.mxu0 0.0
    %8955 = vmatpush1.msra.mxu0 0.0
    %8956 = vmatprep.subr.mxu0 0.0
    %8957 = vmatpush1.msra.mxu0 0.0
    %8958 = vmatprep.subr.mxu0 0.0
    %8959 = vmatpush1.msra.mxu0 0.0
    %8960 = vmatprep.subr.mxu0 0.0
    %8961 = vmatpush1.msra.mxu0 0.0
    %8962 = vmatprep.subr.mxu0 0.0
    %8963 = vmatpush1.msra.mxu0 0.0
    %8964 = vmatprep.subr.mxu0 0.0
    %8965 = vmatpush1.msra.mxu0 0.0
    %8966 = vmatprep.subr.mxu0 0.0
    %8967 = vmatpush1.msra.mxu0 0.0
    %8968 = vmatprep.subr.mxu0 0.0
    %8969 = vmatpush1.msra.mxu0 0.0
    %8970 = vmatprep.subr.mxu0 0.0
    %8971 = vmatpush1.msra.mxu0 0.0
    %8972 = vmatprep.subr.mxu0 0.0
    %8973 = vmatpush1.msra.mxu0 0.0
    %8974 = vmatprep.subr.mxu0 0.0
    %8975 = vmatpush1.msra.mxu0 0.0
    %8976 = vmatprep.subr.mxu0 0.0
    %8977 = vmatpush1.msra.mxu0 0.0
    %8978 = vmatprep.subr.mxu0 0.0
    %8979 = vmatpush1.msra.mxu0 0.0
    %8980 = vmatprep.subr.mxu0 0.0
    %8981 = vmatpush1.msra.mxu0 0.0
    %8982 = vmatprep.subr.mxu0 0.0
    %8983 = vmatpush1.msra.mxu0 0.0
    %8984 = vmatprep.subr.mxu0 0.0
    %8985 = vmatpush1.msra.mxu0 0.0
    %8986 = vmatprep.subr.mxu0 0.0
    %8987 = vmatpush1.msra.mxu0 0.0
    %8988 = vmatprep.subr.mxu0 0.0
    %8989 = vmatpush1.msra.mxu0 0.0
    %8990 = vmatprep.subr.mxu0 0.0
    %8991 = vmatpush1.msra.mxu0 0.0
    %8992 = vmatprep.subr.mxu0 0.0
    %8993 = vmatpush1.msra.mxu0 0.0
    %8994 = vmatprep.mubr.f32.mxu0 0.0
    %8995 = vmatmul.mubr.f32.gmra.mrb[0].mxu0 %v8850
    %v8996 = vpop.f32.mrb[0].mxu0
    %v8997 = vadd.f32 0.0, %v8996
    %v8998 = vpop.f32.mrb[0].mxu0
    %8999 = vmatprep.mubr.f32.mxu0 0.0
    %9000 = vmatmul.mubr.f32.gmra.mrb[0].mxu0 %v8853
    %v9001 = vpop.f32.mrb[0].mxu0
    %v9002 = vadd.f32 0.0, %v9001
    %v9003 = vpop.f32.mrb[0].mxu0
    %9004 = vdwg.mxu0
    %v9005 = vmax.f32 %v8922, %v8997
    %v9006 = vmax.f32 %v8927, %v9002
    %9007 = vmatprep.subr.mxu0 0.0
    %9008 = vmatpush1.msra.mxu0 %v9005
    %9009 = vmatprep.subr.mxu0 0.0
    %9010 = vmatpush1.msra.mxu0 %v9006
    %9011 = vmatprep.subr.mxu0 0.0
    %9012 = vmatpush1.msra.mxu0 0.0
    %9013 = vmatprep.subr.mxu0 0.0
    %9014 = vmatpush1.msra.mxu0 0.0
    %9015 = vmatprep.subr.mxu0 0.0
    %9016 = vmatpush1.msra.mxu0 0.0
    %9017 = vmatprep.subr.mxu0 0.0
    %9018 = vmatpush1.msra.mxu0 0.0
    %9019 = vmatprep.subr.mxu0 0.0
    %9020 = vmatpush1.msra.mxu0 0.0
    %9021 = vmatprep.subr.mxu0 0.0
    %9022 = vmatpush1.msra.mxu0 0.0
    %9023 = vmatprep.subr.mxu0 0.0
    %9024 = vmatpush1.msra.mxu0 0.0
    %9025 = vmatprep.subr.mxu0 0.0
    %9026 = vmatpush1.msra.mxu0 0.0
    %9027 = vmatprep.subr.mxu0 0.0
    %9028 = vmatpush1.msra.mxu0 0.0
    %9029 = vmatprep.subr.mxu0 0.0
    %9030 = vmatpush1.msra.mxu0 0.0
    %9031 = vmatprep.subr.mxu0 0.0
    %9032 = vmatpush1.msra.mxu0 0.0
    %9033 = vmatprep.subr.mxu0 0.0
    %9034 = vmatpush1.msra.mxu0 0.0
    %9035 = vmatprep.subr.mxu0 0.0
    %9036 = vmatpush1.msra.mxu0 0.0
    %9037 = vmatprep.subr.mxu0 0.0
    %9038 = vmatpush1.msra.mxu0 0.0
    %9039 = vmatprep.subr.mxu0 0.0
    %9040 = vmatpush1.msra.mxu0 0.0
    %9041 = vmatprep.subr.mxu0 0.0
    %9042 = vmatpush1.msra.mxu0 0.0
    %9043 = vmatprep.subr.mxu0 0.0
    %9044 = vmatpush1.msra.mxu0 0.0
    %9045 = vmatprep.subr.mxu0 0.0
    %9046 = vmatpush1.msra.mxu0 0.0
    %9047 = vmatprep.subr.mxu0 0.0
    %9048 = vmatpush1.msra.mxu0 0.0
    %9049 = vmatprep.subr.mxu0 0.0
    %9050 = vmatpush1.msra.mxu0 0.0
    %9051 = vmatprep.subr.mxu0 0.0
    %9052 = vmatpush1.msra.mxu0 0.0
    %9053 = vmatprep.subr.mxu0 0.0
    %9054 = vmatpush1.msra.mxu0 0.0
    %9055 = vmatprep.subr.mxu0 0.0
    %9056 = vmatpush1.msra.mxu0 0.0
    %9057 = vmatprep.subr.mxu0 0.0
    %9058 = vmatpush1.msra.mxu0 0.0
    %9059 = vmatprep.subr.mxu0 0.0
    %9060 = vmatpush1.msra.mxu0 0.0
    %9061 = vmatprep.subr.mxu0 0.0
    %9062 = vmatpush1.msra.mxu0 0.0
    %9063 = vmatprep.subr.mxu0 0.0
    %9064 = vmatpush1.msra.mxu0 0.0
    %9065 = vmatprep.subr.mxu0 0.0
    %9066 = vmatpush1.msra.mxu0 0.0
    %9067 = vmatprep.subr.mxu0 0.0
    %9068 = vmatpush1.msra.mxu0 0.0
    %9069 = vmatprep.subr.mxu0 0.0
    %9070 = vmatpush1.msra.mxu0 0.0
    %9071 = vmatprep.mubr.f32.mxu0 0.0
    %9072 = vmatmul.mubr.f32.gmra.mrb[0].mxu0 %v6312
    %v9073 = vpop.f32.mrb[0].mxu0
    %v9074 = vadd.f32 0.0, %v9073
    %v9075 = vpop.f32.mrb[0].mxu0
    %9076 = vdwg.mxu0
    %9077 = vmatprep.subr.mxu0 0.0
    %9078 = vmatpush1.msra.mxu0 %v9005
    %9079 = vmatprep.subr.mxu0 0.0
    %9080 = vmatpush1.msra.mxu0 %v9006
    %9081 = vmatprep.subr.mxu0 0.0
    %9082 = vmatpush1.msra.mxu0 0.0
    %9083 = vmatprep.subr.mxu0 0.0
    %9084 = vmatpush1.msra.mxu0 0.0
    %9085 = vmatprep.subr.mxu0 0.0
    %9086 = vmatpush1.msra.mxu0 0.0
    %9087 = vmatprep.subr.mxu0 0.0
    %9088 = vmatpush1.msra.mxu0 0.0
    %9089 = vmatprep.subr.mxu0 0.0
    %9090 = vmatpush1.msra.mxu0 0.0
    %9091 = vmatprep.subr.mxu0 0.0
    %9092 = vmatpush1.msra.mxu0 0.0
    %9093 = vmatprep.subr.mxu0 0.0
    %9094 = vmatpush1.msra.mxu0 0.0
    %9095 = vmatprep.subr.mxu0 0.0
    %9096 = vmatpush1.msra.mxu0 0.0
    %9097 = vmatprep.subr.mxu0 0.0
    %9098 = vmatpush1.msra.mxu0 0.0
    %9099 = vmatprep.subr.mxu0 0.0
    %9100 = vmatpush1.msra.mxu0 0.0
    %9101 = vmatprep.subr.mxu0 0.0
    %9102 = vmatpush1.msra.mxu0 0.0
    %9103 = vmatprep.subr.mxu0 0.0
    %9104 = vmatpush1.msra.mxu0 0.0
    %9105 = vmatprep.subr.mxu0 0.0
    %9106 = vmatpush1.msra.mxu0 0.0
    %9107 = vmatprep.subr.mxu0 0.0
    %9108 = vmatpush1.msra.mxu0 0.0
    %9109 = vmatprep.subr.mxu0 0.0
    %9110 = vmatpush1.msra.mxu0 0.0
    %9111 = vmatprep.subr.mxu0 0.0
    %9112 = vmatpush1.msra.mxu0 0.0
    %9113 = vmatprep.subr.mxu0 0.0
    %9114 = vmatpush1.msra.mxu0 0.0
    %9115 = vmatprep.subr.mxu0 0.0
    %9116 = vmatpush1.msra.mxu0 0.0
    %9117 = vmatprep.subr.mxu0 0.0
    %9118 = vmatpush1.msra.mxu0 0.0
    %9119 = vmatprep.subr.mxu0 0.0
    %9120 = vmatpush1.msra.mxu0 0.0
    %9121 = vmatprep.subr.mxu0 0.0
    %9122 = vmatpush1.msra.mxu0 0.0
    %9123 = vmatprep.subr.mxu0 0.0
    %9124 = vmatpush1.msra.mxu0 0.0
    %9125 = vmatprep.subr.mxu0 0.0
    %9126 = vmatpush1.msra.mxu0 0.0
    %9127 = vmatprep.subr.mxu0 0.0
    %9128 = vmatpush1.msra.mxu0 0.0
    %9129 = vmatprep.subr.mxu0 0.0
    %9130 = vmatpush1.msra.mxu0 0.0
    %9131 = vmatprep.subr.mxu0 0.0
    %9132 = vmatpush1.msra.mxu0 0.0
    %9133 = vmatprep.subr.mxu0 0.0
    %9134 = vmatpush1.msra.mxu0 0.0
    %9135 = vmatprep.subr.mxu0 0.0
    %9136 = vmatpush1.msra.mxu0 0.0
    %9137 = vmatprep.subr.mxu0 0.0
    %9138 = vmatpush1.msra.mxu0 0.0
    %9139 = vmatprep.subr.mxu0 0.0
    %9140 = vmatpush1.msra.mxu0 0.0
    %9141 = vmatprep.mubr.f32.mxu0 0.0
    %9142 = vmatmul.mubr.f32.gmra.mrb[0].mxu0 %v6384
    %v9143 = vpop.f32.mrb[0].mxu0
    %v9144 = vadd.f32 0.0, %v9143
    %v9145 = vpop.f32.mrb[0].mxu0
    %9146 = vdwg.mxu0
    %v9147 = vmax.f32 %v9074, %v9144
    %v9149 = vsel %vm6153, %v5951, 0
    %v9152 = vsel %vm6153, %v5952, 0
    %9154 = vmatprep.subr.mxu0 0.0
    %9155 = vmatpush1.msra.mxu0 %v1015
    %9156 = vmatprep.subr.mxu0 0.0
    %9157 = vmatpush1.msra.mxu0 0.0
    %9158 = vmatprep.subr.mxu0 0.0
    %9159 = vmatpush1.msra.mxu0 0.0
    %9160 = vmatprep.subr.mxu0 0.0
    %9161 = vmatpush1.msra.mxu0 0.0
    %9162 = vmatprep.subr.mxu0 0.0
    %9163 = vmatpush1.msra.mxu0 0.0
    %9164 = vmatprep.subr.mxu0 0.0
    %9165 = vmatpush1.msra.mxu0 0.0
    %9166 = vmatprep.subr.mxu0 0.0
    %9167 = vmatpush1.msra.mxu0 0.0
    %9168 = vmatprep.subr.mxu0 0.0
    %9169 = vmatpush1.msra.mxu0 0.0
    %9170 = vmatprep.subr.mxu0 0.0
    %9171 = vmatpush1.msra.mxu0 0.0
    %9172 = vmatprep.subr.mxu0 0.0
    %9173 = vmatpush1.msra.mxu0 0.0
    %9174 = vmatprep.subr.mxu0 0.0
    %9175 = vmatpush1.msra.mxu0 0.0
    %9176 = vmatprep.subr.mxu0 0.0
    %9177 = vmatpush1.msra.mxu0 0.0
    %9178 = vmatprep.subr.mxu0 0.0
    %9179 = vmatpush1.msra.mxu0 0.0
    %9180 = vmatprep.subr.mxu0 0.0
    %9181 = vmatpush1.msra.mxu0 0.0
    %9182 = vmatprep.subr.mxu0 0.0
    %9183 = vmatpush1.msra.mxu0 0.0
    %9184 = vmatprep.subr.mxu0 0.0
    %9185 = vmatpush1.msra.mxu0 0.0
    %9186 = vmatprep.subr.mxu0 0.0
    %9187 = vmatpush1.msra.mxu0 0.0
    %9188 = vmatprep.subr.mxu0 0.0
    %9189 = vmatpush1.msra.mxu0 0.0
    %9190 = vmatprep.subr.mxu0 0.0
    %9191 = vmatpush1.msra.mxu0 0.0
    %9192 = vmatprep.subr.mxu0 0.0
    %9193 = vmatpush1.msra.mxu0 0.0
    %9194 = vmatprep.subr.mxu0 0.0
    %9195 = vmatpush1.msra.mxu0 0.0
    %9196 = vmatprep.subr.mxu0 0.0
    %9197 = vmatpush1.msra.mxu0 0.0
    %9198 = vmatprep.subr.mxu0 0.0
    %9199 = vmatpush1.msra.mxu0 0.0
    %9200 = vmatprep.subr.mxu0 0.0
    %9201 = vmatpush1.msra.mxu0 0.0
    %9202 = vmatprep.subr.mxu0 0.0
    %9203 = vmatpush1.msra.mxu0 0.0
    %9204 = vmatprep.subr.mxu0 0.0
    %9205 = vmatpush1.msra.mxu0 0.0
    %9206 = vmatprep.subr.mxu0 0.0
    %9207 = vmatpush1.msra.mxu0 0.0
    %9208 = vmatprep.subr.mxu0 0.0
    %9209 = vmatpush1.msra.mxu0 0.0
    %9210 = vmatprep.subr.mxu0 0.0
    %9211 = vmatpush1.msra.mxu0 0.0
    %9212 = vmatprep.subr.mxu0 0.0
    %9213 = vmatpush1.msra.mxu0 0.0
    %9214 = vmatprep.subr.mxu0 0.0
    %9215 = vmatpush1.msra.mxu0 0.0
    %9216 = vmatprep.subr.mxu0 0.0
    %9217 = vmatpush1.msra.mxu0 0.0
    %9218 = vmatprep.mubr.f32.mxu0 0.0
    %9219 = vmatmul.mubr.f32.gmra.mrb[0].mxu0 %v9149
    %v9220 = vpop.f32.mrb[0].mxu0
    %v9221 = vadd.f32 0.0, %v9220
    %v9222 = vpop.f32.mrb[0].mxu0
    %9223 = vmatprep.mubr.f32.mxu0 0.0
    %9224 = vmatmul.mubr.f32.gmra.mrb[0].mxu0 %v9152
    %v9225 = vpop.f32.mrb[0].mxu0
    %v9226 = vadd.f32 0.0, %v9225
    %v9227 = vpop.f32.mrb[0].mxu0
    %9228 = vdwg.mxu0
    %9229 = vmatprep.subr.mxu0 0.0
    %9230 = vmatpush1.msra.mxu0 %v1025
    %9231 = vmatprep.subr.mxu0 0.0
    %9232 = vmatpush1.msra.mxu0 0.0
    %9233 = vmatprep.subr.mxu0 0.0
    %9234 = vmatpush1.msra.mxu0 0.0
    %9235 = vmatprep.subr.mxu0 0.0
    %9236 = vmatpush1.msra.mxu0 0.0
    %9237 = vmatprep.subr.mxu0 0.0
    %9238 = vmatpush1.msra.mxu0 0.0
    %9239 = vmatprep.subr.mxu0 0.0
    %9240 = vmatpush1.msra.mxu0 0.0
    %9241 = vmatprep.subr.mxu0 0.0
    %9242 = vmatpush1.msra.mxu0 0.0
    %9243 = vmatprep.subr.mxu0 0.0
    %9244 = vmatpush1.msra.mxu0 0.0
    %9245 = vmatprep.subr.mxu0 0.0
    %9246 = vmatpush1.msra.mxu0 0.0
    %9247 = vmatprep.subr.mxu0 0.0
    %9248 = vmatpush1.msra.mxu0 0.0
    %9249 = vmatprep.subr.mxu0 0.0
    %9250 = vmatpush1.msra.mxu0 0.0
    %9251 = vmatprep.subr.mxu0 0.0
    %9252 = vmatpush1.msra.mxu0 0.0
    %9253 = vmatprep.subr.mxu0 0.0
    %9254 = vmatpush1.msra.mxu0 0.0
    %9255 = vmatprep.subr.mxu0 0.0
    %9256 = vmatpush1.msra.mxu0 0.0
    %9257 = vmatprep.subr.mxu0 0.0
    %9258 = vmatpush1.msra.mxu0 0.0
    %9259 = vmatprep.subr.mxu0 0.0
    %9260 = vmatpush1.msra.mxu0 0.0
    %9261 = vmatprep.subr.mxu0 0.0
    %9262 = vmatpush1.msra.mxu0 0.0
    %9263 = vmatprep.subr.mxu0 0.0
    %9264 = vmatpush1.msra.mxu0 0.0
    %9265 = vmatprep.subr.mxu0 0.0
    %9266 = vmatpush1.msra.mxu0 0.0
    %9267 = vmatprep.subr.mxu0 0.0
    %9268 = vmatpush1.msra.mxu0 0.0
    %9269 = vmatprep.subr.mxu0 0.0
    %9270 = vmatpush1.msra.mxu0 0.0
    %9271 = vmatprep.subr.mxu0 0.0
    %9272 = vmatpush1.msra.mxu0 0.0
    %9273 = vmatprep.subr.mxu0 0.0
    %9274 = vmatpush1.msra.mxu0 0.0
    %9275 = vmatprep.subr.mxu0 0.0
    %9276 = vmatpush1.msra.mxu0 0.0
    %9277 = vmatprep.subr.mxu0 0.0
    %9278 = vmatpush1.msra.mxu0 0.0
    %9279 = vmatprep.subr.mxu0 0.0
    %9280 = vmatpush1.msra.mxu0 0.0
    %9281 = vmatprep.subr.mxu0 0.0
    %9282 = vmatpush1.msra.mxu0 0.0
    %9283 = vmatprep.subr.mxu0 0.0
    %9284 = vmatpush1.msra.mxu0 0.0
    %9285 = vmatprep.subr.mxu0 0.0
    %9286 = vmatpush1.msra.mxu0 0.0
    %9287 = vmatprep.subr.mxu0 0.0
    %9288 = vmatpush1.msra.mxu0 0.0
    %9289 = vmatprep.subr.mxu0 0.0
    %9290 = vmatpush1.msra.mxu0 0.0
    %9291 = vmatprep.subr.mxu0 0.0
    %9292 = vmatpush1.msra.mxu0 0.0
    %9293 = vmatprep.mubr.f32.mxu0 0.0
    %9294 = vmatmul.mubr.f32.gmra.mrb[0].mxu0 %v9149
    %v9295 = vpop.f32.mrb[0].mxu0
    %v9296 = vadd.f32 0.0, %v9295
    %v9297 = vpop.f32.mrb[0].mxu0
    %9298 = vmatprep.mubr.f32.mxu0 0.0
    %9299 = vmatmul.mubr.f32.gmra.mrb[0].mxu0 %v9152
    %v9300 = vpop.f32.mrb[0].mxu0
    %v9301 = vadd.f32 0.0, %v9300
    %v9302 = vpop.f32.mrb[0].mxu0
    %9303 = vdwg.mxu0
    %v9304 = vmax.f32 %v9221, %v9296
    %v9305 = vmax.f32 %v9226, %v9301
    %9306 = vmatprep.subr.mxu0 0.0
    %9307 = vmatpush1.msra.mxu0 %v9304
    %9308 = vmatprep.subr.mxu0 0.0
    %9309 = vmatpush1.msra.mxu0 %v9305
    %9310 = vmatprep.subr.mxu0 0.0
    %9311 = vmatpush1.msra.mxu0 0.0
    %9312 = vmatprep.subr.mxu0 0.0
    %9313 = vmatpush1.msra.mxu0 0.0
    %9314 = vmatprep.subr.mxu0 0.0
    %9315 = vmatpush1.msra.mxu0 0.0
    %9316 = vmatprep.subr.mxu0 0.0
    %9317 = vmatpush1.msra.mxu0 0.0
    %9318 = vmatprep.subr.mxu0 0.0
    %9319 = vmatpush1.msra.mxu0 0.0
    %9320 = vmatprep.subr.mxu0 0.0
    %9321 = vmatpush1.msra.mxu0 0.0
    %9322 = vmatprep.subr.mxu0 0.0
    %9323 = vmatpush1.msra.mxu0 0.0
    %9324 = vmatprep.subr.mxu0 0.0
    %9325 = vmatpush1.msra.mxu0 0.0
    %9326 = vmatprep.subr.mxu0 0.0
    %9327 = vmatpush1.msra.mxu0 0.0
    %9328 = vmatprep.subr.mxu0 0.0
    %9329 = vmatpush1.msra.mxu0 0.0
    %9330 = vmatprep.subr.mxu0 0.0
    %9331 = vmatpush1.msra.mxu0 0.0
    %9332 = vmatprep.subr.mxu0 0.0
    %9333 = vmatpush1.msra.mxu0 0.0
    %9334 = vmatprep.subr.mxu0 0.0
    %9335 = vmatpush1.msra.mxu0 0.0
    %9336 = vmatprep.subr.mxu0 0.0
    %9337 = vmatpush1.msra.mxu0 0.0
    %9338 = vmatprep.subr.mxu0 0.0
    %9339 = vmatpush1.msra.mxu0 0.0
    %9340 = vmatprep.subr.mxu0 0.0
    %9341 = vmatpush1.msra.mxu0 0.0
    %9342 = vmatprep.subr.mxu0 0.0
    %9343 = vmatpush1.msra.mxu0 0.0
    %9344 = vmatprep.subr.mxu0 0.0
    %9345 = vmatpush1.msra.mxu0 0.0
    %9346 = vmatprep.subr.mxu0 0.0
    %9347 = vmatpush1.msra.mxu0 0.0
    %9348 = vmatprep.subr.mxu0 0.0
    %9349 = vmatpush1.msra.mxu0 0.0
    %9350 = vmatprep.subr.mxu0 0.0
    %9351 = vmatpush1.msra.mxu0 0.0
    %9352 = vmatprep.subr.mxu0 0.0
    %9353 = vmatpush1.msra.mxu0 0.0
    %9354 = vmatprep.subr.mxu0 0.0
    %9355 = vmatpush1.msra.mxu0 0.0
    %9356 = vmatprep.subr.mxu0 0.0
    %9357 = vmatpush1.msra.mxu0 0.0
    %9358 = vmatprep.subr.mxu0 0.0
    %9359 = vmatpush1.msra.mxu0 0.0
    %9360 = vmatprep.subr.mxu0 0.0
    %9361 = vmatpush1.msra.mxu0 0.0
    %9362 = vmatprep.subr.mxu0 0.0
    %9363 = vmatpush1.msra.mxu0 0.0
    %9364 = vmatprep.subr.mxu0 0.0
    %9365 = vmatpush1.msra.mxu0 0.0
    %9366 = vmatprep.subr.mxu0 0.0
    %9367 = vmatpush1.msra.mxu0 0.0
    %9368 = vmatprep.subr.mxu0 0.0
    %9369 = vmatpush1.msra.mxu0 0.0
    %9370 = vmatprep.mubr.f32.mxu0 0.0
    %9371 = vmatmul.mubr.f32.gmra.mrb[0].mxu0 %v6312
    %v9372 = vpop.f32.mrb[0].mxu0
    %v9373 = vadd.f32 0.0, %v9372
    %v9374 = vpop.f32.mrb[0].mxu0
    %9375 = vdwg.mxu0
    %9376 = vmatprep.subr.mxu0 0.0
    %9377 = vmatpush1.msra.mxu0 %v9304
    %9378 = vmatprep.subr.mxu0 0.0
    %9379 = vmatpush1.msra.mxu0 %v9305
    %9380 = vmatprep.subr.mxu0 0.0
    %9381 = vmatpush1.msra.mxu0 0.0
    %9382 = vmatprep.subr.mxu0 0.0
    %9383 = vmatpush1.msra.mxu0 0.0
    %9384 = vmatprep.subr.mxu0 0.0
    %9385 = vmatpush1.msra.mxu0 0.0
    %9386 = vmatprep.subr.mxu0 0.0
    %9387 = vmatpush1.msra.mxu0 0.0
    %9388 = vmatprep.subr.mxu0 0.0
    %9389 = vmatpush1.msra.mxu0 0.0
    %9390 = vmatprep.subr.mxu0 0.0
    %9391 = vmatpush1.msra.mxu0 0.0
    %9392 = vmatprep.subr.mxu0 0.0
    %9393 = vmatpush1.msra.mxu0 0.0
    %9394 = vmatprep.subr.mxu0 0.0
    %9395 = vmatpush1.msra.mxu0 0.0
    %9396 = vmatprep.subr.mxu0 0.0
    %9397 = vmatpush1.msra.mxu0 0.0
    %9398 = vmatprep.subr.mxu0 0.0
    %9399 = vmatpush1.msra.mxu0 0.0
    %9400 = vmatprep.subr.mxu0 0.0
    %9401 = vmatpush1.msra.mxu0 0.0
    %9402 = vmatprep.subr.mxu0 0.0
    %9403 = vmatpush1.msra.mxu0 0.0
    %9404 = vmatprep.subr.mxu0 0.0
    %9405 = vmatpush1.msra.mxu0 0.0
    %9406 = vmatprep.subr.mxu0 0.0
    %9407 = vmatpush1.msra.mxu0 0.0
    %9408 = vmatprep.subr.mxu0 0.0
    %9409 = vmatpush1.msra.mxu0 0.0
    %9410 = vmatprep.subr.mxu0 0.0
    %9411 = vmatpush1.msra.mxu0 0.0
    %9412 = vmatprep.subr.mxu0 0.0
    %9413 = vmatpush1.msra.mxu0 0.0
    %9414 = vmatprep.subr.mxu0 0.0
    %9415 = vmatpush1.msra.mxu0 0.0
    %9416 = vmatprep.subr.mxu0 0.0
    %9417 = vmatpush1.msra.mxu0 0.0
    %9418 = vmatprep.subr.mxu0 0.0
    %9419 = vmatpush1.msra.mxu0 0.0
    %9420 = vmatprep.subr.mxu0 0.0
    %9421 = vmatpush1.msra.mxu0 0.0
    %9422 = vmatprep.subr.mxu0 0.0
    %9423 = vmatpush1.msra.mxu0 0.0
    %9424 = vmatprep.subr.mxu0 0.0
    %9425 = vmatpush1.msra.mxu0 0.0
    %9426 = vmatprep.subr.mxu0 0.0
    %9427 = vmatpush1.msra.mxu0 0.0
    %9428 = vmatprep.subr.mxu0 0.0
    %9429 = vmatpush1.msra.mxu0 0.0
    %9430 = vmatprep.subr.mxu0 0.0
    %9431 = vmatpush1.msra.mxu0 0.0
    %9432 = vmatprep.subr.mxu0 0.0
    %9433 = vmatpush1.msra.mxu0 0.0
    %9434 = vmatprep.subr.mxu0 0.0
    %9435 = vmatpush1.msra.mxu0 0.0
    %9436 = vmatprep.subr.mxu0 0.0
    %9437 = vmatpush1.msra.mxu0 0.0
    %9438 = vmatprep.subr.mxu0 0.0
    %9439 = vmatpush1.msra.mxu0 0.0
    %9440 = vmatprep.mubr.f32.mxu0 0.0
    %9441 = vmatmul.mubr.f32.gmra.mrb[0].mxu0 %v6384
    %v9442 = vpop.f32.mrb[0].mxu0
    %v9443 = vadd.f32 0.0, %v9442
    %v9444 = vpop.f32.mrb[0].mxu0
    %9445 = vdwg.mxu0
    %v9446 = vmax.f32 %v9373, %v9443
    %v9448 = vsel %vm6153, %v6151, 0
    %v9451 = vsel %vm6153, %v6152, 0
    %9453 = vmatprep.subr.mxu0 0.0
    %9454 = vmatpush1.msra.mxu0 %v1015
    %9455 = vmatprep.subr.mxu0 0.0
    %9456 = vmatpush1.msra.mxu0 0.0
    %9457 = vmatprep.subr.mxu0 0.0
    %9458 = vmatpush1.msra.mxu0 0.0
    %9459 = vmatprep.subr.mxu0 0.0
    %9460 = vmatpush1.msra.mxu0 0.0
    %9461 = vmatprep.subr.mxu0 0.0
    %9462 = vmatpush1.msra.mxu0 0.0
    %9463 = vmatprep.subr.mxu0 0.0
    %9464 = vmatpush1.msra.mxu0 0.0
    %9465 = vmatprep.subr.mxu0 0.0
    %9466 = vmatpush1.msra.mxu0 0.0
    %9467 = vmatprep.subr.mxu0 0.0
    %9468 = vmatpush1.msra.mxu0 0.0
    %9469 = vmatprep.subr.mxu0 0.0
    %9470 = vmatpush1.msra.mxu0 0.0
    %9471 = vmatprep.subr.mxu0 0.0
    %9472 = vmatpush1.msra.mxu0 0.0
    %9473 = vmatprep.subr.mxu0 0.0
    %9474 = vmatpush1.msra.mxu0 0.0
    %9475 = vmatprep.subr.mxu0 0.0
    %9476 = vmatpush1.msra.mxu0 0.0
    %9477 = vmatprep.subr.mxu0 0.0
    %9478 = vmatpush1.msra.mxu0 0.0
    %9479 = vmatprep.subr.mxu0 0.0
    %9480 = vmatpush1.msra.mxu0 0.0
    %9481 = vmatprep.subr.mxu0 0.0
    %9482 = vmatpush1.msra.mxu0 0.0
    %9483 = vmatprep.subr.mxu0 0.0
    %9484 = vmatpush1.msra.mxu0 0.0
    %9485 = vmatprep.subr.mxu0 0.0
    %9486 = vmatpush1.msra.mxu0 0.0
    %9487 = vmatprep.subr.mxu0 0.0
    %9488 = vmatpush1.msra.mxu0 0.0
    %9489 = vmatprep.subr.mxu0 0.0
    %9490 = vmatpush1.msra.mxu0 0.0
    %9491 = vmatprep.subr.mxu0 0.0
    %9492 = vmatpush1.msra.mxu0 0.0
    %9493 = vmatprep.subr.mxu0 0.0
    %9494 = vmatpush1.msra.mxu0 0.0
    %9495 = vmatprep.subr.mxu0 0.0
    %9496 = vmatpush1.msra.mxu0 0.0
    %9497 = vmatprep.subr.mxu0 0.0
    %9498 = vmatpush1.msra.mxu0 0.0
    %9499 = vmatprep.subr.mxu0 0.0
    %9500 = vmatpush1.msra.mxu0 0.0
    %9501 = vmatprep.subr.mxu0 0.0
    %9502 = vmatpush1.msra.mxu0 0.0
    %9503 = vmatprep.subr.mxu0 0.0
    %9504 = vmatpush1.msra.mxu0 0.0
    %9505 = vmatprep.subr.mxu0 0.0
    %9506 = vmatpush1.msra.mxu0 0.0
    %9507 = vmatprep.subr.mxu0 0.0
    %9508 = vmatpush1.msra.mxu0 0.0
    %9509 = vmatprep.subr.mxu0 0.0
    %9510 = vmatpush1.msra.mxu0 0.0
    %9511 = vmatprep.subr.mxu0 0.0
    %9512 = vmatpush1.msra.mxu0 0.0
    %9513 = vmatprep.subr.mxu0 0.0
    %9514 = vmatpush1.msra.mxu0 0.0
    %9515 = vmatprep.subr.mxu0 0.0
    %9516 = vmatpush1.msra.mxu0 0.0
    %9517 = vmatprep.mubr.f32.mxu0 0.0
    %9518 = vmatmul.mubr.f32.gmra.mrb[0].mxu0 %v9448
    %v9519 = vpop.f32.mrb[0].mxu0
    %v9520 = vadd.f32 0.0, %v9519
    %v9521 = vpop.f32.mrb[0].mxu0
    %9522 = vmatprep.mubr.f32.mxu0 0.0
    %9523 = vmatmul.mubr.f32.gmra.mrb[0].mxu0 %v9451
    %v9524 = vpop.f32.mrb[0].mxu0
    %v9525 = vadd.f32 0.0, %v9524
    %v9526 = vpop.f32.mrb[0].mxu0
    %9527 = vdwg.mxu0
    %9528 = vmatprep.subr.mxu0 0.0
    %9529 = vmatpush1.msra.mxu0 %v1025
    %9530 = vmatprep.subr.mxu0 0.0
    %9531 = vmatpush1.msra.mxu0 0.0
    %9532 = vmatprep.subr.mxu0 0.0
    %9533 = vmatpush1.msra.mxu0 0.0
    %9534 = vmatprep.subr.mxu0 0.0
    %9535 = vmatpush1.msra.mxu0 0.0
    %9536 = vmatprep.subr.mxu0 0.0
    %9537 = vmatpush1.msra.mxu0 0.0
    %9538 = vmatprep.subr.mxu0 0.0
    %9539 = vmatpush1.msra.mxu0 0.0
    %9540 = vmatprep.subr.mxu0 0.0
    %9541 = vmatpush1.msra.mxu0 0.0
    %9542 = vmatprep.subr.mxu0 0.0
    %9543 = vmatpush1.msra.mxu0 0.0
    %9544 = vmatprep.subr.mxu0 0.0
    %9545 = vmatpush1.msra.mxu0 0.0
    %9546 = vmatprep.subr.mxu0 0.0
    %9547 = vmatpush1.msra.mxu0 0.0
    %9548 = vmatprep.subr.mxu0 0.0
    %9549 = vmatpush1.msra.mxu0 0.0
    %9550 = vmatprep.subr.mxu0 0.0
    %9551 = vmatpush1.msra.mxu0 0.0
    %9552 = vmatprep.subr.mxu0 0.0
    %9553 = vmatpush1.msra.mxu0 0.0
    %9554 = vmatprep.subr.mxu0 0.0
    %9555 = vmatpush1.msra.mxu0 0.0
    %9556 = vmatprep.subr.mxu0 0.0
    %9557 = vmatpush1.msra.mxu0 0.0
    %9558 = vmatprep.subr.mxu0 0.0
    %9559 = vmatpush1.msra.mxu0 0.0
    %9560 = vmatprep.subr.mxu0 0.0
    %9561 = vmatpush1.msra.mxu0 0.0
    %9562 = vmatprep.subr.mxu0 0.0
    %9563 = vmatpush1.msra.mxu0 0.0
    %9564 = vmatprep.subr.mxu0 0.0
    %9565 = vmatpush1.msra.mxu0 0.0
    %9566 = vmatprep.subr.mxu0 0.0
    %9567 = vmatpush1.msra.mxu0 0.0
    %9568 = vmatprep.subr.mxu0 0.0
    %9569 = vmatpush1.msra.mxu0 0.0
    %9570 = vmatprep.subr.mxu0 0.0
    %9571 = vmatpush1.msra.mxu0 0.0
    %9572 = vmatprep.subr.mxu0 0.0
    %9573 = vmatpush1.msra.mxu0 0.0
    %9574 = vmatprep.subr.mxu0 0.0
    %9575 = vmatpush1.msra.mxu0 0.0
    %9576 = vmatprep.subr.mxu0 0.0
    %9577 = vmatpush1.msra.mxu0 0.0
    %9578 = vmatprep.subr.mxu0 0.0
    %9579 = vmatpush1.msra.mxu0 0.0
    %9580 = vmatprep.subr.mxu0 0.0
    %9581 = vmatpush1.msra.mxu0 0.0
    %9582 = vmatprep.subr.mxu0 0.0
    %9583 = vmatpush1.msra.mxu0 0.0
    %9584 = vmatprep.subr.mxu0 0.0
    %9585 = vmatpush1.msra.mxu0 0.0
    %9586 = vmatprep.subr.mxu0 0.0
    %9587 = vmatpush1.msra.mxu0 0.0
    %9588 = vmatprep.subr.mxu0 0.0
    %9589 = vmatpush1.msra.mxu0 0.0
    %9590 = vmatprep.subr.mxu0 0.0
    %9591 = vmatpush1.msra.mxu0 0.0
    %9592 = vmatprep.mubr.f32.mxu0 0.0
    %9593 = vmatmul.mubr.f32.gmra.mrb[0].mxu0 %v9448
    %v9594 = vpop.f32.mrb[0].mxu0
    %v9595 = vadd.f32 0.0, %v9594
    %v9596 = vpop.f32.mrb[0].mxu0
    %9597 = vmatprep.mubr.f32.mxu0 0.0
    %9598 = vmatmul.mubr.f32.gmra.mrb[0].mxu0 %v9451
    %v9599 = vpop.f32.mrb[0].mxu0
    %v9600 = vadd.f32 0.0, %v9599
    %v9601 = vpop.f32.mrb[0].mxu0
    %9602 = vdwg.mxu0
    %v9603 = vmax.f32 %v9520, %v9595
    %v9604 = vmax.f32 %v9525, %v9600
    %9605 = vmatprep.subr.mxu0 0.0
    %9606 = vmatpush1.msra.mxu0 %v9603
    %9607 = vmatprep.subr.mxu0 0.0
    %9608 = vmatpush1.msra.mxu0 %v9604
    %9609 = vmatprep.subr.mxu0 0.0
    %9610 = vmatpush1.msra.mxu0 0.0
    %9611 = vmatprep.subr.mxu0 0.0
    %9612 = vmatpush1.msra.mxu0 0.0
    %9613 = vmatprep.subr.mxu0 0.0
    %9614 = vmatpush1.msra.mxu0 0.0
    %9615 = vmatprep.subr.mxu0 0.0
    %9616 = vmatpush1.msra.mxu0 0.0
    %9617 = vmatprep.subr.mxu0 0.0
    %9618 = vmatpush1.msra.mxu0 0.0
    %9619 = vmatprep.subr.mxu0 0.0
    %9620 = vmatpush1.msra.mxu0 0.0
    %9621 = vmatprep.subr.mxu0 0.0
    %9622 = vmatpush1.msra.mxu0 0.0
    %9623 = vmatprep.subr.mxu0 0.0
    %9624 = vmatpush1.msra.mxu0 0.0
    %9625 = vmatprep.subr.mxu0 0.0
    %9626 = vmatpush1.msra.mxu0 0.0
    %9627 = vmatprep.subr.mxu0 0.0
    %9628 = vmatpush1.msra.mxu0 0.0
    %9629 = vmatprep.subr.mxu0 0.0
    %9630 = vmatpush1.msra.mxu0 0.0
    %9631 = vmatprep.subr.mxu0 0.0
    %9632 = vmatpush1.msra.mxu0 0.0
    %9633 = vmatprep.subr.mxu0 0.0
    %9634 = vmatpush1.msra.mxu0 0.0
    %9635 = vmatprep.subr.mxu0 0.0
    %9636 = vmatpush1.msra.mxu0 0.0
    %9637 = vmatprep.subr.mxu0 0.0
    %9638 = vmatpush1.msra.mxu0 0.0
    %9639 = vmatprep.subr.mxu0 0.0
    %9640 = vmatpush1.msra.mxu0 0.0
    %9641 = vmatprep.subr.mxu0 0.0
    %9642 = vmatpush1.msra.mxu0 0.0
    %9643 = vmatprep.subr.mxu0 0.0
    %9644 = vmatpush1.msra.mxu0 0.0
    %9645 = vmatprep.subr.mxu0 0.0
    %9646 = vmatpush1.msra.mxu0 0.0
    %9647 = vmatprep.subr.mxu0 0.0
    %9648 = vmatpush1.msra.mxu0 0.0
    %9649 = vmatprep.subr.mxu0 0.0
    %9650 = vmatpush1.msra.mxu0 0.0
    %9651 = vmatprep.subr.mxu0 0.0
    %9652 = vmatpush1.msra.mxu0 0.0
    %9653 = vmatprep.subr.mxu0 0.0
    %9654 = vmatpush1.msra.mxu0 0.0
    %9655 = vmatprep.subr.mxu0 0.0
    %9656 = vmatpush1.msra.mxu0 0.0
    %9657 = vmatprep.subr.mxu0 0.0
    %9658 = vmatpush1.msra.mxu0 0.0
    %9659 = vmatprep.subr.mxu0 0.0
    %9660 = vmatpush1.msra.mxu0 0.0
    %9661 = vmatprep.subr.mxu0 0.0
    %9662 = vmatpush1.msra.mxu0 0.0
    %9663 = vmatprep.subr.mxu0 0.0
    %9664 = vmatpush1.msra.mxu0 0.0
    %9665 = vmatprep.subr.mxu0 0.0
    %9666 = vmatpush1.msra.mxu0 0.0
    %9667 = vmatprep.subr.mxu0 0.0
    %9668 = vmatpush1.msra.mxu0 0.0
    %9669 = vmatprep.mubr.f32.mxu0 0.0
    %9670 = vmatmul.mubr.f32.gmra.mrb[0].mxu0 %v6312
    %v9671 = vpop.f32.mrb[0].mxu0
    %v9672 = vadd.f32 0.0, %v9671
    %v9673 = vpop.f32.mrb[0].mxu0
    %9674 = vdwg.mxu0
    %9675 = vmatprep.subr.mxu0 0.0
    %9676 = vmatpush1.msra.mxu0 %v9603
    %9677 = vmatprep.subr.mxu0 0.0
    %9678 = vmatpush1.msra.mxu0 %v9604
    %9679 = vmatprep.subr.mxu0 0.0
    %9680 = vmatpush1.msra.mxu0 0.0
    %9681 = vmatprep.subr.mxu0 0.0
    %9682 = vmatpush1.msra.mxu0 0.0
    %9683 = vmatprep.subr.mxu0 0.0
    %9684 = vmatpush1.msra.mxu0 0.0
    %9685 = vmatprep.subr.mxu0 0.0
    %9686 = vmatpush1.msra.mxu0 0.0
    %9687 = vmatprep.subr.mxu0 0.0
    %9688 = vmatpush1.msra.mxu0 0.0
    %9689 = vmatprep.subr.mxu0 0.0
    %9690 = vmatpush1.msra.mxu0 0.0
    %9691 = vmatprep.subr.mxu0 0.0
    %9692 = vmatpush1.msra.mxu0 0.0
    %9693 = vmatprep.subr.mxu0 0.0
    %9694 = vmatpush1.msra.mxu0 0.0
    %9695 = vmatprep.subr.mxu0 0.0
    %9696 = vmatpush1.msra.mxu0 0.0
    %9697 = vmatprep.subr.mxu0 0.0
    %9698 = vmatpush1.msra.mxu0 0.0
    %9699 = vmatprep.subr.mxu0 0.0
    %9700 = vmatpush1.msra.mxu0 0.0
    %9701 = vmatprep.subr.mxu0 0.0
    %9702 = vmatpush1.msra.mxu0 0.0
    %9703 = vmatprep.subr.mxu0 0.0
    %9704 = vmatpush1.msra.mxu0 0.0
    %9705 = vmatprep.subr.mxu0 0.0
    %9706 = vmatpush1.msra.mxu0 0.0
    %9707 = vmatprep.subr.mxu0 0.0
    %9708 = vmatpush1.msra.mxu0 0.0
    %9709 = vmatprep.subr.mxu0 0.0
    %9710 = vmatpush1.msra.mxu0 0.0
    %9711 = vmatprep.subr.mxu0 0.0
    %9712 = vmatpush1.msra.mxu0 0.0
    %9713 = vmatprep.subr.mxu0 0.0
    %9714 = vmatpush1.msra.mxu0 0.0
    %9715 = vmatprep.subr.mxu0 0.0
    %9716 = vmatpush1.msra.mxu0 0.0
    %9717 = vmatprep.subr.mxu0 0.0
    %9718 = vmatpush1.msra.mxu0 0.0
    %9719 = vmatprep.subr.mxu0 0.0
    %9720 = vmatpush1.msra.mxu0 0.0
    %9721 = vmatprep.subr.mxu0 0.0
    %9722 = vmatpush1.msra.mxu0 0.0
    %9723 = vmatprep.subr.mxu0 0.0
    %9724 = vmatpush1.msra.mxu0 0.0
    %9725 = vmatprep.subr.mxu0 0.0
    %9726 = vmatpush1.msra.mxu0 0.0
    %9727 = vmatprep.subr.mxu0 0.0
    %9728 = vmatpush1.msra.mxu0 0.0
    %9729 = vmatprep.subr.mxu0 0.0
    %9730 = vmatpush1.msra.mxu0 0.0
    %9731 = vmatprep.subr.mxu0 0.0
    %9732 = vmatpush1.msra.mxu0 0.0
    %9733 = vmatprep.subr.mxu0 0.0
    %9734 = vmatpush1.msra.mxu0 0.0
    %9735 = vmatprep.subr.mxu0 0.0
    %9736 = vmatpush1.msra.mxu0 0.0
    %9737 = vmatprep.subr.mxu0 0.0
    %9738 = vmatpush1.msra.mxu0 0.0
    %9739 = vmatprep.mubr.f32.mxu0 0.0
    %9740 = vmatmul.mubr.f32.gmra.mrb[0].mxu0 %v6384
    %v9741 = vpop.f32.mrb[0].mxu0
    %v9742 = vadd.f32 0.0, %v9741
    %v9743 = vpop.f32.mrb[0].mxu0
    %9744 = vdwg.mxu0
    %v9745 = vmax.f32 %v9672, %v9742
    %9747 = vrot.lane.b32.xlu0 %v6755, 4
    %v9748 = vpop.permute.xlu0 %9747
    %9751 = vrot.lane.b32.xlu0 %v7054, 8
    %v9752 = vpop.permute.xlu0 %9751
    %9755 = vrot.lane.b32.xlu0 %v7353, 12
    %v9756 = vpop.permute.xlu0 %9755
    %9759 = vrot.lane.b32.xlu0 %v7652, 16
    %v9760 = vpop.permute.xlu0 %9759
    %9763 = vrot.lane.b32.xlu0 %v7951, 20
    %v9764 = vpop.permute.xlu0 %9763
    %9767 = vrot.lane.b32.xlu0 %v8250, 24
    %v9768 = vpop.permute.xlu0 %9767
    %9771 = vrot.lane.b32.xlu0 %v8549, 28
    %v9772 = vpop.permute.xlu0 %9771
    %9775 = vrot.lane.b32.xlu0 %v8848, 32
    %v9776 = vpop.permute.xlu0 %9775
    %9779 = vrot.lane.b32.xlu0 %v9147, 36
    %v9780 = vpop.permute.xlu0 %9779
    %9783 = vrot.lane.b32.xlu0 %v9446, 40
    %v9784 = vpop.permute.xlu0 %9783
    %9787 = vrot.lane.b32.xlu0 %v9745, 44
    %v9788 = vpop.permute.xlu0 %9787
    %v9790 = vsel %vm3612, %v6456, %v9748
    %v9791 = vsel %vm6153, %v9790, %v9752
    %v9792 = vsel %vm260, %v9791, %v9756
    %v9793 = vsel %vm3615, %v9792, %v9760
    %vm9794 = vcmask 162816
    %v9795 = vsel %vm9794, %v9793, %v9764
    %v9796 = vsel %vm1052, %v9795, %v9768
    %v9797 = vsel %vm212, %v9796, %v9772
    %vm9798 = vcmask 261120
    %v9799 = vsel %vm9798, %v9797, %v9776
    %v9800 = vsel %vm3590, %v9799, %v9780
    %v9801 = vsel %vm3620, %v9800, %v9784
    %vm9802 = vcmask 359424
    %v9803 = vsel %vm9802, %v9801, %v9788
    %v9805 = vrot.slane %v9803, 3
    %v9807 = vsel %vm3358, %v9803, %v9805
    %v9808 = vrot.slane %v9803, 1
    %v9810 = vrot.slane %v9803, 4
    %v9812 = vsel %vm3358, %v9808, %v9810
    %v9813 = vrot.slane %v9803, 2
    %v9815 = vrot.slane %v9803, 5
    %v9817 = vsel %vm3358, %v9813, %v9815
    %v9818 = vrot.slane %v9803, 6
    %v9820 = vsel %vm3358, %v9805, %v9818
    %9822 = vrot.lane.b32.xlu0 %v9812, 48
    %v9823 = vpop.permute.xlu0 %9822
    %9826 = vrot.lane.b32.xlu0 %v9817, 96
    %v9827 = vpop.permute.xlu0 %9826
    %9830 = vrot.lane.b32.xlu0 %v9820, 16
    %v9831 = vpop.permute.xlu0 %9830
    %v9833 = vsel %vm1267, %v9807, %v9823
    %v9834 = vsel %vm3603, %v9833, %v9827
    %v9835 = vsel %vm3615, %v9827, %v9831
    %v9836 = vld [vmem:[%s5] sm:$0xff]
    %v9837 = vld [vmem:[%s5 + $0x8] sm:$0xff]
    %v9838 = vld [vmem:[%s5 + $0x10] sm:$0xff]
    %v9839 = vld [vmem:[%s5 + $0x18] sm:$0xff]
    %v9840 = vld [vmem:[%s5 + $0x20] sm:$0xff]
    %v9841 = vld [vmem:[%s5 + $0x28] sm:$0xff]
    %v9842 = vld [vmem:[%s5 + $0x30] sm:$0xff]
    %v9843 = vld [vmem:[%s5 + $0x38] sm:$0xff]
    %v9844 = vld [vmem:[%s5 + $0x40] sm:$0xff]
    %v9845 = vld [vmem:[%s5 + $0x48] sm:$0xff]
    %v9846 = vld [vmem:[%s5 + $0x50] sm:$0xff]
    %v9847 = vld [vmem:[%s5 + $0x58] sm:$0xff]
    %v9848 = vld [vmem:[%s5 + $0x60] sm:$0xff]
    %v9849 = vld [vmem:[%s5 + $0x68] sm:$0xff]
    %v9850 = vld [vmem:[%s5 + $0x70] sm:$0xff]
    %v9851 = vld [vmem:[%s5 + $0x78] sm:$0xff]
    %v9852 = vld [vmem:[%s5 + $0x80] sm:$0xff]
    %v9853 = vld [vmem:[%s5 + $0x88] sm:$0xff]
    %v9854 = vld [vmem:[%s5 + $0x90] sm:$0xff]
    %v9855 = vld [vmem:[%s5 + $0x98] sm:$0xff]
    %v9856 = vld [vmem:[%s5 + $0xa0] sm:$0xff]
    %v9857 = vld [vmem:[%s5 + $0xa8] sm:$0xff]
    %v9858 = vld [vmem:[%s5 + $0xb0] sm:$0xff]
    %v9859 = vld [vmem:[%s5 + $0xb8] sm:$0xff]
    %v9860 = vld [vmem:[%s6] sm:$0x1]
    %v9862 = vlaneseq
    %v9863 = vshrl.u32 %v9862, 7
    %v9864 = vsub.s32 0, %v9863
    %v9865 = vrot.slane %v9860, %v9864
    %v9868 = vsel %vm3742, %v9835, 0
    %9870 = vmatprep.subr.mxu0 0.0
    %9871 = vmatpush1.msra.mxu0 %v9836
    %9872 = vmatprep.subr.mxu0 0.0
    %9873 = vmatpush1.msra.mxu0 %v9837
    %9874 = vmatprep.subr.mxu0 0.0
    %9875 = vmatpush1.msra.mxu0 %v9838
    %9876 = vmatprep.subr.mxu0 0.0
    %9877 = vmatpush1.msra.mxu0 %v9839
    %9878 = vmatprep.subr.mxu0 0.0
    %9879 = vmatpush1.msra.mxu0 %v9840
    %9880 = vmatprep.subr.mxu0 0.0
    %9881 = vmatpush1.msra.mxu0 %v9841
    %9882 = vmatprep.subr.mxu0 0.0
    %9883 = vmatpush1.msra.mxu0 %v9842
    %9884 = vmatprep.subr.mxu0 0.0
    %9885 = vmatpush1.msra.mxu0 %v9843
    %9886 = vmatprep.subr.mxu0 0.0
    %9887 = vmatpush1.msra.mxu0 %v9844
    %9888 = vmatprep.subr.mxu0 0.0
    %9889 = vmatpush1.msra.mxu0 %v9845
    %9890 = vmatprep.subr.mxu0 0.0
    %9891 = vmatpush1.msra.mxu0 %v9846
    %9892 = vmatprep.subr.mxu0 0.0
    %9893 = vmatpush1.msra.mxu0 %v9847
    %9894 = vmatprep.subr.mxu0 0.0
    %9895 = vmatpush1.msra.mxu0 %v9848
    %9896 = vmatprep.subr.mxu0 0.0
    %9897 = vmatpush1.msra.mxu0 %v9849
    %9898 = vmatprep.subr.mxu0 0.0
    %9899 = vmatpush1.msra.mxu0 %v9850
    %9900 = vmatprep.subr.mxu0 0.0
    %9901 = vmatpush1.msra.mxu0 %v9851
    %9902 = vmatprep.subr.mxu0 0.0
    %9903 = vmatpush1.msra.mxu0 %v9852
    %9904 = vmatprep.subr.mxu0 0.0
    %9905 = vmatpush1.msra.mxu0 %v9853
    %9906 = vmatprep.subr.mxu0 0.0
    %9907 = vmatpush1.msra.mxu0 %v9854
    %9908 = vmatprep.subr.mxu0 0.0
    %9909 = vmatpush1.msra.mxu0 %v9855
    %9910 = vmatprep.subr.mxu0 0.0
    %9911 = vmatpush1.msra.mxu0 %v9856
    %9912 = vmatprep.subr.mxu0 0.0
    %9913 = vmatpush1.msra.mxu0 %v9857
    %9914 = vmatprep.subr.mxu0 0.0
    %9915 = vmatpush1.msra.mxu0 %v9858
    %9916 = vmatprep.subr.mxu0 0.0
    %9917 = vmatpush1.msra.mxu0 %v9859
    %9918 = vmatprep.subr.mxu0 0.0
    %9919 = vmatpush1.msra.mxu0 0.0
    %9920 = vmatprep.subr.mxu0 0.0
    %9921 = vmatpush1.msra.mxu0 0.0
    %9922 = vmatprep.subr.mxu0 0.0
    %9923 = vmatpush1.msra.mxu0 0.0
    %9924 = vmatprep.subr.mxu0 0.0
    %9925 = vmatpush1.msra.mxu0 0.0
    %9926 = vmatprep.subr.mxu0 0.0
    %9927 = vmatpush1.msra.mxu0 0.0
    %9928 = vmatprep.subr.mxu0 0.0
    %9929 = vmatpush1.msra.mxu0 0.0
    %9930 = vmatprep.subr.mxu0 0.0
    %9931 = vmatpush1.msra.mxu0 0.0
    %9932 = vmatprep.subr.mxu0 0.0
    %9933 = vmatpush1.msra.mxu0 0.0
    %9934 = vmatprep.mubr.f32.mxu0 %v9868
    %9935 = vmatmul.mubr.f32.gmra.mrb[0].mxu0 %v9834
    %v9936 = vpop.f32.mrb[0].mxu0
    %v9937 = vadd.f32 %v9865, %v9936
    %v9938 = vpop.f32.mrb[0].mxu0
    %9939 = vdwg.mxu0
    %v9940 = vmax.f32 %v9937, 0.0
    %v9941 = vld [vmem:[%s7] sm:$0xff]
    %v9942 = vld [vmem:[%s7 + $0x8] sm:$0xff]
    %v9943 = vld [vmem:[%s7 + $0x10] sm:$0xff]
    %v9944 = vld [vmem:[%s7 + $0x18] sm:$0xff]
    %v9945 = vld [vmem:[%s7 + $0x20] sm:$0xff]
    %v9946 = vld [vmem:[%s7 + $0x28] sm:$0xff]
    %v9947 = vld [vmem:[%s7 + $0x30] sm:$0xff]
    %v9948 = vld [vmem:[%s7 + $0x38] sm:$0xff]
    %v9949 = vld [vmem:[%s7 + $0x40] sm:$0xff]
    %v9950 = vld [vmem:[%s7 + $0x48] sm:$0xff]
    %v9951 = vld [vmem:[%s7 + $0x50] sm:$0xff]
    %v9952 = vld [vmem:[%s7 + $0x58] sm:$0xff]
    %v9953 = vld [vmem:[%s7 + $0x60] sm:$0xff]
    %v9954 = vld [vmem:[%s7 + $0x68] sm:$0xff]
    %v9955 = vld [vmem:[%s7 + $0x70] sm:$0xff]
    %v9956 = vld [vmem:[%s8] sm:$0x1]
    %v9958 = vlaneseq
    %v9959 = vshrl.u32 %v9958, 7
    %v9960 = vsub.s32 0, %v9959
    %v9961 = vrot.slane %v9956, %v9960
    %v9964 = vsel %vm3609, %v9940, 0
    %9966 = vmatprep.subr.mxu0 0.0
    %9967 = vmatpush1.msra.mxu0 %v9941
    %9968 = vmatprep.subr.mxu0 0.0
    %9969 = vmatpush1.msra.mxu0 %v9942
    %9970 = vmatprep.subr.mxu0 0.0
    %9971 = vmatpush1.msra.mxu0 %v9943
    %9972 = vmatprep.subr.mxu0 0.0
    %9973 = vmatpush1.msra.mxu0 %v9944
    %9974 = vmatprep.subr.mxu0 0.0
    %9975 = vmatpush1.msra.mxu0 %v9945
    %9976 = vmatprep.subr.mxu0 0.0
    %9977 = vmatpush1.msra.mxu0 %v9946
    %9978 = vmatprep.subr.mxu0 0.0
    %9979 = vmatpush1.msra.mxu0 %v9947
    %9980 = vmatprep.subr.mxu0 0.0
    %9981 = vmatpush1.msra.mxu0 %v9948
    %9982 = vmatprep.subr.mxu0 0.0
    %9983 = vmatpush1.msra.mxu0 %v9949
    %9984 = vmatprep.subr.mxu0 0.0
    %9985 = vmatpush1.msra.mxu0 %v9950
    %9986 = vmatprep.subr.mxu0 0.0
    %9987 = vmatpush1.msra.mxu0 %v9951
    %9988 = vmatprep.subr.mxu0 0.0
    %9989 = vmatpush1.msra.mxu0 %v9952
    %9990 = vmatprep.subr.mxu0 0.0
    %9991 = vmatpush1.msra.mxu0 %v9953
    %9992 = vmatprep.subr.mxu0 0.0
    %9993 = vmatpush1.msra.mxu0 %v9954
    %9994 = vmatprep.subr.mxu0 0.0
    %9995 = vmatpush1.msra.mxu0 %v9955
    %9996 = vmatprep.subr.mxu0 0.0
    %9997 = vmatpush1.msra.mxu0 0.0
    %9998 = vmatprep.subr.mxu0 0.0
    %9999 = vmatpush1.msra.mxu0 0.0
    %10000 = vmatprep.subr.mxu0 0.0
    %10001 = vmatpush1.msra.mxu0 0.0
    %10002 = vmatprep.subr.mxu0 0.0
    %10003 = vmatpush1.msra.mxu0 0.0
    %10004 = vmatprep.subr.mxu0 0.0
    %10005 = vmatpush1.msra.mxu0 0.0
    %10006 = vmatprep.subr.mxu0 0.0
    %10007 = vmatpush1.msra.mxu0 0.0
    %10008 = vmatprep.subr.mxu0 0.0
    %10009 = vmatpush1.msra.mxu0 0.0
    %10010 = vmatprep.subr.mxu0 0.0
    %10011 = vmatpush1.msra.mxu0 0.0
    %10012 = vmatprep.subr.mxu0 0.0
    %10013 = vmatpush1.msra.mxu0 0.0
    %10014 = vmatprep.subr.mxu0 0.0
    %10015 = vmatpush1.msra.mxu0 0.0
    %10016 = vmatprep.subr.mxu0 0.0
    %10017 = vmatpush1.msra.mxu0 0.0
    %10018 = vmatprep.subr.mxu0 0.0
    %10019 = vmatpush1.msra.mxu0 0.0
    %10020 = vmatprep.subr.mxu0 0.0
    %10021 = vmatpush1.msra.mxu0 0.0
    %10022 = vmatprep.subr.mxu0 0.0
    %10023 = vmatpush1.msra.mxu0 0.0
    %10024 = vmatprep.subr.mxu0 0.0
    %10025 = vmatpush1.msra.mxu0 0.0
    %10026 = vmatprep.subr.mxu0 0.0
    %10027 = vmatpush1.msra.mxu0 0.0
    %10028 = vmatprep.subr.mxu0 0.0
    %10029 = vmatpush1.msra.mxu0 0.0
    %10030 = vmatprep.mubr.f32.mxu0 0.0
    %10031 = vmatmul.mubr.f32.gmra.mrb[0].mxu0 %v9964
    %v10032 = vpop.f32.mrb[0].mxu0
    %v10033 = vadd.f32 %v9961, %v10032
    %v10034 = vpop.f32.mrb[0].mxu0
    %10035 = vdwg.mxu0
    %v10036 = vmax.f32 %v10033, 0.0
    %v10037 = vld [vmem:[%s9] sm:$0xff]
    %v10038 = vld [vmem:[%s9 + $0x8] sm:$0xff]
    %v10039 = vld [vmem:[%s9 + $0x10] sm:$0xff]
    %v10040 = vld [vmem:[%s9 + $0x18] sm:$0xff]
    %v10041 = vld [vmem:[%s9 + $0x20] sm:$0xff]
    %v10042 = vld [vmem:[%s9 + $0x28] sm:$0xff]
    %v10043 = vld [vmem:[%s9 + $0x30] sm:$0xff]
    %v10044 = vld [vmem:[%s9 + $0x38] sm:$0xf]
    %v10045 = vld [vmem:[%s10] sm:$0x1]
    %v10047 = vlaneseq
    %v10048 = vshrl.u32 %v10047, 7
    %v10049 = vsub.s32 0, %v10048
    %v10050 = vrot.slane %v10045, %v10049
    %v10053 = vsel %vm3595, %v10036, 0
    %v10056 = vsel %vm125, %v10044, 0
    %10058 = vmatprep.subr.mxu0 0.0
    %10059 = vmatpush1.msra.mxu0 %v10037
    %10060 = vmatprep.subr.mxu0 0.0
    %10061 = vmatpush1.msra.mxu0 %v10038
    %10062 = vmatprep.subr.mxu0 0.0
    %10063 = vmatpush1.msra.mxu0 %v10039
    %10064 = vmatprep.subr.mxu0 0.0
    %10065 = vmatpush1.msra.mxu0 %v10040
    %10066 = vmatprep.subr.mxu0 0.0
    %10067 = vmatpush1.msra.mxu0 %v10041
    %10068 = vmatprep.subr.mxu0 0.0
    %10069 = vmatpush1.msra.mxu0 %v10042
    %10070 = vmatprep.subr.mxu0 0.0
    %10071 = vmatpush1.msra.mxu0 %v10043
    %10072 = vmatprep.subr.mxu0 0.0
    %10073 = vmatpush1.msra.mxu0 %v10056
    %10074 = vmatprep.subr.mxu0 0.0
    %10075 = vmatpush1.msra.mxu0 0.0
    %10076 = vmatprep.subr.mxu0 0.0
    %10077 = vmatpush1.msra.mxu0 0.0
    %10078 = vmatprep.subr.mxu0 0.0
    %10079 = vmatpush1.msra.mxu0 0.0
    %10080 = vmatprep.subr.mxu0 0.0
    %10081 = vmatpush1.msra.mxu0 0.0
    %10082 = vmatprep.subr.mxu0 0.0
    %10083 = vmatpush1.msra.mxu0 0.0
    %10084 = vmatprep.subr.mxu0 0.0
    %10085 = vmatpush1.msra.mxu0 0.0
    %10086 = vmatprep.subr.mxu0 0.0
    %10087 = vmatpush1.msra.mxu0 0.0
    %10088 = vmatprep.subr.mxu0 0.0
    %10089 = vmatpush1.msra.mxu0 0.0
    %10090 = vmatprep.subr.mxu0 0.0
    %10091 = vmatpush1.msra.mxu0 0.0
    %10092 = vmatprep.subr.mxu0 0.0
    %10093 = vmatpush1.msra.mxu0 0.0
    %10094 = vmatprep.subr.mxu0 0.0
    %10095 = vmatpush1.msra.mxu0 0.0
    %10096 = vmatprep.subr.mxu0 0.0
    %10097 = vmatpush1.msra.mxu0 0.0
    %10098 = vmatprep.subr.mxu0 0.0
    %10099 = vmatpush1.msra.mxu0 0.0
    %10100 = vmatprep.subr.mxu0 0.0
    %10101 = vmatpush1.msra.mxu0 0.0
    %10102 = vmatprep.subr.mxu0 0.0
    %10103 = vmatpush1.msra.mxu0 0.0
    %10104 = vmatprep.subr.mxu0 0.0
    %10105 = vmatpush1.msra.mxu0 0.0
    %10106 = vmatprep.subr.mxu0 0.0
    %10107 = vmatpush1.msra.mxu0 0.0
    %10108 = vmatprep.subr.mxu0 0.0
    %10109 = vmatpush1.msra.mxu0 0.0
    %10110 = vmatprep.subr.mxu0 0.0
    %10111 = vmatpush1.msra.mxu0 0.0
    %10112 = vmatprep.subr.mxu0 0.0
    %10113 = vmatpush1.msra.mxu0 0.0
    %10114 = vmatprep.subr.mxu0 0.0
    %10115 = vmatpush1.msra.mxu0 0.0
    %10116 = vmatprep.subr.mxu0 0.0
    %10117 = vmatpush1.msra.mxu0 0.0
    %10118 = vmatprep.subr.mxu0 0.0
    %10119 = vmatpush1.msra.mxu0 0.0
    %10120 = vmatprep.subr.mxu0 0.0
    %10121 = vmatpush1.msra.mxu0 0.0
    %10122 = vmatprep.mubr.f32.mxu0 0.0
    %10123 = vmatmul.mubr.f32.gmra.mrb[0].mxu0 %v10053
    %v10124 = vpop.f32.mrb[0].mxu0
    %v10125 = vadd.f32 %v10050, %v10124
    %v10126 = vpop.f32.mrb[0].mxu0
    %10127 = vdwg.mxu0
    %vm10128 = vcmask 74752
    %10129 = vst.msk [vmem:[#allocation7] sm:$0x3] %vm10128, %v10125
    // Predicated region
    $region54: #{network_forward.1} parent=1 // pred_check
      _
    $region55: #{network_forward.1} parent=1 // pred_check_branch
      %10131 = sbr.rel (0) target = $region57
    $region56: #{network_forward.1} parent=1 // pred_region
      %s10133 = ssub.s32 32, 32
      %10134 = vsyncadd [#allocation3], %s10133
      %s10136 = sshll.u32 [#allocation7], 4
      %s10137 = int_to_ptr.vmem [resolvable:$true] %s10136
      %10139 = dma.vmem_to_hbm [thread:$0]  %s10137, 32, %s11, [#allocation3]
    $region57: #{network_forward.1} parent=1 // pred_fallthru
      _
    // Predicated region
    $region58: #{network_forward.1} parent=1 // pred_check
      _
    $region59: #{network_forward.1} parent=1 // pred_check_branch
      %10141 = sbr.rel (0) target = $region61
    $region60: #{network_forward.1} parent=1 // pred_region
      %10142 = dma.done [#allocation3], 32
    $region61: #{network_forward.1} parent=1 // pred_fallthru
      _
    %10143 = vsyncpa [#allocation3], 1
    %10144 = vsyncpa [#allocation4], 1
    %10145 = vsyncpa [#allocation6], 1

</llo_original>
